<compile_context>
chip_gen: v5e
topology: v5e:2x2
jax: 0.10.0
libtpu: 0.0.40
codegen_flags: <defaults>
</compile_context>

<pallas_src>
import math
from collections import namedtuple

import jax
import jax.numpy as jnp
from jax.experimental import pallas as pl
from jax.experimental.pallas import tpu as pltpu

FLAVATransformerOutput = namedtuple(
    "FLAVATransformerOutput",
    ["last_hidden_state", "pooler_output", "hidden_states", "attentions", "image_labels"],
    defaults=(None, None, None, None, None),
)

# ----- small synthetic config (module defaults scaled down, 128-lane aligned) -----
HIDDEN = 128           # real FLAVA: 768 (also a multiple of 128)
NUM_HEADS = 4          # real FLAVA: 12
HEAD_DIM = HIDDEN // NUM_HEADS
INTERMEDIATE = 256     # real FLAVA: 3072
NUM_LAYERS = 2         # real FLAVA: 12
LN_EPS = 1e-12
BATCH = 2
SEQ = 128              # real FLAVA image stream: 197


def _erf(x):
    # Abramowitz & Stegun 7.1.26 rational approximation (|err| <= 1.5e-7);
    # built only from ops that lower cleanly on the TPU VPU/EUP.
    a1, a2, a3, a4, a5 = 0.254829592, -0.284496736, 1.421413741, -1.453152027, 1.061405429
    p = 0.3275911
    ax = jnp.abs(x)
    t = 1.0 / (1.0 + p * ax)
    poly = ((((a5 * t + a4) * t + a3) * t + a2) * t + a1) * t
    y = 1.0 - poly * jnp.exp(-ax * ax)
    return jnp.where(x >= 0.0, y, -y)


def _gelu_exact(x):
    # nn.functional.gelu default (erf-based, not tanh approximation)
    return 0.5 * x * (1.0 + _erf(x * (1.0 / math.sqrt(2.0))))


def _layer_norm_fp32(x, w, b):
    # Fp32LayerNorm: all math in fp32.
    mu = jnp.mean(x, axis=-1, keepdims=True)
    var = jnp.mean((x - mu) ** 2, axis=-1, keepdims=True)
    return (x - mu) * jax.lax.rsqrt(var + LN_EPS) * w + b


def _flava_encoder_kernel(
    x_ref,
    ln1w_ref, ln1b_ref,
    wqkv_ref, bqkv_ref, wo_ref, bo_ref,
    ln2w_ref, ln2b_ref,
    w1_ref, b1_ref, w2_ref, b2_ref,
    hid_ref, attn_ref,
    h_scratch,
):
    """grid = (batch_tile, layer); one step == one layer of one batch sample."""
    layer = pl.program_id(1)

    @pl.when(layer == 0)
    def _():
        h_scratch[...] = x_ref[0]                  # load input once per batch tile

    x = h_scratch[...]                             # (S, H) fp32 resident activation

    # ---- layernorm_before + fused QKV projection (bf16 MXU, fp32 accumulate) ----
    hs = _layer_norm_fp32(x, ln1w_ref[0], ln1b_ref[0])
    qkv = jnp.dot(hs.astype(jnp.bfloat16), wqkv_ref[0],
                  preferred_element_type=jnp.float32) + bqkv_ref[0]        # (S, 3H)

    # Q/K/V splits are 128-lane aligned (H % 128 == 0) -> free slices.
    q = qkv[:, 0 * HIDDEN:1 * HIDDEN]
    k = qkv[:, 1 * HIDDEN:2 * HIDDEN]
    v = qkv[:, 2 * HIDDEN:3 * HIDDEN]

    def to_heads(t):
        # (S, H) -> (NUM_HEADS, S, HEAD_DIM): cheap lane slices + leading-axis
        # stack; avoids tile-crossing reshapes / sublane transposes in-kernel.
        return jnp.stack(
            [t[:, h * HEAD_DIM:(h + 1) * HEAD_DIM] for h in range(NUM_HEADS)],
            axis=0).astype(jnp.bfloat16)

    qh, kh, vh = to_heads(q), to_heads(k), to_heads(v)      # (NH, S, dh) bf16

    # One batched score einsum over heads; 1/sqrt(dh) is pre-folded into Wq/bq.
    scores = jnp.einsum("hqd,hkd->hqk", qh, kh,
                        preferred_element_type=jnp.float32)               # (NH, S, S) fp32
    scores = scores - jnp.max(scores, axis=-1, keepdims=True)
    e = jnp.exp(scores)
    probs = e / jnp.sum(e, axis=-1, keepdims=True)          # exact softmax (rows sum to 1)

    attn_ref[0, 0] = probs        # lane-dense full-block store (last dim = S = 128)

    ctx = jnp.einsum("hqk,hkd->hqd", probs.astype(jnp.bfloat16), vh,
                     preferred_element_type=jnp.float32)                  # (NH, S, dh) fp32

    # Head merge (lane concat) + SINGLE K=H output projection against full Wo.
    ctx_cat = jnp.concatenate([ctx[h] for h in range(NUM_HEADS)],
                              axis=-1).astype(jnp.bfloat16)               # (S, H)
    attn_out = jnp.dot(ctx_cat, wo_ref[0],
                       preferred_element_type=jnp.float32) + bo_ref[0]

    h1 = attn_out + x                                       # residual 1 (fp32)

    # ---- layernorm_after + FFN ----
    ln2 = _layer_norm_fp32(h1, ln2w_ref[0], ln2b_ref[0])
    ffn = jnp.dot(ln2.astype(jnp.bfloat16), w1_ref[0],
                  preferred_element_type=jnp.float32) + b1_ref[0]
    ffn = _gelu_exact(ffn)                                  # fp32 GELU
    ffn = jnp.dot(ffn.astype(jnp.bfloat16), w2_ref[0],
                  preferred_element_type=jnp.float32) + b2_ref[0]

    out = ffn + h1                                          # residual 2
    h_scratch[...] = out                                    # stay resident for next layer
    hid_ref[0, 0] = out                                     # lane-dense (S, H=128) store


def flava_encoder_forward(x, params):
    """FLAVATransformerEncoder.forward (attention_mask=None, head_mask=None).

    x: (B, S, H) fp32.  params: tuple of per-layer-stacked arrays (leading L axis).
    """
    B, S, H = x.shape
    assert (B, S, H) == (BATCH, SEQ, HIDDEN)
    L = params[0].shape[0]

    def weight_spec(p):
        blk = (1,) + p.shape[1:]
        nd = len(blk)
        return pl.BlockSpec(blk, lambda b, l, _nd=nd: (l,) + (0,) * (_nd - 1))

    in_specs = [pl.BlockSpec((1, S, H), lambda b, l: (b, 0, 0))] + [weight_spec(p) for p in params]
    out_specs = [
        pl.BlockSpec((1, 1, S, H), lambda b, l: (l, b, 0, 0)),
        pl.BlockSpec((1, 1, NUM_HEADS, S, S), lambda b, l: (l, b, 0, 0, 0)),
    ]
    out_shape = (
        jax.ShapeDtypeStruct((L, B, S, H), jnp.float32),
        jax.ShapeDtypeStruct((L, B, NUM_HEADS, S, S), jnp.float32),
    )

    # Advisory cost estimate so XLA schedules surrounding ops around the call.
    mm_flops = (2 * S * H * 3 * H                           # fused QKV projection
                + 2 * 2 * NUM_HEADS * S * S * HEAD_DIM      # scores + context
                + 2 * S * H * H                             # output projection
                + 2 * 2 * S * H * INTERMEDIATE)             # FFN (two matmuls)
    cost = pl.CostEstimate(
        flops=int(mm_flops * B * L),
        transcendentals=int((NUM_HEADS * S * S + S * INTERMEDIATE) * B * L),
        bytes_accessed=int(x.size * 4
                           + B * sum(int(p.size) * p.dtype.itemsize for p in params)
                           + L * B * S * H * 4
                           + L * B * NUM_HEADS * S * S * 4),
    )

    hid_all, attn_all = pl.pallas_call(
        _flava_encoder_kernel,
        out_shape=out_shape,
        grid_spec=pltpu.PrefetchScalarGridSpec(
            num_scalar_prefetch=0,
            grid=(B, L),                               # batch tiles (parallel) x layers (chain)
            in_specs=in_specs,
            out_specs=out_specs,
            scratch_shapes=[pltpu.VMEM((S, H), jnp.float32)],   # resident activation
        ),
        compiler_params=pltpu.CompilerParams(
            dimension_semantics=("parallel", "arbitrary"),      # batch -> v7x megacore
            vmem_limit_bytes=32 * 1024 * 1024,
        ),
        cost_estimate=cost,
    )(x, *params)

    hidden_states = (x,) + tuple(hid_all[l] for l in range(L))
    attentions = tuple(attn_all[l] for l in range(L))      # already (B, NH, S, S)
    return FLAVATransformerOutput(
        last_hidden_state=hidden_states[-1],
        hidden_states=hidden_states,
        attentions=attentions,
    )


def init_encoder_params(key, num_layers=NUM_LAYERS):
    """Synthetic per-layer params, stacked along a leading layer axis."""
    keys = jax.random.split(key, num_layers)
    scale = 1.0 / math.sqrt(HEAD_DIM)

    def one_layer(k):
        ks = jax.random.split(k, 12)

        def lin(kw, kb, din, dout):
            w = 0.02 * jax.random.normal(kw, (din, dout), dtype=jnp.float32)   # [in, out]
            b = 0.02 * jax.random.normal(kb, (1, dout), dtype=jnp.float32)
            return w, b

        wq, bq = lin(ks[0], ks[1], HIDDEN, HIDDEN)
        wk, bk = lin(ks[2], ks[3], HIDDEN, HIDDEN)
        wv, bv = lin(ks[4], ks[5], HIDDEN, HIDDEN)
        wo, bo = lin(ks[6], ks[7], HIDDEN, HIDDEN)
        w1, b1 = lin(ks[8], ks[9], HIDDEN, INTERMEDIATE)
        w2, b2 = lin(ks[10], ks[11], INTERMEDIATE, HIDDEN)

        # Fold 1/sqrt(head_dim) into the Q projection (weights + bias) so the
        # kernel never multiplies the (NH, S, S) score tensor by the scale.
        wq = wq * scale
        bq = bq * scale

        wqkv = jnp.concatenate([wq, wk, wv], axis=1)                  # (H, 3H)
        bqkv = jnp.concatenate([bq, bk, bv], axis=1)                  # (1, 3H)
        ln1w = jnp.ones((1, HIDDEN), jnp.float32)
        ln1b = jnp.zeros((1, HIDDEN), jnp.float32)
        ln2w = jnp.ones((1, HIDDEN), jnp.float32)
        ln2b = jnp.zeros((1, HIDDEN), jnp.float32)
        return (ln1w, ln1b,
                wqkv.astype(jnp.bfloat16), bqkv,
                wo.astype(jnp.bfloat16), bo,
                ln2w, ln2b,
                w1.astype(jnp.bfloat16), b1,
                w2.astype(jnp.bfloat16), b2)

    per_layer = [one_layer(k) for k in keys]
    return tuple(jnp.stack([lp[i] for lp in per_layer], axis=0)
                 for i in range(len(per_layer[0])))


def _reference_encoder(x, params):
    """Pure-JAX fp32 reference (same math, no Pallas) for a sanity check."""
    (ln1w, ln1b, wqkv, bqkv, wo, bo, ln2w, ln2b, w1, b1, w2, b2) = params
    L = ln1w.shape[0]
    B, S, H = x.shape
    hidden = x
    hiddens = [x]
    attns = []
    for l in range(L):
        x2 = hidden.reshape(B * S, H)
        hs = _layer_norm_fp32(x2, ln1w[l], ln1b[l])
        qkv = hs @ wqkv[l].astype(jnp.float32) + bqkv[l]
        q, k, v = jnp.split(qkv, 3, axis=1)

        def heads(t):
            return t.reshape(B, S, NUM_HEADS, HEAD_DIM).transpose(0, 2, 1, 3)

        qh, kh, vh = heads(q), heads(k), heads(v)
        # NOTE: 1/sqrt(head_dim) is pre-folded into the Q weights/bias at init.
        scores = jnp.einsum("bhqd,bhkd->bhqk", qh, kh)
        probs = jax.nn.softmax(scores, axis=-1)
        attns.append(probs)
        ctx = jnp.einsum("bhqk,bhkd->bhqd", probs, vh)
        ctx = ctx.transpose(0, 2, 1, 3).reshape(B * S, H)
        attn_out = ctx @ wo[l].astype(jnp.float32) + bo[l]
        h1 = attn_out + x2
        ln2v = _layer_norm_fp32(h1, ln2w[l], ln2b[l])
        ffn = _gelu_exact(ln2v @ w1[l].astype(jnp.float32) + b1[l])
        out = ffn @ w2[l].astype(jnp.float32) + b2[l] + h1
        hidden = out.reshape(B, S, H)
        hiddens.append(hidden)
    return hidden, hiddens, attns


if __name__ == "__main__":
    root = jax.random.PRNGKey(0)
    k_x, k_p = jax.random.split(root)
    x = jax.random.normal(k_x, (BATCH, SEQ, HIDDEN), dtype=jnp.float32)
    params = init_encoder_params(k_p, NUM_LAYERS)

    out = flava_encoder_forward(x, params)
    jax.block_until_ready(out.last_hidden_state)
    for a in out.attentions:
        jax.block_until_ready(a)

    # shape checks (mirror the PyTorch module's outputs)
    assert out.last_hidden_state.shape == (BATCH, SEQ, HIDDEN)
    assert len(out.hidden_states) == NUM_LAYERS + 1
    assert len(out.attentions) == NUM_LAYERS
    assert out.attentions[0].shape == (BATCH, NUM_HEADS, SEQ, SEQ)

    # numerical sanity vs pure-JAX reference (loose tol: bf16 matmul operands)
    ref_last, _, ref_attns = _reference_encoder(x, params)
    assert bool(jnp.all(jnp.isfinite(out.last_hidden_state)))
    assert jnp.allclose(out.last_hidden_state, ref_last, atol=5e-2), \
        float(jnp.max(jnp.abs(out.last_hidden_state - ref_last)))
    assert jnp.allclose(out.attentions[-1], ref_attns[-1], atol=5e-2), \
        float(jnp.max(jnp.abs(out.attentions[-1] - ref_attns[-1])))

    print("KERNEL_OK")
</pallas_src>

<mosaic_0001>
module attributes {stable_mosaic.version = 11 : i64} {
  func.func @_flava_encoder_kernel(%arg0: i32, %arg1: i32, %arg2: memref<1x128x128xf32, #tpu.memory_space<vmem>>, %arg3: memref<1x1x128xf32, #tpu.memory_space<vmem>>, %arg4: memref<1x1x128xf32, #tpu.memory_space<vmem>>, %arg5: memref<1x128x384xbf16, #tpu.memory_space<vmem>>, %arg6: memref<1x1x384xf32, #tpu.memory_space<vmem>>, %arg7: memref<1x128x128xbf16, #tpu.memory_space<vmem>>, %arg8: memref<1x1x128xf32, #tpu.memory_space<vmem>>, %arg9: memref<1x1x128xf32, #tpu.memory_space<vmem>>, %arg10: memref<1x1x128xf32, #tpu.memory_space<vmem>>, %arg11: memref<1x128x256xbf16, #tpu.memory_space<vmem>>, %arg12: memref<1x1x256xf32, #tpu.memory_space<vmem>>, %arg13: memref<1x256x128xbf16, #tpu.memory_space<vmem>>, %arg14: memref<1x1x128xf32, #tpu.memory_space<vmem>>, %arg15: memref<1x1x128x128xf32, #tpu.memory_space<vmem>>, %arg16: memref<1x1x4x128x128xf32, #tpu.memory_space<vmem>>, %arg17: memref<128x128xf32, #tpu.memory_space<vmem>>) attributes {dimension_semantics = [#tpu.dimension_semantics<parallel>, #tpu.dimension_semantics<arbitrary>], iteration_bounds = array<i64: 2, 2>, scalar_prefetch = 0 : i64, scratch_operands = 1 : i64, tpu.core_type = #tpu.core_type<tc>, window_params = [{transform_indices = @transform_0, window_bounds = array<i64: 1, 128, 128>}, {transform_indices = @transform_1, window_bounds = array<i64: 1, 1, 128>}, {transform_indices = @transform_2, window_bounds = array<i64: 1, 1, 128>}, {transform_indices = @transform_3, window_bounds = array<i64: 1, 128, 384>}, {transform_indices = @transform_4, window_bounds = array<i64: 1, 1, 384>}, {transform_indices = @transform_5, window_bounds = array<i64: 1, 128, 128>}, {transform_indices = @transform_6, window_bounds = array<i64: 1, 1, 128>}, {transform_indices = @transform_7, window_bounds = array<i64: 1, 1, 128>}, {transform_indices = @transform_8, window_bounds = array<i64: 1, 1, 128>}, {transform_indices = @transform_9, window_bounds = array<i64: 1, 128, 256>}, {transform_indices = @transform_10, window_bounds = array<i64: 1, 1, 256>}, {transform_indices = @transform_11, window_bounds = array<i64: 1, 256, 128>}, {transform_indices = @transform_12, window_bounds = array<i64: 1, 1, 128>}, {transform_indices = @transform_13, window_bounds = array<i64: 1, 1, 128, 128>}, {transform_indices = @transform_14, window_bounds = array<i64: 1, 1, 4, 128, 128>}]} {
    %c0_i32 = arith.constant 0 : i32
    %0 = arith.cmpi eq, %arg1, %c0_i32 : i32
    %1 = arith.extui %0 : i1 to i32
    %c0_i32_0 = arith.constant 0 : i32
    %2 = arith.cmpi ne, %1, %c0_i32_0 : i32
    scf.if %2 {
      %c0_81 = arith.constant 0 : index
      %c0_82 = arith.constant 0 : index
      %c0_83 = arith.constant 0 : index
      %191 = vector.load %arg2[%c0_81, %c0_82, %c0_83] : memref<1x128x128xf32, #tpu.memory_space<vmem>>, vector<1x128x128xf32>
      %192 = vector.shape_cast %191 : vector<1x128x128xf32> to vector<128x128xf32>
      %c0_84 = arith.constant 0 : index
      %c0_85 = arith.constant 0 : index
      %193 = vector.load %arg17[%c0_84, %c0_85] : memref<128x128xf32, #tpu.memory_space<vmem>>, vector<128x128xf32>
      tpu.vector_store %arg17[%c0_84, %c0_85], %192 {strides = array<i32>} : memref<128x128xf32, #tpu.memory_space<vmem>>, vector<128x128xf32>,
    } else {
    }
    %c0 = arith.constant 0 : index
    %c0_1 = arith.constant 0 : index
    %3 = vector.load %arg17[%c0, %c0_1] : memref<128x128xf32, #tpu.memory_space<vmem>>, vector<128x128xf32>
    %c0_2 = arith.constant 0 : index
    %c0_3 = arith.constant 0 : index
    %c0_4 = arith.constant 0 : index
    %4 = vector.load %arg3[%c0_2, %c0_3, %c0_4] : memref<1x1x128xf32, #tpu.memory_space<vmem>>, vector<1x1x128xf32>
    %5 = vector.shape_cast %4 : vector<1x1x128xf32> to vector<1x128xf32>
    %c0_5 = arith.constant 0 : index
    %c0_6 = arith.constant 0 : index
    %c0_7 = arith.constant 0 : index
    %6 = vector.load %arg4[%c0_5, %c0_6, %c0_7] : memref<1x1x128xf32, #tpu.memory_space<vmem>>, vector<1x1x128xf32>
    %7 = vector.shape_cast %6 : vector<1x1x128xf32> to vector<1x128xf32>
    %cst = arith.constant dense<0.000000e+00> : vector<128xf32>
    %8 = vector.multi_reduction <add>, %3, %cst [1] : vector<128x128xf32> to vector<128xf32>
    %9 = vector.shape_cast %8 : vector<128xf32> to vector<128x1xf32>
    %cst_8 = arith.constant 1.280000e+02 : f32
    %10 = vector.broadcast %cst_8 : f32 to vector<128x1xf32>
    %11 = arith.divf %9, %10 : vector<128x1xf32>
    %12 = vector.broadcast %11 : vector<128x1xf32> to vector<128x128xf32>
    %13 = arith.subf %3, %12 : vector<128x128xf32>
    %14 = arith.mulf %13, %13 : vector<128x128xf32>
    %cst_9 = arith.constant dense<0.000000e+00> : vector<128xf32>
    %15 = vector.multi_reduction <add>, %14, %cst_9 [1] : vector<128x128xf32> to vector<128xf32>
    %16 = vector.shape_cast %15 : vector<128xf32> to vector<128x1xf32>
    %cst_10 = arith.constant 1.280000e+02 : f32
    %17 = vector.broadcast %cst_10 : f32 to vector<128x1xf32>
    %18 = arith.divf %16, %17 : vector<128x1xf32>
    %19 = vector.broadcast %11 : vector<128x1xf32> to vector<128x128xf32>
    %20 = arith.subf %3, %19 : vector<128x128xf32>
    %cst_11 = arith.constant 9.99999996E-13 : f32
    %21 = vector.broadcast %cst_11 : f32 to vector<128x1xf32>
    %22 = arith.addf %18, %21 : vector<128x1xf32>
    %23 = math.rsqrt %22 : vector<128x1xf32>
    %24 = vector.broadcast %23 : vector<128x1xf32> to vector<128x128xf32>
    %25 = arith.mulf %20, %24 : vector<128x128xf32>
    %26 = vector.broadcast %5 : vector<1x128xf32> to vector<128x128xf32>
    %27 = arith.mulf %25, %26 : vector<128x128xf32>
    %28 = vector.broadcast %7 : vector<1x128xf32> to vector<128x128xf32>
    %29 = arith.addf %27, %28 : vector<128x128xf32>
    %30 = arith.truncf %29 : vector<128x128xf32> to vector<128x128xbf16>
    %c0_12 = arith.constant 0 : index
    %c0_13 = arith.constant 0 : index
    %c0_14 = arith.constant 0 : index
    %31 = vector.load %arg5[%c0_12, %c0_13, %c0_14] : memref<1x128x384xbf16, #tpu.memory_space<vmem>>, vector<1x128x384xbf16>
    %32 = vector.shape_cast %31 : vector<1x128x384xbf16> to vector<128x384xbf16>
    %cst_15 = arith.constant dense<0.000000e+00> : vector<128x384xf32>
    %33 = tpu.matmul %30, %32, %cst_15 {dimension_numbers = #tpu.dot_dimension_numbers<[1], [0], [0], [1], [0, 0, 1, 1], [], []>} : vector<128x128xbf16>, vector<128x384xbf16>, vector<128x384xf32> -> vector<128x384xf32>
    %c0_16 = arith.constant 0 : index
    %c0_17 = arith.constant 0 : index
    %c0_18 = arith.constant 0 : index
    %34 = vector.load %arg6[%c0_16, %c0_17, %c0_18] : memref<1x1x384xf32, #tpu.memory_space<vmem>>, vector<1x1x384xf32>
    %35 = vector.shape_cast %34 : vector<1x1x384xf32> to vector<1x384xf32>
    %36 = vector.broadcast %35 : vector<1x384xf32> to vector<128x384xf32>
    %37 = arith.addf %33, %36 : vector<128x384xf32>
    %38 = vector.extract_strided_slice %37 {offsets = [0, 0], sizes = [128, 128], strides = [1, 1]} : vector<128x384xf32> to vector<128x128xf32>
    %39 = vector.extract_strided_slice %37 {offsets = [0, 128], sizes = [128, 128], strides = [1, 1]} : vector<128x384xf32> to vector<128x128xf32>
    %40 = vector.extract_strided_slice %37 {offsets = [0, 256], sizes = [128, 128], strides = [1, 1]} : vector<128x384xf32> to vector<128x128xf32>
    %41 = vector.extract_strided_slice %38 {offsets = [0, 0], sizes = [128, 32], strides = [1, 1]} : vector<128x128xf32> to vector<128x32xf32>
    %42 = vector.extract_strided_slice %38 {offsets = [0, 32], sizes = [128, 32], strides = [1, 1]} : vector<128x128xf32> to vector<128x32xf32>
    %43 = vector.extract_strided_slice %38 {offsets = [0, 64], sizes = [128, 32], strides = [1, 1]} : vector<128x128xf32> to vector<128x32xf32>
    %44 = vector.extract_strided_slice %38 {offsets = [0, 96], sizes = [128, 32], strides = [1, 1]} : vector<128x128xf32> to vector<128x32xf32>
    %45 = vector.shape_cast %41 : vector<128x32xf32> to vector<1x128x32xf32>
    %46 = vector.shape_cast %42 : vector<128x32xf32> to vector<1x128x32xf32>
    %47 = vector.shape_cast %43 : vector<128x32xf32> to vector<1x128x32xf32>
    %48 = vector.shape_cast %44 : vector<128x32xf32> to vector<1x128x32xf32>
    %49 = tpu.concatenate %45, %46, %47, %48 in 0 : vector<1x128x32xf32>, vector<1x128x32xf32>, vector<1x128x32xf32>, vector<1x128x32xf32> -> vector<4x128x32xf32>
    %50 = arith.truncf %49 : vector<4x128x32xf32> to vector<4x128x32xbf16>
    %51 = vector.extract_strided_slice %39 {offsets = [0, 0], sizes = [128, 32], strides = [1, 1]} : vector<128x128xf32> to vector<128x32xf32>
    %52 = vector.extract_strided_slice %39 {offsets = [0, 32], sizes = [128, 32], strides = [1, 1]} : vector<128x128xf32> to vector<128x32xf32>
    %53 = vector.extract_strided_slice %39 {offsets = [0, 64], sizes = [128, 32], strides = [1, 1]} : vector<128x128xf32> to vector<128x32xf32>
    %54 = vector.extract_strided_slice %39 {offsets = [0, 96], sizes = [128, 32], strides = [1, 1]} : vector<128x128xf32> to vector<128x32xf32>
    %55 = vector.shape_cast %51 : vector<128x32xf32> to vector<1x128x32xf32>
    %56 = vector.shape_cast %52 : vector<128x32xf32> to vector<1x128x32xf32>
    %57 = vector.shape_cast %53 : vector<128x32xf32> to vector<1x128x32xf32>
    %58 = vector.shape_cast %54 : vector<128x32xf32> to vector<1x128x32xf32>
    %59 = tpu.concatenate %55, %56, %57, %58 in 0 : vector<1x128x32xf32>, vector<1x128x32xf32>, vector<1x128x32xf32>, vector<1x128x32xf32> -> vector<4x128x32xf32>
    %60 = arith.truncf %59 : vector<4x128x32xf32> to vector<4x128x32xbf16>
    %61 = vector.extract_strided_slice %40 {offsets = [0, 0], sizes = [128, 32], strides = [1, 1]} : vector<128x128xf32> to vector<128x32xf32>
    %62 = vector.extract_strided_slice %40 {offsets = [0, 32], sizes = [128, 32], strides = [1, 1]} : vector<128x128xf32> to vector<128x32xf32>
    %63 = vector.extract_strided_slice %40 {offsets = [0, 64], sizes = [128, 32], strides = [1, 1]} : vector<128x128xf32> to vector<128x32xf32>
    %64 = vector.extract_strided_slice %40 {offsets = [0, 96], sizes = [128, 32], strides = [1, 1]} : vector<128x128xf32> to vector<128x32xf32>
    %65 = vector.shape_cast %61 : vector<128x32xf32> to vector<1x128x32xf32>
    %66 = vector.shape_cast %62 : vector<128x32xf32> to vector<1x128x32xf32>
    %67 = vector.shape_cast %63 : vector<128x32xf32> to vector<1x128x32xf32>
    %68 = vector.shape_cast %64 : vector<128x32xf32> to vector<1x128x32xf32>
    %69 = tpu.concatenate %65, %66, %67, %68 in 0 : vector<1x128x32xf32>, vector<1x128x32xf32>, vector<1x128x32xf32>, vector<1x128x32xf32> -> vector<4x128x32xf32>
    %70 = arith.truncf %69 : vector<4x128x32xf32> to vector<4x128x32xbf16>
    "tpu.trace_start"() <{level = 10 : i32, message = "hqd,hkd->hqk"}> : () -> ()
    %cst_19 = arith.constant dense<0.000000e+00> : vector<4x128x128xf32>
    %71 = tpu.matmul %50, %60, %cst_19 {dimension_numbers = #tpu.dot_dimension_numbers<[2], [2], [1], [1], [0, 0, 0, 1, 1, 1], [0], [0]>} : vector<4x128x32xbf16>, vector<4x128x32xbf16>, vector<4x128x128xf32> -> vector<4x128x128xf32>
    "tpu.trace_stop"() : () -> ()
    %cst_20 = arith.constant dense<0xFF800000> : vector<4x128xf32>
    %72 = vector.multi_reduction <maximumf>, %71, %cst_20 [2] : vector<4x128x128xf32> to vector<4x128xf32>
    %73 = vector.shape_cast %72 : vector<4x128xf32> to vector<4x128x1xf32>
    %74 = vector.broadcast %73 : vector<4x128x1xf32> to vector<4x128x128xf32>
    %75 = arith.subf %71, %74 : vector<4x128x128xf32>
    %76 = math.exp %75 : vector<4x128x128xf32>
    %cst_21 = arith.constant dense<0.000000e+00> : vector<4x128xf32>
    %77 = vector.multi_reduction <add>, %76, %cst_21 [2] : vector<4x128x128xf32> to vector<4x128xf32>
    %78 = vector.shape_cast %77 : vector<4x128xf32> to vector<4x128x1xf32>
    %79 = vector.broadcast %78 : vector<4x128x1xf32> to vector<4x128x128xf32>
    %80 = arith.divf %76, %79 : vector<4x128x128xf32>
    %c0_22 = arith.constant 0 : index
    %c0_23 = arith.constant 0 : index
    %c0_24 = arith.constant 0 : index
    %c0_25 = arith.constant 0 : index
    %c0_26 = arith.constant 0 : index
    %81 = vector.load %arg16[%c0_22, %c0_23, %c0_24, %c0_25, %c0_26] : memref<1x1x4x128x128xf32, #tpu.memory_space<vmem>>, vector<1x1x4x128x128xf32>
    %82 = vector.shape_cast %81 : vector<1x1x4x128x128xf32> to vector<4x128x128xf32>
    %83 = vector.shape_cast %80 : vector<4x128x128xf32> to vector<1x1x4x128x128xf32>
    tpu.vector_store %arg16[%c0_22, %c0_23, %c0_24, %c0_25, %c0_26], %83 {strides = array<i32>} : memref<1x1x4x128x128xf32, #tpu.memory_space<vmem>>, vector<1x1x4x128x128xf32>,
    %84 = arith.truncf %80 : vector<4x128x128xf32> to vector<4x128x128xbf16>
    "tpu.trace_start"() <{level = 10 : i32, message = "hqk,hkd->hqd"}> : () -> ()
    %cst_27 = arith.constant dense<0.000000e+00> : vector<4x128x32xf32>
    %85 = tpu.matmul %84, %70, %cst_27 {dimension_numbers = #tpu.dot_dimension_numbers<[2], [1], [1], [2], [0, 0, 0, 1, 1, 2], [0], [0]>} : vector<4x128x128xbf16>, vector<4x128x32xbf16>, vector<4x128x32xf32> -> vector<4x128x32xf32>
    "tpu.trace_stop"() : () -> ()
    %86 = vector.extract_strided_slice %85 {offsets = [0, 0, 0], sizes = [1, 128, 32], strides = [1, 1, 1]} : vector<4x128x32xf32> to vector<1x128x32xf32>
    %87 = vector.shape_cast %86 : vector<1x128x32xf32> to vector<128x32xf32>
    %88 = vector.extract_strided_slice %85 {offsets = [1, 0, 0], sizes = [1, 128, 32], strides = [1, 1, 1]} : vector<4x128x32xf32> to vector<1x128x32xf32>
    %89 = vector.shape_cast %88 : vector<1x128x32xf32> to vector<128x32xf32>
    %90 = vector.extract_strided_slice %85 {offsets = [2, 0, 0], sizes = [1, 128, 32], strides = [1, 1, 1]} : vector<4x128x32xf32> to vector<1x128x32xf32>
    %91 = vector.shape_cast %90 : vector<1x128x32xf32> to vector<128x32xf32>
    %92 = vector.extract_strided_slice %85 {offsets = [3, 0, 0], sizes = [1, 128, 32], strides = [1, 1, 1]} : vector<4x128x32xf32> to vector<1x128x32xf32>
    %93 = vector.shape_cast %92 : vector<1x128x32xf32> to vector<128x32xf32>
    %94 = tpu.concatenate %87, %89, %91, %93 in 1 : vector<128x32xf32>, vector<128x32xf32>, vector<128x32xf32>, vector<128x32xf32> -> vector<128x128xf32>
    %95 = arith.truncf %94 : vector<128x128xf32> to vector<128x128xbf16>
    %c0_28 = arith.constant 0 : index
    %c0_29 = arith.constant 0 : index
    %c0_30 = arith.constant 0 : index
    %96 = vector.load %arg7[%c0_28, %c0_29, %c0_30] : memref<1x128x128xbf16, #tpu.memory_space<vmem>>, vector<1x128x128xbf16>
    %97 = vector.shape_cast %96 : vector<1x128x128xbf16> to vector<128x128xbf16>
    %cst_31 = arith.constant dense<0.000000e+00> : vector<128x128xf32>
    %98 = tpu.matmul %95, %97, %cst_31 {dimension_numbers = #tpu.dot_dimension_numbers<[1], [0], [0], [1], [0, 0, 1, 1], [], []>} : vector<128x128xbf16>, vector<128x128xbf16>, vector<128x128xf32> -> vector<128x128xf32>
    %c0_32 = arith.constant 0 : index
    %c0_33 = arith.constant 0 : index
    %c0_34 = arith.constant 0 : index
    %99 = vector.load %arg8[%c0_32, %c0_33, %c0_34] : memref<1x1x128xf32, #tpu.memory_space<vmem>>, vector<1x1x128xf32>
    %100 = vector.shape_cast %99 : vector<1x1x128xf32> to vector<1x128xf32>
    %101 = vector.broadcast %100 : vector<1x128xf32> to vector<128x128xf32>
    %102 = arith.addf %98, %101 : vector<128x128xf32>
    %103 = arith.addf %102, %3 : vector<128x128xf32>
    %c0_35 = arith.constant 0 : index
    %c0_36 = arith.constant 0 : index
    %c0_37 = arith.constant 0 : index
    %104 = vector.load %arg9[%c0_35, %c0_36, %c0_37] : memref<1x1x128xf32, #tpu.memory_space<vmem>>, vector<1x1x128xf32>
    %105 = vector.shape_cast %104 : vector<1x1x128xf32> to vector<1x128xf32>
    %c0_38 = arith.constant 0 : index
    %c0_39 = arith.constant 0 : index
    %c0_40 = arith.constant 0 : index
    %106 = vector.load %arg10[%c0_38, %c0_39, %c0_40] : memref<1x1x128xf32, #tpu.memory_space<vmem>>, vector<1x1x128xf32>
    %107 = vector.shape_cast %106 : vector<1x1x128xf32> to vector<1x128xf32>
    %cst_41 = arith.constant dense<0.000000e+00> : vector<128xf32>
    %108 = vector.multi_reduction <add>, %103, %cst_41 [1] : vector<128x128xf32> to vector<128xf32>
    %109 = vector.shape_cast %108 : vector<128xf32> to vector<128x1xf32>
    %cst_42 = arith.constant 1.280000e+02 : f32
    %110 = vector.broadcast %cst_42 : f32 to vector<128x1xf32>
    %111 = arith.divf %109, %110 : vector<128x1xf32>
    %112 = vector.broadcast %111 : vector<128x1xf32> to vector<128x128xf32>
    %113 = arith.subf %103, %112 : vector<128x128xf32>
    %114 = arith.mulf %113, %113 : vector<128x128xf32>
    %cst_43 = arith.constant dense<0.000000e+00> : vector<128xf32>
    %115 = vector.multi_reduction <add>, %114, %cst_43 [1] : vector<128x128xf32> to vector<128xf32>
    %116 = vector.shape_cast %115 : vector<128xf32> to vector<128x1xf32>
    %cst_44 = arith.constant 1.280000e+02 : f32
    %117 = vector.broadcast %cst_44 : f32 to vector<128x1xf32>
    %118 = arith.divf %116, %117 : vector<128x1xf32>
    %119 = vector.broadcast %111 : vector<128x1xf32> to vector<128x128xf32>
    %120 = arith.subf %103, %119 : vector<128x128xf32>
    %cst_45 = arith.constant 9.99999996E-13 : f32
    %121 = vector.broadcast %cst_45 : f32 to vector<128x1xf32>
    %122 = arith.addf %118, %121 : vector<128x1xf32>
    %123 = math.rsqrt %122 : vector<128x1xf32>
    %124 = vector.broadcast %123 : vector<128x1xf32> to vector<128x128xf32>
    %125 = arith.mulf %120, %124 : vector<128x128xf32>
    %126 = vector.broadcast %105 : vector<1x128xf32> to vector<128x128xf32>
    %127 = arith.mulf %125, %126 : vector<128x128xf32>
    %128 = vector.broadcast %107 : vector<1x128xf32> to vector<128x128xf32>
    %129 = arith.addf %127, %128 : vector<128x128xf32>
    %130 = arith.truncf %129 : vector<128x128xf32> to vector<128x128xbf16>
    %c0_46 = arith.constant 0 : index
    %c0_47 = arith.constant 0 : index
    %c0_48 = arith.constant 0 : index
    %131 = vector.load %arg11[%c0_46, %c0_47, %c0_48] : memref<1x128x256xbf16, #tpu.memory_space<vmem>>, vector<1x128x256xbf16>
    %132 = vector.shape_cast %131 : vector<1x128x256xbf16> to vector<128x256xbf16>
    %cst_49 = arith.constant dense<0.000000e+00> : vector<128x256xf32>
    %133 = tpu.matmul %130, %132, %cst_49 {dimension_numbers = #tpu.dot_dimension_numbers<[1], [0], [0], [1], [0, 0, 1, 1], [], []>} : vector<128x128xbf16>, vector<128x256xbf16>, vector<128x256xf32> -> vector<128x256xf32>
    %c0_50 = arith.constant 0 : index
    %c0_51 = arith.constant 0 : index
    %c0_52 = arith.constant 0 : index
    %134 = vector.load %arg12[%c0_50, %c0_51, %c0_52] : memref<1x1x256xf32, #tpu.memory_space<vmem>>, vector<1x1x256xf32>
    %135 = vector.shape_cast %134 : vector<1x1x256xf32> to vector<1x256xf32>
    %136 = vector.broadcast %135 : vector<1x256xf32> to vector<128x256xf32>
    %137 = arith.addf %133, %136 : vector<128x256xf32>
    %cst_53 = arith.constant 5.000000e-01 : f32
    %138 = vector.broadcast %cst_53 : f32 to vector<128x256xf32>
    %139 = arith.mulf %138, %137 : vector<128x256xf32>
    %cst_54 = arith.constant 0.707106769 : f32
    %140 = vector.broadcast %cst_54 : f32 to vector<128x256xf32>
    %141 = arith.mulf %137, %140 : vector<128x256xf32>
    %142 = math.absf %141 : vector<128x256xf32>
    %cst_55 = arith.constant 0.327591091 : f32
    %143 = vector.broadcast %cst_55 : f32 to vector<128x256xf32>
    %144 = arith.mulf %143, %142 : vector<128x256xf32>
    %cst_56 = arith.constant 1.000000e+00 : f32
    %145 = vector.broadcast %cst_56 : f32 to vector<128x256xf32>
    %146 = arith.addf %145, %144 : vector<128x256xf32>
    %cst_57 = arith.constant 1.000000e+00 : f32
    %147 = vector.broadcast %cst_57 : f32 to vector<128x256xf32>
    %148 = arith.divf %147, %146 : vector<128x256xf32>
    %cst_58 = arith.constant 1.06140542 : f32
    %149 = vector.broadcast %cst_58 : f32 to vector<128x256xf32>
    %150 = arith.mulf %149, %148 : vector<128x256xf32>
    %cst_59 = arith.constant -1.45315206 : f32
    %151 = vector.broadcast %cst_59 : f32 to vector<128x256xf32>
    %152 = arith.addf %150, %151 : vector<128x256xf32>
    %153 = arith.mulf %152, %148 : vector<128x256xf32>
    %cst_60 = arith.constant 1.42141378 : f32
    %154 = vector.broadcast %cst_60 : f32 to vector<128x256xf32>
    %155 = arith.addf %153, %154 : vector<128x256xf32>
    %156 = arith.mulf %155, %148 : vector<128x256xf32>
    %cst_61 = arith.constant -0.284496725 : f32
    %157 = vector.broadcast %cst_61 : f32 to vector<128x256xf32>
    %158 = arith.addf %156, %157 : vector<128x256xf32>
    %159 = arith.mulf %158, %148 : vector<128x256xf32>
    %cst_62 = arith.constant 0.254829586 : f32
    %160 = vector.broadcast %cst_62 : f32 to vector<128x256xf32>
    %161 = arith.addf %159, %160 : vector<128x256xf32>
    %162 = arith.mulf %161, %148 : vector<128x256xf32>
    %cst_63 = arith.constant 0.000000e+00 : f32
    %163 = vector.broadcast %cst_63 : f32 to vector<128x256xf32>
    %164 = arith.subf %163, %142 : vector<128x256xf32>
    %165 = arith.mulf %164, %142 : vector<128x256xf32>
    %166 = math.exp %165 : vector<128x256xf32>
    %167 = arith.mulf %162, %166 : vector<128x256xf32>
    %cst_64 = arith.constant 1.000000e+00 : f32
    %168 = vector.broadcast %cst_64 : f32 to vector<128x256xf32>
    %169 = arith.subf %168, %167 : vector<128x256xf32>
    %cst_65 = arith.constant 0.000000e+00 : f32
    %170 = vector.broadcast %cst_65 : f32 to vector<128x256xf32>
    %171 = arith.cmpf oge, %141, %170 : vector<128x256xf32>
    %cst_66 = arith.constant 0.000000e+00 : f32
    %172 = vector.broadcast %cst_66 : f32 to vector<128x256xf32>
    %173 = arith.subf %172, %169 : vector<128x256xf32>
    %174 = arith.select %171, %169, %173 : vector<128x256xi1>, vector<128x256xf32>
    %cst_67 = arith.constant 1.000000e+00 : f32
    %175 = vector.broadcast %cst_67 : f32 to vector<128x256xf32>
    %176 = arith.addf %175, %174 : vector<128x256xf32>
    %177 = arith.mulf %139, %176 : vector<128x256xf32>
    %178 = arith.truncf %177 : vector<128x256xf32> to vector<128x256xbf16>
    %c0_68 = arith.constant 0 : index
    %c0_69 = arith.constant 0 : index
    %c0_70 = arith.constant 0 : index
    %179 = vector.load %arg13[%c0_68, %c0_69, %c0_70] : memref<1x256x128xbf16, #tpu.memory_space<vmem>>, vector<1x256x128xbf16>
    %180 = vector.shape_cast %179 : vector<1x256x128xbf16> to vector<256x128xbf16>
    %cst_71 = arith.constant dense<0.000000e+00> : vector<128x128xf32>
    %181 = tpu.matmul %178, %180, %cst_71 {dimension_numbers = #tpu.dot_dimension_numbers<[1], [0], [0], [1], [0, 0, 1, 1], [], []>} : vector<128x256xbf16>, vector<256x128xbf16>, vector<128x128xf32> -> vector<128x128xf32>
    %c0_72 = arith.constant 0 : index
    %c0_73 = arith.constant 0 : index
    %c0_74 = arith.constant 0 : index
    %182 = vector.load %arg14[%c0_72, %c0_73, %c0_74] : memref<1x1x128xf32, #tpu.memory_space<vmem>>, vector<1x1x128xf32>
    %183 = vector.shape_cast %182 : vector<1x1x128xf32> to vector<1x128xf32>
    %184 = vector.broadcast %183 : vector<1x128xf32> to vector<128x128xf32>
    %185 = arith.addf %181, %184 : vector<128x128xf32>
    %186 = arith.addf %185, %103 : vector<128x128xf32>
    %c0_75 = arith.constant 0 : index
    %c0_76 = arith.constant 0 : index
    %187 = vector.load %arg17[%c0_75, %c0_76] : memref<128x128xf32, #tpu.memory_space<vmem>>, vector<128x128xf32>
    tpu.vector_store %arg17[%c0_75, %c0_76], %186 {strides = array<i32>} : memref<128x128xf32, #tpu.memory_space<vmem>>, vector<128x128xf32>,
    %c0_77 = arith.constant 0 : index
    %c0_78 = arith.constant 0 : index
    %c0_79 = arith.constant 0 : index
    %c0_80 = arith.constant 0 : index
    %188 = vector.load %arg15[%c0_77, %c0_78, %c0_79, %c0_80] : memref<1x1x128x128xf32, #tpu.memory_space<vmem>>, vector<1x1x128x128xf32>
    %189 = vector.shape_cast %188 : vector<1x1x128x128xf32> to vector<128x128xf32>
    %190 = vector.shape_cast %186 : vector<128x128xf32> to vector<1x1x128x128xf32>
    tpu.vector_store %arg15[%c0_77, %c0_78, %c0_79, %c0_80], %190 {strides = array<i32>} : memref<1x1x128x128xf32, #tpu.memory_space<vmem>>, vector<1x1x128x128xf32>,
    return
  }
  func.func @transform_0(%arg0: i32, %arg1: i32) -> (i32, i32, i32) {
    %c0_i32 = arith.constant 0 : i32
    %c0_i32_0 = arith.constant 0 : i32
    %c0_i32_1 = arith.constant 0 : i32
    return %arg0, %c0_i32, %c0_i32_0 : i32, i32, i32
  }
  func.func @transform_1(%arg0: i32, %arg1: i32) -> (i32, i32, i32) {
    %c0_i32 = arith.constant 0 : i32
    %c0_i32_0 = arith.constant 0 : i32
    %c0_i32_1 = arith.constant 0 : i32
    return %arg1, %c0_i32, %c0_i32_0 : i32, i32, i32
  }
  func.func @transform_2(%arg0: i32, %arg1: i32) -> (i32, i32, i32) {
    %c0_i32 = arith.constant 0 : i32
    %c0_i32_0 = arith.constant 0 : i32
    %c0_i32_1 = arith.constant 0 : i32
    return %arg1, %c0_i32, %c0_i32_0 : i32, i32, i32
  }
  func.func @transform_3(%arg0: i32, %arg1: i32) -> (i32, i32, i32) {
    %c0_i32 = arith.constant 0 : i32
    %c0_i32_0 = arith.constant 0 : i32
    %c0_i32_1 = arith.constant 0 : i32
    return %arg1, %c0_i32, %c0_i32_0 : i32, i32, i32
  }
  func.func @transform_4(%arg0: i32, %arg1: i32) -> (i32, i32, i32) {
    %c0_i32 = arith.constant 0 : i32
    %c0_i32_0 = arith.constant 0 : i32
    %c0_i32_1 = arith.constant 0 : i32
    return %arg1, %c0_i32, %c0_i32_0 : i32, i32, i32
  }
  func.func @transform_5(%arg0: i32, %arg1: i32) -> (i32, i32, i32) {
    %c0_i32 = arith.constant 0 : i32
    %c0_i32_0 = arith.constant 0 : i32
    %c0_i32_1 = arith.constant 0 : i32
    return %arg1, %c0_i32, %c0_i32_0 : i32, i32, i32
  }
  func.func @transform_6(%arg0: i32, %arg1: i32) -> (i32, i32, i32) {
    %c0_i32 = arith.constant 0 : i32
    %c0_i32_0 = arith.constant 0 : i32
    %c0_i32_1 = arith.constant 0 : i32
    return %arg1, %c0_i32, %c0_i32_0 : i32, i32, i32
  }
  func.func @transform_7(%arg0: i32, %arg1: i32) -> (i32, i32, i32) {
    %c0_i32 = arith.constant 0 : i32
    %c0_i32_0 = arith.constant 0 : i32
    %c0_i32_1 = arith.constant 0 : i32
    return %arg1, %c0_i32, %c0_i32_0 : i32, i32, i32
  }
  func.func @transform_8(%arg0: i32, %arg1: i32) -> (i32, i32, i32) {
    %c0_i32 = arith.constant 0 : i32
    %c0_i32_0 = arith.constant 0 : i32
    %c0_i32_1 = arith.constant 0 : i32
    return %arg1, %c0_i32, %c0_i32_0 : i32, i32, i32
  }
  func.func @transform_9(%arg0: i32, %arg1: i32) -> (i32, i32, i32) {
    %c0_i32 = arith.constant 0 : i32
    %c0_i32_0 = arith.constant 0 : i32
    %c0_i32_1 = arith.constant 0 : i32
    return %arg1, %c0_i32, %c0_i32_0 : i32, i32, i32
  }
  func.func @transform_10(%arg0: i32, %arg1: i32) -> (i32, i32, i32) {
    %c0_i32 = arith.constant 0 : i32
    %c0_i32_0 = arith.constant 0 : i32
    %c0_i32_1 = arith.constant 0 : i32
    return %arg1, %c0_i32, %c0_i32_0 : i32, i32, i32
  }
  func.func @transform_11(%arg0: i32, %arg1: i32) -> (i32, i32, i32) {
    %c0_i32 = arith.constant 0 : i32
    %c0_i32_0 = arith.constant 0 : i32
    %c0_i32_1 = arith.constant 0 : i32
    return %arg1, %c0_i32, %c0_i32_0 : i32, i32, i32
  }
  func.func @transform_12(%arg0: i32, %arg1: i32) -> (i32, i32, i32) {
    %c0_i32 = arith.constant 0 : i32
    %c0_i32_0 = arith.constant 0 : i32
    %c0_i32_1 = arith.constant 0 : i32
    return %arg1, %c0_i32, %c0_i32_0 : i32, i32, i32
  }
  func.func @transform_13(%arg0: i32, %arg1: i32) -> (i32, i32, i32, i32) {
    %c0_i32 = arith.constant 0 : i32
    %c0_i32_0 = arith.constant 0 : i32
    %c0_i32_1 = arith.constant 0 : i32
    return %arg1, %arg0, %c0_i32, %c0_i32_0 : i32, i32, i32, i32
  }
  func.func @transform_14(%arg0: i32, %arg1: i32) -> (i32, i32, i32, i32, i32) {
    %c0_i32 = arith.constant 0 : i32
    %c0_i32_0 = arith.constant 0 : i32
    %c0_i32_1 = arith.constant 0 : i32
    %c0_i32_2 = arith.constant 0 : i32
    return %arg1, %arg0, %c0_i32, %c0_i32_0, %c0_i32_1 : i32, i32, i32, i32, i32
  }
}

</mosaic_0001>

<llo_original>
// kernel: tpu_custom_call.1
$region0: #{tpu_custom_call.1}
  #allocation0 [shape = 'u32[]', space=smem, size = 0x4, offset = 0x4, fixed_abs, tag = 'smem constant byte address 0x4 - core index']
  #allocation1 [shape = 'u32[72,128]{1,0:T(1,128)}', space=vmem, size = 0x9000, scoped, tag = 'internal scratch']
  #allocation2 [shape = 'f32[128,128]{1,0:T(8,128)}', space=vmem, size = 0x10000, scoped, tag = 'scratch operand']
  %s0 = inlined_call_operand.hbm [shape: f32[2,128,128], index: 0, kind: input, shape index: {}]
  %s1 = inlined_call_operand.hbm [shape: f32[2,1,128], index: 1, kind: input, shape index: {}]
  %s2 = inlined_call_operand.hbm [shape: f32[2,1,128], index: 2, kind: input, shape index: {}]
  %s3 = inlined_call_operand.hbm [shape: bf16[2,128,384], index: 3, kind: input, shape index: {}]
  %s4 = inlined_call_operand.hbm [shape: f32[2,1,384], index: 4, kind: input, shape index: {}]
  %s5 = inlined_call_operand.hbm [shape: bf16[2,128,128], index: 5, kind: input, shape index: {}]
  %s6 = inlined_call_operand.vmem [shape: f32[2,1,128], index: 6, kind: input, shape index: {}]
  %s7 = inlined_call_operand.hbm [shape: f32[2,1,128], index: 7, kind: input, shape index: {}]
  %s8 = inlined_call_operand.hbm [shape: f32[2,1,128], index: 8, kind: input, shape index: {}]
  %s9 = inlined_call_operand.hbm [shape: bf16[2,128,256], index: 9, kind: input, shape index: {}]
  %s10 = inlined_call_operand.vmem [shape: f32[2,1,256], index: 10, kind: input, shape index: {}]
  %s11 = inlined_call_operand.hbm [shape: bf16[2,256,128], index: 11, kind: input, shape index: {}]
  %s12 = inlined_call_operand.vmem [shape: f32[2,1,128], index: 12, kind: input, shape index: {}]
  %s13 = inlined_call_operand.hbm [shape: f32[2,2,128,128], index: 13, kind: output, shape index: {0}]
  %s14 = inlined_call_operand.hbm [shape: f32[2,2,4,128,128], index: 14, kind: output, shape index: {1}]
  %15 = xla_tuple %s13, %s14
  %s16 = sld [smem:[#allocation0]]
  $region137: #{tpu_custom_call.1} parent=0
    _
  %s18 = ssub.s32 1, %s16
  %s19 = scalar_select 0, %s18, %s16
  $region1: #{tpu_custom_call.1} parent=0
    #allocation3 [shape = 'u8[131072]{0}', space=vmem, size = 0x20000, scoped, tag = 'input window, operand 0']
    #allocation4 [shape = 's32[2]{0}', space=sflag, size = 0x8, scoped, tag = 'scoped memory for tpu_custom_call.1']
    #allocation5 [shape = 's32[2]{0}', space=sflag, size = 0x8, scoped, tag = 'scoped memory for tpu_custom_call.1']
    #allocation6 [shape = 'u8[1024]{0}', space=vmem, size = 0x400, scoped, tag = 'input window, operand 1']
    #allocation7 [shape = 's32[2]{0}', space=sflag, size = 0x8, scoped, tag = 'scoped memory for tpu_custom_call.1']
    #allocation8 [shape = 'u8[1024]{0}', space=vmem, size = 0x400, scoped, tag = 'input window, operand 2']
    #allocation9 [shape = 'u8[196608]{0}', space=vmem, size = 0x30000, scoped, tag = 'input window, operand 3']
    #allocation10 [shape = 's32[2]{0}', space=sflag, size = 0x8, scoped, tag = 'scoped memory for tpu_custom_call.1']
    #allocation11 [shape = 'u8[3072]{0}', space=vmem, size = 0xc00, scoped, tag = 'input window, operand 4']
    #allocation12 [shape = 'u8[65536]{0}', space=vmem, size = 0x10000, scoped, tag = 'input window, operand 5']
    #allocation13 [shape = 's32[2]{0}', space=sflag, size = 0x8, scoped, tag = 'scoped memory for tpu_custom_call.1']
    #allocation14 [shape = 'u8[1024]{0}', space=vmem, size = 0x400, scoped, tag = 'input window, operand 7']
    #allocation15 [shape = 'u8[1024]{0}', space=vmem, size = 0x400, scoped, tag = 'input window, operand 8']
    #allocation16 [shape = 's32[2]{0}', space=sflag, size = 0x8, scoped, tag = 'scoped memory for tpu_custom_call.1']
    #allocation17 [shape = 'u8[131072]{0}', space=vmem, size = 0x20000, scoped, tag = 'input window, operand 9']
    #allocation18 [shape = 'u8[131072]{0}', space=vmem, size = 0x20000, scoped, tag = 'input window, operand 11']
    #allocation19 [shape = 's32[2]{0}', space=sflag, size = 0x8, scoped, tag = 'scoped memory for tpu_custom_call.1']
    #allocation20 [shape = 'u8[131072]{0}', space=vmem, size = 0x20000, scoped, tag = 'output window, operand 0']
    #allocation21 [shape = 'u8[524288]{0}', space=vmem, size = 0x80000, scoped, tag = 'output window, operand 1']
    #allocation22 [shape = 's32[2]{0}', space=sflag, size = 0x8, scoped, tag = 'scoped memory for tpu_custom_call.1']
    %20 = vsyncpa [#allocation4], 0
    %s21 = scalar_lea.sflag [#allocation4], 1
    %22 = vsyncpa %s21, 0
    %23 = vsyncpa [#allocation7], 0
    %s24 = scalar_lea.sflag [#allocation7], 1
    %25 = vsyncpa %s24, 0
    %26 = vsyncpa [#allocation10], 0
    %s27 = scalar_lea.sflag [#allocation10], 1
    %28 = vsyncpa %s27, 0
    %29 = vsyncpa [#allocation13], 0
    %s30 = scalar_lea.sflag [#allocation13], 1
    %31 = vsyncpa %s30, 0
    %32 = vsyncpa [#allocation16], 0
    %s33 = scalar_lea.sflag [#allocation16], 1
    %34 = vsyncpa %s33, 0
    %35 = vsyncpa [#allocation19], 0
    %s36 = scalar_lea.sflag [#allocation19], 1
    %37 = vsyncpa %s36, 0
    %38 = vsyncpa [#allocation5], 0
    %s39 = scalar_lea.sflag [#allocation5], 1
    %40 = vsyncpa %s39, 0
    %41 = vsyncpa [#allocation22], 0
    %s42 = scalar_lea.sflag [#allocation22], 1
    %43 = vsyncpa %s42, 0
    loop: start=0, step=1, limit=6
    $region2: #{tpu_custom_call.1} parent=1 // loop_pre_header
      _
    $region3: #{tpu_custom_call.1} parent=1 // loop_header
      %s45 = sphi 0, %s49
      %p46 = scmp.ge.s32.totalorder %s45, 6
      %s52 = sphi 0, %s64
      %s53 = sphi 0, %s60
      %s54 = sphi 0, %s52
      %s55 = sphi 0, %s53
      %s56 = sphi 0, %s54
      %s57 = sphi 0, %s55
      %s67 = sphi 0, %s69
      %s70 = sphi 0, %s67
      %s71 = sphi 0, %s70
      %s87 = sphi 0, %s71
      %s93 = sphi 0, %s95
      %s96 = sphi 0, %s93
      %s97 = sphi 0, %s96
      %s113 = sphi 0, %s97
      %s119 = sphi 0, %s121
      %s122 = sphi 0, %s119
      %s123 = sphi 0, %s122
      %s139 = sphi 0, %s123
      %s145 = sphi 0, %s147
      %s148 = sphi 0, %s145
      %s149 = sphi 0, %s148
      %s165 = sphi 0, %s149
      %s171 = sphi 0, %s173
      %s174 = sphi 0, %s171
      %s175 = sphi 0, %s174
      %s191 = sphi 0, %s175
      %s197 = sphi 0, %s199
      %s200 = sphi 0, %s197
      %s201 = sphi 0, %s200
      %s217 = sphi 0, %s201
      %s223 = sphi 0, %s225
      %s226 = sphi 0, %s223
      %s227 = sphi 0, %s226
      %s243 = sphi 0, %s227
      %s249 = sphi 0, %s251
      %s252 = sphi 0, %s249
      %s253 = sphi 0, %s252
      %s269 = sphi 0, %s253
      %s275 = sphi 0, %s277
      %s278 = sphi 0, %s275
      %s279 = sphi 0, %s278
      %s295 = sphi 0, %s279
      %s301 = sphi 0, %s303
      %s304 = sphi 0, %s301
      %s305 = sphi 0, %s304
      %s321 = sphi 0, %s305
      %s327 = sphi 0, %s329
      %s330 = sphi 0, %s327
      %s331 = sphi 0, %s330
      %s347 = sphi 0, %s331
      %s353 = sphi 0, %s355
      %s356 = sphi 0, %s353
      %s357 = sphi 0, %s356
      %s373 = sphi 0, %s357
      %s379 = sphi 0, %s381
      %s382 = sphi 0, %s379
      %s383 = sphi 0, %s382
      %s399 = sphi 0, %s383
      %s407 = sphi 0, %s409
      %s410 = sphi 0, %s407
      %s411 = sphi 0, %s410
      %s427 = sphi 0, %s411
      %s435 = sphi 0, %s437
      %s438 = sphi 0, %s435
      %s439 = sphi 0, %s438
      %s455 = sphi 0, %s439
    $region4: #{tpu_custom_call.1} parent=1 // loop_header_branch
      %48 = sbr.rel (%p46) target = $region8
    $region5: #{tpu_custom_call.1} parent=1 // loop_body
      %s50 = ssub.s32 %s45, 1
      %s51 = ssub.s32 %s45, 2
      %s58 = sadd.s32 1, %s53
      %p59 = scmp.ge.s32.totalorder %s58, 2
      %s60 = scalar_select %p59, 0, %s58
      %s61 = sadd.s32 1, %s52
      %s62 = scalar_select %p59, %s61, %s52
      %p63 = scmp.ge.s32.totalorder %s62, 2
      %s64 = scalar_select %p63, 0, %s62
      %s65 = ssub.s32 %s52, %s64
      %p66 = scmp.eq.s32.totalorder %s65, 0
      %s68 = sadd.s32 %s67, 1
      %s69 = scalar_select %p66, %s67, %s68
      %p72 = pneg %p66
      %p73 = scmp.eq.s32.totalorder %s45, 3
      %p74 = por %p72, %p73
      %p75 = scmp.ne.s32.totalorder %s67, %s70
      %p76 = scmp.eq.s32.totalorder %s45, 0
      %p77 = por %p75, %p76
      %p78 = scmp.ne.s32.totalorder %s67, %s70
      %p79 = scmp.eq.s32.totalorder %s50, 3
      %p80 = por %p78, %p79
      %p81 = scmp.ne.s32.totalorder %s70, %s71
      %p82 = scmp.eq.s32.totalorder %s50, 0
      %p83 = por %p81, %p82
      %p84 = scmp.ne.s32.totalorder %s70, %s71
      %p85 = scmp.eq.s32.totalorder %s51, 3
      %p86 = por %p84, %p85
      %p88 = scmp.ne.s32.totalorder %s71, %s87
      %p89 = scmp.eq.s32.totalorder %s51, 0
      %p90 = por %p88, %p89
      %s91 = ssub.s32 %s53, %s60
      %p92 = scmp.eq.s32.totalorder %s91, 0
      %s94 = sadd.s32 %s93, 1
      %s95 = scalar_select %p92, %s93, %s94
      %p98 = pneg %p92
      %p99 = scmp.eq.s32.totalorder %s45, 3
      %p100 = por %p98, %p99
      %p101 = scmp.ne.s32.totalorder %s93, %s96
      %p102 = scmp.eq.s32.totalorder %s45, 0
      %p103 = por %p101, %p102
      %p104 = scmp.ne.s32.totalorder %s93, %s96
      %p105 = scmp.eq.s32.totalorder %s50, 3
      %p106 = por %p104, %p105
      %p107 = scmp.ne.s32.totalorder %s96, %s97
      %p108 = scmp.eq.s32.totalorder %s50, 0
      %p109 = por %p107, %p108
      %p110 = scmp.ne.s32.totalorder %s96, %s97
      %p111 = scmp.eq.s32.totalorder %s51, 3
      %p112 = por %p110, %p111
      %p114 = scmp.ne.s32.totalorder %s97, %s113
      %p115 = scmp.eq.s32.totalorder %s51, 0
      %p116 = por %p114, %p115
      %s117 = ssub.s32 %s53, %s60
      %p118 = scmp.eq.s32.totalorder %s117, 0
      %s120 = sadd.s32 %s119, 1
      %s121 = scalar_select %p118, %s119, %s120
      %p124 = pneg %p118
      %p125 = scmp.eq.s32.totalorder %s45, 3
      %p126 = por %p124, %p125
      %p127 = scmp.ne.s32.totalorder %s119, %s122
      %p128 = scmp.eq.s32.totalorder %s45, 0
      %p129 = por %p127, %p128
      %p130 = scmp.ne.s32.totalorder %s119, %s122
      %p131 = scmp.eq.s32.totalorder %s50, 3
      %p132 = por %p130, %p131
      %p133 = scmp.ne.s32.totalorder %s122, %s123
      %p134 = scmp.eq.s32.totalorder %s50, 0
      %p135 = por %p133, %p134
      %p136 = scmp.ne.s32.totalorder %s122, %s123
      %p137 = scmp.eq.s32.totalorder %s51, 3
      %p138 = por %p136, %p137
      %p140 = scmp.ne.s32.totalorder %s123, %s139
      %p141 = scmp.eq.s32.totalorder %s51, 0
      %p142 = por %p140, %p141
      %s143 = ssub.s32 %s53, %s60
      %p144 = scmp.eq.s32.totalorder %s143, 0
      %s146 = sadd.s32 %s145, 1
      %s147 = scalar_select %p144, %s145, %s146
      %p150 = pneg %p144
      %p151 = scmp.eq.s32.totalorder %s45, 3
      %p152 = por %p150, %p151
      %p153 = scmp.ne.s32.totalorder %s145, %s148
      %p154 = scmp.eq.s32.totalorder %s45, 0
      %p155 = por %p153, %p154
      %p156 = scmp.ne.s32.totalorder %s145, %s148
      %p157 = scmp.eq.s32.totalorder %s50, 3
      %p158 = por %p156, %p157
      %p159 = scmp.ne.s32.totalorder %s148, %s149
      %p160 = scmp.eq.s32.totalorder %s50, 0
      %p161 = por %p159, %p160
      %p162 = scmp.ne.s32.totalorder %s148, %s149
      %p163 = scmp.eq.s32.totalorder %s51, 3
      %p164 = por %p162, %p163
      %p166 = scmp.ne.s32.totalorder %s149, %s165
      %p167 = scmp.eq.s32.totalorder %s51, 0
      %p168 = por %p166, %p167
      %s169 = ssub.s32 %s53, %s60
      %p170 = scmp.eq.s32.totalorder %s169, 0
      %s172 = sadd.s32 %s171, 1
      %s173 = scalar_select %p170, %s171, %s172
      %p176 = pneg %p170
      %p177 = scmp.eq.s32.totalorder %s45, 3
      %p178 = por %p176, %p177
      %p179 = scmp.ne.s32.totalorder %s171, %s174
      %p180 = scmp.eq.s32.totalorder %s45, 0
      %p181 = por %p179, %p180
      %p182 = scmp.ne.s32.totalorder %s171, %s174
      %p183 = scmp.eq.s32.totalorder %s50, 3
      %p184 = por %p182, %p183
      %p185 = scmp.ne.s32.totalorder %s174, %s175
      %p186 = scmp.eq.s32.totalorder %s50, 0
      %p187 = por %p185, %p186
      %p188 = scmp.ne.s32.totalorder %s174, %s175
      %p189 = scmp.eq.s32.totalorder %s51, 3
      %p190 = por %p188, %p189
      %p192 = scmp.ne.s32.totalorder %s175, %s191
      %p193 = scmp.eq.s32.totalorder %s51, 0
      %p194 = por %p192, %p193
      %s195 = ssub.s32 %s53, %s60
      %p196 = scmp.eq.s32.totalorder %s195, 0
      %s198 = sadd.s32 %s197, 1
      %s199 = scalar_select %p196, %s197, %s198
      %p202 = pneg %p196
      %p203 = scmp.eq.s32.totalorder %s45, 3
      %p204 = por %p202, %p203
      %p205 = scmp.ne.s32.totalorder %s197, %s200
      %p206 = scmp.eq.s32.totalorder %s45, 0
      %p207 = por %p205, %p206
      %p208 = scmp.ne.s32.totalorder %s197, %s200
      %p209 = scmp.eq.s32.totalorder %s50, 3
      %p210 = por %p208, %p209
      %p211 = scmp.ne.s32.totalorder %s200, %s201
      %p212 = scmp.eq.s32.totalorder %s50, 0
      %p213 = por %p211, %p212
      %p214 = scmp.ne.s32.totalorder %s200, %s201
      %p215 = scmp.eq.s32.totalorder %s51, 3
      %p216 = por %p214, %p215
      %p218 = scmp.ne.s32.totalorder %s201, %s217
      %p219 = scmp.eq.s32.totalorder %s51, 0
      %p220 = por %p218, %p219
      %s221 = ssub.s32 %s53, %s60
      %p222 = scmp.eq.s32.totalorder %s221, 0
      %s224 = sadd.s32 %s223, 1
      %s225 = scalar_select %p222, %s223, %s224
      %p228 = pneg %p222
      %p229 = scmp.eq.s32.totalorder %s45, 3
      %p230 = por %p228, %p229
      %p231 = scmp.ne.s32.totalorder %s223, %s226
      %p232 = scmp.eq.s32.totalorder %s45, 0
      %p233 = por %p231, %p232
      %p234 = scmp.ne.s32.totalorder %s223, %s226
      %p235 = scmp.eq.s32.totalorder %s50, 3
      %p236 = por %p234, %p235
      %p237 = scmp.ne.s32.totalorder %s226, %s227
      %p238 = scmp.eq.s32.totalorder %s50, 0
      %p239 = por %p237, %p238
      %p240 = scmp.ne.s32.totalorder %s226, %s227
      %p241 = scmp.eq.s32.totalorder %s51, 3
      %p242 = por %p240, %p241
      %p244 = scmp.ne.s32.totalorder %s227, %s243
      %p245 = scmp.eq.s32.totalorder %s51, 0
      %p246 = por %p244, %p245
      %s247 = ssub.s32 %s53, %s60
      %p248 = scmp.eq.s32.totalorder %s247, 0
      %s250 = sadd.s32 %s249, 1
      %s251 = scalar_select %p248, %s249, %s250
      %p254 = pneg %p248
      %p255 = scmp.eq.s32.totalorder %s45, 3
      %p256 = por %p254, %p255
      %p257 = scmp.ne.s32.totalorder %s249, %s252
      %p258 = scmp.eq.s32.totalorder %s45, 0
      %p259 = por %p257, %p258
      %p260 = scmp.ne.s32.totalorder %s249, %s252
      %p261 = scmp.eq.s32.totalorder %s50, 3
      %p262 = por %p260, %p261
      %p263 = scmp.ne.s32.totalorder %s252, %s253
      %p264 = scmp.eq.s32.totalorder %s50, 0
      %p265 = por %p263, %p264
      %p266 = scmp.ne.s32.totalorder %s252, %s253
      %p267 = scmp.eq.s32.totalorder %s51, 3
      %p268 = por %p266, %p267
      %p270 = scmp.ne.s32.totalorder %s253, %s269
      %p271 = scmp.eq.s32.totalorder %s51, 0
      %p272 = por %p270, %p271
      %s273 = ssub.s32 %s53, %s60
      %p274 = scmp.eq.s32.totalorder %s273, 0
      %s276 = sadd.s32 %s275, 1
      %s277 = scalar_select %p274, %s275, %s276
      %p280 = pneg %p274
      %p281 = scmp.eq.s32.totalorder %s45, 3
      %p282 = por %p280, %p281
      %p283 = scmp.ne.s32.totalorder %s275, %s278
      %p284 = scmp.eq.s32.totalorder %s45, 0
      %p285 = por %p283, %p284
      %p286 = scmp.ne.s32.totalorder %s275, %s278
      %p287 = scmp.eq.s32.totalorder %s50, 3
      %p288 = por %p286, %p287
      %p289 = scmp.ne.s32.totalorder %s278, %s279
      %p290 = scmp.eq.s32.totalorder %s50, 0
      %p291 = por %p289, %p290
      %p292 = scmp.ne.s32.totalorder %s278, %s279
      %p293 = scmp.eq.s32.totalorder %s51, 3
      %p294 = por %p292, %p293
      %p296 = scmp.ne.s32.totalorder %s279, %s295
      %p297 = scmp.eq.s32.totalorder %s51, 0
      %p298 = por %p296, %p297
      %s299 = ssub.s32 %s53, %s60
      %p300 = scmp.eq.s32.totalorder %s299, 0
      %s302 = sadd.s32 %s301, 1
      %s303 = scalar_select %p300, %s301, %s302
      %p306 = pneg %p300
      %p307 = scmp.eq.s32.totalorder %s45, 3
      %p308 = por %p306, %p307
      %p309 = scmp.ne.s32.totalorder %s301, %s304
      %p310 = scmp.eq.s32.totalorder %s45, 0
      %p311 = por %p309, %p310
      %p312 = scmp.ne.s32.totalorder %s301, %s304
      %p313 = scmp.eq.s32.totalorder %s50, 3
      %p314 = por %p312, %p313
      %p315 = scmp.ne.s32.totalorder %s304, %s305
      %p316 = scmp.eq.s32.totalorder %s50, 0
      %p317 = por %p315, %p316
      %p318 = scmp.ne.s32.totalorder %s304, %s305
      %p319 = scmp.eq.s32.totalorder %s51, 3
      %p320 = por %p318, %p319
      %p322 = scmp.ne.s32.totalorder %s305, %s321
      %p323 = scmp.eq.s32.totalorder %s51, 0
      %p324 = por %p322, %p323
      %s325 = ssub.s32 %s53, %s60
      %p326 = scmp.eq.s32.totalorder %s325, 0
      %s328 = sadd.s32 %s327, 1
      %s329 = scalar_select %p326, %s327, %s328
      %p332 = pneg %p326
      %p333 = scmp.eq.s32.totalorder %s45, 3
      %p334 = por %p332, %p333
      %p335 = scmp.ne.s32.totalorder %s327, %s330
      %p336 = scmp.eq.s32.totalorder %s45, 0
      %p337 = por %p335, %p336
      %p338 = scmp.ne.s32.totalorder %s327, %s330
      %p339 = scmp.eq.s32.totalorder %s50, 3
      %p340 = por %p338, %p339
      %p341 = scmp.ne.s32.totalorder %s330, %s331
      %p342 = scmp.eq.s32.totalorder %s50, 0
      %p343 = por %p341, %p342
      %p344 = scmp.ne.s32.totalorder %s330, %s331
      %p345 = scmp.eq.s32.totalorder %s51, 3
      %p346 = por %p344, %p345
      %p348 = scmp.ne.s32.totalorder %s331, %s347
      %p349 = scmp.eq.s32.totalorder %s51, 0
      %p350 = por %p348, %p349
      %s351 = ssub.s32 %s53, %s60
      %p352 = scmp.eq.s32.totalorder %s351, 0
      %s354 = sadd.s32 %s353, 1
      %s355 = scalar_select %p352, %s353, %s354
      %p358 = pneg %p352
      %p359 = scmp.eq.s32.totalorder %s45, 3
      %p360 = por %p358, %p359
      %p361 = scmp.ne.s32.totalorder %s353, %s356
      %p362 = scmp.eq.s32.totalorder %s45, 0
      %p363 = por %p361, %p362
      %p364 = scmp.ne.s32.totalorder %s353, %s356
      %p365 = scmp.eq.s32.totalorder %s50, 3
      %p366 = por %p364, %p365
      %p367 = scmp.ne.s32.totalorder %s356, %s357
      %p368 = scmp.eq.s32.totalorder %s50, 0
      %p369 = por %p367, %p368
      %p370 = scmp.ne.s32.totalorder %s356, %s357
      %p371 = scmp.eq.s32.totalorder %s51, 3
      %p372 = por %p370, %p371
      %p374 = scmp.ne.s32.totalorder %s357, %s373
      %p375 = scmp.eq.s32.totalorder %s51, 0
      %p376 = por %p374, %p375
      %s377 = ssub.s32 %s53, %s60
      %p378 = scmp.eq.s32.totalorder %s377, 0
      %s380 = sadd.s32 %s379, 1
      %s381 = scalar_select %p378, %s379, %s380
      %p384 = pneg %p378
      %p385 = scmp.eq.s32.totalorder %s45, 3
      %p386 = por %p384, %p385
      %p387 = scmp.ne.s32.totalorder %s379, %s382
      %p388 = scmp.eq.s32.totalorder %s45, 0
      %p389 = por %p387, %p388
      %p390 = scmp.ne.s32.totalorder %s379, %s382
      %p391 = scmp.eq.s32.totalorder %s50, 3
      %p392 = por %p390, %p391
      %p393 = scmp.ne.s32.totalorder %s382, %s383
      %p394 = scmp.eq.s32.totalorder %s50, 0
      %p395 = por %p393, %p394
      %p396 = scmp.ne.s32.totalorder %s382, %s383
      %p397 = scmp.eq.s32.totalorder %s51, 3
      %p398 = por %p396, %p397
      %p400 = scmp.ne.s32.totalorder %s383, %s399
      %p401 = scmp.eq.s32.totalorder %s51, 0
      %p402 = por %p400, %p401
      %s403 = ssub.s32 %s53, %s60
      %s404 = ssub.s32 %s52, %s64
      %s405 = sor.u32 %s403, %s404
      %p406 = scmp.eq.s32.totalorder %s405, 0
      %s408 = sadd.s32 %s407, 1
      %s409 = scalar_select %p406, %s407, %s408
      %p412 = pneg %p406
      %p413 = scmp.eq.s32.totalorder %s45, 3
      %p414 = por %p412, %p413
      %p415 = scmp.ne.s32.totalorder %s407, %s410
      %p416 = scmp.eq.s32.totalorder %s45, 0
      %p417 = por %p415, %p416
      %p418 = scmp.ne.s32.totalorder %s407, %s410
      %p419 = scmp.eq.s32.totalorder %s50, 3
      %p420 = por %p418, %p419
      %p421 = scmp.ne.s32.totalorder %s410, %s411
      %p422 = scmp.eq.s32.totalorder %s50, 0
      %p423 = por %p421, %p422
      %p424 = scmp.ne.s32.totalorder %s410, %s411
      %p425 = scmp.eq.s32.totalorder %s51, 3
      %p426 = por %p424, %p425
      %p428 = scmp.ne.s32.totalorder %s411, %s427
      %p429 = scmp.eq.s32.totalorder %s51, 0
      %p430 = por %p428, %p429
      %s431 = ssub.s32 %s53, %s60
      %s432 = ssub.s32 %s52, %s64
      %s433 = sor.u32 %s431, %s432
      %p434 = scmp.eq.s32.totalorder %s433, 0
      %s436 = sadd.s32 %s435, 1
      %s437 = scalar_select %p434, %s435, %s436
      %p440 = pneg %p434
      %p441 = scmp.eq.s32.totalorder %s45, 3
      %p442 = por %p440, %p441
      %p443 = scmp.ne.s32.totalorder %s435, %s438
      %p444 = scmp.eq.s32.totalorder %s45, 0
      %p445 = por %p443, %p444
      %p446 = scmp.ne.s32.totalorder %s435, %s438
      %p447 = scmp.eq.s32.totalorder %s50, 3
      %p448 = por %p446, %p447
      %p449 = scmp.ne.s32.totalorder %s438, %s439
      %p450 = scmp.eq.s32.totalorder %s50, 0
      %p451 = por %p449, %p450
      %p452 = scmp.ne.s32.totalorder %s438, %s439
      %p453 = scmp.eq.s32.totalorder %s51, 3
      %p454 = por %p452, %p453
      %p456 = scmp.ne.s32.totalorder %s439, %s455
      %p457 = scmp.eq.s32.totalorder %s51, 0
      %p458 = por %p456, %p457
      %p459 = scmp.le.s32.totalorder 1, %s45
      %p460 = scmp.lt.s32.totalorder %s45, 5
      %p461 = pnand %p459, %p460
      %p462 = pneg %p461
      // Predicated region
      $region9: #{tpu_custom_call.1} parent=5 // pred_check
        _
      $region10: #{tpu_custom_call.1} parent=5 // pred_check_branch
        %464 = sbr.rel (%p461) target = $region12
      $region11: #{tpu_custom_call.1} parent=5 // pred_region
        %s465 = ssub.s32 %s45, 1
      $region12: #{tpu_custom_call.1} parent=5 // pred_fallthru
        _
      %p466 = scmp.lt.s32.totalorder %s45, 4
      // Predicated region
      $region13: #{tpu_custom_call.1} parent=5 // pred_check
        %p467 = pneg %p466
      $region14: #{tpu_custom_call.1} parent=5 // pred_check_branch
        %469 = sbr.rel (%p467) target = $region16
      $region15: #{tpu_custom_call.1} parent=5 // pred_region
        // Predicated region
        $region17: #{tpu_custom_call.1} parent=15 // pred_check
          %p470 = pneg %p77
        $region18: #{tpu_custom_call.1} parent=15 // pred_check_branch
          %472 = sbr.rel (%p470) target = $region20
        $region19: #{tpu_custom_call.1} parent=15 // pred_region
          %s473 = sand.u32 %s67, 1
          %s474 = scalar_lea.sflag [#allocation4], %s473
          %s475 = sand.u32 %s67, 1
          %s476 = smul.addr %s475, 128
          %s477 = scalar_lea.vmem [#allocation3], %s476
          %479 = vsyncadd %s474, 0
          %s480 = smul.addr %s52, 16
          %s481 = smul.addr %s480, 8
          %s482 = scalar_lea.hbm %s0, %s481
          %s483 = sshll.u32 %s482, 4
          %s484 = int_to_ptr.hbm [resolvable:$true] %s483
          %s485 = sshll.u32 %s477, 4
          %s486 = int_to_ptr.vmem [resolvable:$true] %s485
          %491 = dma.hbm_to_vmem [thread:$0]  %s484, 2048, %s486, %s474, 128, 128, 8
        $region20: #{tpu_custom_call.1} parent=15 // pred_fallthru
          _
        // Predicated region
        $region21: #{tpu_custom_call.1} parent=15 // pred_check
          %p492 = pneg %p103
        $region22: #{tpu_custom_call.1} parent=15 // pred_check_branch
          %494 = sbr.rel (%p492) target = $region24
        $region23: #{tpu_custom_call.1} parent=15 // pred_region
          %s495 = sand.u32 %s45, 1
          %s496 = scalar_lea.sflag [#allocation7], %s495
          %s497 = sand.u32 %s93, 1
          %s498 = scalar_lea.vmem [#allocation6], %s497
          %500 = vsyncadd %s496, 0
          %s501 = scalar_lea.hbm %s1, %s53
          %s503 = sshll.u32 %s501, 4
          %s504 = int_to_ptr.hbm [resolvable:$true] %s503
          %s505 = sshll.u32 %s498, 4
          %s506 = int_to_ptr.vmem [resolvable:$true] %s505
          %508 = dma.hbm_to_vmem [thread:$0]  %s504, 16, %s506, %s496
        $region24: #{tpu_custom_call.1} parent=15 // pred_fallthru
          _
        // Predicated region
        $region25: #{tpu_custom_call.1} parent=15 // pred_check
          %p509 = pneg %p129
        $region26: #{tpu_custom_call.1} parent=15 // pred_check_branch
          %511 = sbr.rel (%p509) target = $region28
        $region27: #{tpu_custom_call.1} parent=15 // pred_region
          %s512 = sand.u32 %s45, 1
          %s513 = scalar_lea.sflag [#allocation7], %s512
          %s514 = sand.u32 %s119, 1
          %s515 = scalar_lea.vmem [#allocation8], %s514
          %517 = vsyncadd %s513, 0
          %s518 = scalar_lea.hbm %s2, %s53
          %s520 = sshll.u32 %s518, 4
          %s521 = int_to_ptr.hbm [resolvable:$true] %s520
          %s522 = sshll.u32 %s515, 4
          %s523 = int_to_ptr.vmem [resolvable:$true] %s522
          %525 = dma.hbm_to_vmem [thread:$0]  %s521, 16, %s523, %s513
        $region28: #{tpu_custom_call.1} parent=15 // pred_fallthru
          _
        // Predicated region
        $region29: #{tpu_custom_call.1} parent=15 // pred_check
          %p526 = pneg %p155
        $region30: #{tpu_custom_call.1} parent=15 // pred_check_branch
          %528 = sbr.rel (%p526) target = $region32
        $region31: #{tpu_custom_call.1} parent=15 // pred_region
          %s529 = sand.u32 %s45, 1
          %s530 = scalar_lea.sflag [#allocation10], %s529
          %s531 = sand.u32 %s145, 1
          %s532 = smul.addr %s531, 192
          %s533 = scalar_lea.vmem [#allocation9], %s532
          %535 = vsyncadd %s530, 0
          %s536 = smul.addr %s53, 48
          %s537 = smul.addr %s536, 4
          %s538 = scalar_lea.hbm %s3, %s537
          %s539 = sshll.u32 %s538, 4
          %s540 = int_to_ptr.hbm [resolvable:$true] %s539
          %s541 = sshll.u32 %s533, 4
          %s542 = int_to_ptr.vmem [resolvable:$true] %s541
          %547 = dma.hbm_to_vmem [thread:$0]  %s540, 3072, %s542, %s530, 192, 192, 12
        $region32: #{tpu_custom_call.1} parent=15 // pred_fallthru
          _
        // Predicated region
        $region33: #{tpu_custom_call.1} parent=15 // pred_check
          %p548 = pneg %p181
        $region34: #{tpu_custom_call.1} parent=15 // pred_check_branch
          %550 = sbr.rel (%p548) target = $region36
        $region35: #{tpu_custom_call.1} parent=15 // pred_region
          %s551 = sand.u32 %s45, 1
          %s552 = scalar_lea.sflag [#allocation10], %s551
          %s553 = sand.u32 %s171, 1
          %s554 = smul.addr %s553, 3
          %s555 = scalar_lea.vmem [#allocation11], %s554
          %557 = vsyncadd %s552, 0
          %s558 = smul.addr %s53, 3
          %s559 = scalar_lea.hbm %s4, %s558
          %s561 = sshll.u32 %s559, 4
          %s562 = int_to_ptr.hbm [resolvable:$true] %s561
          %s563 = sshll.u32 %s555, 4
          %s564 = int_to_ptr.vmem [resolvable:$true] %s563
          %566 = dma.hbm_to_vmem [thread:$0]  %s562, 48, %s564, %s552
        $region36: #{tpu_custom_call.1} parent=15 // pred_fallthru
          _
        // Predicated region
        $region37: #{tpu_custom_call.1} parent=15 // pred_check
          %p567 = pneg %p207
        $region38: #{tpu_custom_call.1} parent=15 // pred_check_branch
          %569 = sbr.rel (%p567) target = $region40
        $region39: #{tpu_custom_call.1} parent=15 // pred_region
          %s570 = sand.u32 %s45, 1
          %s571 = scalar_lea.sflag [#allocation13], %s570
          %s572 = sand.u32 %s197, 1
          %s573 = smul.addr %s572, 64
          %s574 = scalar_lea.vmem [#allocation12], %s573
          %576 = vsyncadd %s571, 0
          %s577 = smul.addr %s53, 16
          %s578 = smul.addr %s577, 4
          %s579 = scalar_lea.hbm %s5, %s578
          %s580 = sshll.u32 %s579, 4
          %s581 = int_to_ptr.hbm [resolvable:$true] %s580
          %s582 = sshll.u32 %s574, 4
          %s583 = int_to_ptr.vmem [resolvable:$true] %s582
          %588 = dma.hbm_to_vmem [thread:$0]  %s581, 1024, %s583, %s571, 64, 64, 4
        $region40: #{tpu_custom_call.1} parent=15 // pred_fallthru
          _
        // Predicated region
        $region41: #{tpu_custom_call.1} parent=15 // pred_check
          %p589 = pneg %p233
        $region42: #{tpu_custom_call.1} parent=15 // pred_check_branch
          %591 = sbr.rel (%p589) target = $region44
        $region43: #{tpu_custom_call.1} parent=15 // pred_region
          %p592 = scmp.lt.s32.totalorder %s53, 1
          %s593 = scalar_select %p592, %s53, 1
          %s594 = scalar_lea.vmem %s6, %s593
        $region44: #{tpu_custom_call.1} parent=15 // pred_fallthru
          _
        // Predicated region
        $region45: #{tpu_custom_call.1} parent=15 // pred_check
          %p595 = pneg %p259
        $region46: #{tpu_custom_call.1} parent=15 // pred_check_branch
          %597 = sbr.rel (%p595) target = $region48
        $region47: #{tpu_custom_call.1} parent=15 // pred_region
          %s598 = sand.u32 %s45, 1
          %s599 = scalar_lea.sflag [#allocation13], %s598
          %s600 = sand.u32 %s249, 1
          %s601 = scalar_lea.vmem [#allocation14], %s600
          %603 = vsyncadd %s599, 0
          %s604 = scalar_lea.hbm %s7, %s53
          %s606 = sshll.u32 %s604, 4
          %s607 = int_to_ptr.hbm [resolvable:$true] %s606
          %s608 = sshll.u32 %s601, 4
          %s609 = int_to_ptr.vmem [resolvable:$true] %s608
          %611 = dma.hbm_to_vmem [thread:$0]  %s607, 16, %s609, %s599
        $region48: #{tpu_custom_call.1} parent=15 // pred_fallthru
          _
        // Predicated region
        $region49: #{tpu_custom_call.1} parent=15 // pred_check
          %p612 = pneg %p285
        $region50: #{tpu_custom_call.1} parent=15 // pred_check_branch
          %614 = sbr.rel (%p612) target = $region52
        $region51: #{tpu_custom_call.1} parent=15 // pred_region
          %s615 = sand.u32 %s45, 1
          %s616 = scalar_lea.sflag [#allocation16], %s615
          %s617 = sand.u32 %s275, 1
          %s618 = scalar_lea.vmem [#allocation15], %s617
          %620 = vsyncadd %s616, 0
          %s621 = scalar_lea.hbm %s8, %s53
          %s623 = sshll.u32 %s621, 4
          %s624 = int_to_ptr.hbm [resolvable:$true] %s623
          %s625 = sshll.u32 %s618, 4
          %s626 = int_to_ptr.vmem [resolvable:$true] %s625
          %628 = dma.hbm_to_vmem [thread:$0]  %s624, 16, %s626, %s616
        $region52: #{tpu_custom_call.1} parent=15 // pred_fallthru
          _
        // Predicated region
        $region53: #{tpu_custom_call.1} parent=15 // pred_check
          %p629 = pneg %p311
        $region54: #{tpu_custom_call.1} parent=15 // pred_check_branch
          %631 = sbr.rel (%p629) target = $region56
        $region55: #{tpu_custom_call.1} parent=15 // pred_region
          %s632 = sand.u32 %s45, 1
          %s633 = scalar_lea.sflag [#allocation16], %s632
          %s634 = sand.u32 %s301, 1
          %s635 = smul.addr %s634, 128
          %s636 = scalar_lea.vmem [#allocation17], %s635
          %638 = vsyncadd %s633, 0
          %s639 = smul.addr %s53, 32
          %s640 = smul.addr %s639, 4
          %s641 = scalar_lea.hbm %s9, %s640
          %s642 = sshll.u32 %s641, 4
          %s643 = int_to_ptr.hbm [resolvable:$true] %s642
          %s644 = sshll.u32 %s636, 4
          %s645 = int_to_ptr.vmem [resolvable:$true] %s644
          %650 = dma.hbm_to_vmem [thread:$0]  %s643, 2048, %s645, %s633, 128, 128, 8
        $region56: #{tpu_custom_call.1} parent=15 // pred_fallthru
          _
        // Predicated region
        $region57: #{tpu_custom_call.1} parent=15 // pred_check
          %p651 = pneg %p337
        $region58: #{tpu_custom_call.1} parent=15 // pred_check_branch
          %653 = sbr.rel (%p651) target = $region60
        $region59: #{tpu_custom_call.1} parent=15 // pred_region
          %p654 = scmp.lt.s32.totalorder %s53, 1
          %s655 = scalar_select %p654, %s53, 1
          %s656 = smul.addr %s655, 2
          %s657 = scalar_lea.vmem %s10, %s656
        $region60: #{tpu_custom_call.1} parent=15 // pred_fallthru
          _
        // Predicated region
        $region61: #{tpu_custom_call.1} parent=15 // pred_check
          %p658 = pneg %p363
        $region62: #{tpu_custom_call.1} parent=15 // pred_check_branch
          %660 = sbr.rel (%p658) target = $region64
        $region63: #{tpu_custom_call.1} parent=15 // pred_region
          %s661 = sand.u32 %s353, 1
          %s662 = scalar_lea.sflag [#allocation19], %s661
          %s663 = sand.u32 %s353, 1
          %s664 = smul.addr %s663, 128
          %s665 = scalar_lea.vmem [#allocation18], %s664
          %667 = vsyncadd %s662, 0
          %s668 = smul.addr %s53, 32
          %s669 = smul.addr %s668, 4
          %s670 = scalar_lea.hbm %s11, %s669
          %s671 = sshll.u32 %s670, 4
          %s672 = int_to_ptr.hbm [resolvable:$true] %s671
          %s673 = sshll.u32 %s665, 4
          %s674 = int_to_ptr.vmem [resolvable:$true] %s673
          %679 = dma.hbm_to_vmem [thread:$0]  %s672, 2048, %s674, %s662, 64, 64, 4
        $region64: #{tpu_custom_call.1} parent=15 // pred_fallthru
          _
        // Predicated region
        $region65: #{tpu_custom_call.1} parent=15 // pred_check
          %p680 = pneg %p389
        $region66: #{tpu_custom_call.1} parent=15 // pred_check_branch
          %682 = sbr.rel (%p680) target = $region68
        $region67: #{tpu_custom_call.1} parent=15 // pred_region
          %p683 = scmp.lt.s32.totalorder %s53, 1
          %s684 = scalar_select %p683, %s53, 1
          %s685 = scalar_lea.vmem %s12, %s684
        $region68: #{tpu_custom_call.1} parent=15 // pred_fallthru
          _
      $region16: #{tpu_custom_call.1} parent=5 // pred_fallthru
        _
      %p686 = scmp.le.s32.totalorder 1, %s45
      %p687 = scmp.lt.s32.totalorder %s45, 5
      %p688 = pnand %p686, %p687
      %p689 = pneg %p688
      // Predicated region
      $region69: #{tpu_custom_call.1} parent=5 // pred_check
        _
      $region70: #{tpu_custom_call.1} parent=5 // pred_check_branch
        %691 = sbr.rel (%p688) target = $region72
      $region71: #{tpu_custom_call.1} parent=5 // pred_region
        %s692 = ssub.s32 %s45, 1
        %s693 = sand.u32 %s70, 1
        %s694 = scalar_lea.sflag [#allocation4], %s693
        %s695 = sand.u32 %s70, 1
        %s696 = smul.addr %s695, 128
        %s697 = scalar_lea.vmem [#allocation3], %s696
        // Predicated region
        $region73: #{tpu_custom_call.1} parent=71 // pred_check
          %p698 = pneg %p83
        $region74: #{tpu_custom_call.1} parent=71 // pred_check_branch
          %700 = sbr.rel (%p698) target = $region76
        $region75: #{tpu_custom_call.1} parent=71 // pred_region
          %702 = dma.done %s694, 2048
        $region76: #{tpu_custom_call.1} parent=71 // pred_fallthru
          _
        %s703 = sand.u32 %s50, 1
        %s704 = scalar_lea.sflag [#allocation7], %s703
        %s705 = sand.u32 %s96, 1
        %s706 = scalar_lea.vmem [#allocation6], %s705
        // Predicated region
        $region77: #{tpu_custom_call.1} parent=71 // pred_check
          %p707 = pneg %p109
        $region78: #{tpu_custom_call.1} parent=71 // pred_check_branch
          %709 = sbr.rel (%p707) target = $region80
        $region79: #{tpu_custom_call.1} parent=71 // pred_region
          %711 = dma.done %s704, 16
        $region80: #{tpu_custom_call.1} parent=71 // pred_fallthru
          _
        %s712 = sand.u32 %s50, 1
        %s713 = scalar_lea.sflag [#allocation7], %s712
        %s714 = sand.u32 %s122, 1
        %s715 = scalar_lea.vmem [#allocation8], %s714
        // Predicated region
        $region81: #{tpu_custom_call.1} parent=71 // pred_check
          %p716 = pneg %p135
        $region82: #{tpu_custom_call.1} parent=71 // pred_check_branch
          %718 = sbr.rel (%p716) target = $region84
        $region83: #{tpu_custom_call.1} parent=71 // pred_region
          %720 = dma.done %s713, 16
        $region84: #{tpu_custom_call.1} parent=71 // pred_fallthru
          _
        %s721 = sand.u32 %s50, 1
        %s722 = scalar_lea.sflag [#allocation10], %s721
        %s723 = sand.u32 %s148, 1
        %s724 = smul.addr %s723, 192
        %s725 = scalar_lea.vmem [#allocation9], %s724
        // Predicated region
        $region85: #{tpu_custom_call.1} parent=71 // pred_check
          %p726 = pneg %p161
        $region86: #{tpu_custom_call.1} parent=71 // pred_check_branch
          %728 = sbr.rel (%p726) target = $region88
        $region87: #{tpu_custom_call.1} parent=71 // pred_region
          %730 = dma.done %s722, 3072
        $region88: #{tpu_custom_call.1} parent=71 // pred_fallthru
          _
        %s731 = sand.u32 %s50, 1
        %s732 = scalar_lea.sflag [#allocation10], %s731
        %s733 = sand.u32 %s174, 1
        %s734 = smul.addr %s733, 3
        %s735 = scalar_lea.vmem [#allocation11], %s734
        // Predicated region
        $region89: #{tpu_custom_call.1} parent=71 // pred_check
          %p736 = pneg %p187
        $region90: #{tpu_custom_call.1} parent=71 // pred_check_branch
          %738 = sbr.rel (%p736) target = $region92
        $region91: #{tpu_custom_call.1} parent=71 // pred_region
          %740 = dma.done %s732, 48
        $region92: #{tpu_custom_call.1} parent=71 // pred_fallthru
          _
        %s741 = sand.u32 %s50, 1
        %s742 = scalar_lea.sflag [#allocation13], %s741
        %s743 = sand.u32 %s200, 1
        %s744 = smul.addr %s743, 64
        %s745 = scalar_lea.vmem [#allocation12], %s744
        // Predicated region
        $region93: #{tpu_custom_call.1} parent=71 // pred_check
          %p746 = pneg %p213
        $region94: #{tpu_custom_call.1} parent=71 // pred_check_branch
          %748 = sbr.rel (%p746) target = $region96
        $region95: #{tpu_custom_call.1} parent=71 // pred_region
          %750 = dma.done %s742, 1024
        $region96: #{tpu_custom_call.1} parent=71 // pred_fallthru
          _
        %s751 = sand.u32 %s50, 1
        %s752 = scalar_lea.sflag [#allocation13], %s751
        %s753 = sand.u32 %s252, 1
        %s754 = scalar_lea.vmem [#allocation14], %s753
        // Predicated region
        $region97: #{tpu_custom_call.1} parent=71 // pred_check
          %p755 = pneg %p265
        $region98: #{tpu_custom_call.1} parent=71 // pred_check_branch
          %757 = sbr.rel (%p755) target = $region100
        $region99: #{tpu_custom_call.1} parent=71 // pred_region
          %759 = dma.done %s752, 16
        $region100: #{tpu_custom_call.1} parent=71 // pred_fallthru
          _
        %s760 = sand.u32 %s50, 1
        %s761 = scalar_lea.sflag [#allocation16], %s760
        %s762 = sand.u32 %s278, 1
        %s763 = scalar_lea.vmem [#allocation15], %s762
        // Predicated region
        $region101: #{tpu_custom_call.1} parent=71 // pred_check
          %p764 = pneg %p291
        $region102: #{tpu_custom_call.1} parent=71 // pred_check_branch
          %766 = sbr.rel (%p764) target = $region104
        $region103: #{tpu_custom_call.1} parent=71 // pred_region
          %768 = dma.done %s761, 16
        $region104: #{tpu_custom_call.1} parent=71 // pred_fallthru
          _
        %s769 = sand.u32 %s50, 1
        %s770 = scalar_lea.sflag [#allocation16], %s769
        %s771 = sand.u32 %s304, 1
        %s772 = smul.addr %s771, 128
        %s773 = scalar_lea.vmem [#allocation17], %s772
        // Predicated region
        $region105: #{tpu_custom_call.1} parent=71 // pred_check
          %p774 = pneg %p317
        $region106: #{tpu_custom_call.1} parent=71 // pred_check_branch
          %776 = sbr.rel (%p774) target = $region108
        $region107: #{tpu_custom_call.1} parent=71 // pred_region
          %778 = dma.done %s770, 2048
        $region108: #{tpu_custom_call.1} parent=71 // pred_fallthru
          _
        %s779 = sand.u32 %s356, 1
        %s780 = scalar_lea.sflag [#allocation19], %s779
        %s781 = sand.u32 %s356, 1
        %s782 = smul.addr %s781, 128
        %s783 = scalar_lea.vmem [#allocation18], %s782
        // Predicated region
        $region109: #{tpu_custom_call.1} parent=71 // pred_check
          %p784 = pneg %p369
        $region110: #{tpu_custom_call.1} parent=71 // pred_check_branch
          %786 = sbr.rel (%p784) target = $region112
        $region111: #{tpu_custom_call.1} parent=71 // pred_region
          %788 = dma.done %s780, 2048
        $region112: #{tpu_custom_call.1} parent=71 // pred_fallthru
          _
        %s789 = sand.u32 %s70, 1
        %s790 = scalar_lea.sflag [#allocation4], %s789
        %s791 = sand.u32 %s70, 1
        %s792 = smul.addr %s791, 128
        %s793 = scalar_lea.vmem [#allocation3], %s792
        %p794 = pneg %p83
        %p795 = pneg %p80
        %s796 = sand.u32 %s50, 1
        %s797 = scalar_lea.sflag [#allocation7], %s796
        %s798 = sand.u32 %s96, 1
        %s799 = scalar_lea.vmem [#allocation6], %s798
        %p800 = pneg %p109
        %p801 = pneg %p106
        %s802 = sand.u32 %s50, 1
        %s803 = scalar_lea.sflag [#allocation7], %s802
        %s804 = sand.u32 %s122, 1
        %s805 = scalar_lea.vmem [#allocation8], %s804
        %p806 = pneg %p135
        %p807 = pneg %p132
        %s808 = sand.u32 %s50, 1
        %s809 = scalar_lea.sflag [#allocation10], %s808
        %s810 = sand.u32 %s148, 1
        %s811 = smul.addr %s810, 192
        %s812 = scalar_lea.vmem [#allocation9], %s811
        %p813 = pneg %p161
        %p814 = pneg %p158
        %s815 = sand.u32 %s50, 1
        %s816 = scalar_lea.sflag [#allocation10], %s815
        %s817 = sand.u32 %s174, 1
        %s818 = smul.addr %s817, 3
        %s819 = scalar_lea.vmem [#allocation11], %s818
        %p820 = pneg %p187
        %p821 = pneg %p184
        %s822 = sand.u32 %s50, 1
        %s823 = scalar_lea.sflag [#allocation13], %s822
        %s824 = sand.u32 %s200, 1
        %s825 = smul.addr %s824, 64
        %s826 = scalar_lea.vmem [#allocation12], %s825
        %p827 = pneg %p213
        %p828 = pneg %p210
        %p829 = scmp.lt.s32.totalorder %s55, 1
        %s830 = scalar_select %p829, %s55, 1
        %s831 = scalar_lea.vmem %s6, %s830
        %p832 = pneg %p239
        %p833 = pneg %p236
        %s834 = sand.u32 %s50, 1
        %s835 = scalar_lea.sflag [#allocation13], %s834
        %s836 = sand.u32 %s252, 1
        %s837 = scalar_lea.vmem [#allocation14], %s836
        %p838 = pneg %p265
        %p839 = pneg %p262
        %s840 = sand.u32 %s50, 1
        %s841 = scalar_lea.sflag [#allocation16], %s840
        %s842 = sand.u32 %s278, 1
        %s843 = scalar_lea.vmem [#allocation15], %s842
        %p844 = pneg %p291
        %p845 = pneg %p288
        %s846 = sand.u32 %s50, 1
        %s847 = scalar_lea.sflag [#allocation16], %s846
        %s848 = sand.u32 %s304, 1
        %s849 = smul.addr %s848, 128
        %s850 = scalar_lea.vmem [#allocation17], %s849
        %p851 = pneg %p317
        %p852 = pneg %p314
        %p853 = scmp.lt.s32.totalorder %s55, 1
        %s854 = scalar_select %p853, %s55, 1
        %s855 = smul.addr %s854, 2
        %s856 = scalar_lea.vmem %s10, %s855
        %p857 = pneg %p343
        %p858 = pneg %p340
        %s859 = sand.u32 %s356, 1
        %s860 = scalar_lea.sflag [#allocation19], %s859
        %s861 = sand.u32 %s356, 1
        %s862 = smul.addr %s861, 128
        %s863 = scalar_lea.vmem [#allocation18], %s862
        %p864 = pneg %p369
        %p865 = pneg %p366
        %p866 = scmp.lt.s32.totalorder %s55, 1
        %s867 = scalar_select %p866, %s55, 1
        %s868 = scalar_lea.vmem %s12, %s867
        %p869 = pneg %p395
        %p870 = pneg %p392
        %p871 = pneg %p423
        %p872 = pneg %p420
        %s873 = sand.u32 %s410, 1
        %s874 = scalar_lea.sflag [#allocation5], %s873
        %s875 = sand.u32 %s410, 1
        %s876 = smul.addr %s875, 128
        %s877 = scalar_lea.vmem [#allocation20], %s876
        %p878 = pneg %p451
        %p879 = pneg %p448
        %s880 = sand.u32 %s438, 1
        %s881 = scalar_lea.sflag [#allocation22], %s880
        %s882 = sand.u32 %s438, 1
        %s883 = smul.addr %s882, 512
        %s884 = scalar_lea.vmem [#allocation21], %s883
        %p885 = scmp.lt.s32.totalorder %s55, 1
        %s886 = scalar_select %p885, %s55, 1
        %s887 = scalar_lea.vmem %s6, %s886
        %p888 = scmp.lt.s32.totalorder %s55, 1
        %s889 = scalar_select %p888, %s55, 1
        %s890 = smul.addr %s889, 2
        %s891 = scalar_lea.vmem %s10, %s890
        %p892 = scmp.lt.s32.totalorder %s55, 1
        %s893 = scalar_select %p892, %s55, 1
        %s894 = scalar_lea.vmem %s12, %s893
        %p895 = scmp.eq.s32.totalorder %s55, 0
        // Predicated region
        $region113: #{tpu_custom_call.1} parent=71 // pred_check
          %p896 = pneg %p895
        $region114: #{tpu_custom_call.1} parent=71 // pred_check_branch
          %898 = sbr.rel (%p896) target = $region116
        $region115: #{tpu_custom_call.1} parent=71 // pred_region
          %v899 = vld [vmem:[%s697] sm:$0xff]
          %v900 = vld [vmem:[%s697 + $0x8] sm:$0xff]
          %v901 = vld [vmem:[%s697 + $0x10] sm:$0xff]
          %v902 = vld [vmem:[%s697 + $0x18] sm:$0xff]
          %v903 = vld [vmem:[%s697 + $0x20] sm:$0xff]
          %v904 = vld [vmem:[%s697 + $0x28] sm:$0xff]
          %v905 = vld [vmem:[%s697 + $0x30] sm:$0xff]
          %v906 = vld [vmem:[%s697 + $0x38] sm:$0xff]
          %v907 = vld [vmem:[%s697 + $0x40] sm:$0xff]
          %v908 = vld [vmem:[%s697 + $0x48] sm:$0xff]
          %v909 = vld [vmem:[%s697 + $0x50] sm:$0xff]
          %v910 = vld [vmem:[%s697 + $0x58] sm:$0xff]
          %v911 = vld [vmem:[%s697 + $0x60] sm:$0xff]
          %v912 = vld [vmem:[%s697 + $0x68] sm:$0xff]
          %v913 = vld [vmem:[%s697 + $0x70] sm:$0xff]
          %v914 = vld [vmem:[%s697 + $0x78] sm:$0xff]
          %915 = vst [vmem:[#allocation2] sm:$0xff] %v899
          %916 = vst [vmem:[#allocation2 + $0x8] sm:$0xff] %v900
          %917 = vst [vmem:[#allocation2 + $0x10] sm:$0xff] %v901
          %918 = vst [vmem:[#allocation2 + $0x18] sm:$0xff] %v902
          %919 = vst [vmem:[#allocation2 + $0x20] sm:$0xff] %v903
          %920 = vst [vmem:[#allocation2 + $0x28] sm:$0xff] %v904
          %921 = vst [vmem:[#allocation2 + $0x30] sm:$0xff] %v905
          %922 = vst [vmem:[#allocation2 + $0x38] sm:$0xff] %v906
          %923 = vst [vmem:[#allocation2 + $0x40] sm:$0xff] %v907
          %924 = vst [vmem:[#allocation2 + $0x48] sm:$0xff] %v908
          %925 = vst [vmem:[#allocation2 + $0x50] sm:$0xff] %v909
          %926 = vst [vmem:[#allocation2 + $0x58] sm:$0xff] %v910
          %927 = vst [vmem:[#allocation2 + $0x60] sm:$0xff] %v911
          %928 = vst [vmem:[#allocation2 + $0x68] sm:$0xff] %v912
          %929 = vst [vmem:[#allocation2 + $0x70] sm:$0xff] %v913
          %930 = vst [vmem:[#allocation2 + $0x78] sm:$0xff] %v914
        $region116: #{tpu_custom_call.1} parent=71 // pred_fallthru
          _
        %v931 = vld [vmem:[#allocation2] sm:$0xff]
        %v932 = vld [vmem:[#allocation2 + $0x8] sm:$0xff]
        %v933 = vld [vmem:[#allocation2 + $0x10] sm:$0xff]
        %v934 = vld [vmem:[#allocation2 + $0x18] sm:$0xff]
        %v935 = vld [vmem:[#allocation2 + $0x20] sm:$0xff]
        %v936 = vld [vmem:[#allocation2 + $0x28] sm:$0xff]
        %v937 = vld [vmem:[#allocation2 + $0x30] sm:$0xff]
        %v938 = vld [vmem:[#allocation2 + $0x38] sm:$0xff]
        %v939 = vld [vmem:[#allocation2 + $0x40] sm:$0xff]
        %v940 = vld [vmem:[#allocation2 + $0x48] sm:$0xff]
        %v941 = vld [vmem:[#allocation2 + $0x50] sm:$0xff]
        %v942 = vld [vmem:[#allocation2 + $0x58] sm:$0xff]
        %v943 = vld [vmem:[#allocation2 + $0x60] sm:$0xff]
        %v944 = vld [vmem:[#allocation2 + $0x68] sm:$0xff]
        %v945 = vld [vmem:[#allocation2 + $0x70] sm:$0xff]
        %v946 = vld [vmem:[#allocation2 + $0x78] sm:$0xff]
        %v947 = vld [vmem:[%s706] sm:$0x1]
        %v948 = vld [vmem:[%s715] sm:$0x1]
        %949 = vadd.xlane.f32.xlu0 %v931
        %v950 = vpop.xlane.xlu0 %949
        %951 = vadd.xlane.f32.xlu0 %v932
        %v952 = vpop.xlane.xlu0 %951
        %953 = vadd.xlane.f32.xlu0 %v933
        %v954 = vpop.xlane.xlu0 %953
        %955 = vadd.xlane.f32.xlu0 %v934
        %v956 = vpop.xlane.xlu0 %955
        %957 = vadd.xlane.f32.xlu0 %v935
        %v958 = vpop.xlane.xlu0 %957
        %959 = vadd.xlane.f32.xlu0 %v936
        %v960 = vpop.xlane.xlu0 %959
        %961 = vadd.xlane.f32.xlu0 %v937
        %v962 = vpop.xlane.xlu0 %961
        %963 = vadd.xlane.f32.xlu0 %v938
        %v964 = vpop.xlane.xlu0 %963
        %965 = vadd.xlane.f32.xlu0 %v939
        %v966 = vpop.xlane.xlu0 %965
        %967 = vadd.xlane.f32.xlu0 %v940
        %v968 = vpop.xlane.xlu0 %967
        %969 = vadd.xlane.f32.xlu0 %v941
        %v970 = vpop.xlane.xlu0 %969
        %971 = vadd.xlane.f32.xlu0 %v942
        %v972 = vpop.xlane.xlu0 %971
        %973 = vadd.xlane.f32.xlu0 %v943
        %v974 = vpop.xlane.xlu0 %973
        %975 = vadd.xlane.f32.xlu0 %v944
        %v976 = vpop.xlane.xlu0 %975
        %977 = vadd.xlane.f32.xlu0 %v945
        %v978 = vpop.xlane.xlu0 %977
        %979 = vadd.xlane.f32.xlu0 %v946
        %v980 = vpop.xlane.xlu0 %979
        %v981 = vrcp.pop 128.0
        %v982 = vmul.f32 128.0, %v981
        %v983 = vsub.f32 1.0, %v982
        %v984 = vmul.f32 %v981, %v983
        %v985 = vadd.f32 %v981, %v984
        %vm986 = vweird.f32 %v981
        %v987 = vsel %vm986, %v981, %v985
        %v988 = vmul.f32 %v950, %v987
        %v989 = vmul.f32 %v952, %v987
        %v990 = vmul.f32 %v954, %v987
        %v991 = vmul.f32 %v956, %v987
        %v992 = vmul.f32 %v958, %v987
        %v993 = vmul.f32 %v960, %v987
        %v994 = vmul.f32 %v962, %v987
        %v995 = vmul.f32 %v964, %v987
        %v996 = vmul.f32 %v966, %v987
        %v997 = vmul.f32 %v968, %v987
        %v998 = vmul.f32 %v970, %v987
        %v999 = vmul.f32 %v972, %v987
        %v1000 = vmul.f32 %v974, %v987
        %v1001 = vmul.f32 %v976, %v987
        %v1002 = vmul.f32 %v978, %v987
        %v1003 = vmul.f32 %v980, %v987
        %v1004 = vsub.f32 %v931, %v988
        %v1005 = vsub.f32 %v932, %v989
        %v1006 = vsub.f32 %v933, %v990
        %v1007 = vsub.f32 %v934, %v991
        %v1008 = vsub.f32 %v935, %v992
        %v1009 = vsub.f32 %v936, %v993
        %v1010 = vsub.f32 %v937, %v994
        %v1011 = vsub.f32 %v938, %v995
        %v1012 = vsub.f32 %v939, %v996
        %v1013 = vsub.f32 %v940, %v997
        %v1014 = vsub.f32 %v941, %v998
        %v1015 = vsub.f32 %v942, %v999
        %v1016 = vsub.f32 %v943, %v1000
        %v1017 = vsub.f32 %v944, %v1001
        %v1018 = vsub.f32 %v945, %v1002
        %v1019 = vsub.f32 %v946, %v1003
        %v1020 = vmul.f32 %v1004, %v1004
        %v1021 = vmul.f32 %v1005, %v1005
        %v1022 = vmul.f32 %v1006, %v1006
        %v1023 = vmul.f32 %v1007, %v1007
        %v1024 = vmul.f32 %v1008, %v1008
        %v1025 = vmul.f32 %v1009, %v1009
        %v1026 = vmul.f32 %v1010, %v1010
        %v1027 = vmul.f32 %v1011, %v1011
        %v1028 = vmul.f32 %v1012, %v1012
        %v1029 = vmul.f32 %v1013, %v1013
        %v1030 = vmul.f32 %v1014, %v1014
        %v1031 = vmul.f32 %v1015, %v1015
        %v1032 = vmul.f32 %v1016, %v1016
        %v1033 = vmul.f32 %v1017, %v1017
        %v1034 = vmul.f32 %v1018, %v1018
        %v1035 = vmul.f32 %v1019, %v1019
        %1036 = vadd.xlane.f32.xlu0 %v1020
        %v1037 = vpop.xlane.xlu0 %1036
        %1038 = vadd.xlane.f32.xlu0 %v1021
        %v1039 = vpop.xlane.xlu0 %1038
        %1040 = vadd.xlane.f32.xlu0 %v1022
        %v1041 = vpop.xlane.xlu0 %1040
        %1042 = vadd.xlane.f32.xlu0 %v1023
        %v1043 = vpop.xlane.xlu0 %1042
        %1044 = vadd.xlane.f32.xlu0 %v1024
        %v1045 = vpop.xlane.xlu0 %1044
        %1046 = vadd.xlane.f32.xlu0 %v1025
        %v1047 = vpop.xlane.xlu0 %1046
        %1048 = vadd.xlane.f32.xlu0 %v1026
        %v1049 = vpop.xlane.xlu0 %1048
        %1050 = vadd.xlane.f32.xlu0 %v1027
        %v1051 = vpop.xlane.xlu0 %1050
        %1052 = vadd.xlane.f32.xlu0 %v1028
        %v1053 = vpop.xlane.xlu0 %1052
        %1054 = vadd.xlane.f32.xlu0 %v1029
        %v1055 = vpop.xlane.xlu0 %1054
        %1056 = vadd.xlane.f32.xlu0 %v1030
        %v1057 = vpop.xlane.xlu0 %1056
        %1058 = vadd.xlane.f32.xlu0 %v1031
        %v1059 = vpop.xlane.xlu0 %1058
        %1060 = vadd.xlane.f32.xlu0 %v1032
        %v1061 = vpop.xlane.xlu0 %1060
        %1062 = vadd.xlane.f32.xlu0 %v1033
        %v1063 = vpop.xlane.xlu0 %1062
        %1064 = vadd.xlane.f32.xlu0 %v1034
        %v1065 = vpop.xlane.xlu0 %1064
        %1066 = vadd.xlane.f32.xlu0 %v1035
        %v1067 = vpop.xlane.xlu0 %1066
        %v1068 = vmul.f32 %v1037, %v987
        %v1069 = vmul.f32 %v1039, %v987
        %v1070 = vmul.f32 %v1041, %v987
        %v1071 = vmul.f32 %v1043, %v987
        %v1072 = vmul.f32 %v1045, %v987
        %v1073 = vmul.f32 %v1047, %v987
        %v1074 = vmul.f32 %v1049, %v987
        %v1075 = vmul.f32 %v1051, %v987
        %v1076 = vmul.f32 %v1053, %v987
        %v1077 = vmul.f32 %v1055, %v987
        %v1078 = vmul.f32 %v1057, %v987
        %v1079 = vmul.f32 %v1059, %v987
        %v1080 = vmul.f32 %v1061, %v987
        %v1081 = vmul.f32 %v1063, %v987
        %v1082 = vmul.f32 %v1065, %v987
        %v1083 = vmul.f32 %v1067, %v987
        %v1084 = vadd.f32 %v1068, 1e-12
        %v1085 = vadd.f32 %v1069, 1e-12
        %v1086 = vadd.f32 %v1070, 1e-12
        %v1087 = vadd.f32 %v1071, 1e-12
        %v1088 = vadd.f32 %v1072, 1e-12
        %v1089 = vadd.f32 %v1073, 1e-12
        %v1090 = vadd.f32 %v1074, 1e-12
        %v1091 = vadd.f32 %v1075, 1e-12
        %v1092 = vadd.f32 %v1076, 1e-12
        %v1093 = vadd.f32 %v1077, 1e-12
        %v1094 = vadd.f32 %v1078, 1e-12
        %v1095 = vadd.f32 %v1079, 1e-12
        %v1096 = vadd.f32 %v1080, 1e-12
        %v1097 = vadd.f32 %v1081, 1e-12
        %v1098 = vadd.f32 %v1082, 1e-12
        %v1099 = vadd.f32 %v1083, 1e-12
        %v1100 = vrsqrt.pop %v1084
        %v1101 = vmul.f32 %v1100, %v1084
        %v1102 = vmul.f32 %v1101, %v1100
        %v1103 = vmul.f32 0.5, %v1102
        %v1104 = vsub.f32 1.5, %v1103
        %v1105 = vmul.f32 %v1100, %v1104
        %vm1106 = vweird.f32 %v1084
        %vm1107 = vweird.f32 %v1100
        %vm1108 = vmor %vm1106, %vm1107
        %v1109 = vsel %vm1108, %v1100, %v1105
        %v1110 = vrsqrt.pop %v1085
        %v1111 = vmul.f32 %v1110, %v1085
        %v1112 = vmul.f32 %v1111, %v1110
        %v1113 = vmul.f32 0.5, %v1112
        %v1114 = vsub.f32 1.5, %v1113
        %v1115 = vmul.f32 %v1110, %v1114
        %vm1116 = vweird.f32 %v1085
        %vm1117 = vweird.f32 %v1110
        %vm1118 = vmor %vm1116, %vm1117
        %v1119 = vsel %vm1118, %v1110, %v1115
        %v1120 = vrsqrt.pop %v1086
        %v1121 = vmul.f32 %v1120, %v1086
        %v1122 = vmul.f32 %v1121, %v1120
        %v1123 = vmul.f32 0.5, %v1122
        %v1124 = vsub.f32 1.5, %v1123
        %v1125 = vmul.f32 %v1120, %v1124
        %vm1126 = vweird.f32 %v1086
        %vm1127 = vweird.f32 %v1120
        %vm1128 = vmor %vm1126, %vm1127
        %v1129 = vsel %vm1128, %v1120, %v1125
        %v1130 = vrsqrt.pop %v1087
        %v1131 = vmul.f32 %v1130, %v1087
        %v1132 = vmul.f32 %v1131, %v1130
        %v1133 = vmul.f32 0.5, %v1132
        %v1134 = vsub.f32 1.5, %v1133
        %v1135 = vmul.f32 %v1130, %v1134
        %vm1136 = vweird.f32 %v1087
        %vm1137 = vweird.f32 %v1130
        %vm1138 = vmor %vm1136, %vm1137
        %v1139 = vsel %vm1138, %v1130, %v1135
        %v1140 = vrsqrt.pop %v1088
        %v1141 = vmul.f32 %v1140, %v1088
        %v1142 = vmul.f32 %v1141, %v1140
        %v1143 = vmul.f32 0.5, %v1142
        %v1144 = vsub.f32 1.5, %v1143
        %v1145 = vmul.f32 %v1140, %v1144
        %vm1146 = vweird.f32 %v1088
        %vm1147 = vweird.f32 %v1140
        %vm1148 = vmor %vm1146, %vm1147
        %v1149 = vsel %vm1148, %v1140, %v1145
        %v1150 = vrsqrt.pop %v1089
        %v1151 = vmul.f32 %v1150, %v1089
        %v1152 = vmul.f32 %v1151, %v1150
        %v1153 = vmul.f32 0.5, %v1152
        %v1154 = vsub.f32 1.5, %v1153
        %v1155 = vmul.f32 %v1150, %v1154
        %vm1156 = vweird.f32 %v1089
        %vm1157 = vweird.f32 %v1150
        %vm1158 = vmor %vm1156, %vm1157
        %v1159 = vsel %vm1158, %v1150, %v1155
        %v1160 = vrsqrt.pop %v1090
        %v1161 = vmul.f32 %v1160, %v1090
        %v1162 = vmul.f32 %v1161, %v1160
        %v1163 = vmul.f32 0.5, %v1162
        %v1164 = vsub.f32 1.5, %v1163
        %v1165 = vmul.f32 %v1160, %v1164
        %vm1166 = vweird.f32 %v1090
        %vm1167 = vweird.f32 %v1160
        %vm1168 = vmor %vm1166, %vm1167
        %v1169 = vsel %vm1168, %v1160, %v1165
        %v1170 = vrsqrt.pop %v1091
        %v1171 = vmul.f32 %v1170, %v1091
        %v1172 = vmul.f32 %v1171, %v1170
        %v1173 = vmul.f32 0.5, %v1172
        %v1174 = vsub.f32 1.5, %v1173
        %v1175 = vmul.f32 %v1170, %v1174
        %vm1176 = vweird.f32 %v1091
        %vm1177 = vweird.f32 %v1170
        %vm1178 = vmor %vm1176, %vm1177
        %v1179 = vsel %vm1178, %v1170, %v1175
        %v1180 = vrsqrt.pop %v1092
        %v1181 = vmul.f32 %v1180, %v1092
        %v1182 = vmul.f32 %v1181, %v1180
        %v1183 = vmul.f32 0.5, %v1182
        %v1184 = vsub.f32 1.5, %v1183
        %v1185 = vmul.f32 %v1180, %v1184
        %vm1186 = vweird.f32 %v1092
        %vm1187 = vweird.f32 %v1180
        %vm1188 = vmor %vm1186, %vm1187
        %v1189 = vsel %vm1188, %v1180, %v1185
        %v1190 = vrsqrt.pop %v1093
        %v1191 = vmul.f32 %v1190, %v1093
        %v1192 = vmul.f32 %v1191, %v1190
        %v1193 = vmul.f32 0.5, %v1192
        %v1194 = vsub.f32 1.5, %v1193
        %v1195 = vmul.f32 %v1190, %v1194
        %vm1196 = vweird.f32 %v1093
        %vm1197 = vweird.f32 %v1190
        %vm1198 = vmor %vm1196, %vm1197
        %v1199 = vsel %vm1198, %v1190, %v1195
        %v1200 = vrsqrt.pop %v1094
        %v1201 = vmul.f32 %v1200, %v1094
        %v1202 = vmul.f32 %v1201, %v1200
        %v1203 = vmul.f32 0.5, %v1202
        %v1204 = vsub.f32 1.5, %v1203
        %v1205 = vmul.f32 %v1200, %v1204
        %vm1206 = vweird.f32 %v1094
        %vm1207 = vweird.f32 %v1200
        %vm1208 = vmor %vm1206, %vm1207
        %v1209 = vsel %vm1208, %v1200, %v1205
        %v1210 = vrsqrt.pop %v1095
        %v1211 = vmul.f32 %v1210, %v1095
        %v1212 = vmul.f32 %v1211, %v1210
        %v1213 = vmul.f32 0.5, %v1212
        %v1214 = vsub.f32 1.5, %v1213
        %v1215 = vmul.f32 %v1210, %v1214
        %vm1216 = vweird.f32 %v1095
        %vm1217 = vweird.f32 %v1210
        %vm1218 = vmor %vm1216, %vm1217
        %v1219 = vsel %vm1218, %v1210, %v1215
        %v1220 = vrsqrt.pop %v1096
        %v1221 = vmul.f32 %v1220, %v1096
        %v1222 = vmul.f32 %v1221, %v1220
        %v1223 = vmul.f32 0.5, %v1222
        %v1224 = vsub.f32 1.5, %v1223
        %v1225 = vmul.f32 %v1220, %v1224
        %vm1226 = vweird.f32 %v1096
        %vm1227 = vweird.f32 %v1220
        %vm1228 = vmor %vm1226, %vm1227
        %v1229 = vsel %vm1228, %v1220, %v1225
        %v1230 = vrsqrt.pop %v1097
        %v1231 = vmul.f32 %v1230, %v1097
        %v1232 = vmul.f32 %v1231, %v1230
        %v1233 = vmul.f32 0.5, %v1232
        %v1234 = vsub.f32 1.5, %v1233
        %v1235 = vmul.f32 %v1230, %v1234
        %vm1236 = vweird.f32 %v1097
        %vm1237 = vweird.f32 %v1230
        %vm1238 = vmor %vm1236, %vm1237
        %v1239 = vsel %vm1238, %v1230, %v1235
        %v1240 = vrsqrt.pop %v1098
        %v1241 = vmul.f32 %v1240, %v1098
        %v1242 = vmul.f32 %v1241, %v1240
        %v1243 = vmul.f32 0.5, %v1242
        %v1244 = vsub.f32 1.5, %v1243
        %v1245 = vmul.f32 %v1240, %v1244
        %vm1246 = vweird.f32 %v1098
        %vm1247 = vweird.f32 %v1240
        %vm1248 = vmor %vm1246, %vm1247
        %v1249 = vsel %vm1248, %v1240, %v1245
        %v1250 = vrsqrt.pop %v1099
        %v1251 = vmul.f32 %v1250, %v1099
        %v1252 = vmul.f32 %v1251, %v1250
        %v1253 = vmul.f32 0.5, %v1252
        %v1254 = vsub.f32 1.5, %v1253
        %v1255 = vmul.f32 %v1250, %v1254
        %vm1256 = vweird.f32 %v1099
        %vm1257 = vweird.f32 %v1250
        %vm1258 = vmor %vm1256, %vm1257
        %v1259 = vsel %vm1258, %v1250, %v1255
        %v1260 = vmul.f32 %v1004, %v1109
        %v1261 = vmul.f32 %v1005, %v1119
        %v1262 = vmul.f32 %v1006, %v1129
        %v1263 = vmul.f32 %v1007, %v1139
        %v1264 = vmul.f32 %v1008, %v1149
        %v1265 = vmul.f32 %v1009, %v1159
        %v1266 = vmul.f32 %v1010, %v1169
        %v1267 = vmul.f32 %v1011, %v1179
        %v1268 = vmul.f32 %v1012, %v1189
        %v1269 = vmul.f32 %v1013, %v1199
        %v1270 = vmul.f32 %v1014, %v1209
        %v1271 = vmul.f32 %v1015, %v1219
        %v1272 = vmul.f32 %v1016, %v1229
        %v1273 = vmul.f32 %v1017, %v1239
        %v1274 = vmul.f32 %v1018, %v1249
        %v1275 = vmul.f32 %v1019, %v1259
        %v1277 = vperm.slane %v947, 0
        %v1279 = vmul.f32 %v1260, %v1277
        %v1280 = vmul.f32 %v1261, %v1277
        %v1281 = vmul.f32 %v1262, %v1277
        %v1282 = vmul.f32 %v1263, %v1277
        %v1283 = vmul.f32 %v1264, %v1277
        %v1284 = vmul.f32 %v1265, %v1277
        %v1285 = vmul.f32 %v1266, %v1277
        %v1286 = vmul.f32 %v1267, %v1277
        %v1287 = vmul.f32 %v1268, %v1277
        %v1288 = vmul.f32 %v1269, %v1277
        %v1289 = vmul.f32 %v1270, %v1277
        %v1290 = vmul.f32 %v1271, %v1277
        %v1291 = vmul.f32 %v1272, %v1277
        %v1292 = vmul.f32 %v1273, %v1277
        %v1293 = vmul.f32 %v1274, %v1277
        %v1294 = vmul.f32 %v1275, %v1277
        %v1296 = vperm.slane %v948, 0
        %v1298 = vadd.f32 %v1279, %v1296
        %v1299 = vadd.f32 %v1280, %v1296
        %v1300 = vadd.f32 %v1281, %v1296
        %v1301 = vadd.f32 %v1282, %v1296
        %v1302 = vadd.f32 %v1283, %v1296
        %v1303 = vadd.f32 %v1284, %v1296
        %v1304 = vadd.f32 %v1285, %v1296
        %v1305 = vadd.f32 %v1286, %v1296
        %v1306 = vadd.f32 %v1287, %v1296
        %v1307 = vadd.f32 %v1288, %v1296
        %v1308 = vadd.f32 %v1289, %v1296
        %v1309 = vadd.f32 %v1290, %v1296
        %v1310 = vadd.f32 %v1291, %v1296
        %v1311 = vadd.f32 %v1292, %v1296
        %v1312 = vadd.f32 %v1293, %v1296
        %v1313 = vadd.f32 %v1294, %v1296
        %v1314 = vpack.c.bf16 %v1299, %v1298
        %v1315 = vpack.c.bf16 %v1301, %v1300
        %v1316 = vpack.c.bf16 %v1303, %v1302
        %v1317 = vpack.c.bf16 %v1305, %v1304
        %v1318 = vpack.c.bf16 %v1307, %v1306
        %v1319 = vpack.c.bf16 %v1309, %v1308
        %v1320 = vpack.c.bf16 %v1311, %v1310
        %v1321 = vpack.c.bf16 %v1313, %v1312
        %v1322 = vld [vmem:[%s725] sm:$0xff]
        %v1323 = vld [vmem:[%s725 + $0x8] sm:$0xf]
        %v1324 = vld [vmem:[%s725 + $0xc] sm:$0xff]
        %v1325 = vld [vmem:[%s725 + $0x14] sm:$0xf]
        %v1326 = vld [vmem:[%s725 + $0x18] sm:$0xff]
        %v1327 = vld [vmem:[%s725 + $0x20] sm:$0xf]
        %v1328 = vld [vmem:[%s725 + $0x24] sm:$0xff]
        %v1329 = vld [vmem:[%s725 + $0x2c] sm:$0xf]
        %v1330 = vld [vmem:[%s725 + $0x30] sm:$0xff]
        %v1331 = vld [vmem:[%s725 + $0x38] sm:$0xf]
        %v1332 = vld [vmem:[%s725 + $0x3c] sm:$0xff]
        %v1333 = vld [vmem:[%s725 + $0x44] sm:$0xf]
        %v1334 = vld [vmem:[%s725 + $0x48] sm:$0xff]
        %v1335 = vld [vmem:[%s725 + $0x50] sm:$0xf]
        %v1336 = vld [vmem:[%s725 + $0x54] sm:$0xff]
        %v1337 = vld [vmem:[%s725 + $0x5c] sm:$0xf]
        %v1338 = vld [vmem:[%s725 + $0x60] sm:$0xff]
        %v1339 = vld [vmem:[%s725 + $0x68] sm:$0xf]
        %v1340 = vld [vmem:[%s725 + $0x6c] sm:$0xff]
        %v1341 = vld [vmem:[%s725 + $0x74] sm:$0xf]
        %v1342 = vld [vmem:[%s725 + $0x78] sm:$0xff]
        %v1343 = vld [vmem:[%s725 + $0x80] sm:$0xf]
        %v1344 = vld [vmem:[%s725 + $0x84] sm:$0xff]
        %v1345 = vld [vmem:[%s725 + $0x8c] sm:$0xf]
        %v1346 = vld [vmem:[%s725 + $0x90] sm:$0xff]
        %v1347 = vld [vmem:[%s725 + $0x98] sm:$0xf]
        %v1348 = vld [vmem:[%s725 + $0x9c] sm:$0xff]
        %v1349 = vld [vmem:[%s725 + $0xa4] sm:$0xf]
        %v1350 = vld [vmem:[%s725 + $0xa8] sm:$0xff]
        %v1351 = vld [vmem:[%s725 + $0xb0] sm:$0xf]
        %v1352 = vld [vmem:[%s725 + $0xb4] sm:$0xff]
        %v1353 = vld [vmem:[%s725 + $0xbc] sm:$0xf]
        %v1354 = vld [vmem:[%s735] sm:$0x7]
        %v1356 = vperm.slane %v1354, 0
        %v1357 = vperm.slane %v1354, 1
        %v1358 = vperm.slane %v1354, 2
        %v1394 = vunpack.c.l.b16 %v1322
        %v1395 = vunpack.c.h.b16 %v1322
        %v1396 = vunpack.c.l.b16 %v1323
        %v1397 = vunpack.c.l.b16 %v1324
        %v1398 = vunpack.c.h.b16 %v1324
        %v1399 = vunpack.c.l.b16 %v1325
        %v1400 = vunpack.c.l.b16 %v1326
        %v1401 = vunpack.c.h.b16 %v1326
        %v1402 = vunpack.c.l.b16 %v1327
        %v1403 = vunpack.c.l.b16 %v1328
        %v1404 = vunpack.c.h.b16 %v1328
        %v1405 = vunpack.c.l.b16 %v1329
        %v1406 = vunpack.c.l.b16 %v1330
        %v1407 = vunpack.c.h.b16 %v1330
        %v1408 = vunpack.c.l.b16 %v1331
        %v1409 = vunpack.c.l.b16 %v1332
        %v1410 = vunpack.c.h.b16 %v1332
        %v1411 = vunpack.c.l.b16 %v1333
        %v1412 = vunpack.c.l.b16 %v1334
        %v1413 = vunpack.c.h.b16 %v1334
        %v1414 = vunpack.c.l.b16 %v1335
        %v1415 = vunpack.c.l.b16 %v1336
        %v1416 = vunpack.c.h.b16 %v1336
        %v1417 = vunpack.c.l.b16 %v1337
        %v1418 = vunpack.c.l.b16 %v1338
        %v1419 = vunpack.c.h.b16 %v1338
        %v1420 = vunpack.c.l.b16 %v1339
        %v1421 = vunpack.c.l.b16 %v1340
        %v1422 = vunpack.c.h.b16 %v1340
        %v1423 = vunpack.c.l.b16 %v1341
        %v1424 = vunpack.c.l.b16 %v1342
        %v1425 = vunpack.c.h.b16 %v1342
        %v1426 = vunpack.c.l.b16 %v1343
        %v1427 = vunpack.c.l.b16 %v1344
        %v1428 = vunpack.c.h.b16 %v1344
        %v1429 = vunpack.c.l.b16 %v1345
        %v1430 = vunpack.c.l.b16 %v1346
        %v1431 = vunpack.c.h.b16 %v1346
        %v1432 = vunpack.c.l.b16 %v1347
        %v1433 = vunpack.c.l.b16 %v1348
        %v1434 = vunpack.c.h.b16 %v1348
        %v1435 = vunpack.c.l.b16 %v1349
        %v1436 = vunpack.c.l.b16 %v1350
        %v1437 = vunpack.c.h.b16 %v1350
        %v1438 = vunpack.c.l.b16 %v1351
        %v1439 = vunpack.c.l.b16 %v1352
        %v1440 = vunpack.c.h.b16 %v1352
        %v1441 = vunpack.c.l.b16 %v1353
        %v1442 = vpack.c.b16 %v1397, %v1394
        %v1443 = vpack.c.b16 %v1398, %v1395
        %v1444 = vpack.c.b16 %v1399, %v1396
        %v1445 = vpack.c.b16 %v1403, %v1400
        %v1446 = vpack.c.b16 %v1404, %v1401
        %v1447 = vpack.c.b16 %v1405, %v1402
        %v1448 = vpack.c.b16 %v1409, %v1406
        %v1449 = vpack.c.b16 %v1410, %v1407
        %v1450 = vpack.c.b16 %v1411, %v1408
        %v1451 = vpack.c.b16 %v1415, %v1412
        %v1452 = vpack.c.b16 %v1416, %v1413
        %v1453 = vpack.c.b16 %v1417, %v1414
        %v1454 = vpack.c.b16 %v1421, %v1418
        %v1455 = vpack.c.b16 %v1422, %v1419
        %v1456 = vpack.c.b16 %v1423, %v1420
        %v1457 = vpack.c.b16 %v1427, %v1424
        %v1458 = vpack.c.b16 %v1428, %v1425
        %v1459 = vpack.c.b16 %v1429, %v1426
        %v1460 = vpack.c.b16 %v1433, %v1430
        %v1461 = vpack.c.b16 %v1434, %v1431
        %v1462 = vpack.c.b16 %v1435, %v1432
        %v1463 = vpack.c.b16 %v1439, %v1436
        %v1464 = vpack.c.b16 %v1440, %v1437
        %v1465 = vpack.c.b16 %v1441, %v1438
        %1490 = vmatpush.bf16.msra.mxu0 %v1463
        %1491 = vmatpush.bf16.msra.mxu0 %v1460
        %1492 = vmatpush.bf16.msra.mxu0 %v1457
        %1493 = vmatpush.bf16.msra.mxu0 %v1454
        %1494 = vmatpush.bf16.msra.mxu0 %v1451
        %1495 = vmatpush.bf16.msra.mxu0 %v1448
        %1496 = vmatpush.bf16.msra.mxu0 %v1445
        %1497 = vmatpush.bf16.msra.mxu0 %v1442
        %1498 = vmatmul.bf16.gmra.mxu0 %v1314
        %v1499 = vpop.f32.mrf.mxu0
        %v1500 = vadd.f32 %v1356, %v1499
        %v1501 = vpop.f32.mrf.mxu0
        %v1502 = vadd.f32 %v1356, %v1501
        %1503 = vmatmul.bf16.gmra.mxu0 %v1315
        %v1504 = vpop.f32.mrf.mxu0
        %v1505 = vadd.f32 %v1356, %v1504
        %v1506 = vpop.f32.mrf.mxu0
        %v1507 = vadd.f32 %v1356, %v1506
        %1508 = vmatmul.bf16.gmra.mxu0 %v1316
        %v1509 = vpop.f32.mrf.mxu0
        %v1510 = vadd.f32 %v1356, %v1509
        %v1511 = vpop.f32.mrf.mxu0
        %v1512 = vadd.f32 %v1356, %v1511
        %1513 = vmatmul.bf16.gmra.mxu0 %v1317
        %v1514 = vpop.f32.mrf.mxu0
        %v1515 = vadd.f32 %v1356, %v1514
        %v1516 = vpop.f32.mrf.mxu0
        %v1517 = vadd.f32 %v1356, %v1516
        %1518 = vmatmul.bf16.gmra.mxu0 %v1318
        %v1519 = vpop.f32.mrf.mxu0
        %v1520 = vadd.f32 %v1356, %v1519
        %v1521 = vpop.f32.mrf.mxu0
        %v1522 = vadd.f32 %v1356, %v1521
        %1523 = vmatmul.bf16.gmra.mxu0 %v1319
        %v1524 = vpop.f32.mrf.mxu0
        %v1525 = vadd.f32 %v1356, %v1524
        %v1526 = vpop.f32.mrf.mxu0
        %v1527 = vadd.f32 %v1356, %v1526
        %1528 = vmatmul.bf16.gmra.mxu0 %v1320
        %v1529 = vpop.f32.mrf.mxu0
        %v1530 = vadd.f32 %v1356, %v1529
        %v1531 = vpop.f32.mrf.mxu0
        %v1532 = vadd.f32 %v1356, %v1531
        %1533 = vmatmul.bf16.gmra.mxu0 %v1321
        %v1534 = vpop.f32.mrf.mxu0
        %v1535 = vadd.f32 %v1356, %v1534
        %v1536 = vpop.f32.mrf.mxu0
        %v1537 = vadd.f32 %v1356, %v1536
        %1538 = vdwg.mxu0
        %1539 = vmatpush.bf16.msra.mxu0 %v1464
        %1540 = vmatpush.bf16.msra.mxu0 %v1461
        %1541 = vmatpush.bf16.msra.mxu0 %v1458
        %1542 = vmatpush.bf16.msra.mxu0 %v1455
        %1543 = vmatpush.bf16.msra.mxu0 %v1452
        %1544 = vmatpush.bf16.msra.mxu0 %v1449
        %1545 = vmatpush.bf16.msra.mxu0 %v1446
        %1546 = vmatpush.bf16.msra.mxu0 %v1443
        %1547 = vmatmul.bf16.gmra.mxu0 %v1314
        %v1548 = vpop.f32.mrf.mxu0
        %v1549 = vadd.f32 %v1357, %v1548
        %v1550 = vpop.f32.mrf.mxu0
        %v1551 = vadd.f32 %v1357, %v1550
        %1552 = vmatmul.bf16.gmra.mxu0 %v1315
        %v1553 = vpop.f32.mrf.mxu0
        %v1554 = vadd.f32 %v1357, %v1553
        %v1555 = vpop.f32.mrf.mxu0
        %v1556 = vadd.f32 %v1357, %v1555
        %1557 = vmatmul.bf16.gmra.mxu0 %v1316
        %v1558 = vpop.f32.mrf.mxu0
        %v1559 = vadd.f32 %v1357, %v1558
        %v1560 = vpop.f32.mrf.mxu0
        %v1561 = vadd.f32 %v1357, %v1560
        %1562 = vmatmul.bf16.gmra.mxu0 %v1317
        %v1563 = vpop.f32.mrf.mxu0
        %v1564 = vadd.f32 %v1357, %v1563
        %v1565 = vpop.f32.mrf.mxu0
        %v1566 = vadd.f32 %v1357, %v1565
        %1567 = vmatmul.bf16.gmra.mxu0 %v1318
        %v1568 = vpop.f32.mrf.mxu0
        %v1569 = vadd.f32 %v1357, %v1568
        %v1570 = vpop.f32.mrf.mxu0
        %v1571 = vadd.f32 %v1357, %v1570
        %1572 = vmatmul.bf16.gmra.mxu0 %v1319
        %v1573 = vpop.f32.mrf.mxu0
        %v1574 = vadd.f32 %v1357, %v1573
        %v1575 = vpop.f32.mrf.mxu0
        %v1576 = vadd.f32 %v1357, %v1575
        %1577 = vmatmul.bf16.gmra.mxu0 %v1320
        %v1578 = vpop.f32.mrf.mxu0
        %v1579 = vadd.f32 %v1357, %v1578
        %v1580 = vpop.f32.mrf.mxu0
        %v1581 = vadd.f32 %v1357, %v1580
        %1582 = vmatmul.bf16.gmra.mxu0 %v1321
        %v1583 = vpop.f32.mrf.mxu0
        %v1584 = vadd.f32 %v1357, %v1583
        %v1585 = vpop.f32.mrf.mxu0
        %v1586 = vadd.f32 %v1357, %v1585
        %1587 = vdwg.mxu0
        %1588 = vmatpush.bf16.msra.mxu0 %v1465
        %1589 = vmatpush.bf16.msra.mxu0 %v1462
        %1590 = vmatpush.bf16.msra.mxu0 %v1459
        %1591 = vmatpush.bf16.msra.mxu0 %v1456
        %1592 = vmatpush.bf16.msra.mxu0 %v1453
        %1593 = vmatpush.bf16.msra.mxu0 %v1450
        %1594 = vmatpush.bf16.msra.mxu0 %v1447
        %1595 = vmatpush.bf16.msra.mxu0 %v1444
        %1596 = vmatmul.bf16.gmra.mxu0 %v1314
        %v1597 = vpop.f32.mrf.mxu0
        %v1598 = vadd.f32 %v1358, %v1597
        %v1599 = vpop.f32.mrf.mxu0
        %v1600 = vadd.f32 %v1358, %v1599
        %1601 = vmatmul.bf16.gmra.mxu0 %v1315
        %v1602 = vpop.f32.mrf.mxu0
        %v1603 = vadd.f32 %v1358, %v1602
        %v1604 = vpop.f32.mrf.mxu0
        %v1605 = vadd.f32 %v1358, %v1604
        %1606 = vmatmul.bf16.gmra.mxu0 %v1316
        %v1607 = vpop.f32.mrf.mxu0
        %v1608 = vadd.f32 %v1358, %v1607
        %v1609 = vpop.f32.mrf.mxu0
        %v1610 = vadd.f32 %v1358, %v1609
        %1611 = vmatmul.bf16.gmra.mxu0 %v1317
        %v1612 = vpop.f32.mrf.mxu0
        %v1613 = vadd.f32 %v1358, %v1612
        %v1614 = vpop.f32.mrf.mxu0
        %v1615 = vadd.f32 %v1358, %v1614
        %1616 = vmatmul.bf16.gmra.mxu0 %v1318
        %v1617 = vpop.f32.mrf.mxu0
        %v1618 = vadd.f32 %v1358, %v1617
        %v1619 = vpop.f32.mrf.mxu0
        %v1620 = vadd.f32 %v1358, %v1619
        %1621 = vmatmul.bf16.gmra.mxu0 %v1319
        %v1622 = vpop.f32.mrf.mxu0
        %v1623 = vadd.f32 %v1358, %v1622
        %v1624 = vpop.f32.mrf.mxu0
        %v1625 = vadd.f32 %v1358, %v1624
        %1626 = vmatmul.bf16.gmra.mxu0 %v1320
        %v1627 = vpop.f32.mrf.mxu0
        %v1628 = vadd.f32 %v1358, %v1627
        %v1629 = vpop.f32.mrf.mxu0
        %v1630 = vadd.f32 %v1358, %v1629
        %1631 = vmatmul.bf16.gmra.mxu0 %v1321
        %v1632 = vpop.f32.mrf.mxu0
        %v1633 = vadd.f32 %v1358, %v1632
        %v1634 = vpop.f32.mrf.mxu0
        %v1635 = vadd.f32 %v1358, %v1634
        %1636 = vdwg.mxu0
        %1653 = vrot.lane.b32.xlu0 %v1500, 96
        %v1654 = vpop.permute.xlu0 %1653
        %1655 = vrot.lane.b32.xlu0 %v1502, 96
        %v1656 = vpop.permute.xlu0 %1655
        %1657 = vrot.lane.b32.xlu0 %v1505, 96
        %v1658 = vpop.permute.xlu0 %1657
        %1659 = vrot.lane.b32.xlu0 %v1507, 96
        %v1660 = vpop.permute.xlu0 %1659
        %1661 = vrot.lane.b32.xlu0 %v1510, 96
        %v1662 = vpop.permute.xlu0 %1661
        %1663 = vrot.lane.b32.xlu0 %v1512, 96
        %v1664 = vpop.permute.xlu0 %1663
        %1665 = vrot.lane.b32.xlu0 %v1515, 96
        %v1666 = vpop.permute.xlu0 %1665
        %1667 = vrot.lane.b32.xlu0 %v1517, 96
        %v1668 = vpop.permute.xlu0 %1667
        %1669 = vrot.lane.b32.xlu0 %v1520, 96
        %v1670 = vpop.permute.xlu0 %1669
        %1671 = vrot.lane.b32.xlu0 %v1522, 96
        %v1672 = vpop.permute.xlu0 %1671
        %1673 = vrot.lane.b32.xlu0 %v1525, 96
        %v1674 = vpop.permute.xlu0 %1673
        %1675 = vrot.lane.b32.xlu0 %v1527, 96
        %v1676 = vpop.permute.xlu0 %1675
        %1677 = vrot.lane.b32.xlu0 %v1530, 96
        %v1678 = vpop.permute.xlu0 %1677
        %1679 = vrot.lane.b32.xlu0 %v1532, 96
        %v1680 = vpop.permute.xlu0 %1679
        %1681 = vrot.lane.b32.xlu0 %v1535, 96
        %v1682 = vpop.permute.xlu0 %1681
        %1683 = vrot.lane.b32.xlu0 %v1537, 96
        %v1684 = vpop.permute.xlu0 %1683
        %1701 = vrot.lane.b32.xlu0 %v1500, 64
        %v1702 = vpop.permute.xlu0 %1701
        %1703 = vrot.lane.b32.xlu0 %v1502, 64
        %v1704 = vpop.permute.xlu0 %1703
        %1705 = vrot.lane.b32.xlu0 %v1505, 64
        %v1706 = vpop.permute.xlu0 %1705
        %1707 = vrot.lane.b32.xlu0 %v1507, 64
        %v1708 = vpop.permute.xlu0 %1707
        %1709 = vrot.lane.b32.xlu0 %v1510, 64
        %v1710 = vpop.permute.xlu0 %1709
        %1711 = vrot.lane.b32.xlu0 %v1512, 64
        %v1712 = vpop.permute.xlu0 %1711
        %1713 = vrot.lane.b32.xlu0 %v1515, 64
        %v1714 = vpop.permute.xlu0 %1713
        %1715 = vrot.lane.b32.xlu0 %v1517, 64
        %v1716 = vpop.permute.xlu0 %1715
        %1717 = vrot.lane.b32.xlu0 %v1520, 64
        %v1718 = vpop.permute.xlu0 %1717
        %1719 = vrot.lane.b32.xlu0 %v1522, 64
        %v1720 = vpop.permute.xlu0 %1719
        %1721 = vrot.lane.b32.xlu0 %v1525, 64
        %v1722 = vpop.permute.xlu0 %1721
        %1723 = vrot.lane.b32.xlu0 %v1527, 64
        %v1724 = vpop.permute.xlu0 %1723
        %1725 = vrot.lane.b32.xlu0 %v1530, 64
        %v1726 = vpop.permute.xlu0 %1725
        %1727 = vrot.lane.b32.xlu0 %v1532, 64
        %v1728 = vpop.permute.xlu0 %1727
        %1729 = vrot.lane.b32.xlu0 %v1535, 64
        %v1730 = vpop.permute.xlu0 %1729
        %1731 = vrot.lane.b32.xlu0 %v1537, 64
        %v1732 = vpop.permute.xlu0 %1731
        %1749 = vrot.lane.b32.xlu0 %v1500, 32
        %v1750 = vpop.permute.xlu0 %1749
        %1751 = vrot.lane.b32.xlu0 %v1502, 32
        %v1752 = vpop.permute.xlu0 %1751
        %1753 = vrot.lane.b32.xlu0 %v1505, 32
        %v1754 = vpop.permute.xlu0 %1753
        %1755 = vrot.lane.b32.xlu0 %v1507, 32
        %v1756 = vpop.permute.xlu0 %1755
        %1757 = vrot.lane.b32.xlu0 %v1510, 32
        %v1758 = vpop.permute.xlu0 %1757
        %1759 = vrot.lane.b32.xlu0 %v1512, 32
        %v1760 = vpop.permute.xlu0 %1759
        %1761 = vrot.lane.b32.xlu0 %v1515, 32
        %v1762 = vpop.permute.xlu0 %1761
        %1763 = vrot.lane.b32.xlu0 %v1517, 32
        %v1764 = vpop.permute.xlu0 %1763
        %1765 = vrot.lane.b32.xlu0 %v1520, 32
        %v1766 = vpop.permute.xlu0 %1765
        %1767 = vrot.lane.b32.xlu0 %v1522, 32
        %v1768 = vpop.permute.xlu0 %1767
        %1769 = vrot.lane.b32.xlu0 %v1525, 32
        %v1770 = vpop.permute.xlu0 %1769
        %1771 = vrot.lane.b32.xlu0 %v1527, 32
        %v1772 = vpop.permute.xlu0 %1771
        %1773 = vrot.lane.b32.xlu0 %v1530, 32
        %v1774 = vpop.permute.xlu0 %1773
        %1775 = vrot.lane.b32.xlu0 %v1532, 32
        %v1776 = vpop.permute.xlu0 %1775
        %1777 = vrot.lane.b32.xlu0 %v1535, 32
        %v1778 = vpop.permute.xlu0 %1777
        %1779 = vrot.lane.b32.xlu0 %v1537, 32
        %v1780 = vpop.permute.xlu0 %1779
        %v1797 = vpack.c.bf16 %v1500, %v1500
        %v1798 = vpack.c.bf16 %v1502, %v1502
        %v1799 = vpack.c.bf16 %v1505, %v1505
        %v1800 = vpack.c.bf16 %v1507, %v1507
        %v1801 = vpack.c.bf16 %v1510, %v1510
        %v1802 = vpack.c.bf16 %v1512, %v1512
        %v1803 = vpack.c.bf16 %v1515, %v1515
        %v1804 = vpack.c.bf16 %v1517, %v1517
        %v1805 = vpack.c.bf16 %v1520, %v1520
        %v1806 = vpack.c.bf16 %v1522, %v1522
        %v1807 = vpack.c.bf16 %v1525, %v1525
        %v1808 = vpack.c.bf16 %v1527, %v1527
        %v1809 = vpack.c.bf16 %v1530, %v1530
        %v1810 = vpack.c.bf16 %v1532, %v1532
        %v1811 = vpack.c.bf16 %v1535, %v1535
        %v1812 = vpack.c.bf16 %v1537, %v1537
        %v1813 = vpack.c.bf16 %v1654, %v1654
        %v1814 = vpack.c.bf16 %v1656, %v1656
        %v1815 = vpack.c.bf16 %v1658, %v1658
        %v1816 = vpack.c.bf16 %v1660, %v1660
        %v1817 = vpack.c.bf16 %v1662, %v1662
        %v1818 = vpack.c.bf16 %v1664, %v1664
        %v1819 = vpack.c.bf16 %v1666, %v1666
        %v1820 = vpack.c.bf16 %v1668, %v1668
        %v1821 = vpack.c.bf16 %v1670, %v1670
        %v1822 = vpack.c.bf16 %v1672, %v1672
        %v1823 = vpack.c.bf16 %v1674, %v1674
        %v1824 = vpack.c.bf16 %v1676, %v1676
        %v1825 = vpack.c.bf16 %v1678, %v1678
        %v1826 = vpack.c.bf16 %v1680, %v1680
        %v1827 = vpack.c.bf16 %v1682, %v1682
        %v1828 = vpack.c.bf16 %v1684, %v1684
        %v1829 = vpack.c.bf16 %v1702, %v1702
        %v1830 = vpack.c.bf16 %v1704, %v1704
        %v1831 = vpack.c.bf16 %v1706, %v1706
        %v1832 = vpack.c.bf16 %v1708, %v1708
        %v1833 = vpack.c.bf16 %v1710, %v1710
        %v1834 = vpack.c.bf16 %v1712, %v1712
        %v1835 = vpack.c.bf16 %v1714, %v1714
        %v1836 = vpack.c.bf16 %v1716, %v1716
        %v1837 = vpack.c.bf16 %v1718, %v1718
        %v1838 = vpack.c.bf16 %v1720, %v1720
        %v1839 = vpack.c.bf16 %v1722, %v1722
        %v1840 = vpack.c.bf16 %v1724, %v1724
        %v1841 = vpack.c.bf16 %v1726, %v1726
        %v1842 = vpack.c.bf16 %v1728, %v1728
        %v1843 = vpack.c.bf16 %v1730, %v1730
        %v1844 = vpack.c.bf16 %v1732, %v1732
        %v1845 = vpack.c.bf16 %v1750, %v1750
        %v1846 = vpack.c.bf16 %v1752, %v1752
        %v1847 = vpack.c.bf16 %v1754, %v1754
        %v1848 = vpack.c.bf16 %v1756, %v1756
        %v1849 = vpack.c.bf16 %v1758, %v1758
        %v1850 = vpack.c.bf16 %v1760, %v1760
        %v1851 = vpack.c.bf16 %v1762, %v1762
        %v1852 = vpack.c.bf16 %v1764, %v1764
        %v1853 = vpack.c.bf16 %v1766, %v1766
        %v1854 = vpack.c.bf16 %v1768, %v1768
        %v1855 = vpack.c.bf16 %v1770, %v1770
        %v1856 = vpack.c.bf16 %v1772, %v1772
        %v1857 = vpack.c.bf16 %v1774, %v1774
        %v1858 = vpack.c.bf16 %v1776, %v1776
        %v1859 = vpack.c.bf16 %v1778, %v1778
        %v1860 = vpack.c.bf16 %v1780, %v1780
        %1877 = vrot.lane.b32.xlu0 %v1549, 96
        %v1878 = vpop.permute.xlu0 %1877
        %1879 = vrot.lane.b32.xlu0 %v1551, 96
        %v1880 = vpop.permute.xlu0 %1879
        %1881 = vrot.lane.b32.xlu0 %v1554, 96
        %v1882 = vpop.permute.xlu0 %1881
        %1883 = vrot.lane.b32.xlu0 %v1556, 96
        %v1884 = vpop.permute.xlu0 %1883
        %1885 = vrot.lane.b32.xlu0 %v1559, 96
        %v1886 = vpop.permute.xlu0 %1885
        %1887 = vrot.lane.b32.xlu0 %v1561, 96
        %v1888 = vpop.permute.xlu0 %1887
        %1889 = vrot.lane.b32.xlu0 %v1564, 96
        %v1890 = vpop.permute.xlu0 %1889
        %1891 = vrot.lane.b32.xlu0 %v1566, 96
        %v1892 = vpop.permute.xlu0 %1891
        %1893 = vrot.lane.b32.xlu0 %v1569, 96
        %v1894 = vpop.permute.xlu0 %1893
        %1895 = vrot.lane.b32.xlu0 %v1571, 96
        %v1896 = vpop.permute.xlu0 %1895
        %1897 = vrot.lane.b32.xlu0 %v1574, 96
        %v1898 = vpop.permute.xlu0 %1897
        %1899 = vrot.lane.b32.xlu0 %v1576, 96
        %v1900 = vpop.permute.xlu0 %1899
        %1901 = vrot.lane.b32.xlu0 %v1579, 96
        %v1902 = vpop.permute.xlu0 %1901
        %1903 = vrot.lane.b32.xlu0 %v1581, 96
        %v1904 = vpop.permute.xlu0 %1903
        %1905 = vrot.lane.b32.xlu0 %v1584, 96
        %v1906 = vpop.permute.xlu0 %1905
        %1907 = vrot.lane.b32.xlu0 %v1586, 96
        %v1908 = vpop.permute.xlu0 %1907
        %1925 = vrot.lane.b32.xlu0 %v1549, 64
        %v1926 = vpop.permute.xlu0 %1925
        %1927 = vrot.lane.b32.xlu0 %v1551, 64
        %v1928 = vpop.permute.xlu0 %1927
        %1929 = vrot.lane.b32.xlu0 %v1554, 64
        %v1930 = vpop.permute.xlu0 %1929
        %1931 = vrot.lane.b32.xlu0 %v1556, 64
        %v1932 = vpop.permute.xlu0 %1931
        %1933 = vrot.lane.b32.xlu0 %v1559, 64
        %v1934 = vpop.permute.xlu0 %1933
        %1935 = vrot.lane.b32.xlu0 %v1561, 64
        %v1936 = vpop.permute.xlu0 %1935
        %1937 = vrot.lane.b32.xlu0 %v1564, 64
        %v1938 = vpop.permute.xlu0 %1937
        %1939 = vrot.lane.b32.xlu0 %v1566, 64
        %v1940 = vpop.permute.xlu0 %1939
        %1941 = vrot.lane.b32.xlu0 %v1569, 64
        %v1942 = vpop.permute.xlu0 %1941
        %1943 = vrot.lane.b32.xlu0 %v1571, 64
        %v1944 = vpop.permute.xlu0 %1943
        %1945 = vrot.lane.b32.xlu0 %v1574, 64
        %v1946 = vpop.permute.xlu0 %1945
        %1947 = vrot.lane.b32.xlu0 %v1576, 64
        %v1948 = vpop.permute.xlu0 %1947
        %1949 = vrot.lane.b32.xlu0 %v1579, 64
        %v1950 = vpop.permute.xlu0 %1949
        %1951 = vrot.lane.b32.xlu0 %v1581, 64
        %v1952 = vpop.permute.xlu0 %1951
        %1953 = vrot.lane.b32.xlu0 %v1584, 64
        %v1954 = vpop.permute.xlu0 %1953
        %1955 = vrot.lane.b32.xlu0 %v1586, 64
        %v1956 = vpop.permute.xlu0 %1955
        %1973 = vrot.lane.b32.xlu0 %v1549, 32
        %v1974 = vpop.permute.xlu0 %1973
        %1975 = vrot.lane.b32.xlu0 %v1551, 32
        %v1976 = vpop.permute.xlu0 %1975
        %1977 = vrot.lane.b32.xlu0 %v1554, 32
        %v1978 = vpop.permute.xlu0 %1977
        %1979 = vrot.lane.b32.xlu0 %v1556, 32
        %v1980 = vpop.permute.xlu0 %1979
        %1981 = vrot.lane.b32.xlu0 %v1559, 32
        %v1982 = vpop.permute.xlu0 %1981
        %1983 = vrot.lane.b32.xlu0 %v1561, 32
        %v1984 = vpop.permute.xlu0 %1983
        %1985 = vrot.lane.b32.xlu0 %v1564, 32
        %v1986 = vpop.permute.xlu0 %1985
        %1987 = vrot.lane.b32.xlu0 %v1566, 32
        %v1988 = vpop.permute.xlu0 %1987
        %1989 = vrot.lane.b32.xlu0 %v1569, 32
        %v1990 = vpop.permute.xlu0 %1989
        %1991 = vrot.lane.b32.xlu0 %v1571, 32
        %v1992 = vpop.permute.xlu0 %1991
        %1993 = vrot.lane.b32.xlu0 %v1574, 32
        %v1994 = vpop.permute.xlu0 %1993
        %1995 = vrot.lane.b32.xlu0 %v1576, 32
        %v1996 = vpop.permute.xlu0 %1995
        %1997 = vrot.lane.b32.xlu0 %v1579, 32
        %v1998 = vpop.permute.xlu0 %1997
        %1999 = vrot.lane.b32.xlu0 %v1581, 32
        %v2000 = vpop.permute.xlu0 %1999
        %2001 = vrot.lane.b32.xlu0 %v1584, 32
        %v2002 = vpop.permute.xlu0 %2001
        %2003 = vrot.lane.b32.xlu0 %v1586, 32
        %v2004 = vpop.permute.xlu0 %2003
        %v2021 = vpack.c.bf16 %v1549, %v1549
        %v2022 = vpack.c.bf16 %v1551, %v1551
        %v2023 = vpack.c.bf16 %v1554, %v1554
        %v2024 = vpack.c.bf16 %v1556, %v1556
        %v2025 = vpack.c.bf16 %v1559, %v1559
        %v2026 = vpack.c.bf16 %v1561, %v1561
        %v2027 = vpack.c.bf16 %v1564, %v1564
        %v2028 = vpack.c.bf16 %v1566, %v1566
        %v2029 = vpack.c.bf16 %v1569, %v1569
        %v2030 = vpack.c.bf16 %v1571, %v1571
        %v2031 = vpack.c.bf16 %v1574, %v1574
        %v2032 = vpack.c.bf16 %v1576, %v1576
        %v2033 = vpack.c.bf16 %v1579, %v1579
        %v2034 = vpack.c.bf16 %v1581, %v1581
        %v2035 = vpack.c.bf16 %v1584, %v1584
        %v2036 = vpack.c.bf16 %v1586, %v1586
        %v2037 = vpack.c.bf16 %v1878, %v1878
        %v2038 = vpack.c.bf16 %v1880, %v1880
        %v2039 = vpack.c.bf16 %v1882, %v1882
        %v2040 = vpack.c.bf16 %v1884, %v1884
        %v2041 = vpack.c.bf16 %v1886, %v1886
        %v2042 = vpack.c.bf16 %v1888, %v1888
        %v2043 = vpack.c.bf16 %v1890, %v1890
        %v2044 = vpack.c.bf16 %v1892, %v1892
        %v2045 = vpack.c.bf16 %v1894, %v1894
        %v2046 = vpack.c.bf16 %v1896, %v1896
        %v2047 = vpack.c.bf16 %v1898, %v1898
        %v2048 = vpack.c.bf16 %v1900, %v1900
        %v2049 = vpack.c.bf16 %v1902, %v1902
        %v2050 = vpack.c.bf16 %v1904, %v1904
        %v2051 = vpack.c.bf16 %v1906, %v1906
        %v2052 = vpack.c.bf16 %v1908, %v1908
        %v2053 = vpack.c.bf16 %v1926, %v1926
        %v2054 = vpack.c.bf16 %v1928, %v1928
        %v2055 = vpack.c.bf16 %v1930, %v1930
        %v2056 = vpack.c.bf16 %v1932, %v1932
        %v2057 = vpack.c.bf16 %v1934, %v1934
        %v2058 = vpack.c.bf16 %v1936, %v1936
        %v2059 = vpack.c.bf16 %v1938, %v1938
        %v2060 = vpack.c.bf16 %v1940, %v1940
        %v2061 = vpack.c.bf16 %v1942, %v1942
        %v2062 = vpack.c.bf16 %v1944, %v1944
        %v2063 = vpack.c.bf16 %v1946, %v1946
        %v2064 = vpack.c.bf16 %v1948, %v1948
        %v2065 = vpack.c.bf16 %v1950, %v1950
        %v2066 = vpack.c.bf16 %v1952, %v1952
        %v2067 = vpack.c.bf16 %v1954, %v1954
        %v2068 = vpack.c.bf16 %v1956, %v1956
        %v2069 = vpack.c.bf16 %v1974, %v1974
        %v2070 = vpack.c.bf16 %v1976, %v1976
        %v2071 = vpack.c.bf16 %v1978, %v1978
        %v2072 = vpack.c.bf16 %v1980, %v1980
        %v2073 = vpack.c.bf16 %v1982, %v1982
        %v2074 = vpack.c.bf16 %v1984, %v1984
        %v2075 = vpack.c.bf16 %v1986, %v1986
        %v2076 = vpack.c.bf16 %v1988, %v1988
        %v2077 = vpack.c.bf16 %v1990, %v1990
        %v2078 = vpack.c.bf16 %v1992, %v1992
        %v2079 = vpack.c.bf16 %v1994, %v1994
        %v2080 = vpack.c.bf16 %v1996, %v1996
        %v2081 = vpack.c.bf16 %v1998, %v1998
        %v2082 = vpack.c.bf16 %v2000, %v2000
        %v2083 = vpack.c.bf16 %v2002, %v2002
        %v2084 = vpack.c.bf16 %v2004, %v2004
        %2101 = vrot.lane.b32.xlu0 %v1598, 96
        %v2102 = vpop.permute.xlu0 %2101
        %2103 = vrot.lane.b32.xlu0 %v1600, 96
        %v2104 = vpop.permute.xlu0 %2103
        %2105 = vrot.lane.b32.xlu0 %v1603, 96
        %v2106 = vpop.permute.xlu0 %2105
        %2107 = vrot.lane.b32.xlu0 %v1605, 96
        %v2108 = vpop.permute.xlu0 %2107
        %2109 = vrot.lane.b32.xlu0 %v1608, 96
        %v2110 = vpop.permute.xlu0 %2109
        %2111 = vrot.lane.b32.xlu0 %v1610, 96
        %v2112 = vpop.permute.xlu0 %2111
        %2113 = vrot.lane.b32.xlu0 %v1613, 96
        %v2114 = vpop.permute.xlu0 %2113
        %2115 = vrot.lane.b32.xlu0 %v1615, 96
        %v2116 = vpop.permute.xlu0 %2115
        %2117 = vrot.lane.b32.xlu0 %v1618, 96
        %v2118 = vpop.permute.xlu0 %2117
        %2119 = vrot.lane.b32.xlu0 %v1620, 96
        %v2120 = vpop.permute.xlu0 %2119
        %2121 = vrot.lane.b32.xlu0 %v1623, 96
        %v2122 = vpop.permute.xlu0 %2121
        %2123 = vrot.lane.b32.xlu0 %v1625, 96
        %v2124 = vpop.permute.xlu0 %2123
        %2125 = vrot.lane.b32.xlu0 %v1628, 96
        %v2126 = vpop.permute.xlu0 %2125
        %2127 = vrot.lane.b32.xlu0 %v1630, 96
        %v2128 = vpop.permute.xlu0 %2127
        %2129 = vrot.lane.b32.xlu0 %v1633, 96
        %v2130 = vpop.permute.xlu0 %2129
        %2131 = vrot.lane.b32.xlu0 %v1635, 96
        %v2132 = vpop.permute.xlu0 %2131
        %2149 = vrot.lane.b32.xlu0 %v1598, 64
        %v2150 = vpop.permute.xlu0 %2149
        %2151 = vrot.lane.b32.xlu0 %v1600, 64
        %v2152 = vpop.permute.xlu0 %2151
        %2153 = vrot.lane.b32.xlu0 %v1603, 64
        %v2154 = vpop.permute.xlu0 %2153
        %2155 = vrot.lane.b32.xlu0 %v1605, 64
        %v2156 = vpop.permute.xlu0 %2155
        %2157 = vrot.lane.b32.xlu0 %v1608, 64
        %v2158 = vpop.permute.xlu0 %2157
        %2159 = vrot.lane.b32.xlu0 %v1610, 64
        %v2160 = vpop.permute.xlu0 %2159
        %2161 = vrot.lane.b32.xlu0 %v1613, 64
        %v2162 = vpop.permute.xlu0 %2161
        %2163 = vrot.lane.b32.xlu0 %v1615, 64
        %v2164 = vpop.permute.xlu0 %2163
        %2165 = vrot.lane.b32.xlu0 %v1618, 64
        %v2166 = vpop.permute.xlu0 %2165
        %2167 = vrot.lane.b32.xlu0 %v1620, 64
        %v2168 = vpop.permute.xlu0 %2167
        %2169 = vrot.lane.b32.xlu0 %v1623, 64
        %v2170 = vpop.permute.xlu0 %2169
        %2171 = vrot.lane.b32.xlu0 %v1625, 64
        %v2172 = vpop.permute.xlu0 %2171
        %2173 = vrot.lane.b32.xlu0 %v1628, 64
        %v2174 = vpop.permute.xlu0 %2173
        %2175 = vrot.lane.b32.xlu0 %v1630, 64
        %v2176 = vpop.permute.xlu0 %2175
        %2177 = vrot.lane.b32.xlu0 %v1633, 64
        %v2178 = vpop.permute.xlu0 %2177
        %2179 = vrot.lane.b32.xlu0 %v1635, 64
        %v2180 = vpop.permute.xlu0 %2179
        %2197 = vrot.lane.b32.xlu0 %v1598, 32
        %v2198 = vpop.permute.xlu0 %2197
        %2199 = vrot.lane.b32.xlu0 %v1600, 32
        %v2200 = vpop.permute.xlu0 %2199
        %2201 = vrot.lane.b32.xlu0 %v1603, 32
        %v2202 = vpop.permute.xlu0 %2201
        %2203 = vrot.lane.b32.xlu0 %v1605, 32
        %v2204 = vpop.permute.xlu0 %2203
        %2205 = vrot.lane.b32.xlu0 %v1608, 32
        %v2206 = vpop.permute.xlu0 %2205
        %2207 = vrot.lane.b32.xlu0 %v1610, 32
        %v2208 = vpop.permute.xlu0 %2207
        %2209 = vrot.lane.b32.xlu0 %v1613, 32
        %v2210 = vpop.permute.xlu0 %2209
        %2211 = vrot.lane.b32.xlu0 %v1615, 32
        %v2212 = vpop.permute.xlu0 %2211
        %2213 = vrot.lane.b32.xlu0 %v1618, 32
        %v2214 = vpop.permute.xlu0 %2213
        %2215 = vrot.lane.b32.xlu0 %v1620, 32
        %v2216 = vpop.permute.xlu0 %2215
        %2217 = vrot.lane.b32.xlu0 %v1623, 32
        %v2218 = vpop.permute.xlu0 %2217
        %2219 = vrot.lane.b32.xlu0 %v1625, 32
        %v2220 = vpop.permute.xlu0 %2219
        %2221 = vrot.lane.b32.xlu0 %v1628, 32
        %v2222 = vpop.permute.xlu0 %2221
        %2223 = vrot.lane.b32.xlu0 %v1630, 32
        %v2224 = vpop.permute.xlu0 %2223
        %2225 = vrot.lane.b32.xlu0 %v1633, 32
        %v2226 = vpop.permute.xlu0 %2225
        %2227 = vrot.lane.b32.xlu0 %v1635, 32
        %v2228 = vpop.permute.xlu0 %2227
        %v2245 = vpack.c.bf16 %v1598, %v1598
        %v2246 = vpack.c.bf16 %v1600, %v1600
        %v2247 = vpack.c.bf16 %v1603, %v1603
        %v2248 = vpack.c.bf16 %v1605, %v1605
        %v2249 = vpack.c.bf16 %v1608, %v1608
        %v2250 = vpack.c.bf16 %v1610, %v1610
        %v2251 = vpack.c.bf16 %v1613, %v1613
        %v2252 = vpack.c.bf16 %v1615, %v1615
        %v2253 = vpack.c.bf16 %v1618, %v1618
        %v2254 = vpack.c.bf16 %v1620, %v1620
        %v2255 = vpack.c.bf16 %v1623, %v1623
        %v2256 = vpack.c.bf16 %v1625, %v1625
        %v2257 = vpack.c.bf16 %v1628, %v1628
        %v2258 = vpack.c.bf16 %v1630, %v1630
        %v2259 = vpack.c.bf16 %v1633, %v1633
        %v2260 = vpack.c.bf16 %v1635, %v1635
        %v2261 = vpack.c.bf16 %v2102, %v2102
        %v2262 = vpack.c.bf16 %v2104, %v2104
        %v2263 = vpack.c.bf16 %v2106, %v2106
        %v2264 = vpack.c.bf16 %v2108, %v2108
        %v2265 = vpack.c.bf16 %v2110, %v2110
        %v2266 = vpack.c.bf16 %v2112, %v2112
        %v2267 = vpack.c.bf16 %v2114, %v2114
        %v2268 = vpack.c.bf16 %v2116, %v2116
        %v2269 = vpack.c.bf16 %v2118, %v2118
        %v2270 = vpack.c.bf16 %v2120, %v2120
        %v2271 = vpack.c.bf16 %v2122, %v2122
        %v2272 = vpack.c.bf16 %v2124, %v2124
        %v2273 = vpack.c.bf16 %v2126, %v2126
        %v2274 = vpack.c.bf16 %v2128, %v2128
        %v2275 = vpack.c.bf16 %v2130, %v2130
        %v2276 = vpack.c.bf16 %v2132, %v2132
        %v2277 = vpack.c.bf16 %v2150, %v2150
        %v2278 = vpack.c.bf16 %v2152, %v2152
        %v2279 = vpack.c.bf16 %v2154, %v2154
        %v2280 = vpack.c.bf16 %v2156, %v2156
        %v2281 = vpack.c.bf16 %v2158, %v2158
        %v2282 = vpack.c.bf16 %v2160, %v2160
        %v2283 = vpack.c.bf16 %v2162, %v2162
        %v2284 = vpack.c.bf16 %v2164, %v2164
        %v2285 = vpack.c.bf16 %v2166, %v2166
        %v2286 = vpack.c.bf16 %v2168, %v2168
        %v2287 = vpack.c.bf16 %v2170, %v2170
        %v2288 = vpack.c.bf16 %v2172, %v2172
        %v2289 = vpack.c.bf16 %v2174, %v2174
        %v2290 = vpack.c.bf16 %v2176, %v2176
        %v2291 = vpack.c.bf16 %v2178, %v2178
        %v2292 = vpack.c.bf16 %v2180, %v2180
        %v2293 = vpack.c.bf16 %v2198, %v2198
        %v2294 = vpack.c.bf16 %v2200, %v2200
        %v2295 = vpack.c.bf16 %v2202, %v2202
        %v2296 = vpack.c.bf16 %v2204, %v2204
        %v2297 = vpack.c.bf16 %v2206, %v2206
        %v2298 = vpack.c.bf16 %v2208, %v2208
        %v2299 = vpack.c.bf16 %v2210, %v2210
        %v2300 = vpack.c.bf16 %v2212, %v2212
        %v2301 = vpack.c.bf16 %v2214, %v2214
        %v2302 = vpack.c.bf16 %v2216, %v2216
        %v2303 = vpack.c.bf16 %v2218, %v2218
        %v2304 = vpack.c.bf16 %v2220, %v2220
        %v2305 = vpack.c.bf16 %v2222, %v2222
        %v2306 = vpack.c.bf16 %v2224, %v2224
        %v2307 = vpack.c.bf16 %v2226, %v2226
        %v2308 = vpack.c.bf16 %v2228, %v2228
        %v2325 = vunpack.c.l.b16 %v1797
        %v2326 = vunpack.c.l.b16 %v1798
        %v2327 = vunpack.c.l.b16 %v1799
        %v2328 = vunpack.c.l.b16 %v1800
        %v2329 = vunpack.c.l.b16 %v1801
        %v2330 = vunpack.c.l.b16 %v1802
        %v2331 = vunpack.c.l.b16 %v1803
        %v2332 = vunpack.c.l.b16 %v1804
        %v2333 = vunpack.c.l.b16 %v1805
        %v2334 = vunpack.c.l.b16 %v1806
        %v2335 = vunpack.c.l.b16 %v1807
        %v2336 = vunpack.c.l.b16 %v1808
        %v2337 = vunpack.c.l.b16 %v1809
        %v2338 = vunpack.c.l.b16 %v1810
        %v2339 = vunpack.c.l.b16 %v1811
        %v2340 = vunpack.c.l.b16 %v1812
        %v2341 = vpack.c.b16 %v2326, %v2325
        %v2342 = vpack.c.b16 %v2328, %v2327
        %v2343 = vpack.c.b16 %v2330, %v2329
        %v2344 = vpack.c.b16 %v2332, %v2331
        %v2345 = vpack.c.b16 %v2334, %v2333
        %v2346 = vpack.c.b16 %v2336, %v2335
        %v2347 = vpack.c.b16 %v2338, %v2337
        %v2348 = vpack.c.b16 %v2340, %v2339
        %v2365 = vunpack.c.l.b16 %v2021
        %v2366 = vunpack.c.l.b16 %v2022
        %v2367 = vunpack.c.l.b16 %v2023
        %v2368 = vunpack.c.l.b16 %v2024
        %v2369 = vunpack.c.l.b16 %v2025
        %v2370 = vunpack.c.l.b16 %v2026
        %v2371 = vunpack.c.l.b16 %v2027
        %v2372 = vunpack.c.l.b16 %v2028
        %v2373 = vunpack.c.l.b16 %v2029
        %v2374 = vunpack.c.l.b16 %v2030
        %v2375 = vunpack.c.l.b16 %v2031
        %v2376 = vunpack.c.l.b16 %v2032
        %v2377 = vunpack.c.l.b16 %v2033
        %v2378 = vunpack.c.l.b16 %v2034
        %v2379 = vunpack.c.l.b16 %v2035
        %v2380 = vunpack.c.l.b16 %v2036
        %v2381 = vpack.c.b16 %v2366, %v2365
        %v2382 = vpack.c.b16 %v2368, %v2367
        %v2383 = vpack.c.b16 %v2370, %v2369
        %v2384 = vpack.c.b16 %v2372, %v2371
        %v2385 = vpack.c.b16 %v2374, %v2373
        %v2386 = vpack.c.b16 %v2376, %v2375
        %v2387 = vpack.c.b16 %v2378, %v2377
        %v2388 = vpack.c.b16 %v2380, %v2379
        %vm2389 = vcmask 261120
        %v2391 = vsel %vm2389, %v2341, 0
        %v2394 = vsel %vm2389, %v2342, 0
        %v2397 = vsel %vm2389, %v2343, 0
        %v2400 = vsel %vm2389, %v2344, 0
        %v2403 = vsel %vm2389, %v2345, 0
        %v2406 = vsel %vm2389, %v2346, 0
        %v2409 = vsel %vm2389, %v2347, 0
        %v2412 = vsel %vm2389, %v2348, 0
        %v2415 = vsel %vm2389, %v2381, 0
        %v2418 = vsel %vm2389, %v2382, 0
        %v2421 = vsel %vm2389, %v2383, 0
        %v2424 = vsel %vm2389, %v2384, 0
        %v2427 = vsel %vm2389, %v2385, 0
        %v2430 = vsel %vm2389, %v2386, 0
        %v2433 = vsel %vm2389, %v2387, 0
        %v2436 = vsel %vm2389, %v2388, 0
        %2438 = vmatpush.bf16.xpose.msra.mxu0 %v2436
        %2439 = vmatpush.bf16.xpose.msra.mxu0 %v2433
        %2440 = vmatpush.bf16.xpose.msra.mxu0 %v2430
        %2441 = vmatpush.bf16.xpose.msra.mxu0 %v2427
        %2442 = vmatpush.bf16.xpose.msra.mxu0 %v2424
        %2443 = vmatpush.bf16.xpose.msra.mxu0 %v2421
        %2444 = vmatpush.bf16.xpose.msra.mxu0 %v2418
        %2445 = vmatpush.bf16.xpose.msra.mxu0 %v2415
        %2446 = vmatmul.bf16.gmra.mxu0 %v2391
        %v2447 = vpop.f32.mrf.mxu0
        %v2448 = vadd.f32 0.0, %v2447
        %v2449 = vpop.f32.mrf.mxu0
        %v2450 = vadd.f32 0.0, %v2449
        %2451 = vmatmul.bf16.gmra.mxu0 %v2394
        %v2452 = vpop.f32.mrf.mxu0
        %v2453 = vadd.f32 0.0, %v2452
        %v2454 = vpop.f32.mrf.mxu0
        %v2455 = vadd.f32 0.0, %v2454
        %2456 = vmatmul.bf16.gmra.mxu0 %v2397
        %v2457 = vpop.f32.mrf.mxu0
        %v2458 = vadd.f32 0.0, %v2457
        %v2459 = vpop.f32.mrf.mxu0
        %v2460 = vadd.f32 0.0, %v2459
        %2461 = vmatmul.bf16.gmra.mxu0 %v2400
        %v2462 = vpop.f32.mrf.mxu0
        %v2463 = vadd.f32 0.0, %v2462
        %v2464 = vpop.f32.mrf.mxu0
        %v2465 = vadd.f32 0.0, %v2464
        %2466 = vmatmul.bf16.gmra.mxu0 %v2403
        %v2467 = vpop.f32.mrf.mxu0
        %v2468 = vadd.f32 0.0, %v2467
        %v2469 = vpop.f32.mrf.mxu0
        %v2470 = vadd.f32 0.0, %v2469
        %2471 = vmatmul.bf16.gmra.mxu0 %v2406
        %v2472 = vpop.f32.mrf.mxu0
        %v2473 = vadd.f32 0.0, %v2472
        %v2474 = vpop.f32.mrf.mxu0
        %v2475 = vadd.f32 0.0, %v2474
        %2476 = vmatmul.bf16.gmra.mxu0 %v2409
        %v2477 = vpop.f32.mrf.mxu0
        %v2478 = vadd.f32 0.0, %v2477
        %v2479 = vpop.f32.mrf.mxu0
        %v2480 = vadd.f32 0.0, %v2479
        %2481 = vmatmul.bf16.gmra.mxu0 %v2412
        %v2482 = vpop.f32.mrf.mxu0
        %v2483 = vadd.f32 0.0, %v2482
        %v2484 = vpop.f32.mrf.mxu0
        %v2485 = vadd.f32 0.0, %v2484
        %2486 = vdwg.mxu0
        %v2503 = vunpack.c.l.b16 %v1813
        %v2504 = vunpack.c.l.b16 %v1814
        %v2505 = vunpack.c.l.b16 %v1815
        %v2506 = vunpack.c.l.b16 %v1816
        %v2507 = vunpack.c.l.b16 %v1817
        %v2508 = vunpack.c.l.b16 %v1818
        %v2509 = vunpack.c.l.b16 %v1819
        %v2510 = vunpack.c.l.b16 %v1820
        %v2511 = vunpack.c.l.b16 %v1821
        %v2512 = vunpack.c.l.b16 %v1822
        %v2513 = vunpack.c.l.b16 %v1823
        %v2514 = vunpack.c.l.b16 %v1824
        %v2515 = vunpack.c.l.b16 %v1825
        %v2516 = vunpack.c.l.b16 %v1826
        %v2517 = vunpack.c.l.b16 %v1827
        %v2518 = vunpack.c.l.b16 %v1828
        %v2519 = vpack.c.b16 %v2504, %v2503
        %v2520 = vpack.c.b16 %v2506, %v2505
        %v2521 = vpack.c.b16 %v2508, %v2507
        %v2522 = vpack.c.b16 %v2510, %v2509
        %v2523 = vpack.c.b16 %v2512, %v2511
        %v2524 = vpack.c.b16 %v2514, %v2513
        %v2525 = vpack.c.b16 %v2516, %v2515
        %v2526 = vpack.c.b16 %v2518, %v2517
        %v2543 = vunpack.c.l.b16 %v2037
        %v2544 = vunpack.c.l.b16 %v2038
        %v2545 = vunpack.c.l.b16 %v2039
        %v2546 = vunpack.c.l.b16 %v2040
        %v2547 = vunpack.c.l.b16 %v2041
        %v2548 = vunpack.c.l.b16 %v2042
        %v2549 = vunpack.c.l.b16 %v2043
        %v2550 = vunpack.c.l.b16 %v2044
        %v2551 = vunpack.c.l.b16 %v2045
        %v2552 = vunpack.c.l.b16 %v2046
        %v2553 = vunpack.c.l.b16 %v2047
        %v2554 = vunpack.c.l.b16 %v2048
        %v2555 = vunpack.c.l.b16 %v2049
        %v2556 = vunpack.c.l.b16 %v2050
        %v2557 = vunpack.c.l.b16 %v2051
        %v2558 = vunpack.c.l.b16 %v2052
        %v2559 = vpack.c.b16 %v2544, %v2543
        %v2560 = vpack.c.b16 %v2546, %v2545
        %v2561 = vpack.c.b16 %v2548, %v2547
        %v2562 = vpack.c.b16 %v2550, %v2549
        %v2563 = vpack.c.b16 %v2552, %v2551
        %v2564 = vpack.c.b16 %v2554, %v2553
        %v2565 = vpack.c.b16 %v2556, %v2555
        %v2566 = vpack.c.b16 %v2558, %v2557
        %v2568 = vsel %vm2389, %v2519, 0
        %v2571 = vsel %vm2389, %v2520, 0
        %v2574 = vsel %vm2389, %v2521, 0
        %v2577 = vsel %vm2389, %v2522, 0
        %v2580 = vsel %vm2389, %v2523, 0
        %v2583 = vsel %vm2389, %v2524, 0
        %v2586 = vsel %vm2389, %v2525, 0
        %v2589 = vsel %vm2389, %v2526, 0
        %v2592 = vsel %vm2389, %v2559, 0
        %v2595 = vsel %vm2389, %v2560, 0
        %v2598 = vsel %vm2389, %v2561, 0
        %v2601 = vsel %vm2389, %v2562, 0
        %v2604 = vsel %vm2389, %v2563, 0
        %v2607 = vsel %vm2389, %v2564, 0
        %v2610 = vsel %vm2389, %v2565, 0
        %v2613 = vsel %vm2389, %v2566, 0
        %2615 = vmatpush.bf16.xpose.msra.mxu0 %v2613
        %2616 = vmatpush.bf16.xpose.msra.mxu0 %v2610
        %2617 = vmatpush.bf16.xpose.msra.mxu0 %v2607
        %2618 = vmatpush.bf16.xpose.msra.mxu0 %v2604
        %2619 = vmatpush.bf16.xpose.msra.mxu0 %v2601
        %2620 = vmatpush.bf16.xpose.msra.mxu0 %v2598
        %2621 = vmatpush.bf16.xpose.msra.mxu0 %v2595
        %2622 = vmatpush.bf16.xpose.msra.mxu0 %v2592
        %2623 = vmatmul.bf16.gmra.mxu0 %v2568
        %v2624 = vpop.f32.mrf.mxu0
        %v2625 = vadd.f32 0.0, %v2624
        %v2626 = vpop.f32.mrf.mxu0
        %v2627 = vadd.f32 0.0, %v2626
        %2628 = vmatmul.bf16.gmra.mxu0 %v2571
        %v2629 = vpop.f32.mrf.mxu0
        %v2630 = vadd.f32 0.0, %v2629
        %v2631 = vpop.f32.mrf.mxu0
        %v2632 = vadd.f32 0.0, %v2631
        %2633 = vmatmul.bf16.gmra.mxu0 %v2574
        %v2634 = vpop.f32.mrf.mxu0
        %v2635 = vadd.f32 0.0, %v2634
        %v2636 = vpop.f32.mrf.mxu0
        %v2637 = vadd.f32 0.0, %v2636
        %2638 = vmatmul.bf16.gmra.mxu0 %v2577
        %v2639 = vpop.f32.mrf.mxu0
        %v2640 = vadd.f32 0.0, %v2639
        %v2641 = vpop.f32.mrf.mxu0
        %v2642 = vadd.f32 0.0, %v2641
        %2643 = vmatmul.bf16.gmra.mxu0 %v2580
        %v2644 = vpop.f32.mrf.mxu0
        %v2645 = vadd.f32 0.0, %v2644
        %v2646 = vpop.f32.mrf.mxu0
        %v2647 = vadd.f32 0.0, %v2646
        %2648 = vmatmul.bf16.gmra.mxu0 %v2583
        %v2649 = vpop.f32.mrf.mxu0
        %v2650 = vadd.f32 0.0, %v2649
        %v2651 = vpop.f32.mrf.mxu0
        %v2652 = vadd.f32 0.0, %v2651
        %2653 = vmatmul.bf16.gmra.mxu0 %v2586
        %v2654 = vpop.f32.mrf.mxu0
        %v2655 = vadd.f32 0.0, %v2654
        %v2656 = vpop.f32.mrf.mxu0
        %v2657 = vadd.f32 0.0, %v2656
        %2658 = vmatmul.bf16.gmra.mxu0 %v2589
        %v2659 = vpop.f32.mrf.mxu0
        %v2660 = vadd.f32 0.0, %v2659
        %v2661 = vpop.f32.mrf.mxu0
        %v2662 = vadd.f32 0.0, %v2661
        %2663 = vdwg.mxu0
        %v2680 = vunpack.c.l.b16 %v1829
        %v2681 = vunpack.c.l.b16 %v1830
        %v2682 = vunpack.c.l.b16 %v1831
        %v2683 = vunpack.c.l.b16 %v1832
        %v2684 = vunpack.c.l.b16 %v1833
        %v2685 = vunpack.c.l.b16 %v1834
        %v2686 = vunpack.c.l.b16 %v1835
        %v2687 = vunpack.c.l.b16 %v1836
        %v2688 = vunpack.c.l.b16 %v1837
        %v2689 = vunpack.c.l.b16 %v1838
        %v2690 = vunpack.c.l.b16 %v1839
        %v2691 = vunpack.c.l.b16 %v1840
        %v2692 = vunpack.c.l.b16 %v1841
        %v2693 = vunpack.c.l.b16 %v1842
        %v2694 = vunpack.c.l.b16 %v1843
        %v2695 = vunpack.c.l.b16 %v1844
        %v2696 = vpack.c.b16 %v2681, %v2680
        %v2697 = vpack.c.b16 %v2683, %v2682
        %v2698 = vpack.c.b16 %v2685, %v2684
        %v2699 = vpack.c.b16 %v2687, %v2686
        %v2700 = vpack.c.b16 %v2689, %v2688
        %v2701 = vpack.c.b16 %v2691, %v2690
        %v2702 = vpack.c.b16 %v2693, %v2692
        %v2703 = vpack.c.b16 %v2695, %v2694
        %v2720 = vunpack.c.l.b16 %v2053
        %v2721 = vunpack.c.l.b16 %v2054
        %v2722 = vunpack.c.l.b16 %v2055
        %v2723 = vunpack.c.l.b16 %v2056
        %v2724 = vunpack.c.l.b16 %v2057
        %v2725 = vunpack.c.l.b16 %v2058
        %v2726 = vunpack.c.l.b16 %v2059
        %v2727 = vunpack.c.l.b16 %v2060
        %v2728 = vunpack.c.l.b16 %v2061
        %v2729 = vunpack.c.l.b16 %v2062
        %v2730 = vunpack.c.l.b16 %v2063
        %v2731 = vunpack.c.l.b16 %v2064
        %v2732 = vunpack.c.l.b16 %v2065
        %v2733 = vunpack.c.l.b16 %v2066
        %v2734 = vunpack.c.l.b16 %v2067
        %v2735 = vunpack.c.l.b16 %v2068
        %v2736 = vpack.c.b16 %v2721, %v2720
        %v2737 = vpack.c.b16 %v2723, %v2722
        %v2738 = vpack.c.b16 %v2725, %v2724
        %v2739 = vpack.c.b16 %v2727, %v2726
        %v2740 = vpack.c.b16 %v2729, %v2728
        %v2741 = vpack.c.b16 %v2731, %v2730
        %v2742 = vpack.c.b16 %v2733, %v2732
        %v2743 = vpack.c.b16 %v2735, %v2734
        %v2745 = vsel %vm2389, %v2696, 0
        %v2748 = vsel %vm2389, %v2697, 0
        %v2751 = vsel %vm2389, %v2698, 0
        %v2754 = vsel %vm2389, %v2699, 0
        %v2757 = vsel %vm2389, %v2700, 0
        %v2760 = vsel %vm2389, %v2701, 0
        %v2763 = vsel %vm2389, %v2702, 0
        %v2766 = vsel %vm2389, %v2703, 0
        %v2769 = vsel %vm2389, %v2736, 0
        %v2772 = vsel %vm2389, %v2737, 0
        %v2775 = vsel %vm2389, %v2738, 0
        %v2778 = vsel %vm2389, %v2739, 0
        %v2781 = vsel %vm2389, %v2740, 0
        %v2784 = vsel %vm2389, %v2741, 0
        %v2787 = vsel %vm2389, %v2742, 0
        %v2790 = vsel %vm2389, %v2743, 0
        %2792 = vmatpush.bf16.xpose.msra.mxu0 %v2790
        %2793 = vmatpush.bf16.xpose.msra.mxu0 %v2787
        %2794 = vmatpush.bf16.xpose.msra.mxu0 %v2784
        %2795 = vmatpush.bf16.xpose.msra.mxu0 %v2781
        %2796 = vmatpush.bf16.xpose.msra.mxu0 %v2778
        %2797 = vmatpush.bf16.xpose.msra.mxu0 %v2775
        %2798 = vmatpush.bf16.xpose.msra.mxu0 %v2772
        %2799 = vmatpush.bf16.xpose.msra.mxu0 %v2769
        %2800 = vmatmul.bf16.gmra.mxu0 %v2745
        %v2801 = vpop.f32.mrf.mxu0
        %v2802 = vadd.f32 0.0, %v2801
        %v2803 = vpop.f32.mrf.mxu0
        %v2804 = vadd.f32 0.0, %v2803
        %2805 = vmatmul.bf16.gmra.mxu0 %v2748
        %v2806 = vpop.f32.mrf.mxu0
        %v2807 = vadd.f32 0.0, %v2806
        %v2808 = vpop.f32.mrf.mxu0
        %v2809 = vadd.f32 0.0, %v2808
        %2810 = vmatmul.bf16.gmra.mxu0 %v2751
        %v2811 = vpop.f32.mrf.mxu0
        %v2812 = vadd.f32 0.0, %v2811
        %v2813 = vpop.f32.mrf.mxu0
        %v2814 = vadd.f32 0.0, %v2813
        %2815 = vmatmul.bf16.gmra.mxu0 %v2754
        %v2816 = vpop.f32.mrf.mxu0
        %v2817 = vadd.f32 0.0, %v2816
        %v2818 = vpop.f32.mrf.mxu0
        %v2819 = vadd.f32 0.0, %v2818
        %2820 = vmatmul.bf16.gmra.mxu0 %v2757
        %v2821 = vpop.f32.mrf.mxu0
        %v2822 = vadd.f32 0.0, %v2821
        %v2823 = vpop.f32.mrf.mxu0
        %v2824 = vadd.f32 0.0, %v2823
        %2825 = vmatmul.bf16.gmra.mxu0 %v2760
        %v2826 = vpop.f32.mrf.mxu0
        %v2827 = vadd.f32 0.0, %v2826
        %v2828 = vpop.f32.mrf.mxu0
        %v2829 = vadd.f32 0.0, %v2828
        %2830 = vmatmul.bf16.gmra.mxu0 %v2763
        %v2831 = vpop.f32.mrf.mxu0
        %v2832 = vadd.f32 0.0, %v2831
        %v2833 = vpop.f32.mrf.mxu0
        %v2834 = vadd.f32 0.0, %v2833
        %2835 = vmatmul.bf16.gmra.mxu0 %v2766
        %v2836 = vpop.f32.mrf.mxu0
        %v2837 = vadd.f32 0.0, %v2836
        %v2838 = vpop.f32.mrf.mxu0
        %v2839 = vadd.f32 0.0, %v2838
        %2840 = vdwg.mxu0
        %v2857 = vunpack.c.l.b16 %v1845
        %v2858 = vunpack.c.l.b16 %v1846
        %v2859 = vunpack.c.l.b16 %v1847
        %v2860 = vunpack.c.l.b16 %v1848
        %v2861 = vunpack.c.l.b16 %v1849
        %v2862 = vunpack.c.l.b16 %v1850
        %v2863 = vunpack.c.l.b16 %v1851
        %v2864 = vunpack.c.l.b16 %v1852
        %v2865 = vunpack.c.l.b16 %v1853
        %v2866 = vunpack.c.l.b16 %v1854
        %v2867 = vunpack.c.l.b16 %v1855
        %v2868 = vunpack.c.l.b16 %v1856
        %v2869 = vunpack.c.l.b16 %v1857
        %v2870 = vunpack.c.l.b16 %v1858
        %v2871 = vunpack.c.l.b16 %v1859
        %v2872 = vunpack.c.l.b16 %v1860
        %v2873 = vpack.c.b16 %v2858, %v2857
        %v2874 = vpack.c.b16 %v2860, %v2859
        %v2875 = vpack.c.b16 %v2862, %v2861
        %v2876 = vpack.c.b16 %v2864, %v2863
        %v2877 = vpack.c.b16 %v2866, %v2865
        %v2878 = vpack.c.b16 %v2868, %v2867
        %v2879 = vpack.c.b16 %v2870, %v2869
        %v2880 = vpack.c.b16 %v2872, %v2871
        %v2897 = vunpack.c.l.b16 %v2069
        %v2898 = vunpack.c.l.b16 %v2070
        %v2899 = vunpack.c.l.b16 %v2071
        %v2900 = vunpack.c.l.b16 %v2072
        %v2901 = vunpack.c.l.b16 %v2073
        %v2902 = vunpack.c.l.b16 %v2074
        %v2903 = vunpack.c.l.b16 %v2075
        %v2904 = vunpack.c.l.b16 %v2076
        %v2905 = vunpack.c.l.b16 %v2077
        %v2906 = vunpack.c.l.b16 %v2078
        %v2907 = vunpack.c.l.b16 %v2079
        %v2908 = vunpack.c.l.b16 %v2080
        %v2909 = vunpack.c.l.b16 %v2081
        %v2910 = vunpack.c.l.b16 %v2082
        %v2911 = vunpack.c.l.b16 %v2083
        %v2912 = vunpack.c.l.b16 %v2084
        %v2913 = vpack.c.b16 %v2898, %v2897
        %v2914 = vpack.c.b16 %v2900, %v2899
        %v2915 = vpack.c.b16 %v2902, %v2901
        %v2916 = vpack.c.b16 %v2904, %v2903
        %v2917 = vpack.c.b16 %v2906, %v2905
        %v2918 = vpack.c.b16 %v2908, %v2907
        %v2919 = vpack.c.b16 %v2910, %v2909
        %v2920 = vpack.c.b16 %v2912, %v2911
        %v2922 = vsel %vm2389, %v2873, 0
        %v2925 = vsel %vm2389, %v2874, 0
        %v2928 = vsel %vm2389, %v2875, 0
        %v2931 = vsel %vm2389, %v2876, 0
        %v2934 = vsel %vm2389, %v2877, 0
        %v2937 = vsel %vm2389, %v2878, 0
        %v2940 = vsel %vm2389, %v2879, 0
        %v2943 = vsel %vm2389, %v2880, 0
        %v2946 = vsel %vm2389, %v2913, 0
        %v2949 = vsel %vm2389, %v2914, 0
        %v2952 = vsel %vm2389, %v2915, 0
        %v2955 = vsel %vm2389, %v2916, 0
        %v2958 = vsel %vm2389, %v2917, 0
        %v2961 = vsel %vm2389, %v2918, 0
        %v2964 = vsel %vm2389, %v2919, 0
        %v2967 = vsel %vm2389, %v2920, 0
        %2969 = vmatpush.bf16.xpose.msra.mxu0 %v2967
        %2970 = vmatpush.bf16.xpose.msra.mxu0 %v2964
        %2971 = vmatpush.bf16.xpose.msra.mxu0 %v2961
        %2972 = vmatpush.bf16.xpose.msra.mxu0 %v2958
        %2973 = vmatpush.bf16.xpose.msra.mxu0 %v2955
        %2974 = vmatpush.bf16.xpose.msra.mxu0 %v2952
        %2975 = vmatpush.bf16.xpose.msra.mxu0 %v2949
        %2976 = vmatpush.bf16.xpose.msra.mxu0 %v2946
        %2977 = vmatmul.bf16.gmra.mxu0 %v2922
        %v2978 = vpop.f32.mrf.mxu0
        %v2979 = vadd.f32 0.0, %v2978
        %v2980 = vpop.f32.mrf.mxu0
        %v2981 = vadd.f32 0.0, %v2980
        %2982 = vmatmul.bf16.gmra.mxu0 %v2925
        %v2983 = vpop.f32.mrf.mxu0
        %v2984 = vadd.f32 0.0, %v2983
        %v2985 = vpop.f32.mrf.mxu0
        %v2986 = vadd.f32 0.0, %v2985
        %2987 = vmatmul.bf16.gmra.mxu0 %v2928
        %v2988 = vpop.f32.mrf.mxu0
        %v2989 = vadd.f32 0.0, %v2988
        %v2990 = vpop.f32.mrf.mxu0
        %v2991 = vadd.f32 0.0, %v2990
        %2992 = vmatmul.bf16.gmra.mxu0 %v2931
        %v2993 = vpop.f32.mrf.mxu0
        %v2994 = vadd.f32 0.0, %v2993
        %v2995 = vpop.f32.mrf.mxu0
        %v2996 = vadd.f32 0.0, %v2995
        %2997 = vmatmul.bf16.gmra.mxu0 %v2934
        %v2998 = vpop.f32.mrf.mxu0
        %v2999 = vadd.f32 0.0, %v2998
        %v3000 = vpop.f32.mrf.mxu0
        %v3001 = vadd.f32 0.0, %v3000
        %3002 = vmatmul.bf16.gmra.mxu0 %v2937
        %v3003 = vpop.f32.mrf.mxu0
        %v3004 = vadd.f32 0.0, %v3003
        %v3005 = vpop.f32.mrf.mxu0
        %v3006 = vadd.f32 0.0, %v3005
        %3007 = vmatmul.bf16.gmra.mxu0 %v2940
        %v3008 = vpop.f32.mrf.mxu0
        %v3009 = vadd.f32 0.0, %v3008
        %v3010 = vpop.f32.mrf.mxu0
        %v3011 = vadd.f32 0.0, %v3010
        %3012 = vmatmul.bf16.gmra.mxu0 %v2943
        %v3013 = vpop.f32.mrf.mxu0
        %v3014 = vadd.f32 0.0, %v3013
        %v3015 = vpop.f32.mrf.mxu0
        %v3016 = vadd.f32 0.0, %v3015
        %3017 = vdwg.mxu0
        %3018 = vmax.xlane.f32.xlu0 %v2448
        %v3019 = vpop.xlane.xlu0 %3018
        %3020 = vmax.xlane.f32.xlu0 %v2450
        %v3021 = vpop.xlane.xlu0 %3020
        %3022 = vmax.xlane.f32.xlu0 %v2453
        %v3023 = vpop.xlane.xlu0 %3022
        %3024 = vmax.xlane.f32.xlu0 %v2455
        %v3025 = vpop.xlane.xlu0 %3024
        %3026 = vmax.xlane.f32.xlu0 %v2458
        %v3027 = vpop.xlane.xlu0 %3026
        %3028 = vmax.xlane.f32.xlu0 %v2460
        %v3029 = vpop.xlane.xlu0 %3028
        %3030 = vmax.xlane.f32.xlu0 %v2463
        %v3031 = vpop.xlane.xlu0 %3030
        %3032 = vmax.xlane.f32.xlu0 %v2465
        %v3033 = vpop.xlane.xlu0 %3032
        %3034 = vmax.xlane.f32.xlu0 %v2468
        %v3035 = vpop.xlane.xlu0 %3034
        %3036 = vmax.xlane.f32.xlu0 %v2470
        %v3037 = vpop.xlane.xlu0 %3036
        %3038 = vmax.xlane.f32.xlu0 %v2473
        %v3039 = vpop.xlane.xlu0 %3038
        %3040 = vmax.xlane.f32.xlu0 %v2475
        %v3041 = vpop.xlane.xlu0 %3040
        %3042 = vmax.xlane.f32.xlu0 %v2478
        %v3043 = vpop.xlane.xlu0 %3042
        %3044 = vmax.xlane.f32.xlu0 %v2480
        %v3045 = vpop.xlane.xlu0 %3044
        %3046 = vmax.xlane.f32.xlu0 %v2483
        %v3047 = vpop.xlane.xlu0 %3046
        %3048 = vmax.xlane.f32.xlu0 %v2485
        %v3049 = vpop.xlane.xlu0 %3048
        %3050 = vmax.xlane.f32.xlu0 %v2625
        %v3051 = vpop.xlane.xlu0 %3050
        %3052 = vmax.xlane.f32.xlu0 %v2627
        %v3053 = vpop.xlane.xlu0 %3052
        %3054 = vmax.xlane.f32.xlu0 %v2630
        %v3055 = vpop.xlane.xlu0 %3054
        %3056 = vmax.xlane.f32.xlu0 %v2632
        %v3057 = vpop.xlane.xlu0 %3056
        %3058 = vmax.xlane.f32.xlu0 %v2635
        %v3059 = vpop.xlane.xlu0 %3058
        %3060 = vmax.xlane.f32.xlu0 %v2637
        %v3061 = vpop.xlane.xlu0 %3060
        %3062 = vmax.xlane.f32.xlu0 %v2640
        %v3063 = vpop.xlane.xlu0 %3062
        %3064 = vmax.xlane.f32.xlu0 %v2642
        %v3065 = vpop.xlane.xlu0 %3064
        %3066 = vmax.xlane.f32.xlu0 %v2645
        %v3067 = vpop.xlane.xlu0 %3066
        %3068 = vmax.xlane.f32.xlu0 %v2647
        %v3069 = vpop.xlane.xlu0 %3068
        %3070 = vmax.xlane.f32.xlu0 %v2650
        %v3071 = vpop.xlane.xlu0 %3070
        %3072 = vmax.xlane.f32.xlu0 %v2652
        %v3073 = vpop.xlane.xlu0 %3072
        %3074 = vmax.xlane.f32.xlu0 %v2655
        %v3075 = vpop.xlane.xlu0 %3074
        %3076 = vmax.xlane.f32.xlu0 %v2657
        %v3077 = vpop.xlane.xlu0 %3076
        %3078 = vmax.xlane.f32.xlu0 %v2660
        %v3079 = vpop.xlane.xlu0 %3078
        %3080 = vmax.xlane.f32.xlu0 %v2662
        %v3081 = vpop.xlane.xlu0 %3080
        %3082 = vmax.xlane.f32.xlu0 %v2802
        %v3083 = vpop.xlane.xlu0 %3082
        %3084 = vmax.xlane.f32.xlu0 %v2804
        %v3085 = vpop.xlane.xlu0 %3084
        %3086 = vmax.xlane.f32.xlu0 %v2807
        %v3087 = vpop.xlane.xlu0 %3086
        %3088 = vmax.xlane.f32.xlu0 %v2809
        %v3089 = vpop.xlane.xlu0 %3088
        %3090 = vmax.xlane.f32.xlu0 %v2812
        %v3091 = vpop.xlane.xlu0 %3090
        %3092 = vmax.xlane.f32.xlu0 %v2814
        %v3093 = vpop.xlane.xlu0 %3092
        %3094 = vmax.xlane.f32.xlu0 %v2817
        %v3095 = vpop.xlane.xlu0 %3094
        %3096 = vmax.xlane.f32.xlu0 %v2819
        %v3097 = vpop.xlane.xlu0 %3096
        %3098 = vmax.xlane.f32.xlu0 %v2822
        %v3099 = vpop.xlane.xlu0 %3098
        %3100 = vmax.xlane.f32.xlu0 %v2824
        %v3101 = vpop.xlane.xlu0 %3100
        %3102 = vmax.xlane.f32.xlu0 %v2827
        %v3103 = vpop.xlane.xlu0 %3102
        %3104 = vmax.xlane.f32.xlu0 %v2829
        %v3105 = vpop.xlane.xlu0 %3104
        %3106 = vmax.xlane.f32.xlu0 %v2832
        %v3107 = vpop.xlane.xlu0 %3106
        %3108 = vmax.xlane.f32.xlu0 %v2834
        %v3109 = vpop.xlane.xlu0 %3108
        %3110 = vmax.xlane.f32.xlu0 %v2837
        %v3111 = vpop.xlane.xlu0 %3110
        %3112 = vmax.xlane.f32.xlu0 %v2839
        %v3113 = vpop.xlane.xlu0 %3112
        %3114 = vmax.xlane.f32.xlu0 %v2979
        %v3115 = vpop.xlane.xlu0 %3114
        %3116 = vmax.xlane.f32.xlu0 %v2981
        %v3117 = vpop.xlane.xlu0 %3116
        %3118 = vmax.xlane.f32.xlu0 %v2984
        %v3119 = vpop.xlane.xlu0 %3118
        %3120 = vmax.xlane.f32.xlu0 %v2986
        %v3121 = vpop.xlane.xlu0 %3120
        %3122 = vmax.xlane.f32.xlu0 %v2989
        %v3123 = vpop.xlane.xlu0 %3122
        %3124 = vmax.xlane.f32.xlu0 %v2991
        %v3125 = vpop.xlane.xlu0 %3124
        %3126 = vmax.xlane.f32.xlu0 %v2994
        %v3127 = vpop.xlane.xlu0 %3126
        %3128 = vmax.xlane.f32.xlu0 %v2996
        %v3129 = vpop.xlane.xlu0 %3128
        %3130 = vmax.xlane.f32.xlu0 %v2999
        %v3131 = vpop.xlane.xlu0 %3130
        %3132 = vmax.xlane.f32.xlu0 %v3001
        %v3133 = vpop.xlane.xlu0 %3132
        %3134 = vmax.xlane.f32.xlu0 %v3004
        %v3135 = vpop.xlane.xlu0 %3134
        %3136 = vmax.xlane.f32.xlu0 %v3006
        %v3137 = vpop.xlane.xlu0 %3136
        %3138 = vmax.xlane.f32.xlu0 %v3009
        %v3139 = vpop.xlane.xlu0 %3138
        %3140 = vmax.xlane.f32.xlu0 %v3011
        %v3141 = vpop.xlane.xlu0 %3140
        %3142 = vmax.xlane.f32.xlu0 %v3014
        %v3143 = vpop.xlane.xlu0 %3142
        %3144 = vmax.xlane.f32.xlu0 %v3016
        %v3145 = vpop.xlane.xlu0 %3144
        %v3146 = vsub.f32 %v2448, %v3019
        %v3147 = vsub.f32 %v2450, %v3021
        %v3148 = vsub.f32 %v2453, %v3023
        %v3149 = vsub.f32 %v2455, %v3025
        %v3150 = vsub.f32 %v2458, %v3027
        %v3151 = vsub.f32 %v2460, %v3029
        %v3152 = vsub.f32 %v2463, %v3031
        %v3153 = vsub.f32 %v2465, %v3033
        %v3154 = vsub.f32 %v2468, %v3035
        %v3155 = vsub.f32 %v2470, %v3037
        %v3156 = vsub.f32 %v2473, %v3039
        %v3157 = vsub.f32 %v2475, %v3041
        %v3158 = vsub.f32 %v2478, %v3043
        %v3159 = vsub.f32 %v2480, %v3045
        %v3160 = vsub.f32 %v2483, %v3047
        %v3161 = vsub.f32 %v2485, %v3049
        %v3162 = vsub.f32 %v2625, %v3051
        %v3163 = vsub.f32 %v2627, %v3053
        %v3164 = vsub.f32 %v2630, %v3055
        %v3165 = vsub.f32 %v2632, %v3057
        %v3166 = vsub.f32 %v2635, %v3059
        %v3167 = vsub.f32 %v2637, %v3061
        %v3168 = vsub.f32 %v2640, %v3063
        %v3169 = vsub.f32 %v2642, %v3065
        %v3170 = vsub.f32 %v2645, %v3067
        %v3171 = vsub.f32 %v2647, %v3069
        %v3172 = vsub.f32 %v2650, %v3071
        %v3173 = vsub.f32 %v2652, %v3073
        %v3174 = vsub.f32 %v2655, %v3075
        %v3175 = vsub.f32 %v2657, %v3077
        %v3176 = vsub.f32 %v2660, %v3079
        %v3177 = vsub.f32 %v2662, %v3081
        %v3178 = vsub.f32 %v2802, %v3083
        %v3179 = vsub.f32 %v2804, %v3085
        %v3180 = vsub.f32 %v2807, %v3087
        %v3181 = vsub.f32 %v2809, %v3089
        %v3182 = vsub.f32 %v2812, %v3091
        %v3183 = vsub.f32 %v2814, %v3093
        %v3184 = vsub.f32 %v2817, %v3095
        %v3185 = vsub.f32 %v2819, %v3097
        %v3186 = vsub.f32 %v2822, %v3099
        %v3187 = vsub.f32 %v2824, %v3101
        %v3188 = vsub.f32 %v2827, %v3103
        %v3189 = vsub.f32 %v2829, %v3105
        %v3190 = vsub.f32 %v2832, %v3107
        %v3191 = vsub.f32 %v2834, %v3109
        %v3192 = vsub.f32 %v2837, %v3111
        %v3193 = vsub.f32 %v2839, %v3113
        %v3194 = vsub.f32 %v2979, %v3115
        %v3195 = vsub.f32 %v2981, %v3117
        %v3196 = vsub.f32 %v2984, %v3119
        %v3197 = vsub.f32 %v2986, %v3121
        %v3198 = vsub.f32 %v2989, %v3123
        %v3199 = vsub.f32 %v2991, %v3125
        %v3200 = vsub.f32 %v2994, %v3127
        %v3201 = vsub.f32 %v2996, %v3129
        %v3202 = vsub.f32 %v2999, %v3131
        %v3203 = vsub.f32 %v3001, %v3133
        %v3204 = vsub.f32 %v3004, %v3135
        %v3205 = vsub.f32 %v3006, %v3137
        %v3206 = vsub.f32 %v3009, %v3139
        %v3207 = vsub.f32 %v3011, %v3141
        %v3208 = vsub.f32 %v3014, %v3143
        %v3209 = vsub.f32 %v3016, %v3145
        %v3210 = vmul.f32 %v3146, 1.442695
        %v3211 = vpow.pop %v3210
        %v3212 = vmul.f32 %v3147, 1.442695
        %v3213 = vpow.pop %v3212
        %v3214 = vmul.f32 %v3148, 1.442695
        %v3215 = vpow.pop %v3214
        %v3216 = vmul.f32 %v3149, 1.442695
        %v3217 = vpow.pop %v3216
        %v3218 = vmul.f32 %v3150, 1.442695
        %v3219 = vpow.pop %v3218
        %v3220 = vmul.f32 %v3151, 1.442695
        %v3221 = vpow.pop %v3220
        %v3222 = vmul.f32 %v3152, 1.442695
        %v3223 = vpow.pop %v3222
        %v3224 = vmul.f32 %v3153, 1.442695
        %v3225 = vpow.pop %v3224
        %v3226 = vmul.f32 %v3154, 1.442695
        %v3227 = vpow.pop %v3226
        %v3228 = vmul.f32 %v3155, 1.442695
        %v3229 = vpow.pop %v3228
        %v3230 = vmul.f32 %v3156, 1.442695
        %v3231 = vpow.pop %v3230
        %v3232 = vmul.f32 %v3157, 1.442695
        %v3233 = vpow.pop %v3232
        %v3234 = vmul.f32 %v3158, 1.442695
        %v3235 = vpow.pop %v3234
        %v3236 = vmul.f32 %v3159, 1.442695
        %v3237 = vpow.pop %v3236
        %v3238 = vmul.f32 %v3160, 1.442695
        %v3239 = vpow.pop %v3238
        %v3240 = vmul.f32 %v3161, 1.442695
        %v3241 = vpow.pop %v3240
        %v3242 = vmul.f32 %v3162, 1.442695
        %v3243 = vpow.pop %v3242
        %v3244 = vmul.f32 %v3163, 1.442695
        %v3245 = vpow.pop %v3244
        %v3246 = vmul.f32 %v3164, 1.442695
        %v3247 = vpow.pop %v3246
        %v3248 = vmul.f32 %v3165, 1.442695
        %v3249 = vpow.pop %v3248
        %v3250 = vmul.f32 %v3166, 1.442695
        %v3251 = vpow.pop %v3250
        %v3252 = vmul.f32 %v3167, 1.442695
        %v3253 = vpow.pop %v3252
        %v3254 = vmul.f32 %v3168, 1.442695
        %v3255 = vpow.pop %v3254
        %v3256 = vmul.f32 %v3169, 1.442695
        %v3257 = vpow.pop %v3256
        %v3258 = vmul.f32 %v3170, 1.442695
        %v3259 = vpow.pop %v3258
        %v3260 = vmul.f32 %v3171, 1.442695
        %v3261 = vpow.pop %v3260
        %v3262 = vmul.f32 %v3172, 1.442695
        %v3263 = vpow.pop %v3262
        %v3264 = vmul.f32 %v3173, 1.442695
        %v3265 = vpow.pop %v3264
        %v3266 = vmul.f32 %v3174, 1.442695
        %v3267 = vpow.pop %v3266
        %v3268 = vmul.f32 %v3175, 1.442695
        %v3269 = vpow.pop %v3268
        %v3270 = vmul.f32 %v3176, 1.442695
        %v3271 = vpow.pop %v3270
        %v3272 = vmul.f32 %v3177, 1.442695
        %v3273 = vpow.pop %v3272
        %v3274 = vmul.f32 %v3178, 1.442695
        %v3275 = vpow.pop %v3274
        %v3276 = vmul.f32 %v3179, 1.442695
        %v3277 = vpow.pop %v3276
        %v3278 = vmul.f32 %v3180, 1.442695
        %v3279 = vpow.pop %v3278
        %v3280 = vmul.f32 %v3181, 1.442695
        %v3281 = vpow.pop %v3280
        %v3282 = vmul.f32 %v3182, 1.442695
        %v3283 = vpow.pop %v3282
        %v3284 = vmul.f32 %v3183, 1.442695
        %v3285 = vpow.pop %v3284
        %v3286 = vmul.f32 %v3184, 1.442695
        %v3287 = vpow.pop %v3286
        %v3288 = vmul.f32 %v3185, 1.442695
        %v3289 = vpow.pop %v3288
        %v3290 = vmul.f32 %v3186, 1.442695
        %v3291 = vpow.pop %v3290
        %v3292 = vmul.f32 %v3187, 1.442695
        %v3293 = vpow.pop %v3292
        %v3294 = vmul.f32 %v3188, 1.442695
        %v3295 = vpow.pop %v3294
        %v3296 = vmul.f32 %v3189, 1.442695
        %v3297 = vpow.pop %v3296
        %v3298 = vmul.f32 %v3190, 1.442695
        %v3299 = vpow.pop %v3298
        %v3300 = vmul.f32 %v3191, 1.442695
        %v3301 = vpow.pop %v3300
        %v3302 = vmul.f32 %v3192, 1.442695
        %v3303 = vpow.pop %v3302
        %v3304 = vmul.f32 %v3193, 1.442695
        %v3305 = vpow.pop %v3304
        %v3306 = vmul.f32 %v3194, 1.442695
        %v3307 = vpow.pop %v3306
        %v3308 = vmul.f32 %v3195, 1.442695
        %v3309 = vpow.pop %v3308
        %v3310 = vmul.f32 %v3196, 1.442695
        %v3311 = vpow.pop %v3310
        %v3312 = vmul.f32 %v3197, 1.442695
        %v3313 = vpow.pop %v3312
        %v3314 = vmul.f32 %v3198, 1.442695
        %v3315 = vpow.pop %v3314
        %v3316 = vmul.f32 %v3199, 1.442695
        %v3317 = vpow.pop %v3316
        %v3318 = vmul.f32 %v3200, 1.442695
        %v3319 = vpow.pop %v3318
        %v3320 = vmul.f32 %v3201, 1.442695
        %v3321 = vpow.pop %v3320
        %v3322 = vmul.f32 %v3202, 1.442695
        %v3323 = vpow.pop %v3322
        %v3324 = vmul.f32 %v3203, 1.442695
        %v3325 = vpow.pop %v3324
        %v3326 = vmul.f32 %v3204, 1.442695
        %v3327 = vpow.pop %v3326
        %v3328 = vmul.f32 %v3205, 1.442695
        %v3329 = vpow.pop %v3328
        %v3330 = vmul.f32 %v3206, 1.442695
        %v3331 = vpow.pop %v3330
        %v3332 = vmul.f32 %v3207, 1.442695
        %v3333 = vpow.pop %v3332
        %v3334 = vmul.f32 %v3208, 1.442695
        %v3335 = vpow.pop %v3334
        %v3336 = vmul.f32 %v3209, 1.442695
        %v3337 = vpow.pop %v3336
        %3338 = vadd.xlane.f32.xlu0 %v3211
        %v3339 = vpop.xlane.xlu0 %3338
        %3340 = vadd.xlane.f32.xlu0 %v3213
        %v3341 = vpop.xlane.xlu0 %3340
        %3342 = vadd.xlane.f32.xlu0 %v3215
        %v3343 = vpop.xlane.xlu0 %3342
        %3344 = vadd.xlane.f32.xlu0 %v3217
        %v3345 = vpop.xlane.xlu0 %3344
        %3346 = vadd.xlane.f32.xlu0 %v3219
        %v3347 = vpop.xlane.xlu0 %3346
        %3348 = vadd.xlane.f32.xlu0 %v3221
        %v3349 = vpop.xlane.xlu0 %3348
        %3350 = vadd.xlane.f32.xlu0 %v3223
        %v3351 = vpop.xlane.xlu0 %3350
        %3352 = vadd.xlane.f32.xlu0 %v3225
        %v3353 = vpop.xlane.xlu0 %3352
        %3354 = vadd.xlane.f32.xlu0 %v3227
        %v3355 = vpop.xlane.xlu0 %3354
        %3356 = vadd.xlane.f32.xlu0 %v3229
        %v3357 = vpop.xlane.xlu0 %3356
        %3358 = vadd.xlane.f32.xlu0 %v3231
        %v3359 = vpop.xlane.xlu0 %3358
        %3360 = vadd.xlane.f32.xlu0 %v3233
        %v3361 = vpop.xlane.xlu0 %3360
        %3362 = vadd.xlane.f32.xlu0 %v3235
        %v3363 = vpop.xlane.xlu0 %3362
        %3364 = vadd.xlane.f32.xlu0 %v3237
        %v3365 = vpop.xlane.xlu0 %3364
        %3366 = vadd.xlane.f32.xlu0 %v3239
        %v3367 = vpop.xlane.xlu0 %3366
        %3368 = vadd.xlane.f32.xlu0 %v3241
        %v3369 = vpop.xlane.xlu0 %3368
        %3370 = vadd.xlane.f32.xlu0 %v3243
        %v3371 = vpop.xlane.xlu0 %3370
        %3372 = vadd.xlane.f32.xlu0 %v3245
        %v3373 = vpop.xlane.xlu0 %3372
        %3374 = vadd.xlane.f32.xlu0 %v3247
        %v3375 = vpop.xlane.xlu0 %3374
        %3376 = vadd.xlane.f32.xlu0 %v3249
        %v3377 = vpop.xlane.xlu0 %3376
        %3378 = vadd.xlane.f32.xlu0 %v3251
        %v3379 = vpop.xlane.xlu0 %3378
        %3380 = vadd.xlane.f32.xlu0 %v3253
        %v3381 = vpop.xlane.xlu0 %3380
        %3382 = vadd.xlane.f32.xlu0 %v3255
        %v3383 = vpop.xlane.xlu0 %3382
        %3384 = vadd.xlane.f32.xlu0 %v3257
        %v3385 = vpop.xlane.xlu0 %3384
        %3386 = vadd.xlane.f32.xlu0 %v3259
        %v3387 = vpop.xlane.xlu0 %3386
        %3388 = vadd.xlane.f32.xlu0 %v3261
        %v3389 = vpop.xlane.xlu0 %3388
        %3390 = vadd.xlane.f32.xlu0 %v3263
        %v3391 = vpop.xlane.xlu0 %3390
        %3392 = vadd.xlane.f32.xlu0 %v3265
        %v3393 = vpop.xlane.xlu0 %3392
        %3394 = vadd.xlane.f32.xlu0 %v3267
        %v3395 = vpop.xlane.xlu0 %3394
        %3396 = vadd.xlane.f32.xlu0 %v3269
        %v3397 = vpop.xlane.xlu0 %3396
        %3398 = vadd.xlane.f32.xlu0 %v3271
        %v3399 = vpop.xlane.xlu0 %3398
        %3400 = vadd.xlane.f32.xlu0 %v3273
        %v3401 = vpop.xlane.xlu0 %3400
        %3402 = vadd.xlane.f32.xlu0 %v3275
        %v3403 = vpop.xlane.xlu0 %3402
        %3404 = vadd.xlane.f32.xlu0 %v3277
        %v3405 = vpop.xlane.xlu0 %3404
        %3406 = vadd.xlane.f32.xlu0 %v3279
        %v3407 = vpop.xlane.xlu0 %3406
        %3408 = vadd.xlane.f32.xlu0 %v3281
        %v3409 = vpop.xlane.xlu0 %3408
        %3410 = vadd.xlane.f32.xlu0 %v3283
        %v3411 = vpop.xlane.xlu0 %3410
        %3412 = vadd.xlane.f32.xlu0 %v3285
        %v3413 = vpop.xlane.xlu0 %3412
        %3414 = vadd.xlane.f32.xlu0 %v3287
        %v3415 = vpop.xlane.xlu0 %3414
        %3416 = vadd.xlane.f32.xlu0 %v3289
        %v3417 = vpop.xlane.xlu0 %3416
        %3418 = vadd.xlane.f32.xlu0 %v3291
        %v3419 = vpop.xlane.xlu0 %3418
        %3420 = vadd.xlane.f32.xlu0 %v3293
        %v3421 = vpop.xlane.xlu0 %3420
        %3422 = vadd.xlane.f32.xlu0 %v3295
        %v3423 = vpop.xlane.xlu0 %3422
        %3424 = vadd.xlane.f32.xlu0 %v3297
        %v3425 = vpop.xlane.xlu0 %3424
        %3426 = vadd.xlane.f32.xlu0 %v3299
        %v3427 = vpop.xlane.xlu0 %3426
        %3428 = vadd.xlane.f32.xlu0 %v3301
        %v3429 = vpop.xlane.xlu0 %3428
        %3430 = vadd.xlane.f32.xlu0 %v3303
        %v3431 = vpop.xlane.xlu0 %3430
        %3432 = vadd.xlane.f32.xlu0 %v3305
        %v3433 = vpop.xlane.xlu0 %3432
        %3434 = vadd.xlane.f32.xlu0 %v3307
        %v3435 = vpop.xlane.xlu0 %3434
        %3436 = vadd.xlane.f32.xlu0 %v3309
        %v3437 = vpop.xlane.xlu0 %3436
        %3438 = vadd.xlane.f32.xlu0 %v3311
        %v3439 = vpop.xlane.xlu0 %3438
        %3440 = vadd.xlane.f32.xlu0 %v3313
        %v3441 = vpop.xlane.xlu0 %3440
        %3442 = vadd.xlane.f32.xlu0 %v3315
        %v3443 = vpop.xlane.xlu0 %3442
        %3444 = vadd.xlane.f32.xlu0 %v3317
        %v3445 = vpop.xlane.xlu0 %3444
        %3446 = vadd.xlane.f32.xlu0 %v3319
        %v3447 = vpop.xlane.xlu0 %3446
        %3448 = vadd.xlane.f32.xlu0 %v3321
        %v3449 = vpop.xlane.xlu0 %3448
        %3450 = vadd.xlane.f32.xlu0 %v3323
        %v3451 = vpop.xlane.xlu0 %3450
        %3452 = vadd.xlane.f32.xlu0 %v3325
        %v3453 = vpop.xlane.xlu0 %3452
        %3454 = vadd.xlane.f32.xlu0 %v3327
        %v3455 = vpop.xlane.xlu0 %3454
        %3456 = vadd.xlane.f32.xlu0 %v3329
        %v3457 = vpop.xlane.xlu0 %3456
        %3458 = vadd.xlane.f32.xlu0 %v3331
        %v3459 = vpop.xlane.xlu0 %3458
        %3460 = vadd.xlane.f32.xlu0 %v3333
        %v3461 = vpop.xlane.xlu0 %3460
        %3462 = vadd.xlane.f32.xlu0 %v3335
        %v3463 = vpop.xlane.xlu0 %3462
        %3464 = vadd.xlane.f32.xlu0 %v3337
        %v3465 = vpop.xlane.xlu0 %3464
        %v3466 = vrcp.pop %v3339
        %v3467 = vmul.f32 %v3339, %v3466
        %v3468 = vsub.f32 1.0, %v3467
        %v3469 = vmul.f32 %v3466, %v3468
        %v3470 = vadd.f32 %v3466, %v3469
        %vm3471 = vweird.f32 %v3339
        %vm3472 = vweird.f32 %v3466
        %vm3473 = vmor %vm3471, %vm3472
        %v3474 = vsel %vm3473, %v3466, %v3470
        %v3475 = vand.u32 2147483647, %v3339
        %vm3476 = vcmp.eq.f32.partialorder %v3475, 8.507059e+37
        %v3477 = vand.u32 %v3339, 2147483648
        %v3478 = vor.u32 1.1754944e-38, %v3477
        %v3479 = vsel %vm3476, %v3478, %v3474
        %v3480 = vmul.f32 %v3211, %v3479
        %v3481 = vrcp.pop %v3341
        %v3482 = vmul.f32 %v3341, %v3481
        %v3483 = vsub.f32 1.0, %v3482
        %v3484 = vmul.f32 %v3481, %v3483
        %v3485 = vadd.f32 %v3481, %v3484
        %vm3486 = vweird.f32 %v3341
        %vm3487 = vweird.f32 %v3481
        %vm3488 = vmor %vm3486, %vm3487
        %v3489 = vsel %vm3488, %v3481, %v3485
        %v3490 = vand.u32 2147483647, %v3341
        %vm3491 = vcmp.eq.f32.partialorder %v3490, 8.507059e+37
        %v3492 = vand.u32 %v3341, 2147483648
        %v3493 = vor.u32 1.1754944e-38, %v3492
        %v3494 = vsel %vm3491, %v3493, %v3489
        %v3495 = vmul.f32 %v3213, %v3494
        %v3496 = vrcp.pop %v3343
        %v3497 = vmul.f32 %v3343, %v3496
        %v3498 = vsub.f32 1.0, %v3497
        %v3499 = vmul.f32 %v3496, %v3498
        %v3500 = vadd.f32 %v3496, %v3499
        %vm3501 = vweird.f32 %v3343
        %vm3502 = vweird.f32 %v3496
        %vm3503 = vmor %vm3501, %vm3502
        %v3504 = vsel %vm3503, %v3496, %v3500
        %v3505 = vand.u32 2147483647, %v3343
        %vm3506 = vcmp.eq.f32.partialorder %v3505, 8.507059e+37
        %v3507 = vand.u32 %v3343, 2147483648
        %v3508 = vor.u32 1.1754944e-38, %v3507
        %v3509 = vsel %vm3506, %v3508, %v3504
        %v3510 = vmul.f32 %v3215, %v3509
        %v3511 = vrcp.pop %v3345
        %v3512 = vmul.f32 %v3345, %v3511
        %v3513 = vsub.f32 1.0, %v3512
        %v3514 = vmul.f32 %v3511, %v3513
        %v3515 = vadd.f32 %v3511, %v3514
        %vm3516 = vweird.f32 %v3345
        %vm3517 = vweird.f32 %v3511
        %vm3518 = vmor %vm3516, %vm3517
        %v3519 = vsel %vm3518, %v3511, %v3515
        %v3520 = vand.u32 2147483647, %v3345
        %vm3521 = vcmp.eq.f32.partialorder %v3520, 8.507059e+37
        %v3522 = vand.u32 %v3345, 2147483648
        %v3523 = vor.u32 1.1754944e-38, %v3522
        %v3524 = vsel %vm3521, %v3523, %v3519
        %v3525 = vmul.f32 %v3217, %v3524
        %v3526 = vrcp.pop %v3347
        %v3527 = vmul.f32 %v3347, %v3526
        %v3528 = vsub.f32 1.0, %v3527
        %v3529 = vmul.f32 %v3526, %v3528
        %v3530 = vadd.f32 %v3526, %v3529
        %vm3531 = vweird.f32 %v3347
        %vm3532 = vweird.f32 %v3526
        %vm3533 = vmor %vm3531, %vm3532
        %v3534 = vsel %vm3533, %v3526, %v3530
        %v3535 = vand.u32 2147483647, %v3347
        %vm3536 = vcmp.eq.f32.partialorder %v3535, 8.507059e+37
        %v3537 = vand.u32 %v3347, 2147483648
        %v3538 = vor.u32 1.1754944e-38, %v3537
        %v3539 = vsel %vm3536, %v3538, %v3534
        %v3540 = vmul.f32 %v3219, %v3539
        %v3541 = vrcp.pop %v3349
        %v3542 = vmul.f32 %v3349, %v3541
        %v3543 = vsub.f32 1.0, %v3542
        %v3544 = vmul.f32 %v3541, %v3543
        %v3545 = vadd.f32 %v3541, %v3544
        %vm3546 = vweird.f32 %v3349
        %vm3547 = vweird.f32 %v3541
        %vm3548 = vmor %vm3546, %vm3547
        %v3549 = vsel %vm3548, %v3541, %v3545
        %v3550 = vand.u32 2147483647, %v3349
        %vm3551 = vcmp.eq.f32.partialorder %v3550, 8.507059e+37
        %v3552 = vand.u32 %v3349, 2147483648
        %v3553 = vor.u32 1.1754944e-38, %v3552
        %v3554 = vsel %vm3551, %v3553, %v3549
        %v3555 = vmul.f32 %v3221, %v3554
        %v3556 = vrcp.pop %v3351
        %v3557 = vmul.f32 %v3351, %v3556
        %v3558 = vsub.f32 1.0, %v3557
        %v3559 = vmul.f32 %v3556, %v3558
        %v3560 = vadd.f32 %v3556, %v3559
        %vm3561 = vweird.f32 %v3351
        %vm3562 = vweird.f32 %v3556
        %vm3563 = vmor %vm3561, %vm3562
        %v3564 = vsel %vm3563, %v3556, %v3560
        %v3565 = vand.u32 2147483647, %v3351
        %vm3566 = vcmp.eq.f32.partialorder %v3565, 8.507059e+37
        %v3567 = vand.u32 %v3351, 2147483648
        %v3568 = vor.u32 1.1754944e-38, %v3567
        %v3569 = vsel %vm3566, %v3568, %v3564
        %v3570 = vmul.f32 %v3223, %v3569
        %v3571 = vrcp.pop %v3353
        %v3572 = vmul.f32 %v3353, %v3571
        %v3573 = vsub.f32 1.0, %v3572
        %v3574 = vmul.f32 %v3571, %v3573
        %v3575 = vadd.f32 %v3571, %v3574
        %vm3576 = vweird.f32 %v3353
        %vm3577 = vweird.f32 %v3571
        %vm3578 = vmor %vm3576, %vm3577
        %v3579 = vsel %vm3578, %v3571, %v3575
        %v3580 = vand.u32 2147483647, %v3353
        %vm3581 = vcmp.eq.f32.partialorder %v3580, 8.507059e+37
        %v3582 = vand.u32 %v3353, 2147483648
        %v3583 = vor.u32 1.1754944e-38, %v3582
        %v3584 = vsel %vm3581, %v3583, %v3579
        %v3585 = vmul.f32 %v3225, %v3584
        %v3586 = vrcp.pop %v3355
        %v3587 = vmul.f32 %v3355, %v3586
        %v3588 = vsub.f32 1.0, %v3587
        %v3589 = vmul.f32 %v3586, %v3588
        %v3590 = vadd.f32 %v3586, %v3589
        %vm3591 = vweird.f32 %v3355
        %vm3592 = vweird.f32 %v3586
        %vm3593 = vmor %vm3591, %vm3592
        %v3594 = vsel %vm3593, %v3586, %v3590
        %v3595 = vand.u32 2147483647, %v3355
        %vm3596 = vcmp.eq.f32.partialorder %v3595, 8.507059e+37
        %v3597 = vand.u32 %v3355, 2147483648
        %v3598 = vor.u32 1.1754944e-38, %v3597
        %v3599 = vsel %vm3596, %v3598, %v3594
        %v3600 = vmul.f32 %v3227, %v3599
        %v3601 = vrcp.pop %v3357
        %v3602 = vmul.f32 %v3357, %v3601
        %v3603 = vsub.f32 1.0, %v3602
        %v3604 = vmul.f32 %v3601, %v3603
        %v3605 = vadd.f32 %v3601, %v3604
        %vm3606 = vweird.f32 %v3357
        %vm3607 = vweird.f32 %v3601
        %vm3608 = vmor %vm3606, %vm3607
        %v3609 = vsel %vm3608, %v3601, %v3605
        %v3610 = vand.u32 2147483647, %v3357
        %vm3611 = vcmp.eq.f32.partialorder %v3610, 8.507059e+37
        %v3612 = vand.u32 %v3357, 2147483648
        %v3613 = vor.u32 1.1754944e-38, %v3612
        %v3614 = vsel %vm3611, %v3613, %v3609
        %v3615 = vmul.f32 %v3229, %v3614
        %v3616 = vrcp.pop %v3359
        %v3617 = vmul.f32 %v3359, %v3616
        %v3618 = vsub.f32 1.0, %v3617
        %v3619 = vmul.f32 %v3616, %v3618
        %v3620 = vadd.f32 %v3616, %v3619
        %vm3621 = vweird.f32 %v3359
        %vm3622 = vweird.f32 %v3616
        %vm3623 = vmor %vm3621, %vm3622
        %v3624 = vsel %vm3623, %v3616, %v3620
        %v3625 = vand.u32 2147483647, %v3359
        %vm3626 = vcmp.eq.f32.partialorder %v3625, 8.507059e+37
        %v3627 = vand.u32 %v3359, 2147483648
        %v3628 = vor.u32 1.1754944e-38, %v3627
        %v3629 = vsel %vm3626, %v3628, %v3624
        %v3630 = vmul.f32 %v3231, %v3629
        %v3631 = vrcp.pop %v3361
        %v3632 = vmul.f32 %v3361, %v3631
        %v3633 = vsub.f32 1.0, %v3632
        %v3634 = vmul.f32 %v3631, %v3633
        %v3635 = vadd.f32 %v3631, %v3634
        %vm3636 = vweird.f32 %v3361
        %vm3637 = vweird.f32 %v3631
        %vm3638 = vmor %vm3636, %vm3637
        %v3639 = vsel %vm3638, %v3631, %v3635
        %v3640 = vand.u32 2147483647, %v3361
        %vm3641 = vcmp.eq.f32.partialorder %v3640, 8.507059e+37
        %v3642 = vand.u32 %v3361, 2147483648
        %v3643 = vor.u32 1.1754944e-38, %v3642
        %v3644 = vsel %vm3641, %v3643, %v3639
        %v3645 = vmul.f32 %v3233, %v3644
        %v3646 = vrcp.pop %v3363
        %v3647 = vmul.f32 %v3363, %v3646
        %v3648 = vsub.f32 1.0, %v3647
        %v3649 = vmul.f32 %v3646, %v3648
        %v3650 = vadd.f32 %v3646, %v3649
        %vm3651 = vweird.f32 %v3363
        %vm3652 = vweird.f32 %v3646
        %vm3653 = vmor %vm3651, %vm3652
        %v3654 = vsel %vm3653, %v3646, %v3650
        %v3655 = vand.u32 2147483647, %v3363
        %vm3656 = vcmp.eq.f32.partialorder %v3655, 8.507059e+37
        %v3657 = vand.u32 %v3363, 2147483648
        %v3658 = vor.u32 1.1754944e-38, %v3657
        %v3659 = vsel %vm3656, %v3658, %v3654
        %v3660 = vmul.f32 %v3235, %v3659
        %v3661 = vrcp.pop %v3365
        %v3662 = vmul.f32 %v3365, %v3661
        %v3663 = vsub.f32 1.0, %v3662
        %v3664 = vmul.f32 %v3661, %v3663
        %v3665 = vadd.f32 %v3661, %v3664
        %vm3666 = vweird.f32 %v3365
        %vm3667 = vweird.f32 %v3661
        %vm3668 = vmor %vm3666, %vm3667
        %v3669 = vsel %vm3668, %v3661, %v3665
        %v3670 = vand.u32 2147483647, %v3365
        %vm3671 = vcmp.eq.f32.partialorder %v3670, 8.507059e+37
        %v3672 = vand.u32 %v3365, 2147483648
        %v3673 = vor.u32 1.1754944e-38, %v3672
        %v3674 = vsel %vm3671, %v3673, %v3669
        %v3675 = vmul.f32 %v3237, %v3674
        %v3676 = vrcp.pop %v3367
        %v3677 = vmul.f32 %v3367, %v3676
        %v3678 = vsub.f32 1.0, %v3677
        %v3679 = vmul.f32 %v3676, %v3678
        %v3680 = vadd.f32 %v3676, %v3679
        %vm3681 = vweird.f32 %v3367
        %vm3682 = vweird.f32 %v3676
        %vm3683 = vmor %vm3681, %vm3682
        %v3684 = vsel %vm3683, %v3676, %v3680
        %v3685 = vand.u32 2147483647, %v3367
        %vm3686 = vcmp.eq.f32.partialorder %v3685, 8.507059e+37
        %v3687 = vand.u32 %v3367, 2147483648
        %v3688 = vor.u32 1.1754944e-38, %v3687
        %v3689 = vsel %vm3686, %v3688, %v3684
        %v3690 = vmul.f32 %v3239, %v3689
        %v3691 = vrcp.pop %v3369
        %v3692 = vmul.f32 %v3369, %v3691
        %v3693 = vsub.f32 1.0, %v3692
        %v3694 = vmul.f32 %v3691, %v3693
        %v3695 = vadd.f32 %v3691, %v3694
        %vm3696 = vweird.f32 %v3369
        %vm3697 = vweird.f32 %v3691
        %vm3698 = vmor %vm3696, %vm3697
        %v3699 = vsel %vm3698, %v3691, %v3695
        %v3700 = vand.u32 2147483647, %v3369
        %vm3701 = vcmp.eq.f32.partialorder %v3700, 8.507059e+37
        %v3702 = vand.u32 %v3369, 2147483648
        %v3703 = vor.u32 1.1754944e-38, %v3702
        %v3704 = vsel %vm3701, %v3703, %v3699
        %v3705 = vmul.f32 %v3241, %v3704
        %v3706 = vrcp.pop %v3371
        %v3707 = vmul.f32 %v3371, %v3706
        %v3708 = vsub.f32 1.0, %v3707
        %v3709 = vmul.f32 %v3706, %v3708
        %v3710 = vadd.f32 %v3706, %v3709
        %vm3711 = vweird.f32 %v3371
        %vm3712 = vweird.f32 %v3706
        %vm3713 = vmor %vm3711, %vm3712
        %v3714 = vsel %vm3713, %v3706, %v3710
        %v3715 = vand.u32 2147483647, %v3371
        %vm3716 = vcmp.eq.f32.partialorder %v3715, 8.507059e+37
        %v3717 = vand.u32 %v3371, 2147483648
        %v3718 = vor.u32 1.1754944e-38, %v3717
        %v3719 = vsel %vm3716, %v3718, %v3714
        %v3720 = vmul.f32 %v3243, %v3719
        %v3721 = vrcp.pop %v3373
        %v3722 = vmul.f32 %v3373, %v3721
        %v3723 = vsub.f32 1.0, %v3722
        %v3724 = vmul.f32 %v3721, %v3723
        %v3725 = vadd.f32 %v3721, %v3724
        %vm3726 = vweird.f32 %v3373
        %vm3727 = vweird.f32 %v3721
        %vm3728 = vmor %vm3726, %vm3727
        %v3729 = vsel %vm3728, %v3721, %v3725
        %v3730 = vand.u32 2147483647, %v3373
        %vm3731 = vcmp.eq.f32.partialorder %v3730, 8.507059e+37
        %v3732 = vand.u32 %v3373, 2147483648
        %v3733 = vor.u32 1.1754944e-38, %v3732
        %v3734 = vsel %vm3731, %v3733, %v3729
        %v3735 = vmul.f32 %v3245, %v3734
        %v3736 = vrcp.pop %v3375
        %v3737 = vmul.f32 %v3375, %v3736
        %v3738 = vsub.f32 1.0, %v3737
        %v3739 = vmul.f32 %v3736, %v3738
        %v3740 = vadd.f32 %v3736, %v3739
        %vm3741 = vweird.f32 %v3375
        %vm3742 = vweird.f32 %v3736
        %vm3743 = vmor %vm3741, %vm3742
        %v3744 = vsel %vm3743, %v3736, %v3740
        %v3745 = vand.u32 2147483647, %v3375
        %vm3746 = vcmp.eq.f32.partialorder %v3745, 8.507059e+37
        %v3747 = vand.u32 %v3375, 2147483648
        %v3748 = vor.u32 1.1754944e-38, %v3747
        %v3749 = vsel %vm3746, %v3748, %v3744
        %v3750 = vmul.f32 %v3247, %v3749
        %v3751 = vrcp.pop %v3377
        %v3752 = vmul.f32 %v3377, %v3751
        %v3753 = vsub.f32 1.0, %v3752
        %v3754 = vmul.f32 %v3751, %v3753
        %v3755 = vadd.f32 %v3751, %v3754
        %vm3756 = vweird.f32 %v3377
        %vm3757 = vweird.f32 %v3751
        %vm3758 = vmor %vm3756, %vm3757
        %v3759 = vsel %vm3758, %v3751, %v3755
        %v3760 = vand.u32 2147483647, %v3377
        %vm3761 = vcmp.eq.f32.partialorder %v3760, 8.507059e+37
        %v3762 = vand.u32 %v3377, 2147483648
        %v3763 = vor.u32 1.1754944e-38, %v3762
        %v3764 = vsel %vm3761, %v3763, %v3759
        %v3765 = vmul.f32 %v3249, %v3764
        %v3766 = vrcp.pop %v3379
        %v3767 = vmul.f32 %v3379, %v3766
        %v3768 = vsub.f32 1.0, %v3767
        %v3769 = vmul.f32 %v3766, %v3768
        %v3770 = vadd.f32 %v3766, %v3769
        %vm3771 = vweird.f32 %v3379
        %vm3772 = vweird.f32 %v3766
        %vm3773 = vmor %vm3771, %vm3772
        %v3774 = vsel %vm3773, %v3766, %v3770
        %v3775 = vand.u32 2147483647, %v3379
        %vm3776 = vcmp.eq.f32.partialorder %v3775, 8.507059e+37
        %v3777 = vand.u32 %v3379, 2147483648
        %v3778 = vor.u32 1.1754944e-38, %v3777
        %v3779 = vsel %vm3776, %v3778, %v3774
        %v3780 = vmul.f32 %v3251, %v3779
        %v3781 = vrcp.pop %v3381
        %v3782 = vmul.f32 %v3381, %v3781
        %v3783 = vsub.f32 1.0, %v3782
        %v3784 = vmul.f32 %v3781, %v3783
        %v3785 = vadd.f32 %v3781, %v3784
        %vm3786 = vweird.f32 %v3381
        %vm3787 = vweird.f32 %v3781
        %vm3788 = vmor %vm3786, %vm3787
        %v3789 = vsel %vm3788, %v3781, %v3785
        %v3790 = vand.u32 2147483647, %v3381
        %vm3791 = vcmp.eq.f32.partialorder %v3790, 8.507059e+37
        %v3792 = vand.u32 %v3381, 2147483648
        %v3793 = vor.u32 1.1754944e-38, %v3792
        %v3794 = vsel %vm3791, %v3793, %v3789
        %v3795 = vmul.f32 %v3253, %v3794
        %v3796 = vrcp.pop %v3383
        %v3797 = vmul.f32 %v3383, %v3796
        %v3798 = vsub.f32 1.0, %v3797
        %v3799 = vmul.f32 %v3796, %v3798
        %v3800 = vadd.f32 %v3796, %v3799
        %vm3801 = vweird.f32 %v3383
        %vm3802 = vweird.f32 %v3796
        %vm3803 = vmor %vm3801, %vm3802
        %v3804 = vsel %vm3803, %v3796, %v3800
        %v3805 = vand.u32 2147483647, %v3383
        %vm3806 = vcmp.eq.f32.partialorder %v3805, 8.507059e+37
        %v3807 = vand.u32 %v3383, 2147483648
        %v3808 = vor.u32 1.1754944e-38, %v3807
        %v3809 = vsel %vm3806, %v3808, %v3804
        %v3810 = vmul.f32 %v3255, %v3809
        %v3811 = vrcp.pop %v3385
        %v3812 = vmul.f32 %v3385, %v3811
        %v3813 = vsub.f32 1.0, %v3812
        %v3814 = vmul.f32 %v3811, %v3813
        %v3815 = vadd.f32 %v3811, %v3814
        %vm3816 = vweird.f32 %v3385
        %vm3817 = vweird.f32 %v3811
        %vm3818 = vmor %vm3816, %vm3817
        %v3819 = vsel %vm3818, %v3811, %v3815
        %v3820 = vand.u32 2147483647, %v3385
        %vm3821 = vcmp.eq.f32.partialorder %v3820, 8.507059e+37
        %v3822 = vand.u32 %v3385, 2147483648
        %v3823 = vor.u32 1.1754944e-38, %v3822
        %v3824 = vsel %vm3821, %v3823, %v3819
        %v3825 = vmul.f32 %v3257, %v3824
        %v3826 = vrcp.pop %v3387
        %v3827 = vmul.f32 %v3387, %v3826
        %v3828 = vsub.f32 1.0, %v3827
        %v3829 = vmul.f32 %v3826, %v3828
        %v3830 = vadd.f32 %v3826, %v3829
        %vm3831 = vweird.f32 %v3387
        %vm3832 = vweird.f32 %v3826
        %vm3833 = vmor %vm3831, %vm3832
        %v3834 = vsel %vm3833, %v3826, %v3830
        %v3835 = vand.u32 2147483647, %v3387
        %vm3836 = vcmp.eq.f32.partialorder %v3835, 8.507059e+37
        %v3837 = vand.u32 %v3387, 2147483648
        %v3838 = vor.u32 1.1754944e-38, %v3837
        %v3839 = vsel %vm3836, %v3838, %v3834
        %v3840 = vmul.f32 %v3259, %v3839
        %v3841 = vrcp.pop %v3389
        %v3842 = vmul.f32 %v3389, %v3841
        %v3843 = vsub.f32 1.0, %v3842
        %v3844 = vmul.f32 %v3841, %v3843
        %v3845 = vadd.f32 %v3841, %v3844
        %vm3846 = vweird.f32 %v3389
        %vm3847 = vweird.f32 %v3841
        %vm3848 = vmor %vm3846, %vm3847
        %v3849 = vsel %vm3848, %v3841, %v3845
        %v3850 = vand.u32 2147483647, %v3389
        %vm3851 = vcmp.eq.f32.partialorder %v3850, 8.507059e+37
        %v3852 = vand.u32 %v3389, 2147483648
        %v3853 = vor.u32 1.1754944e-38, %v3852
        %v3854 = vsel %vm3851, %v3853, %v3849
        %v3855 = vmul.f32 %v3261, %v3854
        %v3856 = vrcp.pop %v3391
        %v3857 = vmul.f32 %v3391, %v3856
        %v3858 = vsub.f32 1.0, %v3857
        %v3859 = vmul.f32 %v3856, %v3858
        %v3860 = vadd.f32 %v3856, %v3859
        %vm3861 = vweird.f32 %v3391
        %vm3862 = vweird.f32 %v3856
        %vm3863 = vmor %vm3861, %vm3862
        %v3864 = vsel %vm3863, %v3856, %v3860
        %v3865 = vand.u32 2147483647, %v3391
        %vm3866 = vcmp.eq.f32.partialorder %v3865, 8.507059e+37
        %v3867 = vand.u32 %v3391, 2147483648
        %v3868 = vor.u32 1.1754944e-38, %v3867
        %v3869 = vsel %vm3866, %v3868, %v3864
        %v3870 = vmul.f32 %v3263, %v3869
        %v3871 = vrcp.pop %v3393
        %v3872 = vmul.f32 %v3393, %v3871
        %v3873 = vsub.f32 1.0, %v3872
        %v3874 = vmul.f32 %v3871, %v3873
        %v3875 = vadd.f32 %v3871, %v3874
        %vm3876 = vweird.f32 %v3393
        %vm3877 = vweird.f32 %v3871
        %vm3878 = vmor %vm3876, %vm3877
        %v3879 = vsel %vm3878, %v3871, %v3875
        %v3880 = vand.u32 2147483647, %v3393
        %vm3881 = vcmp.eq.f32.partialorder %v3880, 8.507059e+37
        %v3882 = vand.u32 %v3393, 2147483648
        %v3883 = vor.u32 1.1754944e-38, %v3882
        %v3884 = vsel %vm3881, %v3883, %v3879
        %v3885 = vmul.f32 %v3265, %v3884
        %v3886 = vrcp.pop %v3395
        %v3887 = vmul.f32 %v3395, %v3886
        %v3888 = vsub.f32 1.0, %v3887
        %v3889 = vmul.f32 %v3886, %v3888
        %v3890 = vadd.f32 %v3886, %v3889
        %vm3891 = vweird.f32 %v3395
        %vm3892 = vweird.f32 %v3886
        %vm3893 = vmor %vm3891, %vm3892
        %v3894 = vsel %vm3893, %v3886, %v3890
        %v3895 = vand.u32 2147483647, %v3395
        %vm3896 = vcmp.eq.f32.partialorder %v3895, 8.507059e+37
        %v3897 = vand.u32 %v3395, 2147483648
        %v3898 = vor.u32 1.1754944e-38, %v3897
        %v3899 = vsel %vm3896, %v3898, %v3894
        %v3900 = vmul.f32 %v3267, %v3899
        %v3901 = vrcp.pop %v3397
        %v3902 = vmul.f32 %v3397, %v3901
        %v3903 = vsub.f32 1.0, %v3902
        %v3904 = vmul.f32 %v3901, %v3903
        %v3905 = vadd.f32 %v3901, %v3904
        %vm3906 = vweird.f32 %v3397
        %vm3907 = vweird.f32 %v3901
        %vm3908 = vmor %vm3906, %vm3907
        %v3909 = vsel %vm3908, %v3901, %v3905
        %v3910 = vand.u32 2147483647, %v3397
        %vm3911 = vcmp.eq.f32.partialorder %v3910, 8.507059e+37
        %v3912 = vand.u32 %v3397, 2147483648
        %v3913 = vor.u32 1.1754944e-38, %v3912
        %v3914 = vsel %vm3911, %v3913, %v3909
        %v3915 = vmul.f32 %v3269, %v3914
        %v3916 = vrcp.pop %v3399
        %v3917 = vmul.f32 %v3399, %v3916
        %v3918 = vsub.f32 1.0, %v3917
        %v3919 = vmul.f32 %v3916, %v3918
        %v3920 = vadd.f32 %v3916, %v3919
        %vm3921 = vweird.f32 %v3399
        %vm3922 = vweird.f32 %v3916
        %vm3923 = vmor %vm3921, %vm3922
        %v3924 = vsel %vm3923, %v3916, %v3920
        %v3925 = vand.u32 2147483647, %v3399
        %vm3926 = vcmp.eq.f32.partialorder %v3925, 8.507059e+37
        %v3927 = vand.u32 %v3399, 2147483648
        %v3928 = vor.u32 1.1754944e-38, %v3927
        %v3929 = vsel %vm3926, %v3928, %v3924
        %v3930 = vmul.f32 %v3271, %v3929
        %v3931 = vrcp.pop %v3401
        %v3932 = vmul.f32 %v3401, %v3931
        %v3933 = vsub.f32 1.0, %v3932
        %v3934 = vmul.f32 %v3931, %v3933
        %v3935 = vadd.f32 %v3931, %v3934
        %vm3936 = vweird.f32 %v3401
        %vm3937 = vweird.f32 %v3931
        %vm3938 = vmor %vm3936, %vm3937
        %v3939 = vsel %vm3938, %v3931, %v3935
        %v3940 = vand.u32 2147483647, %v3401
        %vm3941 = vcmp.eq.f32.partialorder %v3940, 8.507059e+37
        %v3942 = vand.u32 %v3401, 2147483648
        %v3943 = vor.u32 1.1754944e-38, %v3942
        %v3944 = vsel %vm3941, %v3943, %v3939
        %v3945 = vmul.f32 %v3273, %v3944
        %v3946 = vrcp.pop %v3403
        %v3947 = vmul.f32 %v3403, %v3946
        %v3948 = vsub.f32 1.0, %v3947
        %v3949 = vmul.f32 %v3946, %v3948
        %v3950 = vadd.f32 %v3946, %v3949
        %vm3951 = vweird.f32 %v3403
        %vm3952 = vweird.f32 %v3946
        %vm3953 = vmor %vm3951, %vm3952
        %v3954 = vsel %vm3953, %v3946, %v3950
        %v3955 = vand.u32 2147483647, %v3403
        %vm3956 = vcmp.eq.f32.partialorder %v3955, 8.507059e+37
        %v3957 = vand.u32 %v3403, 2147483648
        %v3958 = vor.u32 1.1754944e-38, %v3957
        %v3959 = vsel %vm3956, %v3958, %v3954
        %v3960 = vmul.f32 %v3275, %v3959
        %v3961 = vrcp.pop %v3405
        %v3962 = vmul.f32 %v3405, %v3961
        %v3963 = vsub.f32 1.0, %v3962
        %v3964 = vmul.f32 %v3961, %v3963
        %v3965 = vadd.f32 %v3961, %v3964
        %vm3966 = vweird.f32 %v3405
        %vm3967 = vweird.f32 %v3961
        %vm3968 = vmor %vm3966, %vm3967
        %v3969 = vsel %vm3968, %v3961, %v3965
        %v3970 = vand.u32 2147483647, %v3405
        %vm3971 = vcmp.eq.f32.partialorder %v3970, 8.507059e+37
        %v3972 = vand.u32 %v3405, 2147483648
        %v3973 = vor.u32 1.1754944e-38, %v3972
        %v3974 = vsel %vm3971, %v3973, %v3969
        %v3975 = vmul.f32 %v3277, %v3974
        %v3976 = vrcp.pop %v3407
        %v3977 = vmul.f32 %v3407, %v3976
        %v3978 = vsub.f32 1.0, %v3977
        %v3979 = vmul.f32 %v3976, %v3978
        %v3980 = vadd.f32 %v3976, %v3979
        %vm3981 = vweird.f32 %v3407
        %vm3982 = vweird.f32 %v3976
        %vm3983 = vmor %vm3981, %vm3982
        %v3984 = vsel %vm3983, %v3976, %v3980
        %v3985 = vand.u32 2147483647, %v3407
        %vm3986 = vcmp.eq.f32.partialorder %v3985, 8.507059e+37
        %v3987 = vand.u32 %v3407, 2147483648
        %v3988 = vor.u32 1.1754944e-38, %v3987
        %v3989 = vsel %vm3986, %v3988, %v3984
        %v3990 = vmul.f32 %v3279, %v3989
        %v3991 = vrcp.pop %v3409
        %v3992 = vmul.f32 %v3409, %v3991
        %v3993 = vsub.f32 1.0, %v3992
        %v3994 = vmul.f32 %v3991, %v3993
        %v3995 = vadd.f32 %v3991, %v3994
        %vm3996 = vweird.f32 %v3409
        %vm3997 = vweird.f32 %v3991
        %vm3998 = vmor %vm3996, %vm3997
        %v3999 = vsel %vm3998, %v3991, %v3995
        %v4000 = vand.u32 2147483647, %v3409
        %vm4001 = vcmp.eq.f32.partialorder %v4000, 8.507059e+37
        %v4002 = vand.u32 %v3409, 2147483648
        %v4003 = vor.u32 1.1754944e-38, %v4002
        %v4004 = vsel %vm4001, %v4003, %v3999
        %v4005 = vmul.f32 %v3281, %v4004
        %v4006 = vrcp.pop %v3411
        %v4007 = vmul.f32 %v3411, %v4006
        %v4008 = vsub.f32 1.0, %v4007
        %v4009 = vmul.f32 %v4006, %v4008
        %v4010 = vadd.f32 %v4006, %v4009
        %vm4011 = vweird.f32 %v3411
        %vm4012 = vweird.f32 %v4006
        %vm4013 = vmor %vm4011, %vm4012
        %v4014 = vsel %vm4013, %v4006, %v4010
        %v4015 = vand.u32 2147483647, %v3411
        %vm4016 = vcmp.eq.f32.partialorder %v4015, 8.507059e+37
        %v4017 = vand.u32 %v3411, 2147483648
        %v4018 = vor.u32 1.1754944e-38, %v4017
        %v4019 = vsel %vm4016, %v4018, %v4014
        %v4020 = vmul.f32 %v3283, %v4019
        %v4021 = vrcp.pop %v3413
        %v4022 = vmul.f32 %v3413, %v4021
        %v4023 = vsub.f32 1.0, %v4022
        %v4024 = vmul.f32 %v4021, %v4023
        %v4025 = vadd.f32 %v4021, %v4024
        %vm4026 = vweird.f32 %v3413
        %vm4027 = vweird.f32 %v4021
        %vm4028 = vmor %vm4026, %vm4027
        %v4029 = vsel %vm4028, %v4021, %v4025
        %v4030 = vand.u32 2147483647, %v3413
        %vm4031 = vcmp.eq.f32.partialorder %v4030, 8.507059e+37
        %v4032 = vand.u32 %v3413, 2147483648
        %v4033 = vor.u32 1.1754944e-38, %v4032
        %v4034 = vsel %vm4031, %v4033, %v4029
        %v4035 = vmul.f32 %v3285, %v4034
        %v4036 = vrcp.pop %v3415
        %v4037 = vmul.f32 %v3415, %v4036
        %v4038 = vsub.f32 1.0, %v4037
        %v4039 = vmul.f32 %v4036, %v4038
        %v4040 = vadd.f32 %v4036, %v4039
        %vm4041 = vweird.f32 %v3415
        %vm4042 = vweird.f32 %v4036
        %vm4043 = vmor %vm4041, %vm4042
        %v4044 = vsel %vm4043, %v4036, %v4040
        %v4045 = vand.u32 2147483647, %v3415
        %vm4046 = vcmp.eq.f32.partialorder %v4045, 8.507059e+37
        %v4047 = vand.u32 %v3415, 2147483648
        %v4048 = vor.u32 1.1754944e-38, %v4047
        %v4049 = vsel %vm4046, %v4048, %v4044
        %v4050 = vmul.f32 %v3287, %v4049
        %v4051 = vrcp.pop %v3417
        %v4052 = vmul.f32 %v3417, %v4051
        %v4053 = vsub.f32 1.0, %v4052
        %v4054 = vmul.f32 %v4051, %v4053
        %v4055 = vadd.f32 %v4051, %v4054
        %vm4056 = vweird.f32 %v3417
        %vm4057 = vweird.f32 %v4051
        %vm4058 = vmor %vm4056, %vm4057
        %v4059 = vsel %vm4058, %v4051, %v4055
        %v4060 = vand.u32 2147483647, %v3417
        %vm4061 = vcmp.eq.f32.partialorder %v4060, 8.507059e+37
        %v4062 = vand.u32 %v3417, 2147483648
        %v4063 = vor.u32 1.1754944e-38, %v4062
        %v4064 = vsel %vm4061, %v4063, %v4059
        %v4065 = vmul.f32 %v3289, %v4064
        %v4066 = vrcp.pop %v3419
        %v4067 = vmul.f32 %v3419, %v4066
        %v4068 = vsub.f32 1.0, %v4067
        %v4069 = vmul.f32 %v4066, %v4068
        %v4070 = vadd.f32 %v4066, %v4069
        %vm4071 = vweird.f32 %v3419
        %vm4072 = vweird.f32 %v4066
        %vm4073 = vmor %vm4071, %vm4072
        %v4074 = vsel %vm4073, %v4066, %v4070
        %v4075 = vand.u32 2147483647, %v3419
        %vm4076 = vcmp.eq.f32.partialorder %v4075, 8.507059e+37
        %v4077 = vand.u32 %v3419, 2147483648
        %v4078 = vor.u32 1.1754944e-38, %v4077
        %v4079 = vsel %vm4076, %v4078, %v4074
        %v4080 = vmul.f32 %v3291, %v4079
        %v4081 = vrcp.pop %v3421
        %v4082 = vmul.f32 %v3421, %v4081
        %v4083 = vsub.f32 1.0, %v4082
        %v4084 = vmul.f32 %v4081, %v4083
        %v4085 = vadd.f32 %v4081, %v4084
        %vm4086 = vweird.f32 %v3421
        %vm4087 = vweird.f32 %v4081
        %vm4088 = vmor %vm4086, %vm4087
        %v4089 = vsel %vm4088, %v4081, %v4085
        %v4090 = vand.u32 2147483647, %v3421
        %vm4091 = vcmp.eq.f32.partialorder %v4090, 8.507059e+37
        %v4092 = vand.u32 %v3421, 2147483648
        %v4093 = vor.u32 1.1754944e-38, %v4092
        %v4094 = vsel %vm4091, %v4093, %v4089
        %v4095 = vmul.f32 %v3293, %v4094
        %v4096 = vrcp.pop %v3423
        %v4097 = vmul.f32 %v3423, %v4096
        %v4098 = vsub.f32 1.0, %v4097
        %v4099 = vmul.f32 %v4096, %v4098
        %v4100 = vadd.f32 %v4096, %v4099
        %vm4101 = vweird.f32 %v3423
        %vm4102 = vweird.f32 %v4096
        %vm4103 = vmor %vm4101, %vm4102
        %v4104 = vsel %vm4103, %v4096, %v4100
        %v4105 = vand.u32 2147483647, %v3423
        %vm4106 = vcmp.eq.f32.partialorder %v4105, 8.507059e+37
        %v4107 = vand.u32 %v3423, 2147483648
        %v4108 = vor.u32 1.1754944e-38, %v4107
        %v4109 = vsel %vm4106, %v4108, %v4104
        %v4110 = vmul.f32 %v3295, %v4109
        %v4111 = vrcp.pop %v3425
        %v4112 = vmul.f32 %v3425, %v4111
        %v4113 = vsub.f32 1.0, %v4112
        %v4114 = vmul.f32 %v4111, %v4113
        %v4115 = vadd.f32 %v4111, %v4114
        %vm4116 = vweird.f32 %v3425
        %vm4117 = vweird.f32 %v4111
        %vm4118 = vmor %vm4116, %vm4117
        %v4119 = vsel %vm4118, %v4111, %v4115
        %v4120 = vand.u32 2147483647, %v3425
        %vm4121 = vcmp.eq.f32.partialorder %v4120, 8.507059e+37
        %v4122 = vand.u32 %v3425, 2147483648
        %v4123 = vor.u32 1.1754944e-38, %v4122
        %v4124 = vsel %vm4121, %v4123, %v4119
        %v4125 = vmul.f32 %v3297, %v4124
        %v4126 = vrcp.pop %v3427
        %v4127 = vmul.f32 %v3427, %v4126
        %v4128 = vsub.f32 1.0, %v4127
        %v4129 = vmul.f32 %v4126, %v4128
        %v4130 = vadd.f32 %v4126, %v4129
        %vm4131 = vweird.f32 %v3427
        %vm4132 = vweird.f32 %v4126
        %vm4133 = vmor %vm4131, %vm4132
        %v4134 = vsel %vm4133, %v4126, %v4130
        %v4135 = vand.u32 2147483647, %v3427
        %vm4136 = vcmp.eq.f32.partialorder %v4135, 8.507059e+37
        %v4137 = vand.u32 %v3427, 2147483648
        %v4138 = vor.u32 1.1754944e-38, %v4137
        %v4139 = vsel %vm4136, %v4138, %v4134
        %v4140 = vmul.f32 %v3299, %v4139
        %v4141 = vrcp.pop %v3429
        %v4142 = vmul.f32 %v3429, %v4141
        %v4143 = vsub.f32 1.0, %v4142
        %v4144 = vmul.f32 %v4141, %v4143
        %v4145 = vadd.f32 %v4141, %v4144
        %vm4146 = vweird.f32 %v3429
        %vm4147 = vweird.f32 %v4141
        %vm4148 = vmor %vm4146, %vm4147
        %v4149 = vsel %vm4148, %v4141, %v4145
        %v4150 = vand.u32 2147483647, %v3429
        %vm4151 = vcmp.eq.f32.partialorder %v4150, 8.507059e+37
        %v4152 = vand.u32 %v3429, 2147483648
        %v4153 = vor.u32 1.1754944e-38, %v4152
        %v4154 = vsel %vm4151, %v4153, %v4149
        %v4155 = vmul.f32 %v3301, %v4154
        %v4156 = vrcp.pop %v3431
        %v4157 = vmul.f32 %v3431, %v4156
        %v4158 = vsub.f32 1.0, %v4157
        %v4159 = vmul.f32 %v4156, %v4158
        %v4160 = vadd.f32 %v4156, %v4159
        %vm4161 = vweird.f32 %v3431
        %vm4162 = vweird.f32 %v4156
        %vm4163 = vmor %vm4161, %vm4162
        %v4164 = vsel %vm4163, %v4156, %v4160
        %v4165 = vand.u32 2147483647, %v3431
        %vm4166 = vcmp.eq.f32.partialorder %v4165, 8.507059e+37
        %v4167 = vand.u32 %v3431, 2147483648
        %v4168 = vor.u32 1.1754944e-38, %v4167
        %v4169 = vsel %vm4166, %v4168, %v4164
        %v4170 = vmul.f32 %v3303, %v4169
        %v4171 = vrcp.pop %v3433
        %v4172 = vmul.f32 %v3433, %v4171
        %v4173 = vsub.f32 1.0, %v4172
        %v4174 = vmul.f32 %v4171, %v4173
        %v4175 = vadd.f32 %v4171, %v4174
        %vm4176 = vweird.f32 %v3433
        %vm4177 = vweird.f32 %v4171
        %vm4178 = vmor %vm4176, %vm4177
        %v4179 = vsel %vm4178, %v4171, %v4175
        %v4180 = vand.u32 2147483647, %v3433
        %vm4181 = vcmp.eq.f32.partialorder %v4180, 8.507059e+37
        %v4182 = vand.u32 %v3433, 2147483648
        %v4183 = vor.u32 1.1754944e-38, %v4182
        %v4184 = vsel %vm4181, %v4183, %v4179
        %v4185 = vmul.f32 %v3305, %v4184
        %v4186 = vrcp.pop %v3435
        %v4187 = vmul.f32 %v3435, %v4186
        %v4188 = vsub.f32 1.0, %v4187
        %v4189 = vmul.f32 %v4186, %v4188
        %v4190 = vadd.f32 %v4186, %v4189
        %vm4191 = vweird.f32 %v3435
        %vm4192 = vweird.f32 %v4186
        %vm4193 = vmor %vm4191, %vm4192
        %v4194 = vsel %vm4193, %v4186, %v4190
        %v4195 = vand.u32 2147483647, %v3435
        %vm4196 = vcmp.eq.f32.partialorder %v4195, 8.507059e+37
        %v4197 = vand.u32 %v3435, 2147483648
        %v4198 = vor.u32 1.1754944e-38, %v4197
        %v4199 = vsel %vm4196, %v4198, %v4194
        %v4200 = vmul.f32 %v3307, %v4199
        %v4201 = vrcp.pop %v3437
        %v4202 = vmul.f32 %v3437, %v4201
        %v4203 = vsub.f32 1.0, %v4202
        %v4204 = vmul.f32 %v4201, %v4203
        %v4205 = vadd.f32 %v4201, %v4204
        %vm4206 = vweird.f32 %v3437
        %vm4207 = vweird.f32 %v4201
        %vm4208 = vmor %vm4206, %vm4207
        %v4209 = vsel %vm4208, %v4201, %v4205
        %v4210 = vand.u32 2147483647, %v3437
        %vm4211 = vcmp.eq.f32.partialorder %v4210, 8.507059e+37
        %v4212 = vand.u32 %v3437, 2147483648
        %v4213 = vor.u32 1.1754944e-38, %v4212
        %v4214 = vsel %vm4211, %v4213, %v4209
        %v4215 = vmul.f32 %v3309, %v4214
        %v4216 = vrcp.pop %v3439
        %v4217 = vmul.f32 %v3439, %v4216
        %v4218 = vsub.f32 1.0, %v4217
        %v4219 = vmul.f32 %v4216, %v4218
        %v4220 = vadd.f32 %v4216, %v4219
        %vm4221 = vweird.f32 %v3439
        %vm4222 = vweird.f32 %v4216
        %vm4223 = vmor %vm4221, %vm4222
        %v4224 = vsel %vm4223, %v4216, %v4220
        %v4225 = vand.u32 2147483647, %v3439
        %vm4226 = vcmp.eq.f32.partialorder %v4225, 8.507059e+37
        %v4227 = vand.u32 %v3439, 2147483648
        %v4228 = vor.u32 1.1754944e-38, %v4227
        %v4229 = vsel %vm4226, %v4228, %v4224
        %v4230 = vmul.f32 %v3311, %v4229
        %v4231 = vrcp.pop %v3441
        %v4232 = vmul.f32 %v3441, %v4231
        %v4233 = vsub.f32 1.0, %v4232
        %v4234 = vmul.f32 %v4231, %v4233
        %v4235 = vadd.f32 %v4231, %v4234
        %vm4236 = vweird.f32 %v3441
        %vm4237 = vweird.f32 %v4231
        %vm4238 = vmor %vm4236, %vm4237
        %v4239 = vsel %vm4238, %v4231, %v4235
        %v4240 = vand.u32 2147483647, %v3441
        %vm4241 = vcmp.eq.f32.partialorder %v4240, 8.507059e+37
        %v4242 = vand.u32 %v3441, 2147483648
        %v4243 = vor.u32 1.1754944e-38, %v4242
        %v4244 = vsel %vm4241, %v4243, %v4239
        %v4245 = vmul.f32 %v3313, %v4244
        %v4246 = vrcp.pop %v3443
        %v4247 = vmul.f32 %v3443, %v4246
        %v4248 = vsub.f32 1.0, %v4247
        %v4249 = vmul.f32 %v4246, %v4248
        %v4250 = vadd.f32 %v4246, %v4249
        %vm4251 = vweird.f32 %v3443
        %vm4252 = vweird.f32 %v4246
        %vm4253 = vmor %vm4251, %vm4252
        %v4254 = vsel %vm4253, %v4246, %v4250
        %v4255 = vand.u32 2147483647, %v3443
        %vm4256 = vcmp.eq.f32.partialorder %v4255, 8.507059e+37
        %v4257 = vand.u32 %v3443, 2147483648
        %v4258 = vor.u32 1.1754944e-38, %v4257
        %v4259 = vsel %vm4256, %v4258, %v4254
        %v4260 = vmul.f32 %v3315, %v4259
        %v4261 = vrcp.pop %v3445
        %v4262 = vmul.f32 %v3445, %v4261
        %v4263 = vsub.f32 1.0, %v4262
        %v4264 = vmul.f32 %v4261, %v4263
        %v4265 = vadd.f32 %v4261, %v4264
        %vm4266 = vweird.f32 %v3445
        %vm4267 = vweird.f32 %v4261
        %vm4268 = vmor %vm4266, %vm4267
        %v4269 = vsel %vm4268, %v4261, %v4265
        %v4270 = vand.u32 2147483647, %v3445
        %vm4271 = vcmp.eq.f32.partialorder %v4270, 8.507059e+37
        %v4272 = vand.u32 %v3445, 2147483648
        %v4273 = vor.u32 1.1754944e-38, %v4272
        %v4274 = vsel %vm4271, %v4273, %v4269
        %v4275 = vmul.f32 %v3317, %v4274
        %v4276 = vrcp.pop %v3447
        %v4277 = vmul.f32 %v3447, %v4276
        %v4278 = vsub.f32 1.0, %v4277
        %v4279 = vmul.f32 %v4276, %v4278
        %v4280 = vadd.f32 %v4276, %v4279
        %vm4281 = vweird.f32 %v3447
        %vm4282 = vweird.f32 %v4276
        %vm4283 = vmor %vm4281, %vm4282
        %v4284 = vsel %vm4283, %v4276, %v4280
        %v4285 = vand.u32 2147483647, %v3447
        %vm4286 = vcmp.eq.f32.partialorder %v4285, 8.507059e+37
        %v4287 = vand.u32 %v3447, 2147483648
        %v4288 = vor.u32 1.1754944e-38, %v4287
        %v4289 = vsel %vm4286, %v4288, %v4284
        %v4290 = vmul.f32 %v3319, %v4289
        %v4291 = vrcp.pop %v3449
        %v4292 = vmul.f32 %v3449, %v4291
        %v4293 = vsub.f32 1.0, %v4292
        %v4294 = vmul.f32 %v4291, %v4293
        %v4295 = vadd.f32 %v4291, %v4294
        %vm4296 = vweird.f32 %v3449
        %vm4297 = vweird.f32 %v4291
        %vm4298 = vmor %vm4296, %vm4297
        %v4299 = vsel %vm4298, %v4291, %v4295
        %v4300 = vand.u32 2147483647, %v3449
        %vm4301 = vcmp.eq.f32.partialorder %v4300, 8.507059e+37
        %v4302 = vand.u32 %v3449, 2147483648
        %v4303 = vor.u32 1.1754944e-38, %v4302
        %v4304 = vsel %vm4301, %v4303, %v4299
        %v4305 = vmul.f32 %v3321, %v4304
        %v4306 = vrcp.pop %v3451
        %v4307 = vmul.f32 %v3451, %v4306
        %v4308 = vsub.f32 1.0, %v4307
        %v4309 = vmul.f32 %v4306, %v4308
        %v4310 = vadd.f32 %v4306, %v4309
        %vm4311 = vweird.f32 %v3451
        %vm4312 = vweird.f32 %v4306
        %vm4313 = vmor %vm4311, %vm4312
        %v4314 = vsel %vm4313, %v4306, %v4310
        %v4315 = vand.u32 2147483647, %v3451
        %vm4316 = vcmp.eq.f32.partialorder %v4315, 8.507059e+37
        %v4317 = vand.u32 %v3451, 2147483648
        %v4318 = vor.u32 1.1754944e-38, %v4317
        %v4319 = vsel %vm4316, %v4318, %v4314
        %v4320 = vmul.f32 %v3323, %v4319
        %v4321 = vrcp.pop %v3453
        %v4322 = vmul.f32 %v3453, %v4321
        %v4323 = vsub.f32 1.0, %v4322
        %v4324 = vmul.f32 %v4321, %v4323
        %v4325 = vadd.f32 %v4321, %v4324
        %vm4326 = vweird.f32 %v3453
        %vm4327 = vweird.f32 %v4321
        %vm4328 = vmor %vm4326, %vm4327
        %v4329 = vsel %vm4328, %v4321, %v4325
        %v4330 = vand.u32 2147483647, %v3453
        %vm4331 = vcmp.eq.f32.partialorder %v4330, 8.507059e+37
        %v4332 = vand.u32 %v3453, 2147483648
        %v4333 = vor.u32 1.1754944e-38, %v4332
        %v4334 = vsel %vm4331, %v4333, %v4329
        %v4335 = vmul.f32 %v3325, %v4334
        %v4336 = vrcp.pop %v3455
        %v4337 = vmul.f32 %v3455, %v4336
        %v4338 = vsub.f32 1.0, %v4337
        %v4339 = vmul.f32 %v4336, %v4338
        %v4340 = vadd.f32 %v4336, %v4339
        %vm4341 = vweird.f32 %v3455
        %vm4342 = vweird.f32 %v4336
        %vm4343 = vmor %vm4341, %vm4342
        %v4344 = vsel %vm4343, %v4336, %v4340
        %v4345 = vand.u32 2147483647, %v3455
        %vm4346 = vcmp.eq.f32.partialorder %v4345, 8.507059e+37
        %v4347 = vand.u32 %v3455, 2147483648
        %v4348 = vor.u32 1.1754944e-38, %v4347
        %v4349 = vsel %vm4346, %v4348, %v4344
        %v4350 = vmul.f32 %v3327, %v4349
        %v4351 = vrcp.pop %v3457
        %v4352 = vmul.f32 %v3457, %v4351
        %v4353 = vsub.f32 1.0, %v4352
        %v4354 = vmul.f32 %v4351, %v4353
        %v4355 = vadd.f32 %v4351, %v4354
        %vm4356 = vweird.f32 %v3457
        %vm4357 = vweird.f32 %v4351
        %vm4358 = vmor %vm4356, %vm4357
        %v4359 = vsel %vm4358, %v4351, %v4355
        %v4360 = vand.u32 2147483647, %v3457
        %vm4361 = vcmp.eq.f32.partialorder %v4360, 8.507059e+37
        %v4362 = vand.u32 %v3457, 2147483648
        %v4363 = vor.u32 1.1754944e-38, %v4362
        %v4364 = vsel %vm4361, %v4363, %v4359
        %v4365 = vmul.f32 %v3329, %v4364
        %v4366 = vrcp.pop %v3459
        %v4367 = vmul.f32 %v3459, %v4366
        %v4368 = vsub.f32 1.0, %v4367
        %v4369 = vmul.f32 %v4366, %v4368
        %v4370 = vadd.f32 %v4366, %v4369
        %vm4371 = vweird.f32 %v3459
        %vm4372 = vweird.f32 %v4366
        %vm4373 = vmor %vm4371, %vm4372
        %v4374 = vsel %vm4373, %v4366, %v4370
        %v4375 = vand.u32 2147483647, %v3459
        %vm4376 = vcmp.eq.f32.partialorder %v4375, 8.507059e+37
        %v4377 = vand.u32 %v3459, 2147483648
        %v4378 = vor.u32 1.1754944e-38, %v4377
        %v4379 = vsel %vm4376, %v4378, %v4374
        %v4380 = vmul.f32 %v3331, %v4379
        %v4381 = vrcp.pop %v3461
        %v4382 = vmul.f32 %v3461, %v4381
        %v4383 = vsub.f32 1.0, %v4382
        %v4384 = vmul.f32 %v4381, %v4383
        %v4385 = vadd.f32 %v4381, %v4384
        %vm4386 = vweird.f32 %v3461
        %vm4387 = vweird.f32 %v4381
        %vm4388 = vmor %vm4386, %vm4387
        %v4389 = vsel %vm4388, %v4381, %v4385
        %v4390 = vand.u32 2147483647, %v3461
        %vm4391 = vcmp.eq.f32.partialorder %v4390, 8.507059e+37
        %v4392 = vand.u32 %v3461, 2147483648
        %v4393 = vor.u32 1.1754944e-38, %v4392
        %v4394 = vsel %vm4391, %v4393, %v4389
        %v4395 = vmul.f32 %v3333, %v4394
        %v4396 = vrcp.pop %v3463
        %v4397 = vmul.f32 %v3463, %v4396
        %v4398 = vsub.f32 1.0, %v4397
        %v4399 = vmul.f32 %v4396, %v4398
        %v4400 = vadd.f32 %v4396, %v4399
        %vm4401 = vweird.f32 %v3463
        %vm4402 = vweird.f32 %v4396
        %vm4403 = vmor %vm4401, %vm4402
        %v4404 = vsel %vm4403, %v4396, %v4400
        %v4405 = vand.u32 2147483647, %v3463
        %vm4406 = vcmp.eq.f32.partialorder %v4405, 8.507059e+37
        %v4407 = vand.u32 %v3463, 2147483648
        %v4408 = vor.u32 1.1754944e-38, %v4407
        %v4409 = vsel %vm4406, %v4408, %v4404
        %v4410 = vmul.f32 %v3335, %v4409
        %v4411 = vrcp.pop %v3465
        %v4412 = vmul.f32 %v3465, %v4411
        %v4413 = vsub.f32 1.0, %v4412
        %v4414 = vmul.f32 %v4411, %v4413
        %v4415 = vadd.f32 %v4411, %v4414
        %vm4416 = vweird.f32 %v3465
        %vm4417 = vweird.f32 %v4411
        %vm4418 = vmor %vm4416, %vm4417
        %v4419 = vsel %vm4418, %v4411, %v4415
        %v4420 = vand.u32 2147483647, %v3465
        %vm4421 = vcmp.eq.f32.partialorder %v4420, 8.507059e+37
        %v4422 = vand.u32 %v3465, 2147483648
        %v4423 = vor.u32 1.1754944e-38, %v4422
        %v4424 = vsel %vm4421, %v4423, %v4419
        %v4425 = vmul.f32 %v3337, %v4424
        %4426 = vst [vmem:[%s884] sm:$0xff] %v3480
        %4427 = vst [vmem:[%s884 + $0x8] sm:$0xff] %v3495
        %4428 = vst [vmem:[%s884 + $0x10] sm:$0xff] %v3510
        %4429 = vst [vmem:[%s884 + $0x18] sm:$0xff] %v3525
        %4430 = vst [vmem:[%s884 + $0x20] sm:$0xff] %v3540
        %4431 = vst [vmem:[%s884 + $0x28] sm:$0xff] %v3555
        %4432 = vst [vmem:[%s884 + $0x30] sm:$0xff] %v3570
        %4433 = vst [vmem:[%s884 + $0x38] sm:$0xff] %v3585
        %4434 = vst [vmem:[%s884 + $0x40] sm:$0xff] %v3600
        %4435 = vst [vmem:[%s884 + $0x48] sm:$0xff] %v3615
        %4436 = vst [vmem:[%s884 + $0x50] sm:$0xff] %v3630
        %4437 = vst [vmem:[%s884 + $0x58] sm:$0xff] %v3645
        %4438 = vst [vmem:[%s884 + $0x60] sm:$0xff] %v3660
        %4439 = vst [vmem:[%s884 + $0x68] sm:$0xff] %v3675
        %4440 = vst [vmem:[%s884 + $0x70] sm:$0xff] %v3690
        %4441 = vst [vmem:[%s884 + $0x78] sm:$0xff] %v3705
        %4442 = vst [vmem:[%s884 + $0x80] sm:$0xff] %v3720
        %4443 = vst [vmem:[%s884 + $0x88] sm:$0xff] %v3735
        %4444 = vst [vmem:[%s884 + $0x90] sm:$0xff] %v3750
        %4445 = vst [vmem:[%s884 + $0x98] sm:$0xff] %v3765
        %4446 = vst [vmem:[%s884 + $0xa0] sm:$0xff] %v3780
        %4447 = vst [vmem:[%s884 + $0xa8] sm:$0xff] %v3795
        %4448 = vst [vmem:[%s884 + $0xb0] sm:$0xff] %v3810
        %4449 = vst [vmem:[%s884 + $0xb8] sm:$0xff] %v3825
        %4450 = vst [vmem:[%s884 + $0xc0] sm:$0xff] %v3840
        %4451 = vst [vmem:[%s884 + $0xc8] sm:$0xff] %v3855
        %4452 = vst [vmem:[%s884 + $0xd0] sm:$0xff] %v3870
        %4453 = vst [vmem:[%s884 + $0xd8] sm:$0xff] %v3885
        %4454 = vst [vmem:[%s884 + $0xe0] sm:$0xff] %v3900
        %4455 = vst [vmem:[%s884 + $0xe8] sm:$0xff] %v3915
        %4456 = vst [vmem:[%s884 + $0xf0] sm:$0xff] %v3930
        %4457 = vst [vmem:[%s884 + $0xf8] sm:$0xff] %v3945
        %4458 = vst [vmem:[%s884 + $0x100] sm:$0xff] %v3960
        %4459 = vst [vmem:[%s884 + $0x108] sm:$0xff] %v3975
        %4460 = vst [vmem:[%s884 + $0x110] sm:$0xff] %v3990
        %4461 = vst [vmem:[%s884 + $0x118] sm:$0xff] %v4005
        %4462 = vst [vmem:[%s884 + $0x120] sm:$0xff] %v4020
        %4463 = vst [vmem:[%s884 + $0x128] sm:$0xff] %v4035
        %4464 = vst [vmem:[%s884 + $0x130] sm:$0xff] %v4050
        %4465 = vst [vmem:[%s884 + $0x138] sm:$0xff] %v4065
        %4466 = vst [vmem:[%s884 + $0x140] sm:$0xff] %v4080
        %4467 = vst [vmem:[%s884 + $0x148] sm:$0xff] %v4095
        %4468 = vst [vmem:[%s884 + $0x150] sm:$0xff] %v4110
        %4469 = vst [vmem:[%s884 + $0x158] sm:$0xff] %v4125
        %4470 = vst [vmem:[%s884 + $0x160] sm:$0xff] %v4140
        %4471 = vst [vmem:[%s884 + $0x168] sm:$0xff] %v4155
        %4472 = vst [vmem:[%s884 + $0x170] sm:$0xff] %v4170
        %4473 = vst [vmem:[%s884 + $0x178] sm:$0xff] %v4185
        %4474 = vst [vmem:[%s884 + $0x180] sm:$0xff] %v4200
        %4475 = vst [vmem:[%s884 + $0x188] sm:$0xff] %v4215
        %4476 = vst [vmem:[%s884 + $0x190] sm:$0xff] %v4230
        %4477 = vst [vmem:[%s884 + $0x198] sm:$0xff] %v4245
        %4478 = vst [vmem:[%s884 + $0x1a0] sm:$0xff] %v4260
        %4479 = vst [vmem:[%s884 + $0x1a8] sm:$0xff] %v4275
        %4480 = vst [vmem:[%s884 + $0x1b0] sm:$0xff] %v4290
        %4481 = vst [vmem:[%s884 + $0x1b8] sm:$0xff] %v4305
        %4482 = vst [vmem:[%s884 + $0x1c0] sm:$0xff] %v4320
        %4483 = vst [vmem:[%s884 + $0x1c8] sm:$0xff] %v4335
        %4484 = vst [vmem:[%s884 + $0x1d0] sm:$0xff] %v4350
        %4485 = vst [vmem:[%s884 + $0x1d8] sm:$0xff] %v4365
        %4486 = vst [vmem:[%s884 + $0x1e0] sm:$0xff] %v4380
        %4487 = vst [vmem:[%s884 + $0x1e8] sm:$0xff] %v4395
        %4488 = vst [vmem:[%s884 + $0x1f0] sm:$0xff] %v4410
        %4489 = vst [vmem:[%s884 + $0x1f8] sm:$0xff] %v4425
        %v4490 = vpack.c.bf16 %v3480, %v3480
        %v4491 = vpack.c.bf16 %v3495, %v3495
        %v4492 = vpack.c.bf16 %v3510, %v3510
        %v4493 = vpack.c.bf16 %v3525, %v3525
        %v4494 = vpack.c.bf16 %v3540, %v3540
        %v4495 = vpack.c.bf16 %v3555, %v3555
        %v4496 = vpack.c.bf16 %v3570, %v3570
        %v4497 = vpack.c.bf16 %v3585, %v3585
        %v4498 = vpack.c.bf16 %v3600, %v3600
        %v4499 = vpack.c.bf16 %v3615, %v3615
        %v4500 = vpack.c.bf16 %v3630, %v3630
        %v4501 = vpack.c.bf16 %v3645, %v3645
        %v4502 = vpack.c.bf16 %v3660, %v3660
        %v4503 = vpack.c.bf16 %v3675, %v3675
        %v4504 = vpack.c.bf16 %v3690, %v3690
        %v4505 = vpack.c.bf16 %v3705, %v3705
        %v4506 = vpack.c.bf16 %v3720, %v3720
        %v4507 = vpack.c.bf16 %v3735, %v3735
        %v4508 = vpack.c.bf16 %v3750, %v3750
        %v4509 = vpack.c.bf16 %v3765, %v3765
        %v4510 = vpack.c.bf16 %v3780, %v3780
        %v4511 = vpack.c.bf16 %v3795, %v3795
        %v4512 = vpack.c.bf16 %v3810, %v3810
        %v4513 = vpack.c.bf16 %v3825, %v3825
        %v4514 = vpack.c.bf16 %v3840, %v3840
        %v4515 = vpack.c.bf16 %v3855, %v3855
        %v4516 = vpack.c.bf16 %v3870, %v3870
        %v4517 = vpack.c.bf16 %v3885, %v3885
        %v4518 = vpack.c.bf16 %v3900, %v3900
        %v4519 = vpack.c.bf16 %v3915, %v3915
        %v4520 = vpack.c.bf16 %v3930, %v3930
        %v4521 = vpack.c.bf16 %v3945, %v3945
        %v4522 = vpack.c.bf16 %v3960, %v3960
        %v4523 = vpack.c.bf16 %v3975, %v3975
        %v4524 = vpack.c.bf16 %v3990, %v3990
        %v4525 = vpack.c.bf16 %v4005, %v4005
        %v4526 = vpack.c.bf16 %v4020, %v4020
        %v4527 = vpack.c.bf16 %v4035, %v4035
        %v4528 = vpack.c.bf16 %v4050, %v4050
        %v4529 = vpack.c.bf16 %v4065, %v4065
        %v4530 = vpack.c.bf16 %v4080, %v4080
        %v4531 = vpack.c.bf16 %v4095, %v4095
        %v4532 = vpack.c.bf16 %v4110, %v4110
        %v4533 = vpack.c.bf16 %v4125, %v4125
        %v4534 = vpack.c.bf16 %v4140, %v4140
        %v4535 = vpack.c.bf16 %v4155, %v4155
        %v4536 = vpack.c.bf16 %v4170, %v4170
        %v4537 = vpack.c.bf16 %v4185, %v4185
        %v4538 = vpack.c.bf16 %v4200, %v4200
        %v4539 = vpack.c.bf16 %v4215, %v4215
        %v4540 = vpack.c.bf16 %v4230, %v4230
        %v4541 = vpack.c.bf16 %v4245, %v4245
        %v4542 = vpack.c.bf16 %v4260, %v4260
        %v4543 = vpack.c.bf16 %v4275, %v4275
        %v4544 = vpack.c.bf16 %v4290, %v4290
        %v4545 = vpack.c.bf16 %v4305, %v4305
        %v4546 = vpack.c.bf16 %v4320, %v4320
        %v4547 = vpack.c.bf16 %v4335, %v4335
        %v4548 = vpack.c.bf16 %v4350, %v4350
        %v4549 = vpack.c.bf16 %v4365, %v4365
        %v4550 = vpack.c.bf16 %v4380, %v4380
        %v4551 = vpack.c.bf16 %v4395, %v4395
        %v4552 = vpack.c.bf16 %v4410, %v4410
        %v4553 = vpack.c.bf16 %v4425, %v4425
        %v4570 = vunpack.c.l.b16 %v4490
        %v4571 = vunpack.c.l.b16 %v4491
        %v4572 = vunpack.c.l.b16 %v4492
        %v4573 = vunpack.c.l.b16 %v4493
        %v4574 = vunpack.c.l.b16 %v4494
        %v4575 = vunpack.c.l.b16 %v4495
        %v4576 = vunpack.c.l.b16 %v4496
        %v4577 = vunpack.c.l.b16 %v4497
        %v4578 = vunpack.c.l.b16 %v4498
        %v4579 = vunpack.c.l.b16 %v4499
        %v4580 = vunpack.c.l.b16 %v4500
        %v4581 = vunpack.c.l.b16 %v4501
        %v4582 = vunpack.c.l.b16 %v4502
        %v4583 = vunpack.c.l.b16 %v4503
        %v4584 = vunpack.c.l.b16 %v4504
        %v4585 = vunpack.c.l.b16 %v4505
        %v4586 = vpack.c.b16 %v4571, %v4570
        %v4587 = vpack.c.b16 %v4573, %v4572
        %v4588 = vpack.c.b16 %v4575, %v4574
        %v4589 = vpack.c.b16 %v4577, %v4576
        %v4590 = vpack.c.b16 %v4579, %v4578
        %v4591 = vpack.c.b16 %v4581, %v4580
        %v4592 = vpack.c.b16 %v4583, %v4582
        %v4593 = vpack.c.b16 %v4585, %v4584
        %v4618 = vunpack.c.l.b16 %v2245
        %v4619 = vunpack.c.l.b16 %v2246
        %v4620 = vunpack.c.l.b16 %v2247
        %v4621 = vunpack.c.l.b16 %v2248
        %v4622 = vunpack.c.l.b16 %v2249
        %v4623 = vunpack.c.l.b16 %v2250
        %v4624 = vunpack.c.l.b16 %v2251
        %v4625 = vunpack.c.l.b16 %v2252
        %v4626 = vunpack.c.l.b16 %v2253
        %v4627 = vunpack.c.l.b16 %v2254
        %v4628 = vunpack.c.l.b16 %v2255
        %v4629 = vunpack.c.l.b16 %v2256
        %v4630 = vunpack.c.l.b16 %v2257
        %v4631 = vunpack.c.l.b16 %v2258
        %v4632 = vunpack.c.l.b16 %v2259
        %v4633 = vunpack.c.l.b16 %v2260
        %v4634 = vpack.c.b16 %v4619, %v4618
        %v4635 = vpack.c.b16 %v4621, %v4620
        %v4636 = vpack.c.b16 %v4623, %v4622
        %v4637 = vpack.c.b16 %v4625, %v4624
        %v4638 = vpack.c.b16 %v4627, %v4626
        %v4639 = vpack.c.b16 %v4629, %v4628
        %v4640 = vpack.c.b16 %v4631, %v4630
        %v4641 = vpack.c.b16 %v4633, %v4632
        %4650 = vmatpush.bf16.msra.mxu0 %v4641
        %4651 = vmatpush.bf16.msra.mxu0 %v4640
        %4652 = vmatpush.bf16.msra.mxu0 %v4639
        %4653 = vmatpush.bf16.msra.mxu0 %v4638
        %4654 = vmatpush.bf16.msra.mxu0 %v4637
        %4655 = vmatpush.bf16.msra.mxu0 %v4636
        %4656 = vmatpush.bf16.msra.mxu0 %v4635
        %4657 = vmatpush.bf16.msra.mxu0 %v4634
        %4658 = vmatmul.bf16.gmra.mxu0 %v4586
        %v4659 = vpop.f32.mrf.mxu0
        %v4660 = vadd.f32 0.0, %v4659
        %v4661 = vpop.f32.mrf.mxu0
        %v4662 = vadd.f32 0.0, %v4661
        %4663 = vmatmul.bf16.gmra.mxu0 %v4587
        %v4664 = vpop.f32.mrf.mxu0
        %v4665 = vadd.f32 0.0, %v4664
        %v4666 = vpop.f32.mrf.mxu0
        %v4667 = vadd.f32 0.0, %v4666
        %4668 = vmatmul.bf16.gmra.mxu0 %v4588
        %v4669 = vpop.f32.mrf.mxu0
        %v4670 = vadd.f32 0.0, %v4669
        %v4671 = vpop.f32.mrf.mxu0
        %v4672 = vadd.f32 0.0, %v4671
        %4673 = vmatmul.bf16.gmra.mxu0 %v4589
        %v4674 = vpop.f32.mrf.mxu0
        %v4675 = vadd.f32 0.0, %v4674
        %v4676 = vpop.f32.mrf.mxu0
        %v4677 = vadd.f32 0.0, %v4676
        %4678 = vmatmul.bf16.gmra.mxu0 %v4590
        %v4679 = vpop.f32.mrf.mxu0
        %v4680 = vadd.f32 0.0, %v4679
        %v4681 = vpop.f32.mrf.mxu0
        %v4682 = vadd.f32 0.0, %v4681
        %4683 = vmatmul.bf16.gmra.mxu0 %v4591
        %v4684 = vpop.f32.mrf.mxu0
        %v4685 = vadd.f32 0.0, %v4684
        %v4686 = vpop.f32.mrf.mxu0
        %v4687 = vadd.f32 0.0, %v4686
        %4688 = vmatmul.bf16.gmra.mxu0 %v4592
        %v4689 = vpop.f32.mrf.mxu0
        %v4690 = vadd.f32 0.0, %v4689
        %v4691 = vpop.f32.mrf.mxu0
        %v4692 = vadd.f32 0.0, %v4691
        %4693 = vmatmul.bf16.gmra.mxu0 %v4593
        %v4694 = vpop.f32.mrf.mxu0
        %v4695 = vadd.f32 0.0, %v4694
        %v4696 = vpop.f32.mrf.mxu0
        %v4697 = vadd.f32 0.0, %v4696
        %4698 = vdwg.mxu0
        %v4715 = vunpack.c.l.b16 %v4506
        %v4716 = vunpack.c.l.b16 %v4507
        %v4717 = vunpack.c.l.b16 %v4508
        %v4718 = vunpack.c.l.b16 %v4509
        %v4719 = vunpack.c.l.b16 %v4510
        %v4720 = vunpack.c.l.b16 %v4511
        %v4721 = vunpack.c.l.b16 %v4512
        %v4722 = vunpack.c.l.b16 %v4513
        %v4723 = vunpack.c.l.b16 %v4514
        %v4724 = vunpack.c.l.b16 %v4515
        %v4725 = vunpack.c.l.b16 %v4516
        %v4726 = vunpack.c.l.b16 %v4517
        %v4727 = vunpack.c.l.b16 %v4518
        %v4728 = vunpack.c.l.b16 %v4519
        %v4729 = vunpack.c.l.b16 %v4520
        %v4730 = vunpack.c.l.b16 %v4521
        %v4731 = vpack.c.b16 %v4716, %v4715
        %v4732 = vpack.c.b16 %v4718, %v4717
        %v4733 = vpack.c.b16 %v4720, %v4719
        %v4734 = vpack.c.b16 %v4722, %v4721
        %v4735 = vpack.c.b16 %v4724, %v4723
        %v4736 = vpack.c.b16 %v4726, %v4725
        %v4737 = vpack.c.b16 %v4728, %v4727
        %v4738 = vpack.c.b16 %v4730, %v4729
        %v4763 = vunpack.c.l.b16 %v2261
        %v4764 = vunpack.c.l.b16 %v2262
        %v4765 = vunpack.c.l.b16 %v2263
        %v4766 = vunpack.c.l.b16 %v2264
        %v4767 = vunpack.c.l.b16 %v2265
        %v4768 = vunpack.c.l.b16 %v2266
        %v4769 = vunpack.c.l.b16 %v2267
        %v4770 = vunpack.c.l.b16 %v2268
        %v4771 = vunpack.c.l.b16 %v2269
        %v4772 = vunpack.c.l.b16 %v2270
        %v4773 = vunpack.c.l.b16 %v2271
        %v4774 = vunpack.c.l.b16 %v2272
        %v4775 = vunpack.c.l.b16 %v2273
        %v4776 = vunpack.c.l.b16 %v2274
        %v4777 = vunpack.c.l.b16 %v2275
        %v4778 = vunpack.c.l.b16 %v2276
        %v4779 = vpack.c.b16 %v4764, %v4763
        %v4780 = vpack.c.b16 %v4766, %v4765
        %v4781 = vpack.c.b16 %v4768, %v4767
        %v4782 = vpack.c.b16 %v4770, %v4769
        %v4783 = vpack.c.b16 %v4772, %v4771
        %v4784 = vpack.c.b16 %v4774, %v4773
        %v4785 = vpack.c.b16 %v4776, %v4775
        %v4786 = vpack.c.b16 %v4778, %v4777
        %4795 = vmatpush.bf16.msra.mxu0 %v4786
        %4796 = vmatpush.bf16.msra.mxu0 %v4785
        %4797 = vmatpush.bf16.msra.mxu0 %v4784
        %4798 = vmatpush.bf16.msra.mxu0 %v4783
        %4799 = vmatpush.bf16.msra.mxu0 %v4782
        %4800 = vmatpush.bf16.msra.mxu0 %v4781
        %4801 = vmatpush.bf16.msra.mxu0 %v4780
        %4802 = vmatpush.bf16.msra.mxu0 %v4779
        %4803 = vmatmul.bf16.gmra.mxu0 %v4731
        %v4804 = vpop.f32.mrf.mxu0
        %v4805 = vadd.f32 0.0, %v4804
        %v4806 = vpop.f32.mrf.mxu0
        %v4807 = vadd.f32 0.0, %v4806
        %4808 = vmatmul.bf16.gmra.mxu0 %v4732
        %v4809 = vpop.f32.mrf.mxu0
        %v4810 = vadd.f32 0.0, %v4809
        %v4811 = vpop.f32.mrf.mxu0
        %v4812 = vadd.f32 0.0, %v4811
        %4813 = vmatmul.bf16.gmra.mxu0 %v4733
        %v4814 = vpop.f32.mrf.mxu0
        %v4815 = vadd.f32 0.0, %v4814
        %v4816 = vpop.f32.mrf.mxu0
        %v4817 = vadd.f32 0.0, %v4816
        %4818 = vmatmul.bf16.gmra.mxu0 %v4734
        %v4819 = vpop.f32.mrf.mxu0
        %v4820 = vadd.f32 0.0, %v4819
        %v4821 = vpop.f32.mrf.mxu0
        %v4822 = vadd.f32 0.0, %v4821
        %4823 = vmatmul.bf16.gmra.mxu0 %v4735
        %v4824 = vpop.f32.mrf.mxu0
        %v4825 = vadd.f32 0.0, %v4824
        %v4826 = vpop.f32.mrf.mxu0
        %v4827 = vadd.f32 0.0, %v4826
        %4828 = vmatmul.bf16.gmra.mxu0 %v4736
        %v4829 = vpop.f32.mrf.mxu0
        %v4830 = vadd.f32 0.0, %v4829
        %v4831 = vpop.f32.mrf.mxu0
        %v4832 = vadd.f32 0.0, %v4831
        %4833 = vmatmul.bf16.gmra.mxu0 %v4737
        %v4834 = vpop.f32.mrf.mxu0
        %v4835 = vadd.f32 0.0, %v4834
        %v4836 = vpop.f32.mrf.mxu0
        %v4837 = vadd.f32 0.0, %v4836
        %4838 = vmatmul.bf16.gmra.mxu0 %v4738
        %v4839 = vpop.f32.mrf.mxu0
        %v4840 = vadd.f32 0.0, %v4839
        %v4841 = vpop.f32.mrf.mxu0
        %v4842 = vadd.f32 0.0, %v4841
        %4843 = vdwg.mxu0
        %v4860 = vunpack.c.l.b16 %v4522
        %v4861 = vunpack.c.l.b16 %v4523
        %v4862 = vunpack.c.l.b16 %v4524
        %v4863 = vunpack.c.l.b16 %v4525
        %v4864 = vunpack.c.l.b16 %v4526
        %v4865 = vunpack.c.l.b16 %v4527
        %v4866 = vunpack.c.l.b16 %v4528
        %v4867 = vunpack.c.l.b16 %v4529
        %v4868 = vunpack.c.l.b16 %v4530
        %v4869 = vunpack.c.l.b16 %v4531
        %v4870 = vunpack.c.l.b16 %v4532
        %v4871 = vunpack.c.l.b16 %v4533
        %v4872 = vunpack.c.l.b16 %v4534
        %v4873 = vunpack.c.l.b16 %v4535
        %v4874 = vunpack.c.l.b16 %v4536
        %v4875 = vunpack.c.l.b16 %v4537
        %v4876 = vpack.c.b16 %v4861, %v4860
        %v4877 = vpack.c.b16 %v4863, %v4862
        %v4878 = vpack.c.b16 %v4865, %v4864
        %v4879 = vpack.c.b16 %v4867, %v4866
        %v4880 = vpack.c.b16 %v4869, %v4868
        %v4881 = vpack.c.b16 %v4871, %v4870
        %v4882 = vpack.c.b16 %v4873, %v4872
        %v4883 = vpack.c.b16 %v4875, %v4874
        %v4908 = vunpack.c.l.b16 %v2277
        %v4909 = vunpack.c.l.b16 %v2278
        %v4910 = vunpack.c.l.b16 %v2279
        %v4911 = vunpack.c.l.b16 %v2280
        %v4912 = vunpack.c.l.b16 %v2281
        %v4913 = vunpack.c.l.b16 %v2282
        %v4914 = vunpack.c.l.b16 %v2283
        %v4915 = vunpack.c.l.b16 %v2284
        %v4916 = vunpack.c.l.b16 %v2285
        %v4917 = vunpack.c.l.b16 %v2286
        %v4918 = vunpack.c.l.b16 %v2287
        %v4919 = vunpack.c.l.b16 %v2288
        %v4920 = vunpack.c.l.b16 %v2289
        %v4921 = vunpack.c.l.b16 %v2290
        %v4922 = vunpack.c.l.b16 %v2291
        %v4923 = vunpack.c.l.b16 %v2292
        %v4924 = vpack.c.b16 %v4909, %v4908
        %v4925 = vpack.c.b16 %v4911, %v4910
        %v4926 = vpack.c.b16 %v4913, %v4912
        %v4927 = vpack.c.b16 %v4915, %v4914
        %v4928 = vpack.c.b16 %v4917, %v4916
        %v4929 = vpack.c.b16 %v4919, %v4918
        %v4930 = vpack.c.b16 %v4921, %v4920
        %v4931 = vpack.c.b16 %v4923, %v4922
        %4940 = vmatpush.bf16.msra.mxu0 %v4931
        %4941 = vmatpush.bf16.msra.mxu0 %v4930
        %4942 = vmatpush.bf16.msra.mxu0 %v4929
        %4943 = vmatpush.bf16.msra.mxu0 %v4928
        %4944 = vmatpush.bf16.msra.mxu0 %v4927
        %4945 = vmatpush.bf16.msra.mxu0 %v4926
        %4946 = vmatpush.bf16.msra.mxu0 %v4925
        %4947 = vmatpush.bf16.msra.mxu0 %v4924
        %4948 = vmatmul.bf16.gmra.mxu0 %v4876
        %v4949 = vpop.f32.mrf.mxu0
        %v4950 = vadd.f32 0.0, %v4949
        %v4951 = vpop.f32.mrf.mxu0
        %v4952 = vadd.f32 0.0, %v4951
        %4953 = vmatmul.bf16.gmra.mxu0 %v4877
        %v4954 = vpop.f32.mrf.mxu0
        %v4955 = vadd.f32 0.0, %v4954
        %v4956 = vpop.f32.mrf.mxu0
        %v4957 = vadd.f32 0.0, %v4956
        %4958 = vmatmul.bf16.gmra.mxu0 %v4878
        %v4959 = vpop.f32.mrf.mxu0
        %v4960 = vadd.f32 0.0, %v4959
        %v4961 = vpop.f32.mrf.mxu0
        %v4962 = vadd.f32 0.0, %v4961
        %4963 = vmatmul.bf16.gmra.mxu0 %v4879
        %v4964 = vpop.f32.mrf.mxu0
        %v4965 = vadd.f32 0.0, %v4964
        %v4966 = vpop.f32.mrf.mxu0
        %v4967 = vadd.f32 0.0, %v4966
        %4968 = vmatmul.bf16.gmra.mxu0 %v4880
        %v4969 = vpop.f32.mrf.mxu0
        %v4970 = vadd.f32 0.0, %v4969
        %v4971 = vpop.f32.mrf.mxu0
        %v4972 = vadd.f32 0.0, %v4971
        %4973 = vmatmul.bf16.gmra.mxu0 %v4881
        %v4974 = vpop.f32.mrf.mxu0
        %v4975 = vadd.f32 0.0, %v4974
        %v4976 = vpop.f32.mrf.mxu0
        %v4977 = vadd.f32 0.0, %v4976
        %4978 = vmatmul.bf16.gmra.mxu0 %v4882
        %v4979 = vpop.f32.mrf.mxu0
        %v4980 = vadd.f32 0.0, %v4979
        %v4981 = vpop.f32.mrf.mxu0
        %v4982 = vadd.f32 0.0, %v4981
        %4983 = vmatmul.bf16.gmra.mxu0 %v4883
        %v4984 = vpop.f32.mrf.mxu0
        %v4985 = vadd.f32 0.0, %v4984
        %v4986 = vpop.f32.mrf.mxu0
        %v4987 = vadd.f32 0.0, %v4986
        %4988 = vdwg.mxu0
        %v5005 = vunpack.c.l.b16 %v4538
        %v5006 = vunpack.c.l.b16 %v4539
        %v5007 = vunpack.c.l.b16 %v4540
        %v5008 = vunpack.c.l.b16 %v4541
        %v5009 = vunpack.c.l.b16 %v4542
        %v5010 = vunpack.c.l.b16 %v4543
        %v5011 = vunpack.c.l.b16 %v4544
        %v5012 = vunpack.c.l.b16 %v4545
        %v5013 = vunpack.c.l.b16 %v4546
        %v5014 = vunpack.c.l.b16 %v4547
        %v5015 = vunpack.c.l.b16 %v4548
        %v5016 = vunpack.c.l.b16 %v4549
        %v5017 = vunpack.c.l.b16 %v4550
        %v5018 = vunpack.c.l.b16 %v4551
        %v5019 = vunpack.c.l.b16 %v4552
        %v5020 = vunpack.c.l.b16 %v4553
        %v5021 = vpack.c.b16 %v5006, %v5005
        %v5022 = vpack.c.b16 %v5008, %v5007
        %v5023 = vpack.c.b16 %v5010, %v5009
        %v5024 = vpack.c.b16 %v5012, %v5011
        %v5025 = vpack.c.b16 %v5014, %v5013
        %v5026 = vpack.c.b16 %v5016, %v5015
        %v5027 = vpack.c.b16 %v5018, %v5017
        %v5028 = vpack.c.b16 %v5020, %v5019
        %v5053 = vunpack.c.l.b16 %v2293
        %v5054 = vunpack.c.l.b16 %v2294
        %v5055 = vunpack.c.l.b16 %v2295
        %v5056 = vunpack.c.l.b16 %v2296
        %v5057 = vunpack.c.l.b16 %v2297
        %v5058 = vunpack.c.l.b16 %v2298
        %v5059 = vunpack.c.l.b16 %v2299
        %v5060 = vunpack.c.l.b16 %v2300
        %v5061 = vunpack.c.l.b16 %v2301
        %v5062 = vunpack.c.l.b16 %v2302
        %v5063 = vunpack.c.l.b16 %v2303
        %v5064 = vunpack.c.l.b16 %v2304
        %v5065 = vunpack.c.l.b16 %v2305
        %v5066 = vunpack.c.l.b16 %v2306
        %v5067 = vunpack.c.l.b16 %v2307
        %v5068 = vunpack.c.l.b16 %v2308
        %v5069 = vpack.c.b16 %v5054, %v5053
        %v5070 = vpack.c.b16 %v5056, %v5055
        %v5071 = vpack.c.b16 %v5058, %v5057
        %v5072 = vpack.c.b16 %v5060, %v5059
        %v5073 = vpack.c.b16 %v5062, %v5061
        %v5074 = vpack.c.b16 %v5064, %v5063
        %v5075 = vpack.c.b16 %v5066, %v5065
        %v5076 = vpack.c.b16 %v5068, %v5067
        %5085 = vmatpush.bf16.msra.mxu0 %v5076
        %5086 = vmatpush.bf16.msra.mxu0 %v5075
        %5087 = vmatpush.bf16.msra.mxu0 %v5074
        %5088 = vmatpush.bf16.msra.mxu0 %v5073
        %5089 = vmatpush.bf16.msra.mxu0 %v5072
        %5090 = vmatpush.bf16.msra.mxu0 %v5071
        %5091 = vmatpush.bf16.msra.mxu0 %v5070
        %5092 = vmatpush.bf16.msra.mxu0 %v5069
        %5093 = vmatmul.bf16.gmra.mxu0 %v5021
        %v5094 = vpop.f32.mrf.mxu0
        %v5095 = vadd.f32 0.0, %v5094
        %v5096 = vpop.f32.mrf.mxu0
        %v5097 = vadd.f32 0.0, %v5096
        %5098 = vmatmul.bf16.gmra.mxu0 %v5022
        %v5099 = vpop.f32.mrf.mxu0
        %v5100 = vadd.f32 0.0, %v5099
        %v5101 = vpop.f32.mrf.mxu0
        %v5102 = vadd.f32 0.0, %v5101
        %5103 = vmatmul.bf16.gmra.mxu0 %v5023
        %v5104 = vpop.f32.mrf.mxu0
        %v5105 = vadd.f32 0.0, %v5104
        %v5106 = vpop.f32.mrf.mxu0
        %v5107 = vadd.f32 0.0, %v5106
        %5108 = vmatmul.bf16.gmra.mxu0 %v5024
        %v5109 = vpop.f32.mrf.mxu0
        %v5110 = vadd.f32 0.0, %v5109
        %v5111 = vpop.f32.mrf.mxu0
        %v5112 = vadd.f32 0.0, %v5111
        %5113 = vmatmul.bf16.gmra.mxu0 %v5025
        %v5114 = vpop.f32.mrf.mxu0
        %v5115 = vadd.f32 0.0, %v5114
        %v5116 = vpop.f32.mrf.mxu0
        %v5117 = vadd.f32 0.0, %v5116
        %5118 = vmatmul.bf16.gmra.mxu0 %v5026
        %v5119 = vpop.f32.mrf.mxu0
        %v5120 = vadd.f32 0.0, %v5119
        %v5121 = vpop.f32.mrf.mxu0
        %v5122 = vadd.f32 0.0, %v5121
        %5123 = vmatmul.bf16.gmra.mxu0 %v5027
        %v5124 = vpop.f32.mrf.mxu0
        %v5125 = vadd.f32 0.0, %v5124
        %v5126 = vpop.f32.mrf.mxu0
        %v5127 = vadd.f32 0.0, %v5126
        %5128 = vmatmul.bf16.gmra.mxu0 %v5028
        %v5129 = vpop.f32.mrf.mxu0
        %v5130 = vadd.f32 0.0, %v5129
        %v5131 = vpop.f32.mrf.mxu0
        %v5132 = vadd.f32 0.0, %v5131
        %5133 = vdwg.mxu0
        %5150 = vrot.lane.b32.xlu0 %v4805, 32
        %v5151 = vpop.permute.xlu0 %5150
        %5152 = vrot.lane.b32.xlu0 %v4807, 32
        %v5153 = vpop.permute.xlu0 %5152
        %5154 = vrot.lane.b32.xlu0 %v4810, 32
        %v5155 = vpop.permute.xlu0 %5154
        %5156 = vrot.lane.b32.xlu0 %v4812, 32
        %v5157 = vpop.permute.xlu0 %5156
        %5158 = vrot.lane.b32.xlu0 %v4815, 32
        %v5159 = vpop.permute.xlu0 %5158
        %5160 = vrot.lane.b32.xlu0 %v4817, 32
        %v5161 = vpop.permute.xlu0 %5160
        %5162 = vrot.lane.b32.xlu0 %v4820, 32
        %v5163 = vpop.permute.xlu0 %5162
        %5164 = vrot.lane.b32.xlu0 %v4822, 32
        %v5165 = vpop.permute.xlu0 %5164
        %5166 = vrot.lane.b32.xlu0 %v4825, 32
        %v5167 = vpop.permute.xlu0 %5166
        %5168 = vrot.lane.b32.xlu0 %v4827, 32
        %v5169 = vpop.permute.xlu0 %5168
        %5170 = vrot.lane.b32.xlu0 %v4830, 32
        %v5171 = vpop.permute.xlu0 %5170
        %5172 = vrot.lane.b32.xlu0 %v4832, 32
        %v5173 = vpop.permute.xlu0 %5172
        %5174 = vrot.lane.b32.xlu0 %v4835, 32
        %v5175 = vpop.permute.xlu0 %5174
        %5176 = vrot.lane.b32.xlu0 %v4837, 32
        %v5177 = vpop.permute.xlu0 %5176
        %5178 = vrot.lane.b32.xlu0 %v4840, 32
        %v5179 = vpop.permute.xlu0 %5178
        %5180 = vrot.lane.b32.xlu0 %v4842, 32
        %v5181 = vpop.permute.xlu0 %5180
        %5214 = vrot.lane.b32.xlu0 %v4950, 64
        %v5215 = vpop.permute.xlu0 %5214
        %5216 = vrot.lane.b32.xlu0 %v4952, 64
        %v5217 = vpop.permute.xlu0 %5216
        %5218 = vrot.lane.b32.xlu0 %v4955, 64
        %v5219 = vpop.permute.xlu0 %5218
        %5220 = vrot.lane.b32.xlu0 %v4957, 64
        %v5221 = vpop.permute.xlu0 %5220
        %5222 = vrot.lane.b32.xlu0 %v4960, 64
        %v5223 = vpop.permute.xlu0 %5222
        %5224 = vrot.lane.b32.xlu0 %v4962, 64
        %v5225 = vpop.permute.xlu0 %5224
        %5226 = vrot.lane.b32.xlu0 %v4965, 64
        %v5227 = vpop.permute.xlu0 %5226
        %5228 = vrot.lane.b32.xlu0 %v4967, 64
        %v5229 = vpop.permute.xlu0 %5228
        %5230 = vrot.lane.b32.xlu0 %v4970, 64
        %v5231 = vpop.permute.xlu0 %5230
        %5232 = vrot.lane.b32.xlu0 %v4972, 64
        %v5233 = vpop.permute.xlu0 %5232
        %5234 = vrot.lane.b32.xlu0 %v4975, 64
        %v5235 = vpop.permute.xlu0 %5234
        %5236 = vrot.lane.b32.xlu0 %v4977, 64
        %v5237 = vpop.permute.xlu0 %5236
        %5238 = vrot.lane.b32.xlu0 %v4980, 64
        %v5239 = vpop.permute.xlu0 %5238
        %5240 = vrot.lane.b32.xlu0 %v4982, 64
        %v5241 = vpop.permute.xlu0 %5240
        %5242 = vrot.lane.b32.xlu0 %v4985, 64
        %v5243 = vpop.permute.xlu0 %5242
        %5244 = vrot.lane.b32.xlu0 %v4987, 64
        %v5245 = vpop.permute.xlu0 %5244
        %5278 = vrot.lane.b32.xlu0 %v5095, 96
        %v5279 = vpop.permute.xlu0 %5278
        %5280 = vrot.lane.b32.xlu0 %v5097, 96
        %v5281 = vpop.permute.xlu0 %5280
        %5282 = vrot.lane.b32.xlu0 %v5100, 96
        %v5283 = vpop.permute.xlu0 %5282
        %5284 = vrot.lane.b32.xlu0 %v5102, 96
        %v5285 = vpop.permute.xlu0 %5284
        %5286 = vrot.lane.b32.xlu0 %v5105, 96
        %v5287 = vpop.permute.xlu0 %5286
        %5288 = vrot.lane.b32.xlu0 %v5107, 96
        %v5289 = vpop.permute.xlu0 %5288
        %5290 = vrot.lane.b32.xlu0 %v5110, 96
        %v5291 = vpop.permute.xlu0 %5290
        %5292 = vrot.lane.b32.xlu0 %v5112, 96
        %v5293 = vpop.permute.xlu0 %5292
        %5294 = vrot.lane.b32.xlu0 %v5115, 96
        %v5295 = vpop.permute.xlu0 %5294
        %5296 = vrot.lane.b32.xlu0 %v5117, 96
        %v5297 = vpop.permute.xlu0 %5296
        %5298 = vrot.lane.b32.xlu0 %v5120, 96
        %v5299 = vpop.permute.xlu0 %5298
        %5300 = vrot.lane.b32.xlu0 %v5122, 96
        %v5301 = vpop.permute.xlu0 %5300
        %5302 = vrot.lane.b32.xlu0 %v5125, 96
        %v5303 = vpop.permute.xlu0 %5302
        %5304 = vrot.lane.b32.xlu0 %v5127, 96
        %v5305 = vpop.permute.xlu0 %5304
        %5306 = vrot.lane.b32.xlu0 %v5130, 96
        %v5307 = vpop.permute.xlu0 %5306
        %5308 = vrot.lane.b32.xlu0 %v5132, 96
        %v5309 = vpop.permute.xlu0 %5308
        %v5326 = vsel %vm2389, %v4660, %v5151
        %v5327 = vsel %vm2389, %v4662, %v5153
        %v5328 = vsel %vm2389, %v4665, %v5155
        %v5329 = vsel %vm2389, %v4667, %v5157
        %v5330 = vsel %vm2389, %v4670, %v5159
        %v5331 = vsel %vm2389, %v4672, %v5161
        %v5332 = vsel %vm2389, %v4675, %v5163
        %v5333 = vsel %vm2389, %v4677, %v5165
        %v5334 = vsel %vm2389, %v4680, %v5167
        %v5335 = vsel %vm2389, %v4682, %v5169
        %v5336 = vsel %vm2389, %v4685, %v5171
        %v5337 = vsel %vm2389, %v4687, %v5173
        %v5338 = vsel %vm2389, %v4690, %v5175
        %v5339 = vsel %vm2389, %v4692, %v5177
        %v5340 = vsel %vm2389, %v4695, %v5179
        %v5341 = vsel %vm2389, %v4697, %v5181
        %vm5342 = vcmask 523264
        %v5343 = vsel %vm5342, %v5326, %v5215
        %v5344 = vsel %vm5342, %v5327, %v5217
        %v5345 = vsel %vm5342, %v5328, %v5219
        %v5346 = vsel %vm5342, %v5329, %v5221
        %v5347 = vsel %vm5342, %v5330, %v5223
        %v5348 = vsel %vm5342, %v5331, %v5225
        %v5349 = vsel %vm5342, %v5332, %v5227
        %v5350 = vsel %vm5342, %v5333, %v5229
        %v5351 = vsel %vm5342, %v5334, %v5231
        %v5352 = vsel %vm5342, %v5335, %v5233
        %v5353 = vsel %vm5342, %v5336, %v5235
        %v5354 = vsel %vm5342, %v5337, %v5237
        %v5355 = vsel %vm5342, %v5338, %v5239
        %v5356 = vsel %vm5342, %v5339, %v5241
        %v5357 = vsel %vm5342, %v5340, %v5243
        %v5358 = vsel %vm5342, %v5341, %v5245
        %vm5359 = vcmask 785408
        %v5360 = vsel %vm5359, %v5343, %v5279
        %v5361 = vsel %vm5359, %v5344, %v5281
        %v5362 = vsel %vm5359, %v5345, %v5283
        %v5363 = vsel %vm5359, %v5346, %v5285
        %v5364 = vsel %vm5359, %v5347, %v5287
        %v5365 = vsel %vm5359, %v5348, %v5289
        %v5366 = vsel %vm5359, %v5349, %v5291
        %v5367 = vsel %vm5359, %v5350, %v5293
        %v5368 = vsel %vm5359, %v5351, %v5295
        %v5369 = vsel %vm5359, %v5352, %v5297
        %v5370 = vsel %vm5359, %v5353, %v5299
        %v5371 = vsel %vm5359, %v5354, %v5301
        %v5372 = vsel %vm5359, %v5355, %v5303
        %v5373 = vsel %vm5359, %v5356, %v5305
        %v5374 = vsel %vm5359, %v5357, %v5307
        %v5375 = vsel %vm5359, %v5358, %v5309
        %v5376 = vpack.c.bf16 %v5361, %v5360
        %v5377 = vpack.c.bf16 %v5363, %v5362
        %v5378 = vpack.c.bf16 %v5365, %v5364
        %v5379 = vpack.c.bf16 %v5367, %v5366
        %v5380 = vpack.c.bf16 %v5369, %v5368
        %v5381 = vpack.c.bf16 %v5371, %v5370
        %v5382 = vpack.c.bf16 %v5373, %v5372
        %v5383 = vpack.c.bf16 %v5375, %v5374
        %v5384 = vld [vmem:[%s745] sm:$0xf]
        %v5385 = vld [vmem:[%s745 + $0x4] sm:$0xf]
        %v5386 = vld [vmem:[%s745 + $0x8] sm:$0xf]
        %v5387 = vld [vmem:[%s745 + $0xc] sm:$0xf]
        %v5388 = vld [vmem:[%s745 + $0x10] sm:$0xf]
        %v5389 = vld [vmem:[%s745 + $0x14] sm:$0xf]
        %v5390 = vld [vmem:[%s745 + $0x18] sm:$0xf]
        %v5391 = vld [vmem:[%s745 + $0x1c] sm:$0xf]
        %v5392 = vld [vmem:[%s745 + $0x20] sm:$0xf]
        %v5393 = vld [vmem:[%s745 + $0x24] sm:$0xf]
        %v5394 = vld [vmem:[%s745 + $0x28] sm:$0xf]
        %v5395 = vld [vmem:[%s745 + $0x2c] sm:$0xf]
        %v5396 = vld [vmem:[%s745 + $0x30] sm:$0xf]
        %v5397 = vld [vmem:[%s745 + $0x34] sm:$0xf]
        %v5398 = vld [vmem:[%s745 + $0x38] sm:$0xf]
        %v5399 = vld [vmem:[%s745 + $0x3c] sm:$0xf]
        %v5400 = vld [vmem:[%s887] sm:$0x1]
        %v5402 = vperm.slane %v5400, 0
        %v5420 = vunpack.c.l.b16 %v5384
        %v5421 = vunpack.c.l.b16 %v5385
        %v5422 = vunpack.c.l.b16 %v5386
        %v5423 = vunpack.c.l.b16 %v5387
        %v5424 = vunpack.c.l.b16 %v5388
        %v5425 = vunpack.c.l.b16 %v5389
        %v5426 = vunpack.c.l.b16 %v5390
        %v5427 = vunpack.c.l.b16 %v5391
        %v5428 = vunpack.c.l.b16 %v5392
        %v5429 = vunpack.c.l.b16 %v5393
        %v5430 = vunpack.c.l.b16 %v5394
        %v5431 = vunpack.c.l.b16 %v5395
        %v5432 = vunpack.c.l.b16 %v5396
        %v5433 = vunpack.c.l.b16 %v5397
        %v5434 = vunpack.c.l.b16 %v5398
        %v5435 = vunpack.c.l.b16 %v5399
        %v5436 = vpack.c.b16 %v5421, %v5420
        %v5437 = vpack.c.b16 %v5423, %v5422
        %v5438 = vpack.c.b16 %v5425, %v5424
        %v5439 = vpack.c.b16 %v5427, %v5426
        %v5440 = vpack.c.b16 %v5429, %v5428
        %v5441 = vpack.c.b16 %v5431, %v5430
        %v5442 = vpack.c.b16 %v5433, %v5432
        %v5443 = vpack.c.b16 %v5435, %v5434
        %5452 = vmatpush.bf16.msra.mxu0 %v5443
        %5453 = vmatpush.bf16.msra.mxu0 %v5442
        %5454 = vmatpush.bf16.msra.mxu0 %v5441
        %5455 = vmatpush.bf16.msra.mxu0 %v5440
        %5456 = vmatpush.bf16.msra.mxu0 %v5439
        %5457 = vmatpush.bf16.msra.mxu0 %v5438
        %5458 = vmatpush.bf16.msra.mxu0 %v5437
        %5459 = vmatpush.bf16.msra.mxu0 %v5436
        %5460 = vmatmul.bf16.gmra.mxu0 %v5376
        %v5461 = vpop.f32.mrf.mxu0
        %v5462 = vadd.f32 %v5402, %v5461
        %v5463 = vpop.f32.mrf.mxu0
        %v5464 = vadd.f32 %v5402, %v5463
        %5465 = vmatmul.bf16.gmra.mxu0 %v5377
        %v5466 = vpop.f32.mrf.mxu0
        %v5467 = vadd.f32 %v5402, %v5466
        %v5468 = vpop.f32.mrf.mxu0
        %v5469 = vadd.f32 %v5402, %v5468
        %5470 = vmatmul.bf16.gmra.mxu0 %v5378
        %v5471 = vpop.f32.mrf.mxu0
        %v5472 = vadd.f32 %v5402, %v5471
        %v5473 = vpop.f32.mrf.mxu0
        %v5474 = vadd.f32 %v5402, %v5473
        %5475 = vmatmul.bf16.gmra.mxu0 %v5379
        %v5476 = vpop.f32.mrf.mxu0
        %v5477 = vadd.f32 %v5402, %v5476
        %v5478 = vpop.f32.mrf.mxu0
        %v5479 = vadd.f32 %v5402, %v5478
        %5480 = vmatmul.bf16.gmra.mxu0 %v5380
        %v5481 = vpop.f32.mrf.mxu0
        %v5482 = vadd.f32 %v5402, %v5481
        %v5483 = vpop.f32.mrf.mxu0
        %v5484 = vadd.f32 %v5402, %v5483
        %5485 = vmatmul.bf16.gmra.mxu0 %v5381
        %v5486 = vpop.f32.mrf.mxu0
        %v5487 = vadd.f32 %v5402, %v5486
        %v5488 = vpop.f32.mrf.mxu0
        %v5489 = vadd.f32 %v5402, %v5488
        %5490 = vmatmul.bf16.gmra.mxu0 %v5382
        %v5491 = vpop.f32.mrf.mxu0
        %v5492 = vadd.f32 %v5402, %v5491
        %v5493 = vpop.f32.mrf.mxu0
        %v5494 = vadd.f32 %v5402, %v5493
        %5495 = vmatmul.bf16.gmra.mxu0 %v5383
        %v5496 = vpop.f32.mrf.mxu0
        %v5497 = vadd.f32 %v5402, %v5496
        %v5498 = vpop.f32.mrf.mxu0
        %v5499 = vadd.f32 %v5402, %v5498
        %5500 = vdwg.mxu0
        %v5501 = vadd.f32 %v5462, %v931
        %v5502 = vadd.f32 %v5464, %v932
        %v5503 = vadd.f32 %v5467, %v933
        %v5504 = vadd.f32 %v5469, %v934
        %v5505 = vadd.f32 %v5472, %v935
        %v5506 = vadd.f32 %v5474, %v936
        %v5507 = vadd.f32 %v5477, %v937
        %v5508 = vadd.f32 %v5479, %v938
        %v5509 = vadd.f32 %v5482, %v939
        %v5510 = vadd.f32 %v5484, %v940
        %v5511 = vadd.f32 %v5487, %v941
        %v5512 = vadd.f32 %v5489, %v942
        %v5513 = vadd.f32 %v5492, %v943
        %v5514 = vadd.f32 %v5494, %v944
        %v5515 = vadd.f32 %v5497, %v945
        %v5516 = vadd.f32 %v5499, %v946
        %v5517 = vld [vmem:[%s754] sm:$0x1]
        %v5518 = vld [vmem:[%s763] sm:$0x1]
        %5519 = vadd.xlane.f32.xlu0 %v5501
        %v5520 = vpop.xlane.xlu0 %5519
        %5521 = vadd.xlane.f32.xlu0 %v5502
        %v5522 = vpop.xlane.xlu0 %5521
        %5523 = vadd.xlane.f32.xlu0 %v5503
        %v5524 = vpop.xlane.xlu0 %5523
        %5525 = vadd.xlane.f32.xlu0 %v5504
        %v5526 = vpop.xlane.xlu0 %5525
        %5527 = vadd.xlane.f32.xlu0 %v5505
        %v5528 = vpop.xlane.xlu0 %5527
        %5529 = vadd.xlane.f32.xlu0 %v5506
        %v5530 = vpop.xlane.xlu0 %5529
        %5531 = vadd.xlane.f32.xlu0 %v5507
        %v5532 = vpop.xlane.xlu0 %5531
        %5533 = vadd.xlane.f32.xlu0 %v5508
        %v5534 = vpop.xlane.xlu0 %5533
        %5535 = vadd.xlane.f32.xlu0 %v5509
        %v5536 = vpop.xlane.xlu0 %5535
        %5537 = vadd.xlane.f32.xlu0 %v5510
        %v5538 = vpop.xlane.xlu0 %5537
        %5539 = vadd.xlane.f32.xlu0 %v5511
        %v5540 = vpop.xlane.xlu0 %5539
        %5541 = vadd.xlane.f32.xlu0 %v5512
        %v5542 = vpop.xlane.xlu0 %5541
        %5543 = vadd.xlane.f32.xlu0 %v5513
        %v5544 = vpop.xlane.xlu0 %5543
        %5545 = vadd.xlane.f32.xlu0 %v5514
        %v5546 = vpop.xlane.xlu0 %5545
        %5547 = vadd.xlane.f32.xlu0 %v5515
        %v5548 = vpop.xlane.xlu0 %5547
        %5549 = vadd.xlane.f32.xlu0 %v5516
        %v5550 = vpop.xlane.xlu0 %5549
        %v5551 = vmul.f32 %v5520, %v987
        %v5552 = vmul.f32 %v5522, %v987
        %v5553 = vmul.f32 %v5524, %v987
        %v5554 = vmul.f32 %v5526, %v987
        %v5555 = vmul.f32 %v5528, %v987
        %v5556 = vmul.f32 %v5530, %v987
        %v5557 = vmul.f32 %v5532, %v987
        %v5558 = vmul.f32 %v5534, %v987
        %v5559 = vmul.f32 %v5536, %v987
        %v5560 = vmul.f32 %v5538, %v987
        %v5561 = vmul.f32 %v5540, %v987
        %v5562 = vmul.f32 %v5542, %v987
        %v5563 = vmul.f32 %v5544, %v987
        %v5564 = vmul.f32 %v5546, %v987
        %v5565 = vmul.f32 %v5548, %v987
        %v5566 = vmul.f32 %v5550, %v987
        %v5567 = vsub.f32 %v5501, %v5551
        %v5568 = vsub.f32 %v5502, %v5552
        %v5569 = vsub.f32 %v5503, %v5553
        %v5570 = vsub.f32 %v5504, %v5554
        %v5571 = vsub.f32 %v5505, %v5555
        %v5572 = vsub.f32 %v5506, %v5556
        %v5573 = vsub.f32 %v5507, %v5557
        %v5574 = vsub.f32 %v5508, %v5558
        %v5575 = vsub.f32 %v5509, %v5559
        %v5576 = vsub.f32 %v5510, %v5560
        %v5577 = vsub.f32 %v5511, %v5561
        %v5578 = vsub.f32 %v5512, %v5562
        %v5579 = vsub.f32 %v5513, %v5563
        %v5580 = vsub.f32 %v5514, %v5564
        %v5581 = vsub.f32 %v5515, %v5565
        %v5582 = vsub.f32 %v5516, %v5566
        %v5583 = vmul.f32 %v5567, %v5567
        %v5584 = vmul.f32 %v5568, %v5568
        %v5585 = vmul.f32 %v5569, %v5569
        %v5586 = vmul.f32 %v5570, %v5570
        %v5587 = vmul.f32 %v5571, %v5571
        %v5588 = vmul.f32 %v5572, %v5572
        %v5589 = vmul.f32 %v5573, %v5573
        %v5590 = vmul.f32 %v5574, %v5574
        %v5591 = vmul.f32 %v5575, %v5575
        %v5592 = vmul.f32 %v5576, %v5576
        %v5593 = vmul.f32 %v5577, %v5577
        %v5594 = vmul.f32 %v5578, %v5578
        %v5595 = vmul.f32 %v5579, %v5579
        %v5596 = vmul.f32 %v5580, %v5580
        %v5597 = vmul.f32 %v5581, %v5581
        %v5598 = vmul.f32 %v5582, %v5582
        %5599 = vadd.xlane.f32.xlu0 %v5583
        %v5600 = vpop.xlane.xlu0 %5599
        %5601 = vadd.xlane.f32.xlu0 %v5584
        %v5602 = vpop.xlane.xlu0 %5601
        %5603 = vadd.xlane.f32.xlu0 %v5585
        %v5604 = vpop.xlane.xlu0 %5603
        %5605 = vadd.xlane.f32.xlu0 %v5586
        %v5606 = vpop.xlane.xlu0 %5605
        %5607 = vadd.xlane.f32.xlu0 %v5587
        %v5608 = vpop.xlane.xlu0 %5607
        %5609 = vadd.xlane.f32.xlu0 %v5588
        %v5610 = vpop.xlane.xlu0 %5609
        %5611 = vadd.xlane.f32.xlu0 %v5589
        %v5612 = vpop.xlane.xlu0 %5611
        %5613 = vadd.xlane.f32.xlu0 %v5590
        %v5614 = vpop.xlane.xlu0 %5613
        %5615 = vadd.xlane.f32.xlu0 %v5591
        %v5616 = vpop.xlane.xlu0 %5615
        %5617 = vadd.xlane.f32.xlu0 %v5592
        %v5618 = vpop.xlane.xlu0 %5617
        %5619 = vadd.xlane.f32.xlu0 %v5593
        %v5620 = vpop.xlane.xlu0 %5619
        %5621 = vadd.xlane.f32.xlu0 %v5594
        %v5622 = vpop.xlane.xlu0 %5621
        %5623 = vadd.xlane.f32.xlu0 %v5595
        %v5624 = vpop.xlane.xlu0 %5623
        %5625 = vadd.xlane.f32.xlu0 %v5596
        %v5626 = vpop.xlane.xlu0 %5625
        %5627 = vadd.xlane.f32.xlu0 %v5597
        %v5628 = vpop.xlane.xlu0 %5627
        %5629 = vadd.xlane.f32.xlu0 %v5598
        %v5630 = vpop.xlane.xlu0 %5629
        %v5631 = vmul.f32 %v5600, %v987
        %v5632 = vmul.f32 %v5602, %v987
        %v5633 = vmul.f32 %v5604, %v987
        %v5634 = vmul.f32 %v5606, %v987
        %v5635 = vmul.f32 %v5608, %v987
        %v5636 = vmul.f32 %v5610, %v987
        %v5637 = vmul.f32 %v5612, %v987
        %v5638 = vmul.f32 %v5614, %v987
        %v5639 = vmul.f32 %v5616, %v987
        %v5640 = vmul.f32 %v5618, %v987
        %v5641 = vmul.f32 %v5620, %v987
        %v5642 = vmul.f32 %v5622, %v987
        %v5643 = vmul.f32 %v5624, %v987
        %v5644 = vmul.f32 %v5626, %v987
        %v5645 = vmul.f32 %v5628, %v987
        %v5646 = vmul.f32 %v5630, %v987
        %v5647 = vadd.f32 %v5631, 1e-12
        %v5648 = vadd.f32 %v5632, 1e-12
        %v5649 = vadd.f32 %v5633, 1e-12
        %v5650 = vadd.f32 %v5634, 1e-12
        %v5651 = vadd.f32 %v5635, 1e-12
        %v5652 = vadd.f32 %v5636, 1e-12
        %v5653 = vadd.f32 %v5637, 1e-12
        %v5654 = vadd.f32 %v5638, 1e-12
        %v5655 = vadd.f32 %v5639, 1e-12
        %v5656 = vadd.f32 %v5640, 1e-12
        %v5657 = vadd.f32 %v5641, 1e-12
        %v5658 = vadd.f32 %v5642, 1e-12
        %v5659 = vadd.f32 %v5643, 1e-12
        %v5660 = vadd.f32 %v5644, 1e-12
        %v5661 = vadd.f32 %v5645, 1e-12
        %v5662 = vadd.f32 %v5646, 1e-12
        %v5663 = vrsqrt.pop %v5647
        %v5664 = vmul.f32 %v5663, %v5647
        %v5665 = vmul.f32 %v5664, %v5663
        %v5666 = vmul.f32 0.5, %v5665
        %v5667 = vsub.f32 1.5, %v5666
        %v5668 = vmul.f32 %v5663, %v5667
        %vm5669 = vweird.f32 %v5647
        %vm5670 = vweird.f32 %v5663
        %vm5671 = vmor %vm5669, %vm5670
        %v5672 = vsel %vm5671, %v5663, %v5668
        %v5673 = vrsqrt.pop %v5648
        %v5674 = vmul.f32 %v5673, %v5648
        %v5675 = vmul.f32 %v5674, %v5673
        %v5676 = vmul.f32 0.5, %v5675
        %v5677 = vsub.f32 1.5, %v5676
        %v5678 = vmul.f32 %v5673, %v5677
        %vm5679 = vweird.f32 %v5648
        %vm5680 = vweird.f32 %v5673
        %vm5681 = vmor %vm5679, %vm5680
        %v5682 = vsel %vm5681, %v5673, %v5678
        %v5683 = vrsqrt.pop %v5649
        %v5684 = vmul.f32 %v5683, %v5649
        %v5685 = vmul.f32 %v5684, %v5683
        %v5686 = vmul.f32 0.5, %v5685
        %v5687 = vsub.f32 1.5, %v5686
        %v5688 = vmul.f32 %v5683, %v5687
        %vm5689 = vweird.f32 %v5649
        %vm5690 = vweird.f32 %v5683
        %vm5691 = vmor %vm5689, %vm5690
        %v5692 = vsel %vm5691, %v5683, %v5688
        %v5693 = vrsqrt.pop %v5650
        %v5694 = vmul.f32 %v5693, %v5650
        %v5695 = vmul.f32 %v5694, %v5693
        %v5696 = vmul.f32 0.5, %v5695
        %v5697 = vsub.f32 1.5, %v5696
        %v5698 = vmul.f32 %v5693, %v5697
        %vm5699 = vweird.f32 %v5650
        %vm5700 = vweird.f32 %v5693
        %vm5701 = vmor %vm5699, %vm5700
        %v5702 = vsel %vm5701, %v5693, %v5698
        %v5703 = vrsqrt.pop %v5651
        %v5704 = vmul.f32 %v5703, %v5651
        %v5705 = vmul.f32 %v5704, %v5703
        %v5706 = vmul.f32 0.5, %v5705
        %v5707 = vsub.f32 1.5, %v5706
        %v5708 = vmul.f32 %v5703, %v5707
        %vm5709 = vweird.f32 %v5651
        %vm5710 = vweird.f32 %v5703
        %vm5711 = vmor %vm5709, %vm5710
        %v5712 = vsel %vm5711, %v5703, %v5708
        %v5713 = vrsqrt.pop %v5652
        %v5714 = vmul.f32 %v5713, %v5652
        %v5715 = vmul.f32 %v5714, %v5713
        %v5716 = vmul.f32 0.5, %v5715
        %v5717 = vsub.f32 1.5, %v5716
        %v5718 = vmul.f32 %v5713, %v5717
        %vm5719 = vweird.f32 %v5652
        %vm5720 = vweird.f32 %v5713
        %vm5721 = vmor %vm5719, %vm5720
        %v5722 = vsel %vm5721, %v5713, %v5718
        %v5723 = vrsqrt.pop %v5653
        %v5724 = vmul.f32 %v5723, %v5653
        %v5725 = vmul.f32 %v5724, %v5723
        %v5726 = vmul.f32 0.5, %v5725
        %v5727 = vsub.f32 1.5, %v5726
        %v5728 = vmul.f32 %v5723, %v5727
        %vm5729 = vweird.f32 %v5653
        %vm5730 = vweird.f32 %v5723
        %vm5731 = vmor %vm5729, %vm5730
        %v5732 = vsel %vm5731, %v5723, %v5728
        %v5733 = vrsqrt.pop %v5654
        %v5734 = vmul.f32 %v5733, %v5654
        %v5735 = vmul.f32 %v5734, %v5733
        %v5736 = vmul.f32 0.5, %v5735
        %v5737 = vsub.f32 1.5, %v5736
        %v5738 = vmul.f32 %v5733, %v5737
        %vm5739 = vweird.f32 %v5654
        %vm5740 = vweird.f32 %v5733
        %vm5741 = vmor %vm5739, %vm5740
        %v5742 = vsel %vm5741, %v5733, %v5738
        %v5743 = vrsqrt.pop %v5655
        %v5744 = vmul.f32 %v5743, %v5655
        %v5745 = vmul.f32 %v5744, %v5743
        %v5746 = vmul.f32 0.5, %v5745
        %v5747 = vsub.f32 1.5, %v5746
        %v5748 = vmul.f32 %v5743, %v5747
        %vm5749 = vweird.f32 %v5655
        %vm5750 = vweird.f32 %v5743
        %vm5751 = vmor %vm5749, %vm5750
        %v5752 = vsel %vm5751, %v5743, %v5748
        %v5753 = vrsqrt.pop %v5656
        %v5754 = vmul.f32 %v5753, %v5656
        %v5755 = vmul.f32 %v5754, %v5753
        %v5756 = vmul.f32 0.5, %v5755
        %v5757 = vsub.f32 1.5, %v5756
        %v5758 = vmul.f32 %v5753, %v5757
        %vm5759 = vweird.f32 %v5656
        %vm5760 = vweird.f32 %v5753
        %vm5761 = vmor %vm5759, %vm5760
        %v5762 = vsel %vm5761, %v5753, %v5758
        %v5763 = vrsqrt.pop %v5657
        %v5764 = vmul.f32 %v5763, %v5657
        %v5765 = vmul.f32 %v5764, %v5763
        %v5766 = vmul.f32 0.5, %v5765
        %v5767 = vsub.f32 1.5, %v5766
        %v5768 = vmul.f32 %v5763, %v5767
        %vm5769 = vweird.f32 %v5657
        %vm5770 = vweird.f32 %v5763
        %vm5771 = vmor %vm5769, %vm5770
        %v5772 = vsel %vm5771, %v5763, %v5768
        %v5773 = vrsqrt.pop %v5658
        %v5774 = vmul.f32 %v5773, %v5658
        %v5775 = vmul.f32 %v5774, %v5773
        %v5776 = vmul.f32 0.5, %v5775
        %v5777 = vsub.f32 1.5, %v5776
        %v5778 = vmul.f32 %v5773, %v5777
        %vm5779 = vweird.f32 %v5658
        %vm5780 = vweird.f32 %v5773
        %vm5781 = vmor %vm5779, %vm5780
        %v5782 = vsel %vm5781, %v5773, %v5778
        %v5783 = vrsqrt.pop %v5659
        %v5784 = vmul.f32 %v5783, %v5659
        %v5785 = vmul.f32 %v5784, %v5783
        %v5786 = vmul.f32 0.5, %v5785
        %v5787 = vsub.f32 1.5, %v5786
        %v5788 = vmul.f32 %v5783, %v5787
        %vm5789 = vweird.f32 %v5659
        %vm5790 = vweird.f32 %v5783
        %vm5791 = vmor %vm5789, %vm5790
        %v5792 = vsel %vm5791, %v5783, %v5788
        %v5793 = vrsqrt.pop %v5660
        %v5794 = vmul.f32 %v5793, %v5660
        %v5795 = vmul.f32 %v5794, %v5793
        %v5796 = vmul.f32 0.5, %v5795
        %v5797 = vsub.f32 1.5, %v5796
        %v5798 = vmul.f32 %v5793, %v5797
        %vm5799 = vweird.f32 %v5660
        %vm5800 = vweird.f32 %v5793
        %vm5801 = vmor %vm5799, %vm5800
        %v5802 = vsel %vm5801, %v5793, %v5798
        %v5803 = vrsqrt.pop %v5661
        %v5804 = vmul.f32 %v5803, %v5661
        %v5805 = vmul.f32 %v5804, %v5803
        %v5806 = vmul.f32 0.5, %v5805
        %v5807 = vsub.f32 1.5, %v5806
        %v5808 = vmul.f32 %v5803, %v5807
        %vm5809 = vweird.f32 %v5661
        %vm5810 = vweird.f32 %v5803
        %vm5811 = vmor %vm5809, %vm5810
        %v5812 = vsel %vm5811, %v5803, %v5808
        %v5813 = vrsqrt.pop %v5662
        %v5814 = vmul.f32 %v5813, %v5662
        %v5815 = vmul.f32 %v5814, %v5813
        %v5816 = vmul.f32 0.5, %v5815
        %v5817 = vsub.f32 1.5, %v5816
        %v5818 = vmul.f32 %v5813, %v5817
        %vm5819 = vweird.f32 %v5662
        %vm5820 = vweird.f32 %v5813
        %vm5821 = vmor %vm5819, %vm5820
        %v5822 = vsel %vm5821, %v5813, %v5818
        %v5823 = vmul.f32 %v5567, %v5672
        %v5824 = vmul.f32 %v5568, %v5682
        %v5825 = vmul.f32 %v5569, %v5692
        %v5826 = vmul.f32 %v5570, %v5702
        %v5827 = vmul.f32 %v5571, %v5712
        %v5828 = vmul.f32 %v5572, %v5722
        %v5829 = vmul.f32 %v5573, %v5732
        %v5830 = vmul.f32 %v5574, %v5742
        %v5831 = vmul.f32 %v5575, %v5752
        %v5832 = vmul.f32 %v5576, %v5762
        %v5833 = vmul.f32 %v5577, %v5772
        %v5834 = vmul.f32 %v5578, %v5782
        %v5835 = vmul.f32 %v5579, %v5792
        %v5836 = vmul.f32 %v5580, %v5802
        %v5837 = vmul.f32 %v5581, %v5812
        %v5838 = vmul.f32 %v5582, %v5822
        %v5840 = vperm.slane %v5517, 0
        %v5842 = vmul.f32 %v5823, %v5840
        %v5843 = vmul.f32 %v5824, %v5840
        %v5844 = vmul.f32 %v5825, %v5840
        %v5845 = vmul.f32 %v5826, %v5840
        %v5846 = vmul.f32 %v5827, %v5840
        %v5847 = vmul.f32 %v5828, %v5840
        %v5848 = vmul.f32 %v5829, %v5840
        %v5849 = vmul.f32 %v5830, %v5840
        %v5850 = vmul.f32 %v5831, %v5840
        %v5851 = vmul.f32 %v5832, %v5840
        %v5852 = vmul.f32 %v5833, %v5840
        %v5853 = vmul.f32 %v5834, %v5840
        %v5854 = vmul.f32 %v5835, %v5840
        %v5855 = vmul.f32 %v5836, %v5840
        %v5856 = vmul.f32 %v5837, %v5840
        %v5857 = vmul.f32 %v5838, %v5840
        %v5859 = vperm.slane %v5518, 0
        %v5861 = vadd.f32 %v5842, %v5859
        %v5862 = vadd.f32 %v5843, %v5859
        %v5863 = vadd.f32 %v5844, %v5859
        %v5864 = vadd.f32 %v5845, %v5859
        %v5865 = vadd.f32 %v5846, %v5859
        %v5866 = vadd.f32 %v5847, %v5859
        %v5867 = vadd.f32 %v5848, %v5859
        %v5868 = vadd.f32 %v5849, %v5859
        %v5869 = vadd.f32 %v5850, %v5859
        %v5870 = vadd.f32 %v5851, %v5859
        %v5871 = vadd.f32 %v5852, %v5859
        %v5872 = vadd.f32 %v5853, %v5859
        %v5873 = vadd.f32 %v5854, %v5859
        %v5874 = vadd.f32 %v5855, %v5859
        %v5875 = vadd.f32 %v5856, %v5859
        %v5876 = vadd.f32 %v5857, %v5859
        %v5877 = vpack.c.bf16 %v5862, %v5861
        %v5878 = vpack.c.bf16 %v5864, %v5863
        %v5879 = vpack.c.bf16 %v5866, %v5865
        %v5880 = vpack.c.bf16 %v5868, %v5867
        %v5881 = vpack.c.bf16 %v5870, %v5869
        %v5882 = vpack.c.bf16 %v5872, %v5871
        %v5883 = vpack.c.bf16 %v5874, %v5873
        %v5884 = vpack.c.bf16 %v5876, %v5875
        %v5885 = vld [vmem:[%s773] sm:$0xff]
        %v5886 = vld [vmem:[%s773 + $0x8] sm:$0xff]
        %v5887 = vld [vmem:[%s773 + $0x10] sm:$0xff]
        %v5888 = vld [vmem:[%s773 + $0x18] sm:$0xff]
        %v5889 = vld [vmem:[%s773 + $0x20] sm:$0xff]
        %v5890 = vld [vmem:[%s773 + $0x28] sm:$0xff]
        %v5891 = vld [vmem:[%s773 + $0x30] sm:$0xff]
        %v5892 = vld [vmem:[%s773 + $0x38] sm:$0xff]
        %v5893 = vld [vmem:[%s773 + $0x40] sm:$0xff]
        %v5894 = vld [vmem:[%s773 + $0x48] sm:$0xff]
        %v5895 = vld [vmem:[%s773 + $0x50] sm:$0xff]
        %v5896 = vld [vmem:[%s773 + $0x58] sm:$0xff]
        %v5897 = vld [vmem:[%s773 + $0x60] sm:$0xff]
        %v5898 = vld [vmem:[%s773 + $0x68] sm:$0xff]
        %v5899 = vld [vmem:[%s773 + $0x70] sm:$0xff]
        %v5900 = vld [vmem:[%s773 + $0x78] sm:$0xff]
        %v5901 = vld [vmem:[%s891] sm:$0x3]
        %v5903 = vperm.slane %v5901, 0
        %v5904 = vperm.slane %v5901, 1
        %v5923 = vunpack.c.l.b16 %v5885
        %v5924 = vunpack.c.h.b16 %v5885
        %v5925 = vunpack.c.l.b16 %v5886
        %v5926 = vunpack.c.h.b16 %v5886
        %v5927 = vunpack.c.l.b16 %v5887
        %v5928 = vunpack.c.h.b16 %v5887
        %v5929 = vunpack.c.l.b16 %v5888
        %v5930 = vunpack.c.h.b16 %v5888
        %v5931 = vunpack.c.l.b16 %v5889
        %v5932 = vunpack.c.h.b16 %v5889
        %v5933 = vunpack.c.l.b16 %v5890
        %v5934 = vunpack.c.h.b16 %v5890
        %v5935 = vunpack.c.l.b16 %v5891
        %v5936 = vunpack.c.h.b16 %v5891
        %v5937 = vunpack.c.l.b16 %v5892
        %v5938 = vunpack.c.h.b16 %v5892
        %v5939 = vunpack.c.l.b16 %v5893
        %v5940 = vunpack.c.h.b16 %v5893
        %v5941 = vunpack.c.l.b16 %v5894
        %v5942 = vunpack.c.h.b16 %v5894
        %v5943 = vunpack.c.l.b16 %v5895
        %v5944 = vunpack.c.h.b16 %v5895
        %v5945 = vunpack.c.l.b16 %v5896
        %v5946 = vunpack.c.h.b16 %v5896
        %v5947 = vunpack.c.l.b16 %v5897
        %v5948 = vunpack.c.h.b16 %v5897
        %v5949 = vunpack.c.l.b16 %v5898
        %v5950 = vunpack.c.h.b16 %v5898
        %v5951 = vunpack.c.l.b16 %v5899
        %v5952 = vunpack.c.h.b16 %v5899
        %v5953 = vunpack.c.l.b16 %v5900
        %v5954 = vunpack.c.h.b16 %v5900
        %v5955 = vpack.c.b16 %v5925, %v5923
        %v5956 = vpack.c.b16 %v5926, %v5924
        %v5957 = vpack.c.b16 %v5929, %v5927
        %v5958 = vpack.c.b16 %v5930, %v5928
        %v5959 = vpack.c.b16 %v5933, %v5931
        %v5960 = vpack.c.b16 %v5934, %v5932
        %v5961 = vpack.c.b16 %v5937, %v5935
        %v5962 = vpack.c.b16 %v5938, %v5936
        %v5963 = vpack.c.b16 %v5941, %v5939
        %v5964 = vpack.c.b16 %v5942, %v5940
        %v5965 = vpack.c.b16 %v5945, %v5943
        %v5966 = vpack.c.b16 %v5946, %v5944
        %v5967 = vpack.c.b16 %v5949, %v5947
        %v5968 = vpack.c.b16 %v5950, %v5948
        %v5969 = vpack.c.b16 %v5953, %v5951
        %v5970 = vpack.c.b16 %v5954, %v5952
        %5987 = vmatpush.bf16.msra.mxu0 %v5969
        %5988 = vmatpush.bf16.msra.mxu0 %v5967
        %5989 = vmatpush.bf16.msra.mxu0 %v5965
        %5990 = vmatpush.bf16.msra.mxu0 %v5963
        %5991 = vmatpush.bf16.msra.mxu0 %v5961
        %5992 = vmatpush.bf16.msra.mxu0 %v5959
        %5993 = vmatpush.bf16.msra.mxu0 %v5957
        %5994 = vmatpush.bf16.msra.mxu0 %v5955
        %5995 = vmatmul.bf16.gmra.mxu0 %v5877
        %v5996 = vpop.f32.mrf.mxu0
        %v5997 = vadd.f32 %v5903, %v5996
        %v5998 = vpop.f32.mrf.mxu0
        %v5999 = vadd.f32 %v5903, %v5998
        %6000 = vmatmul.bf16.gmra.mxu0 %v5878
        %v6001 = vpop.f32.mrf.mxu0
        %v6002 = vadd.f32 %v5903, %v6001
        %v6003 = vpop.f32.mrf.mxu0
        %v6004 = vadd.f32 %v5903, %v6003
        %6005 = vmatmul.bf16.gmra.mxu0 %v5879
        %v6006 = vpop.f32.mrf.mxu0
        %v6007 = vadd.f32 %v5903, %v6006
        %v6008 = vpop.f32.mrf.mxu0
        %v6009 = vadd.f32 %v5903, %v6008
        %6010 = vmatmul.bf16.gmra.mxu0 %v5880
        %v6011 = vpop.f32.mrf.mxu0
        %v6012 = vadd.f32 %v5903, %v6011
        %v6013 = vpop.f32.mrf.mxu0
        %v6014 = vadd.f32 %v5903, %v6013
        %6015 = vmatmul.bf16.gmra.mxu0 %v5881
        %v6016 = vpop.f32.mrf.mxu0
        %v6017 = vadd.f32 %v5903, %v6016
        %v6018 = vpop.f32.mrf.mxu0
        %v6019 = vadd.f32 %v5903, %v6018
        %6020 = vmatmul.bf16.gmra.mxu0 %v5882
        %v6021 = vpop.f32.mrf.mxu0
        %v6022 = vadd.f32 %v5903, %v6021
        %v6023 = vpop.f32.mrf.mxu0
        %v6024 = vadd.f32 %v5903, %v6023
        %6025 = vmatmul.bf16.gmra.mxu0 %v5883
        %v6026 = vpop.f32.mrf.mxu0
        %v6027 = vadd.f32 %v5903, %v6026
        %v6028 = vpop.f32.mrf.mxu0
        %v6029 = vadd.f32 %v5903, %v6028
        %6030 = vmatmul.bf16.gmra.mxu0 %v5884
        %v6031 = vpop.f32.mrf.mxu0
        %v6032 = vadd.f32 %v5903, %v6031
        %v6033 = vpop.f32.mrf.mxu0
        %v6034 = vadd.f32 %v5903, %v6033
        %6035 = vdwg.mxu0
        %6036 = vmatpush.bf16.msra.mxu0 %v5970
        %6037 = vmatpush.bf16.msra.mxu0 %v5968
        %6038 = vmatpush.bf16.msra.mxu0 %v5966
        %6039 = vmatpush.bf16.msra.mxu0 %v5964
        %6040 = vmatpush.bf16.msra.mxu0 %v5962
        %6041 = vmatpush.bf16.msra.mxu0 %v5960
        %6042 = vmatpush.bf16.msra.mxu0 %v5958
        %6043 = vmatpush.bf16.msra.mxu0 %v5956
        %6044 = vmatmul.bf16.gmra.mxu0 %v5877
        %v6045 = vpop.f32.mrf.mxu0
        %v6046 = vadd.f32 %v5904, %v6045
        %v6047 = vpop.f32.mrf.mxu0
        %v6048 = vadd.f32 %v5904, %v6047
        %6049 = vmatmul.bf16.gmra.mxu0 %v5878
        %v6050 = vpop.f32.mrf.mxu0
        %v6051 = vadd.f32 %v5904, %v6050
        %v6052 = vpop.f32.mrf.mxu0
        %v6053 = vadd.f32 %v5904, %v6052
        %6054 = vmatmul.bf16.gmra.mxu0 %v5879
        %v6055 = vpop.f32.mrf.mxu0
        %v6056 = vadd.f32 %v5904, %v6055
        %v6057 = vpop.f32.mrf.mxu0
        %v6058 = vadd.f32 %v5904, %v6057
        %6059 = vmatmul.bf16.gmra.mxu0 %v5880
        %v6060 = vpop.f32.mrf.mxu0
        %v6061 = vadd.f32 %v5904, %v6060
        %v6062 = vpop.f32.mrf.mxu0
        %v6063 = vadd.f32 %v5904, %v6062
        %6064 = vmatmul.bf16.gmra.mxu0 %v5881
        %v6065 = vpop.f32.mrf.mxu0
        %v6066 = vadd.f32 %v5904, %v6065
        %v6067 = vpop.f32.mrf.mxu0
        %v6068 = vadd.f32 %v5904, %v6067
        %6069 = vmatmul.bf16.gmra.mxu0 %v5882
        %v6070 = vpop.f32.mrf.mxu0
        %v6071 = vadd.f32 %v5904, %v6070
        %v6072 = vpop.f32.mrf.mxu0
        %v6073 = vadd.f32 %v5904, %v6072
        %6074 = vmatmul.bf16.gmra.mxu0 %v5883
        %v6075 = vpop.f32.mrf.mxu0
        %v6076 = vadd.f32 %v5904, %v6075
        %v6077 = vpop.f32.mrf.mxu0
        %v6078 = vadd.f32 %v5904, %v6077
        %6079 = vmatmul.bf16.gmra.mxu0 %v5884
        %v6080 = vpop.f32.mrf.mxu0
        %v6081 = vadd.f32 %v5904, %v6080
        %v6082 = vpop.f32.mrf.mxu0
        %v6083 = vadd.f32 %v5904, %v6082
        %6084 = vdwg.mxu0
        %v6085 = vmul.f32 %v5997, 0.5
        %v6086 = vmul.f32 %v6046, 0.5
        %v6087 = vmul.f32 %v5999, 0.5
        %v6088 = vmul.f32 %v6048, 0.5
        %v6089 = vmul.f32 %v6002, 0.5
        %v6090 = vmul.f32 %v6051, 0.5
        %v6091 = vmul.f32 %v6004, 0.5
        %v6092 = vmul.f32 %v6053, 0.5
        %v6093 = vmul.f32 %v6007, 0.5
        %v6094 = vmul.f32 %v6056, 0.5
        %v6095 = vmul.f32 %v6009, 0.5
        %v6096 = vmul.f32 %v6058, 0.5
        %v6097 = vmul.f32 %v6012, 0.5
        %v6098 = vmul.f32 %v6061, 0.5
        %v6099 = vmul.f32 %v6014, 0.5
        %v6100 = vmul.f32 %v6063, 0.5
        %v6101 = vmul.f32 %v6017, 0.5
        %v6102 = vmul.f32 %v6066, 0.5
        %v6103 = vmul.f32 %v6019, 0.5
        %v6104 = vmul.f32 %v6068, 0.5
        %v6105 = vmul.f32 %v6022, 0.5
        %v6106 = vmul.f32 %v6071, 0.5
        %v6107 = vmul.f32 %v6024, 0.5
        %v6108 = vmul.f32 %v6073, 0.5
        %v6109 = vmul.f32 %v6027, 0.5
        %v6110 = vmul.f32 %v6076, 0.5
        %v6111 = vmul.f32 %v6029, 0.5
        %v6112 = vmul.f32 %v6078, 0.5
        %v6113 = vmul.f32 %v6032, 0.5
        %v6114 = vmul.f32 %v6081, 0.5
        %v6115 = vmul.f32 %v6034, 0.5
        %v6116 = vmul.f32 %v6083, 0.5
        %v6117 = vmul.f32 %v5997, 0.70710677
        %v6118 = vmul.f32 %v6046, 0.70710677
        %v6119 = vmul.f32 %v5999, 0.70710677
        %v6120 = vmul.f32 %v6048, 0.70710677
        %v6121 = vmul.f32 %v6002, 0.70710677
        %v6122 = vmul.f32 %v6051, 0.70710677
        %v6123 = vmul.f32 %v6004, 0.70710677
        %v6124 = vmul.f32 %v6053, 0.70710677
        %v6125 = vmul.f32 %v6007, 0.70710677
        %v6126 = vmul.f32 %v6056, 0.70710677
        %v6127 = vmul.f32 %v6009, 0.70710677
        %v6128 = vmul.f32 %v6058, 0.70710677
        %v6129 = vmul.f32 %v6012, 0.70710677
        %v6130 = vmul.f32 %v6061, 0.70710677
        %v6131 = vmul.f32 %v6014, 0.70710677
        %v6132 = vmul.f32 %v6063, 0.70710677
        %v6133 = vmul.f32 %v6017, 0.70710677
        %v6134 = vmul.f32 %v6066, 0.70710677
        %v6135 = vmul.f32 %v6019, 0.70710677
        %v6136 = vmul.f32 %v6068, 0.70710677
        %v6137 = vmul.f32 %v6022, 0.70710677
        %v6138 = vmul.f32 %v6071, 0.70710677
        %v6139 = vmul.f32 %v6024, 0.70710677
        %v6140 = vmul.f32 %v6073, 0.70710677
        %v6141 = vmul.f32 %v6027, 0.70710677
        %v6142 = vmul.f32 %v6076, 0.70710677
        %v6143 = vmul.f32 %v6029, 0.70710677
        %v6144 = vmul.f32 %v6078, 0.70710677
        %v6145 = vmul.f32 %v6032, 0.70710677
        %v6146 = vmul.f32 %v6081, 0.70710677
        %v6147 = vmul.f32 %v6034, 0.70710677
        %v6148 = vmul.f32 %v6083, 0.70710677
        %v6149 = vand.u32 2147483647, %v6117
        %v6150 = vand.u32 2147483647, %v6118
        %v6151 = vand.u32 2147483647, %v6119
        %v6152 = vand.u32 2147483647, %v6120
        %v6153 = vand.u32 2147483647, %v6121
        %v6154 = vand.u32 2147483647, %v6122
        %v6155 = vand.u32 2147483647, %v6123
        %v6156 = vand.u32 2147483647, %v6124
        %v6157 = vand.u32 2147483647, %v6125
        %v6158 = vand.u32 2147483647, %v6126
        %v6159 = vand.u32 2147483647, %v6127
        %v6160 = vand.u32 2147483647, %v6128
        %v6161 = vand.u32 2147483647, %v6129
        %v6162 = vand.u32 2147483647, %v6130
        %v6163 = vand.u32 2147483647, %v6131
        %v6164 = vand.u32 2147483647, %v6132
        %v6165 = vand.u32 2147483647, %v6133
        %v6166 = vand.u32 2147483647, %v6134
        %v6167 = vand.u32 2147483647, %v6135
        %v6168 = vand.u32 2147483647, %v6136
        %v6169 = vand.u32 2147483647, %v6137
        %v6170 = vand.u32 2147483647, %v6138
        %v6171 = vand.u32 2147483647, %v6139
        %v6172 = vand.u32 2147483647, %v6140
        %v6173 = vand.u32 2147483647, %v6141
        %v6174 = vand.u32 2147483647, %v6142
        %v6175 = vand.u32 2147483647, %v6143
        %v6176 = vand.u32 2147483647, %v6144
        %v6177 = vand.u32 2147483647, %v6145
        %v6178 = vand.u32 2147483647, %v6146
        %v6179 = vand.u32 2147483647, %v6147
        %v6180 = vand.u32 2147483647, %v6148
        %v6181 = vmul.f32 %v6149, 0.3275911
        %v6182 = vmul.f32 %v6150, 0.3275911
        %v6183 = vmul.f32 %v6151, 0.3275911
        %v6184 = vmul.f32 %v6152, 0.3275911
        %v6185 = vmul.f32 %v6153, 0.3275911
        %v6186 = vmul.f32 %v6154, 0.3275911
        %v6187 = vmul.f32 %v6155, 0.3275911
        %v6188 = vmul.f32 %v6156, 0.3275911
        %v6189 = vmul.f32 %v6157, 0.3275911
        %v6190 = vmul.f32 %v6158, 0.3275911
        %v6191 = vmul.f32 %v6159, 0.3275911
        %v6192 = vmul.f32 %v6160, 0.3275911
        %v6193 = vmul.f32 %v6161, 0.3275911
        %v6194 = vmul.f32 %v6162, 0.3275911
        %v6195 = vmul.f32 %v6163, 0.3275911
        %v6196 = vmul.f32 %v6164, 0.3275911
        %v6197 = vmul.f32 %v6165, 0.3275911
        %v6198 = vmul.f32 %v6166, 0.3275911
        %v6199 = vmul.f32 %v6167, 0.3275911
        %v6200 = vmul.f32 %v6168, 0.3275911
        %v6201 = vmul.f32 %v6169, 0.3275911
        %v6202 = vmul.f32 %v6170, 0.3275911
        %v6203 = vmul.f32 %v6171, 0.3275911
        %v6204 = vmul.f32 %v6172, 0.3275911
        %v6205 = vmul.f32 %v6173, 0.3275911
        %v6206 = vmul.f32 %v6174, 0.3275911
        %v6207 = vmul.f32 %v6175, 0.3275911
        %v6208 = vmul.f32 %v6176, 0.3275911
        %v6209 = vmul.f32 %v6177, 0.3275911
        %v6210 = vmul.f32 %v6178, 0.3275911
        %v6211 = vmul.f32 %v6179, 0.3275911
        %v6212 = vmul.f32 %v6180, 0.3275911
        %v6213 = vadd.f32 %v6181, 1.0
        %v6214 = vadd.f32 %v6182, 1.0
        %v6215 = vadd.f32 %v6183, 1.0
        %v6216 = vadd.f32 %v6184, 1.0
        %v6217 = vadd.f32 %v6185, 1.0
        %v6218 = vadd.f32 %v6186, 1.0
        %v6219 = vadd.f32 %v6187, 1.0
        %v6220 = vadd.f32 %v6188, 1.0
        %v6221 = vadd.f32 %v6189, 1.0
        %v6222 = vadd.f32 %v6190, 1.0
        %v6223 = vadd.f32 %v6191, 1.0
        %v6224 = vadd.f32 %v6192, 1.0
        %v6225 = vadd.f32 %v6193, 1.0
        %v6226 = vadd.f32 %v6194, 1.0
        %v6227 = vadd.f32 %v6195, 1.0
        %v6228 = vadd.f32 %v6196, 1.0
        %v6229 = vadd.f32 %v6197, 1.0
        %v6230 = vadd.f32 %v6198, 1.0
        %v6231 = vadd.f32 %v6199, 1.0
        %v6232 = vadd.f32 %v6200, 1.0
        %v6233 = vadd.f32 %v6201, 1.0
        %v6234 = vadd.f32 %v6202, 1.0
        %v6235 = vadd.f32 %v6203, 1.0
        %v6236 = vadd.f32 %v6204, 1.0
        %v6237 = vadd.f32 %v6205, 1.0
        %v6238 = vadd.f32 %v6206, 1.0
        %v6239 = vadd.f32 %v6207, 1.0
        %v6240 = vadd.f32 %v6208, 1.0
        %v6241 = vadd.f32 %v6209, 1.0
        %v6242 = vadd.f32 %v6210, 1.0
        %v6243 = vadd.f32 %v6211, 1.0
        %v6244 = vadd.f32 %v6212, 1.0
        %v6245 = vrcp.pop %v6213
        %v6246 = vmul.f32 %v6213, %v6245
        %v6247 = vsub.f32 1.0, %v6246
        %v6248 = vmul.f32 %v6245, %v6247
        %v6249 = vadd.f32 %v6245, %v6248
        %vm6250 = vweird.f32 %v6213
        %vm6251 = vweird.f32 %v6245
        %vm6252 = vmor %vm6250, %vm6251
        %v6253 = vsel %vm6252, %v6245, %v6249
        %v6254 = vand.u32 2147483647, %v6213
        %vm6255 = vcmp.eq.f32.partialorder %v6254, 8.507059e+37
        %v6256 = vand.u32 %v6213, 2147483648
        %v6257 = vor.u32 1.1754944e-38, %v6256
        %v6258 = vsel %vm6255, %v6257, %v6253
        %v6259 = vmul.f32 1.0, %v6258
        %v6260 = vrcp.pop %v6214
        %v6261 = vmul.f32 %v6214, %v6260
        %v6262 = vsub.f32 1.0, %v6261
        %v6263 = vmul.f32 %v6260, %v6262
        %v6264 = vadd.f32 %v6260, %v6263
        %vm6265 = vweird.f32 %v6214
        %vm6266 = vweird.f32 %v6260
        %vm6267 = vmor %vm6265, %vm6266
        %v6268 = vsel %vm6267, %v6260, %v6264
        %v6269 = vand.u32 2147483647, %v6214
        %vm6270 = vcmp.eq.f32.partialorder %v6269, 8.507059e+37
        %v6271 = vand.u32 %v6214, 2147483648
        %v6272 = vor.u32 1.1754944e-38, %v6271
        %v6273 = vsel %vm6270, %v6272, %v6268
        %v6274 = vmul.f32 1.0, %v6273
        %v6275 = vrcp.pop %v6215
        %v6276 = vmul.f32 %v6215, %v6275
        %v6277 = vsub.f32 1.0, %v6276
        %v6278 = vmul.f32 %v6275, %v6277
        %v6279 = vadd.f32 %v6275, %v6278
        %vm6280 = vweird.f32 %v6215
        %vm6281 = vweird.f32 %v6275
        %vm6282 = vmor %vm6280, %vm6281
        %v6283 = vsel %vm6282, %v6275, %v6279
        %v6284 = vand.u32 2147483647, %v6215
        %vm6285 = vcmp.eq.f32.partialorder %v6284, 8.507059e+37
        %v6286 = vand.u32 %v6215, 2147483648
        %v6287 = vor.u32 1.1754944e-38, %v6286
        %v6288 = vsel %vm6285, %v6287, %v6283
        %v6289 = vmul.f32 1.0, %v6288
        %v6290 = vrcp.pop %v6216
        %v6291 = vmul.f32 %v6216, %v6290
        %v6292 = vsub.f32 1.0, %v6291
        %v6293 = vmul.f32 %v6290, %v6292
        %v6294 = vadd.f32 %v6290, %v6293
        %vm6295 = vweird.f32 %v6216
        %vm6296 = vweird.f32 %v6290
        %vm6297 = vmor %vm6295, %vm6296
        %v6298 = vsel %vm6297, %v6290, %v6294
        %v6299 = vand.u32 2147483647, %v6216
        %vm6300 = vcmp.eq.f32.partialorder %v6299, 8.507059e+37
        %v6301 = vand.u32 %v6216, 2147483648
        %v6302 = vor.u32 1.1754944e-38, %v6301
        %v6303 = vsel %vm6300, %v6302, %v6298
        %v6304 = vmul.f32 1.0, %v6303
        %v6305 = vrcp.pop %v6217
        %v6306 = vmul.f32 %v6217, %v6305
        %v6307 = vsub.f32 1.0, %v6306
        %v6308 = vmul.f32 %v6305, %v6307
        %v6309 = vadd.f32 %v6305, %v6308
        %vm6310 = vweird.f32 %v6217
        %vm6311 = vweird.f32 %v6305
        %vm6312 = vmor %vm6310, %vm6311
        %v6313 = vsel %vm6312, %v6305, %v6309
        %v6314 = vand.u32 2147483647, %v6217
        %vm6315 = vcmp.eq.f32.partialorder %v6314, 8.507059e+37
        %v6316 = vand.u32 %v6217, 2147483648
        %v6317 = vor.u32 1.1754944e-38, %v6316
        %v6318 = vsel %vm6315, %v6317, %v6313
        %v6319 = vmul.f32 1.0, %v6318
        %v6320 = vrcp.pop %v6218
        %v6321 = vmul.f32 %v6218, %v6320
        %v6322 = vsub.f32 1.0, %v6321
        %v6323 = vmul.f32 %v6320, %v6322
        %v6324 = vadd.f32 %v6320, %v6323
        %vm6325 = vweird.f32 %v6218
        %vm6326 = vweird.f32 %v6320
        %vm6327 = vmor %vm6325, %vm6326
        %v6328 = vsel %vm6327, %v6320, %v6324
        %v6329 = vand.u32 2147483647, %v6218
        %vm6330 = vcmp.eq.f32.partialorder %v6329, 8.507059e+37
        %v6331 = vand.u32 %v6218, 2147483648
        %v6332 = vor.u32 1.1754944e-38, %v6331
        %v6333 = vsel %vm6330, %v6332, %v6328
        %v6334 = vmul.f32 1.0, %v6333
        %v6335 = vrcp.pop %v6219
        %v6336 = vmul.f32 %v6219, %v6335
        %v6337 = vsub.f32 1.0, %v6336
        %v6338 = vmul.f32 %v6335, %v6337
        %v6339 = vadd.f32 %v6335, %v6338
        %vm6340 = vweird.f32 %v6219
        %vm6341 = vweird.f32 %v6335
        %vm6342 = vmor %vm6340, %vm6341
        %v6343 = vsel %vm6342, %v6335, %v6339
        %v6344 = vand.u32 2147483647, %v6219
        %vm6345 = vcmp.eq.f32.partialorder %v6344, 8.507059e+37
        %v6346 = vand.u32 %v6219, 2147483648
        %v6347 = vor.u32 1.1754944e-38, %v6346
        %v6348 = vsel %vm6345, %v6347, %v6343
        %v6349 = vmul.f32 1.0, %v6348
        %v6350 = vrcp.pop %v6220
        %v6351 = vmul.f32 %v6220, %v6350
        %v6352 = vsub.f32 1.0, %v6351
        %v6353 = vmul.f32 %v6350, %v6352
        %v6354 = vadd.f32 %v6350, %v6353
        %vm6355 = vweird.f32 %v6220
        %vm6356 = vweird.f32 %v6350
        %vm6357 = vmor %vm6355, %vm6356
        %v6358 = vsel %vm6357, %v6350, %v6354
        %v6359 = vand.u32 2147483647, %v6220
        %vm6360 = vcmp.eq.f32.partialorder %v6359, 8.507059e+37
        %v6361 = vand.u32 %v6220, 2147483648
        %v6362 = vor.u32 1.1754944e-38, %v6361
        %v6363 = vsel %vm6360, %v6362, %v6358
        %v6364 = vmul.f32 1.0, %v6363
        %v6365 = vrcp.pop %v6221
        %v6366 = vmul.f32 %v6221, %v6365
        %v6367 = vsub.f32 1.0, %v6366
        %v6368 = vmul.f32 %v6365, %v6367
        %v6369 = vadd.f32 %v6365, %v6368
        %vm6370 = vweird.f32 %v6221
        %vm6371 = vweird.f32 %v6365
        %vm6372 = vmor %vm6370, %vm6371
        %v6373 = vsel %vm6372, %v6365, %v6369
        %v6374 = vand.u32 2147483647, %v6221
        %vm6375 = vcmp.eq.f32.partialorder %v6374, 8.507059e+37
        %v6376 = vand.u32 %v6221, 2147483648
        %v6377 = vor.u32 1.1754944e-38, %v6376
        %v6378 = vsel %vm6375, %v6377, %v6373
        %v6379 = vmul.f32 1.0, %v6378
        %v6380 = vrcp.pop %v6222
        %v6381 = vmul.f32 %v6222, %v6380
        %v6382 = vsub.f32 1.0, %v6381
        %v6383 = vmul.f32 %v6380, %v6382
        %v6384 = vadd.f32 %v6380, %v6383
        %vm6385 = vweird.f32 %v6222
        %vm6386 = vweird.f32 %v6380
        %vm6387 = vmor %vm6385, %vm6386
        %v6388 = vsel %vm6387, %v6380, %v6384
        %v6389 = vand.u32 2147483647, %v6222
        %vm6390 = vcmp.eq.f32.partialorder %v6389, 8.507059e+37
        %v6391 = vand.u32 %v6222, 2147483648
        %v6392 = vor.u32 1.1754944e-38, %v6391
        %v6393 = vsel %vm6390, %v6392, %v6388
        %v6394 = vmul.f32 1.0, %v6393
        %v6395 = vrcp.pop %v6223
        %v6396 = vmul.f32 %v6223, %v6395
        %v6397 = vsub.f32 1.0, %v6396
        %v6398 = vmul.f32 %v6395, %v6397
        %v6399 = vadd.f32 %v6395, %v6398
        %vm6400 = vweird.f32 %v6223
        %vm6401 = vweird.f32 %v6395
        %vm6402 = vmor %vm6400, %vm6401
        %v6403 = vsel %vm6402, %v6395, %v6399
        %v6404 = vand.u32 2147483647, %v6223
        %vm6405 = vcmp.eq.f32.partialorder %v6404, 8.507059e+37
        %v6406 = vand.u32 %v6223, 2147483648
        %v6407 = vor.u32 1.1754944e-38, %v6406
        %v6408 = vsel %vm6405, %v6407, %v6403
        %v6409 = vmul.f32 1.0, %v6408
        %v6410 = vrcp.pop %v6224
        %v6411 = vmul.f32 %v6224, %v6410
        %v6412 = vsub.f32 1.0, %v6411
        %v6413 = vmul.f32 %v6410, %v6412
        %v6414 = vadd.f32 %v6410, %v6413
        %vm6415 = vweird.f32 %v6224
        %vm6416 = vweird.f32 %v6410
        %vm6417 = vmor %vm6415, %vm6416
        %v6418 = vsel %vm6417, %v6410, %v6414
        %v6419 = vand.u32 2147483647, %v6224
        %vm6420 = vcmp.eq.f32.partialorder %v6419, 8.507059e+37
        %v6421 = vand.u32 %v6224, 2147483648
        %v6422 = vor.u32 1.1754944e-38, %v6421
        %v6423 = vsel %vm6420, %v6422, %v6418
        %v6424 = vmul.f32 1.0, %v6423
        %v6425 = vrcp.pop %v6225
        %v6426 = vmul.f32 %v6225, %v6425
        %v6427 = vsub.f32 1.0, %v6426
        %v6428 = vmul.f32 %v6425, %v6427
        %v6429 = vadd.f32 %v6425, %v6428
        %vm6430 = vweird.f32 %v6225
        %vm6431 = vweird.f32 %v6425
        %vm6432 = vmor %vm6430, %vm6431
        %v6433 = vsel %vm6432, %v6425, %v6429
        %v6434 = vand.u32 2147483647, %v6225
        %vm6435 = vcmp.eq.f32.partialorder %v6434, 8.507059e+37
        %v6436 = vand.u32 %v6225, 2147483648
        %v6437 = vor.u32 1.1754944e-38, %v6436
        %v6438 = vsel %vm6435, %v6437, %v6433
        %v6439 = vmul.f32 1.0, %v6438
        %v6440 = vrcp.pop %v6226
        %v6441 = vmul.f32 %v6226, %v6440
        %v6442 = vsub.f32 1.0, %v6441
        %v6443 = vmul.f32 %v6440, %v6442
        %v6444 = vadd.f32 %v6440, %v6443
        %vm6445 = vweird.f32 %v6226
        %vm6446 = vweird.f32 %v6440
        %vm6447 = vmor %vm6445, %vm6446
        %v6448 = vsel %vm6447, %v6440, %v6444
        %v6449 = vand.u32 2147483647, %v6226
        %vm6450 = vcmp.eq.f32.partialorder %v6449, 8.507059e+37
        %v6451 = vand.u32 %v6226, 2147483648
        %v6452 = vor.u32 1.1754944e-38, %v6451
        %v6453 = vsel %vm6450, %v6452, %v6448
        %v6454 = vmul.f32 1.0, %v6453
        %v6455 = vrcp.pop %v6227
        %v6456 = vmul.f32 %v6227, %v6455
        %v6457 = vsub.f32 1.0, %v6456
        %v6458 = vmul.f32 %v6455, %v6457
        %v6459 = vadd.f32 %v6455, %v6458
        %vm6460 = vweird.f32 %v6227
        %vm6461 = vweird.f32 %v6455
        %vm6462 = vmor %vm6460, %vm6461
        %v6463 = vsel %vm6462, %v6455, %v6459
        %v6464 = vand.u32 2147483647, %v6227
        %vm6465 = vcmp.eq.f32.partialorder %v6464, 8.507059e+37
        %v6466 = vand.u32 %v6227, 2147483648
        %v6467 = vor.u32 1.1754944e-38, %v6466
        %v6468 = vsel %vm6465, %v6467, %v6463
        %v6469 = vmul.f32 1.0, %v6468
        %v6470 = vrcp.pop %v6228
        %v6471 = vmul.f32 %v6228, %v6470
        %v6472 = vsub.f32 1.0, %v6471
        %v6473 = vmul.f32 %v6470, %v6472
        %v6474 = vadd.f32 %v6470, %v6473
        %vm6475 = vweird.f32 %v6228
        %vm6476 = vweird.f32 %v6470
        %vm6477 = vmor %vm6475, %vm6476
        %v6478 = vsel %vm6477, %v6470, %v6474
        %v6479 = vand.u32 2147483647, %v6228
        %vm6480 = vcmp.eq.f32.partialorder %v6479, 8.507059e+37
        %v6481 = vand.u32 %v6228, 2147483648
        %v6482 = vor.u32 1.1754944e-38, %v6481
        %v6483 = vsel %vm6480, %v6482, %v6478
        %v6484 = vmul.f32 1.0, %v6483
        %v6485 = vrcp.pop %v6229
        %v6486 = vmul.f32 %v6229, %v6485
        %v6487 = vsub.f32 1.0, %v6486
        %v6488 = vmul.f32 %v6485, %v6487
        %v6489 = vadd.f32 %v6485, %v6488
        %vm6490 = vweird.f32 %v6229
        %vm6491 = vweird.f32 %v6485
        %vm6492 = vmor %vm6490, %vm6491
        %v6493 = vsel %vm6492, %v6485, %v6489
        %v6494 = vand.u32 2147483647, %v6229
        %vm6495 = vcmp.eq.f32.partialorder %v6494, 8.507059e+37
        %v6496 = vand.u32 %v6229, 2147483648
        %v6497 = vor.u32 1.1754944e-38, %v6496
        %v6498 = vsel %vm6495, %v6497, %v6493
        %v6499 = vmul.f32 1.0, %v6498
        %v6500 = vrcp.pop %v6230
        %v6501 = vmul.f32 %v6230, %v6500
        %v6502 = vsub.f32 1.0, %v6501
        %v6503 = vmul.f32 %v6500, %v6502
        %v6504 = vadd.f32 %v6500, %v6503
        %vm6505 = vweird.f32 %v6230
        %vm6506 = vweird.f32 %v6500
        %vm6507 = vmor %vm6505, %vm6506
        %v6508 = vsel %vm6507, %v6500, %v6504
        %v6509 = vand.u32 2147483647, %v6230
        %vm6510 = vcmp.eq.f32.partialorder %v6509, 8.507059e+37
        %v6511 = vand.u32 %v6230, 2147483648
        %v6512 = vor.u32 1.1754944e-38, %v6511
        %v6513 = vsel %vm6510, %v6512, %v6508
        %v6514 = vmul.f32 1.0, %v6513
        %v6515 = vrcp.pop %v6231
        %v6516 = vmul.f32 %v6231, %v6515
        %v6517 = vsub.f32 1.0, %v6516
        %v6518 = vmul.f32 %v6515, %v6517
        %v6519 = vadd.f32 %v6515, %v6518
        %vm6520 = vweird.f32 %v6231
        %vm6521 = vweird.f32 %v6515
        %vm6522 = vmor %vm6520, %vm6521
        %v6523 = vsel %vm6522, %v6515, %v6519
        %v6524 = vand.u32 2147483647, %v6231
        %vm6525 = vcmp.eq.f32.partialorder %v6524, 8.507059e+37
        %v6526 = vand.u32 %v6231, 2147483648
        %v6527 = vor.u32 1.1754944e-38, %v6526
        %v6528 = vsel %vm6525, %v6527, %v6523
        %v6529 = vmul.f32 1.0, %v6528
        %v6530 = vrcp.pop %v6232
        %v6531 = vmul.f32 %v6232, %v6530
        %v6532 = vsub.f32 1.0, %v6531
        %v6533 = vmul.f32 %v6530, %v6532
        %v6534 = vadd.f32 %v6530, %v6533
        %vm6535 = vweird.f32 %v6232
        %vm6536 = vweird.f32 %v6530
        %vm6537 = vmor %vm6535, %vm6536
        %v6538 = vsel %vm6537, %v6530, %v6534
        %v6539 = vand.u32 2147483647, %v6232
        %vm6540 = vcmp.eq.f32.partialorder %v6539, 8.507059e+37
        %v6541 = vand.u32 %v6232, 2147483648
        %v6542 = vor.u32 1.1754944e-38, %v6541
        %v6543 = vsel %vm6540, %v6542, %v6538
        %v6544 = vmul.f32 1.0, %v6543
        %v6545 = vrcp.pop %v6233
        %v6546 = vmul.f32 %v6233, %v6545
        %v6547 = vsub.f32 1.0, %v6546
        %v6548 = vmul.f32 %v6545, %v6547
        %v6549 = vadd.f32 %v6545, %v6548
        %vm6550 = vweird.f32 %v6233
        %vm6551 = vweird.f32 %v6545
        %vm6552 = vmor %vm6550, %vm6551
        %v6553 = vsel %vm6552, %v6545, %v6549
        %v6554 = vand.u32 2147483647, %v6233
        %vm6555 = vcmp.eq.f32.partialorder %v6554, 8.507059e+37
        %v6556 = vand.u32 %v6233, 2147483648
        %v6557 = vor.u32 1.1754944e-38, %v6556
        %v6558 = vsel %vm6555, %v6557, %v6553
        %v6559 = vmul.f32 1.0, %v6558
        %v6560 = vrcp.pop %v6234
        %v6561 = vmul.f32 %v6234, %v6560
        %v6562 = vsub.f32 1.0, %v6561
        %v6563 = vmul.f32 %v6560, %v6562
        %v6564 = vadd.f32 %v6560, %v6563
        %vm6565 = vweird.f32 %v6234
        %vm6566 = vweird.f32 %v6560
        %vm6567 = vmor %vm6565, %vm6566
        %v6568 = vsel %vm6567, %v6560, %v6564
        %v6569 = vand.u32 2147483647, %v6234
        %vm6570 = vcmp.eq.f32.partialorder %v6569, 8.507059e+37
        %v6571 = vand.u32 %v6234, 2147483648
        %v6572 = vor.u32 1.1754944e-38, %v6571
        %v6573 = vsel %vm6570, %v6572, %v6568
        %v6574 = vmul.f32 1.0, %v6573
        %v6575 = vrcp.pop %v6235
        %v6576 = vmul.f32 %v6235, %v6575
        %v6577 = vsub.f32 1.0, %v6576
        %v6578 = vmul.f32 %v6575, %v6577
        %v6579 = vadd.f32 %v6575, %v6578
        %vm6580 = vweird.f32 %v6235
        %vm6581 = vweird.f32 %v6575
        %vm6582 = vmor %vm6580, %vm6581
        %v6583 = vsel %vm6582, %v6575, %v6579
        %v6584 = vand.u32 2147483647, %v6235
        %vm6585 = vcmp.eq.f32.partialorder %v6584, 8.507059e+37
        %v6586 = vand.u32 %v6235, 2147483648
        %v6587 = vor.u32 1.1754944e-38, %v6586
        %v6588 = vsel %vm6585, %v6587, %v6583
        %v6589 = vmul.f32 1.0, %v6588
        %v6590 = vrcp.pop %v6236
        %v6591 = vmul.f32 %v6236, %v6590
        %v6592 = vsub.f32 1.0, %v6591
        %v6593 = vmul.f32 %v6590, %v6592
        %v6594 = vadd.f32 %v6590, %v6593
        %vm6595 = vweird.f32 %v6236
        %vm6596 = vweird.f32 %v6590
        %vm6597 = vmor %vm6595, %vm6596
        %v6598 = vsel %vm6597, %v6590, %v6594
        %v6599 = vand.u32 2147483647, %v6236
        %vm6600 = vcmp.eq.f32.partialorder %v6599, 8.507059e+37
        %v6601 = vand.u32 %v6236, 2147483648
        %v6602 = vor.u32 1.1754944e-38, %v6601
        %v6603 = vsel %vm6600, %v6602, %v6598
        %v6604 = vmul.f32 1.0, %v6603
        %v6605 = vrcp.pop %v6237
        %v6606 = vmul.f32 %v6237, %v6605
        %v6607 = vsub.f32 1.0, %v6606
        %v6608 = vmul.f32 %v6605, %v6607
        %v6609 = vadd.f32 %v6605, %v6608
        %vm6610 = vweird.f32 %v6237
        %vm6611 = vweird.f32 %v6605
        %vm6612 = vmor %vm6610, %vm6611
        %v6613 = vsel %vm6612, %v6605, %v6609
        %v6614 = vand.u32 2147483647, %v6237
        %vm6615 = vcmp.eq.f32.partialorder %v6614, 8.507059e+37
        %v6616 = vand.u32 %v6237, 2147483648
        %v6617 = vor.u32 1.1754944e-38, %v6616
        %v6618 = vsel %vm6615, %v6617, %v6613
        %v6619 = vmul.f32 1.0, %v6618
        %v6620 = vrcp.pop %v6238
        %v6621 = vmul.f32 %v6238, %v6620
        %v6622 = vsub.f32 1.0, %v6621
        %v6623 = vmul.f32 %v6620, %v6622
        %v6624 = vadd.f32 %v6620, %v6623
        %vm6625 = vweird.f32 %v6238
        %vm6626 = vweird.f32 %v6620
        %vm6627 = vmor %vm6625, %vm6626
        %v6628 = vsel %vm6627, %v6620, %v6624
        %v6629 = vand.u32 2147483647, %v6238
        %vm6630 = vcmp.eq.f32.partialorder %v6629, 8.507059e+37
        %v6631 = vand.u32 %v6238, 2147483648
        %v6632 = vor.u32 1.1754944e-38, %v6631
        %v6633 = vsel %vm6630, %v6632, %v6628
        %v6634 = vmul.f32 1.0, %v6633
        %v6635 = vrcp.pop %v6239
        %v6636 = vmul.f32 %v6239, %v6635
        %v6637 = vsub.f32 1.0, %v6636
        %v6638 = vmul.f32 %v6635, %v6637
        %v6639 = vadd.f32 %v6635, %v6638
        %vm6640 = vweird.f32 %v6239
        %vm6641 = vweird.f32 %v6635
        %vm6642 = vmor %vm6640, %vm6641
        %v6643 = vsel %vm6642, %v6635, %v6639
        %v6644 = vand.u32 2147483647, %v6239
        %vm6645 = vcmp.eq.f32.partialorder %v6644, 8.507059e+37
        %v6646 = vand.u32 %v6239, 2147483648
        %v6647 = vor.u32 1.1754944e-38, %v6646
        %v6648 = vsel %vm6645, %v6647, %v6643
        %v6649 = vmul.f32 1.0, %v6648
        %v6650 = vrcp.pop %v6240
        %v6651 = vmul.f32 %v6240, %v6650
        %v6652 = vsub.f32 1.0, %v6651
        %v6653 = vmul.f32 %v6650, %v6652
        %v6654 = vadd.f32 %v6650, %v6653
        %vm6655 = vweird.f32 %v6240
        %vm6656 = vweird.f32 %v6650
        %vm6657 = vmor %vm6655, %vm6656
        %v6658 = vsel %vm6657, %v6650, %v6654
        %v6659 = vand.u32 2147483647, %v6240
        %vm6660 = vcmp.eq.f32.partialorder %v6659, 8.507059e+37
        %v6661 = vand.u32 %v6240, 2147483648
        %v6662 = vor.u32 1.1754944e-38, %v6661
        %v6663 = vsel %vm6660, %v6662, %v6658
        %v6664 = vmul.f32 1.0, %v6663
        %v6665 = vrcp.pop %v6241
        %v6666 = vmul.f32 %v6241, %v6665
        %v6667 = vsub.f32 1.0, %v6666
        %v6668 = vmul.f32 %v6665, %v6667
        %v6669 = vadd.f32 %v6665, %v6668
        %vm6670 = vweird.f32 %v6241
        %vm6671 = vweird.f32 %v6665
        %vm6672 = vmor %vm6670, %vm6671
        %v6673 = vsel %vm6672, %v6665, %v6669
        %v6674 = vand.u32 2147483647, %v6241
        %vm6675 = vcmp.eq.f32.partialorder %v6674, 8.507059e+37
        %v6676 = vand.u32 %v6241, 2147483648
        %v6677 = vor.u32 1.1754944e-38, %v6676
        %v6678 = vsel %vm6675, %v6677, %v6673
        %v6679 = vmul.f32 1.0, %v6678
        %v6680 = vrcp.pop %v6242
        %v6681 = vmul.f32 %v6242, %v6680
        %v6682 = vsub.f32 1.0, %v6681
        %v6683 = vmul.f32 %v6680, %v6682
        %v6684 = vadd.f32 %v6680, %v6683
        %vm6685 = vweird.f32 %v6242
        %vm6686 = vweird.f32 %v6680
        %vm6687 = vmor %vm6685, %vm6686
        %v6688 = vsel %vm6687, %v6680, %v6684
        %v6689 = vand.u32 2147483647, %v6242
        %vm6690 = vcmp.eq.f32.partialorder %v6689, 8.507059e+37
        %v6691 = vand.u32 %v6242, 2147483648
        %v6692 = vor.u32 1.1754944e-38, %v6691
        %v6693 = vsel %vm6690, %v6692, %v6688
        %v6694 = vmul.f32 1.0, %v6693
        %v6695 = vrcp.pop %v6243
        %v6696 = vmul.f32 %v6243, %v6695
        %v6697 = vsub.f32 1.0, %v6696
        %v6698 = vmul.f32 %v6695, %v6697
        %v6699 = vadd.f32 %v6695, %v6698
        %vm6700 = vweird.f32 %v6243
        %vm6701 = vweird.f32 %v6695
        %vm6702 = vmor %vm6700, %vm6701
        %v6703 = vsel %vm6702, %v6695, %v6699
        %v6704 = vand.u32 2147483647, %v6243
        %vm6705 = vcmp.eq.f32.partialorder %v6704, 8.507059e+37
        %v6706 = vand.u32 %v6243, 2147483648
        %v6707 = vor.u32 1.1754944e-38, %v6706
        %v6708 = vsel %vm6705, %v6707, %v6703
        %v6709 = vmul.f32 1.0, %v6708
        %v6710 = vrcp.pop %v6244
        %v6711 = vmul.f32 %v6244, %v6710
        %v6712 = vsub.f32 1.0, %v6711
        %v6713 = vmul.f32 %v6710, %v6712
        %v6714 = vadd.f32 %v6710, %v6713
        %vm6715 = vweird.f32 %v6244
        %vm6716 = vweird.f32 %v6710
        %vm6717 = vmor %vm6715, %vm6716
        %v6718 = vsel %vm6717, %v6710, %v6714
        %v6719 = vand.u32 2147483647, %v6244
        %vm6720 = vcmp.eq.f32.partialorder %v6719, 8.507059e+37
        %v6721 = vand.u32 %v6244, 2147483648
        %v6722 = vor.u32 1.1754944e-38, %v6721
        %v6723 = vsel %vm6720, %v6722, %v6718
        %v6724 = vmul.f32 1.0, %v6723
        %v6725 = vmul.f32 %v6259, 1.0614054
        %v6726 = vmul.f32 %v6274, 1.0614054
        %v6727 = vmul.f32 %v6289, 1.0614054
        %v6728 = vmul.f32 %v6304, 1.0614054
        %v6729 = vmul.f32 %v6319, 1.0614054
        %v6730 = vmul.f32 %v6334, 1.0614054
        %v6731 = vmul.f32 %v6349, 1.0614054
        %v6732 = vmul.f32 %v6364, 1.0614054
        %v6733 = vmul.f32 %v6379, 1.0614054
        %v6734 = vmul.f32 %v6394, 1.0614054
        %v6735 = vmul.f32 %v6409, 1.0614054
        %v6736 = vmul.f32 %v6424, 1.0614054
        %v6737 = vmul.f32 %v6439, 1.0614054
        %v6738 = vmul.f32 %v6454, 1.0614054
        %v6739 = vmul.f32 %v6469, 1.0614054
        %v6740 = vmul.f32 %v6484, 1.0614054
        %v6741 = vmul.f32 %v6499, 1.0614054
        %v6742 = vmul.f32 %v6514, 1.0614054
        %v6743 = vmul.f32 %v6529, 1.0614054
        %v6744 = vmul.f32 %v6544, 1.0614054
        %v6745 = vmul.f32 %v6559, 1.0614054
        %v6746 = vmul.f32 %v6574, 1.0614054
        %v6747 = vmul.f32 %v6589, 1.0614054
        %v6748 = vmul.f32 %v6604, 1.0614054
        %v6749 = vmul.f32 %v6619, 1.0614054
        %v6750 = vmul.f32 %v6634, 1.0614054
        %v6751 = vmul.f32 %v6649, 1.0614054
        %v6752 = vmul.f32 %v6664, 1.0614054
        %v6753 = vmul.f32 %v6679, 1.0614054
        %v6754 = vmul.f32 %v6694, 1.0614054
        %v6755 = vmul.f32 %v6709, 1.0614054
        %v6756 = vmul.f32 %v6724, 1.0614054
        %v6757 = vadd.f32 %v6725, -1.4531521
        %v6758 = vadd.f32 %v6726, -1.4531521
        %v6759 = vadd.f32 %v6727, -1.4531521
        %v6760 = vadd.f32 %v6728, -1.4531521
        %v6761 = vadd.f32 %v6729, -1.4531521
        %v6762 = vadd.f32 %v6730, -1.4531521
        %v6763 = vadd.f32 %v6731, -1.4531521
        %v6764 = vadd.f32 %v6732, -1.4531521
        %v6765 = vadd.f32 %v6733, -1.4531521
        %v6766 = vadd.f32 %v6734, -1.4531521
        %v6767 = vadd.f32 %v6735, -1.4531521
        %v6768 = vadd.f32 %v6736, -1.4531521
        %v6769 = vadd.f32 %v6737, -1.4531521
        %v6770 = vadd.f32 %v6738, -1.4531521
        %v6771 = vadd.f32 %v6739, -1.4531521
        %v6772 = vadd.f32 %v6740, -1.4531521
        %v6773 = vadd.f32 %v6741, -1.4531521
        %v6774 = vadd.f32 %v6742, -1.4531521
        %v6775 = vadd.f32 %v6743, -1.4531521
        %v6776 = vadd.f32 %v6744, -1.4531521
        %v6777 = vadd.f32 %v6745, -1.4531521
        %v6778 = vadd.f32 %v6746, -1.4531521
        %v6779 = vadd.f32 %v6747, -1.4531521
        %v6780 = vadd.f32 %v6748, -1.4531521
        %v6781 = vadd.f32 %v6749, -1.4531521
        %v6782 = vadd.f32 %v6750, -1.4531521
        %v6783 = vadd.f32 %v6751, -1.4531521
        %v6784 = vadd.f32 %v6752, -1.4531521
        %v6785 = vadd.f32 %v6753, -1.4531521
        %v6786 = vadd.f32 %v6754, -1.4531521
        %v6787 = vadd.f32 %v6755, -1.4531521
        %v6788 = vadd.f32 %v6756, -1.4531521
        %v6789 = vmul.f32 %v6757, %v6259
        %v6790 = vmul.f32 %v6758, %v6274
        %v6791 = vmul.f32 %v6759, %v6289
        %v6792 = vmul.f32 %v6760, %v6304
        %v6793 = vmul.f32 %v6761, %v6319
        %v6794 = vmul.f32 %v6762, %v6334
        %v6795 = vmul.f32 %v6763, %v6349
        %v6796 = vmul.f32 %v6764, %v6364
        %v6797 = vmul.f32 %v6765, %v6379
        %v6798 = vmul.f32 %v6766, %v6394
        %v6799 = vmul.f32 %v6767, %v6409
        %v6800 = vmul.f32 %v6768, %v6424
        %v6801 = vmul.f32 %v6769, %v6439
        %v6802 = vmul.f32 %v6770, %v6454
        %v6803 = vmul.f32 %v6771, %v6469
        %v6804 = vmul.f32 %v6772, %v6484
        %v6805 = vmul.f32 %v6773, %v6499
        %v6806 = vmul.f32 %v6774, %v6514
        %v6807 = vmul.f32 %v6775, %v6529
        %v6808 = vmul.f32 %v6776, %v6544
        %v6809 = vmul.f32 %v6777, %v6559
        %v6810 = vmul.f32 %v6778, %v6574
        %v6811 = vmul.f32 %v6779, %v6589
        %v6812 = vmul.f32 %v6780, %v6604
        %v6813 = vmul.f32 %v6781, %v6619
        %v6814 = vmul.f32 %v6782, %v6634
        %v6815 = vmul.f32 %v6783, %v6649
        %v6816 = vmul.f32 %v6784, %v6664
        %v6817 = vmul.f32 %v6785, %v6679
        %v6818 = vmul.f32 %v6786, %v6694
        %v6819 = vmul.f32 %v6787, %v6709
        %v6820 = vmul.f32 %v6788, %v6724
        %v6821 = vadd.f32 %v6789, 1.4214138
        %v6822 = vadd.f32 %v6790, 1.4214138
        %v6823 = vadd.f32 %v6791, 1.4214138
        %v6824 = vadd.f32 %v6792, 1.4214138
        %v6825 = vadd.f32 %v6793, 1.4214138
        %v6826 = vadd.f32 %v6794, 1.4214138
        %v6827 = vadd.f32 %v6795, 1.4214138
        %v6828 = vadd.f32 %v6796, 1.4214138
        %v6829 = vadd.f32 %v6797, 1.4214138
        %v6830 = vadd.f32 %v6798, 1.4214138
        %v6831 = vadd.f32 %v6799, 1.4214138
        %v6832 = vadd.f32 %v6800, 1.4214138
        %v6833 = vadd.f32 %v6801, 1.4214138
        %v6834 = vadd.f32 %v6802, 1.4214138
        %v6835 = vadd.f32 %v6803, 1.4214138
        %v6836 = vadd.f32 %v6804, 1.4214138
        %v6837 = vadd.f32 %v6805, 1.4214138
        %v6838 = vadd.f32 %v6806, 1.4214138
        %v6839 = vadd.f32 %v6807, 1.4214138
        %v6840 = vadd.f32 %v6808, 1.4214138
        %v6841 = vadd.f32 %v6809, 1.4214138
        %v6842 = vadd.f32 %v6810, 1.4214138
        %v6843 = vadd.f32 %v6811, 1.4214138
        %v6844 = vadd.f32 %v6812, 1.4214138
        %v6845 = vadd.f32 %v6813, 1.4214138
        %v6846 = vadd.f32 %v6814, 1.4214138
        %v6847 = vadd.f32 %v6815, 1.4214138
        %v6848 = vadd.f32 %v6816, 1.4214138
        %v6849 = vadd.f32 %v6817, 1.4214138
        %v6850 = vadd.f32 %v6818, 1.4214138
        %v6851 = vadd.f32 %v6819, 1.4214138
        %v6852 = vadd.f32 %v6820, 1.4214138
        %v6853 = vmul.f32 %v6821, %v6259
        %v6854 = vmul.f32 %v6822, %v6274
        %v6855 = vmul.f32 %v6823, %v6289
        %v6856 = vmul.f32 %v6824, %v6304
        %v6857 = vmul.f32 %v6825, %v6319
        %v6858 = vmul.f32 %v6826, %v6334
        %v6859 = vmul.f32 %v6827, %v6349
        %v6860 = vmul.f32 %v6828, %v6364
        %v6861 = vmul.f32 %v6829, %v6379
        %v6862 = vmul.f32 %v6830, %v6394
        %v6863 = vmul.f32 %v6831, %v6409
        %v6864 = vmul.f32 %v6832, %v6424
        %v6865 = vmul.f32 %v6833, %v6439
        %v6866 = vmul.f32 %v6834, %v6454
        %v6867 = vmul.f32 %v6835, %v6469
        %v6868 = vmul.f32 %v6836, %v6484
        %v6869 = vmul.f32 %v6837, %v6499
        %v6870 = vmul.f32 %v6838, %v6514
        %v6871 = vmul.f32 %v6839, %v6529
        %v6872 = vmul.f32 %v6840, %v6544
        %v6873 = vmul.f32 %v6841, %v6559
        %v6874 = vmul.f32 %v6842, %v6574
        %v6875 = vmul.f32 %v6843, %v6589
        %v6876 = vmul.f32 %v6844, %v6604
        %v6877 = vmul.f32 %v6845, %v6619
        %v6878 = vmul.f32 %v6846, %v6634
        %v6879 = vmul.f32 %v6847, %v6649
        %v6880 = vmul.f32 %v6848, %v6664
        %v6881 = vmul.f32 %v6849, %v6679
        %v6882 = vmul.f32 %v6850, %v6694
        %v6883 = vmul.f32 %v6851, %v6709
        %v6884 = vmul.f32 %v6852, %v6724
        %v6885 = vadd.f32 %v6853, -0.28449672
        %v6886 = vadd.f32 %v6854, -0.28449672
        %v6887 = vadd.f32 %v6855, -0.28449672
        %v6888 = vadd.f32 %v6856, -0.28449672
        %v6889 = vadd.f32 %v6857, -0.28449672
        %v6890 = vadd.f32 %v6858, -0.28449672
        %v6891 = vadd.f32 %v6859, -0.28449672
        %v6892 = vadd.f32 %v6860, -0.28449672
        %v6893 = vadd.f32 %v6861, -0.28449672
        %v6894 = vadd.f32 %v6862, -0.28449672
        %v6895 = vadd.f32 %v6863, -0.28449672
        %v6896 = vadd.f32 %v6864, -0.28449672
        %v6897 = vadd.f32 %v6865, -0.28449672
        %v6898 = vadd.f32 %v6866, -0.28449672
        %v6899 = vadd.f32 %v6867, -0.28449672
        %v6900 = vadd.f32 %v6868, -0.28449672
        %v6901 = vadd.f32 %v6869, -0.28449672
        %v6902 = vadd.f32 %v6870, -0.28449672
        %v6903 = vadd.f32 %v6871, -0.28449672
        %v6904 = vadd.f32 %v6872, -0.28449672
        %v6905 = vadd.f32 %v6873, -0.28449672
        %v6906 = vadd.f32 %v6874, -0.28449672
        %v6907 = vadd.f32 %v6875, -0.28449672
        %v6908 = vadd.f32 %v6876, -0.28449672
        %v6909 = vadd.f32 %v6877, -0.28449672
        %v6910 = vadd.f32 %v6878, -0.28449672
        %v6911 = vadd.f32 %v6879, -0.28449672
        %v6912 = vadd.f32 %v6880, -0.28449672
        %v6913 = vadd.f32 %v6881, -0.28449672
        %v6914 = vadd.f32 %v6882, -0.28449672
        %v6915 = vadd.f32 %v6883, -0.28449672
        %v6916 = vadd.f32 %v6884, -0.28449672
        %v6917 = vmul.f32 %v6885, %v6259
        %v6918 = vmul.f32 %v6886, %v6274
        %v6919 = vmul.f32 %v6887, %v6289
        %v6920 = vmul.f32 %v6888, %v6304
        %v6921 = vmul.f32 %v6889, %v6319
        %v6922 = vmul.f32 %v6890, %v6334
        %v6923 = vmul.f32 %v6891, %v6349
        %v6924 = vmul.f32 %v6892, %v6364
        %v6925 = vmul.f32 %v6893, %v6379
        %v6926 = vmul.f32 %v6894, %v6394
        %v6927 = vmul.f32 %v6895, %v6409
        %v6928 = vmul.f32 %v6896, %v6424
        %v6929 = vmul.f32 %v6897, %v6439
        %v6930 = vmul.f32 %v6898, %v6454
        %v6931 = vmul.f32 %v6899, %v6469
        %v6932 = vmul.f32 %v6900, %v6484
        %v6933 = vmul.f32 %v6901, %v6499
        %v6934 = vmul.f32 %v6902, %v6514
        %v6935 = vmul.f32 %v6903, %v6529
        %v6936 = vmul.f32 %v6904, %v6544
        %v6937 = vmul.f32 %v6905, %v6559
        %v6938 = vmul.f32 %v6906, %v6574
        %v6939 = vmul.f32 %v6907, %v6589
        %v6940 = vmul.f32 %v6908, %v6604
        %v6941 = vmul.f32 %v6909, %v6619
        %v6942 = vmul.f32 %v6910, %v6634
        %v6943 = vmul.f32 %v6911, %v6649
        %v6944 = vmul.f32 %v6912, %v6664
        %v6945 = vmul.f32 %v6913, %v6679
        %v6946 = vmul.f32 %v6914, %v6694
        %v6947 = vmul.f32 %v6915, %v6709
        %v6948 = vmul.f32 %v6916, %v6724
        %v6949 = vadd.f32 %v6917, 0.2548296
        %v6950 = vadd.f32 %v6918, 0.2548296
        %v6951 = vadd.f32 %v6919, 0.2548296
        %v6952 = vadd.f32 %v6920, 0.2548296
        %v6953 = vadd.f32 %v6921, 0.2548296
        %v6954 = vadd.f32 %v6922, 0.2548296
        %v6955 = vadd.f32 %v6923, 0.2548296
        %v6956 = vadd.f32 %v6924, 0.2548296
        %v6957 = vadd.f32 %v6925, 0.2548296
        %v6958 = vadd.f32 %v6926, 0.2548296
        %v6959 = vadd.f32 %v6927, 0.2548296
        %v6960 = vadd.f32 %v6928, 0.2548296
        %v6961 = vadd.f32 %v6929, 0.2548296
        %v6962 = vadd.f32 %v6930, 0.2548296
        %v6963 = vadd.f32 %v6931, 0.2548296
        %v6964 = vadd.f32 %v6932, 0.2548296
        %v6965 = vadd.f32 %v6933, 0.2548296
        %v6966 = vadd.f32 %v6934, 0.2548296
        %v6967 = vadd.f32 %v6935, 0.2548296
        %v6968 = vadd.f32 %v6936, 0.2548296
        %v6969 = vadd.f32 %v6937, 0.2548296
        %v6970 = vadd.f32 %v6938, 0.2548296
        %v6971 = vadd.f32 %v6939, 0.2548296
        %v6972 = vadd.f32 %v6940, 0.2548296
        %v6973 = vadd.f32 %v6941, 0.2548296
        %v6974 = vadd.f32 %v6942, 0.2548296
        %v6975 = vadd.f32 %v6943, 0.2548296
        %v6976 = vadd.f32 %v6944, 0.2548296
        %v6977 = vadd.f32 %v6945, 0.2548296
        %v6978 = vadd.f32 %v6946, 0.2548296
        %v6979 = vadd.f32 %v6947, 0.2548296
        %v6980 = vadd.f32 %v6948, 0.2548296
        %v6981 = vmul.f32 %v6949, %v6259
        %v6982 = vmul.f32 %v6950, %v6274
        %v6983 = vmul.f32 %v6951, %v6289
        %v6984 = vmul.f32 %v6952, %v6304
        %v6985 = vmul.f32 %v6953, %v6319
        %v6986 = vmul.f32 %v6954, %v6334
        %v6987 = vmul.f32 %v6955, %v6349
        %v6988 = vmul.f32 %v6956, %v6364
        %v6989 = vmul.f32 %v6957, %v6379
        %v6990 = vmul.f32 %v6958, %v6394
        %v6991 = vmul.f32 %v6959, %v6409
        %v6992 = vmul.f32 %v6960, %v6424
        %v6993 = vmul.f32 %v6961, %v6439
        %v6994 = vmul.f32 %v6962, %v6454
        %v6995 = vmul.f32 %v6963, %v6469
        %v6996 = vmul.f32 %v6964, %v6484
        %v6997 = vmul.f32 %v6965, %v6499
        %v6998 = vmul.f32 %v6966, %v6514
        %v6999 = vmul.f32 %v6967, %v6529
        %v7000 = vmul.f32 %v6968, %v6544
        %v7001 = vmul.f32 %v6969, %v6559
        %v7002 = vmul.f32 %v6970, %v6574
        %v7003 = vmul.f32 %v6971, %v6589
        %v7004 = vmul.f32 %v6972, %v6604
        %v7005 = vmul.f32 %v6973, %v6619
        %v7006 = vmul.f32 %v6974, %v6634
        %v7007 = vmul.f32 %v6975, %v6649
        %v7008 = vmul.f32 %v6976, %v6664
        %v7009 = vmul.f32 %v6977, %v6679
        %v7010 = vmul.f32 %v6978, %v6694
        %v7011 = vmul.f32 %v6979, %v6709
        %v7012 = vmul.f32 %v6980, %v6724
        %v7013 = vsub.f32 0.0, %v6149
        %v7014 = vsub.f32 0.0, %v6150
        %v7015 = vsub.f32 0.0, %v6151
        %v7016 = vsub.f32 0.0, %v6152
        %v7017 = vsub.f32 0.0, %v6153
        %v7018 = vsub.f32 0.0, %v6154
        %v7019 = vsub.f32 0.0, %v6155
        %v7020 = vsub.f32 0.0, %v6156
        %v7021 = vsub.f32 0.0, %v6157
        %v7022 = vsub.f32 0.0, %v6158
        %v7023 = vsub.f32 0.0, %v6159
        %v7024 = vsub.f32 0.0, %v6160
        %v7025 = vsub.f32 0.0, %v6161
        %v7026 = vsub.f32 0.0, %v6162
        %v7027 = vsub.f32 0.0, %v6163
        %v7028 = vsub.f32 0.0, %v6164
        %v7029 = vsub.f32 0.0, %v6165
        %v7030 = vsub.f32 0.0, %v6166
        %v7031 = vsub.f32 0.0, %v6167
        %v7032 = vsub.f32 0.0, %v6168
        %v7033 = vsub.f32 0.0, %v6169
        %v7034 = vsub.f32 0.0, %v6170
        %v7035 = vsub.f32 0.0, %v6171
        %v7036 = vsub.f32 0.0, %v6172
        %v7037 = vsub.f32 0.0, %v6173
        %v7038 = vsub.f32 0.0, %v6174
        %v7039 = vsub.f32 0.0, %v6175
        %v7040 = vsub.f32 0.0, %v6176
        %v7041 = vsub.f32 0.0, %v6177
        %v7042 = vsub.f32 0.0, %v6178
        %v7043 = vsub.f32 0.0, %v6179
        %v7044 = vsub.f32 0.0, %v6180
        %v7045 = vmul.f32 %v7013, %v6149
        %v7046 = vmul.f32 %v7014, %v6150
        %v7047 = vmul.f32 %v7015, %v6151
        %v7048 = vmul.f32 %v7016, %v6152
        %v7049 = vmul.f32 %v7017, %v6153
        %v7050 = vmul.f32 %v7018, %v6154
        %v7051 = vmul.f32 %v7019, %v6155
        %v7052 = vmul.f32 %v7020, %v6156
        %v7053 = vmul.f32 %v7021, %v6157
        %v7054 = vmul.f32 %v7022, %v6158
        %v7055 = vmul.f32 %v7023, %v6159
        %v7056 = vmul.f32 %v7024, %v6160
        %v7057 = vmul.f32 %v7025, %v6161
        %v7058 = vmul.f32 %v7026, %v6162
        %v7059 = vmul.f32 %v7027, %v6163
        %v7060 = vmul.f32 %v7028, %v6164
        %v7061 = vmul.f32 %v7029, %v6165
        %v7062 = vmul.f32 %v7030, %v6166
        %v7063 = vmul.f32 %v7031, %v6167
        %v7064 = vmul.f32 %v7032, %v6168
        %v7065 = vmul.f32 %v7033, %v6169
        %v7066 = vmul.f32 %v7034, %v6170
        %v7067 = vmul.f32 %v7035, %v6171
        %v7068 = vmul.f32 %v7036, %v6172
        %v7069 = vmul.f32 %v7037, %v6173
        %v7070 = vmul.f32 %v7038, %v6174
        %v7071 = vmul.f32 %v7039, %v6175
        %v7072 = vmul.f32 %v7040, %v6176
        %v7073 = vmul.f32 %v7041, %v6177
        %v7074 = vmul.f32 %v7042, %v6178
        %v7075 = vmul.f32 %v7043, %v6179
        %v7076 = vmul.f32 %v7044, %v6180
        %v7077 = vmul.f32 %v7045, 1.442695
        %v7078 = vpow.pop %v7077
        %v7079 = vmul.f32 %v7046, 1.442695
        %v7080 = vpow.pop %v7079
        %v7081 = vmul.f32 %v7047, 1.442695
        %v7082 = vpow.pop %v7081
        %v7083 = vmul.f32 %v7048, 1.442695
        %v7084 = vpow.pop %v7083
        %v7085 = vmul.f32 %v7049, 1.442695
        %v7086 = vpow.pop %v7085
        %v7087 = vmul.f32 %v7050, 1.442695
        %v7088 = vpow.pop %v7087
        %v7089 = vmul.f32 %v7051, 1.442695
        %v7090 = vpow.pop %v7089
        %v7091 = vmul.f32 %v7052, 1.442695
        %v7092 = vpow.pop %v7091
        %v7093 = vmul.f32 %v7053, 1.442695
        %v7094 = vpow.pop %v7093
        %v7095 = vmul.f32 %v7054, 1.442695
        %v7096 = vpow.pop %v7095
        %v7097 = vmul.f32 %v7055, 1.442695
        %v7098 = vpow.pop %v7097
        %v7099 = vmul.f32 %v7056, 1.442695
        %v7100 = vpow.pop %v7099
        %v7101 = vmul.f32 %v7057, 1.442695
        %v7102 = vpow.pop %v7101
        %v7103 = vmul.f32 %v7058, 1.442695
        %v7104 = vpow.pop %v7103
        %v7105 = vmul.f32 %v7059, 1.442695
        %v7106 = vpow.pop %v7105
        %v7107 = vmul.f32 %v7060, 1.442695
        %v7108 = vpow.pop %v7107
        %v7109 = vmul.f32 %v7061, 1.442695
        %v7110 = vpow.pop %v7109
        %v7111 = vmul.f32 %v7062, 1.442695
        %v7112 = vpow.pop %v7111
        %v7113 = vmul.f32 %v7063, 1.442695
        %v7114 = vpow.pop %v7113
        %v7115 = vmul.f32 %v7064, 1.442695
        %v7116 = vpow.pop %v7115
        %v7117 = vmul.f32 %v7065, 1.442695
        %v7118 = vpow.pop %v7117
        %v7119 = vmul.f32 %v7066, 1.442695
        %v7120 = vpow.pop %v7119
        %v7121 = vmul.f32 %v7067, 1.442695
        %v7122 = vpow.pop %v7121
        %v7123 = vmul.f32 %v7068, 1.442695
        %v7124 = vpow.pop %v7123
        %v7125 = vmul.f32 %v7069, 1.442695
        %v7126 = vpow.pop %v7125
        %v7127 = vmul.f32 %v7070, 1.442695
        %v7128 = vpow.pop %v7127
        %v7129 = vmul.f32 %v7071, 1.442695
        %v7130 = vpow.pop %v7129
        %v7131 = vmul.f32 %v7072, 1.442695
        %v7132 = vpow.pop %v7131
        %v7133 = vmul.f32 %v7073, 1.442695
        %v7134 = vpow.pop %v7133
        %v7135 = vmul.f32 %v7074, 1.442695
        %v7136 = vpow.pop %v7135
        %v7137 = vmul.f32 %v7075, 1.442695
        %v7138 = vpow.pop %v7137
        %v7139 = vmul.f32 %v7076, 1.442695
        %v7140 = vpow.pop %v7139
        %v7141 = vmul.f32 %v6981, %v7078
        %v7142 = vmul.f32 %v6982, %v7080
        %v7143 = vmul.f32 %v6983, %v7082
        %v7144 = vmul.f32 %v6984, %v7084
        %v7145 = vmul.f32 %v6985, %v7086
        %v7146 = vmul.f32 %v6986, %v7088
        %v7147 = vmul.f32 %v6987, %v7090
        %v7148 = vmul.f32 %v6988, %v7092
        %v7149 = vmul.f32 %v6989, %v7094
        %v7150 = vmul.f32 %v6990, %v7096
        %v7151 = vmul.f32 %v6991, %v7098
        %v7152 = vmul.f32 %v6992, %v7100
        %v7153 = vmul.f32 %v6993, %v7102
        %v7154 = vmul.f32 %v6994, %v7104
        %v7155 = vmul.f32 %v6995, %v7106
        %v7156 = vmul.f32 %v6996, %v7108
        %v7157 = vmul.f32 %v6997, %v7110
        %v7158 = vmul.f32 %v6998, %v7112
        %v7159 = vmul.f32 %v6999, %v7114
        %v7160 = vmul.f32 %v7000, %v7116
        %v7161 = vmul.f32 %v7001, %v7118
        %v7162 = vmul.f32 %v7002, %v7120
        %v7163 = vmul.f32 %v7003, %v7122
        %v7164 = vmul.f32 %v7004, %v7124
        %v7165 = vmul.f32 %v7005, %v7126
        %v7166 = vmul.f32 %v7006, %v7128
        %v7167 = vmul.f32 %v7007, %v7130
        %v7168 = vmul.f32 %v7008, %v7132
        %v7169 = vmul.f32 %v7009, %v7134
        %v7170 = vmul.f32 %v7010, %v7136
        %v7171 = vmul.f32 %v7011, %v7138
        %v7172 = vmul.f32 %v7012, %v7140
        %v7173 = vsub.f32 1.0, %v7141
        %v7174 = vsub.f32 1.0, %v7142
        %v7175 = vsub.f32 1.0, %v7143
        %v7176 = vsub.f32 1.0, %v7144
        %v7177 = vsub.f32 1.0, %v7145
        %v7178 = vsub.f32 1.0, %v7146
        %v7179 = vsub.f32 1.0, %v7147
        %v7180 = vsub.f32 1.0, %v7148
        %v7181 = vsub.f32 1.0, %v7149
        %v7182 = vsub.f32 1.0, %v7150
        %v7183 = vsub.f32 1.0, %v7151
        %v7184 = vsub.f32 1.0, %v7152
        %v7185 = vsub.f32 1.0, %v7153
        %v7186 = vsub.f32 1.0, %v7154
        %v7187 = vsub.f32 1.0, %v7155
        %v7188 = vsub.f32 1.0, %v7156
        %v7189 = vsub.f32 1.0, %v7157
        %v7190 = vsub.f32 1.0, %v7158
        %v7191 = vsub.f32 1.0, %v7159
        %v7192 = vsub.f32 1.0, %v7160
        %v7193 = vsub.f32 1.0, %v7161
        %v7194 = vsub.f32 1.0, %v7162
        %v7195 = vsub.f32 1.0, %v7163
        %v7196 = vsub.f32 1.0, %v7164
        %v7197 = vsub.f32 1.0, %v7165
        %v7198 = vsub.f32 1.0, %v7166
        %v7199 = vsub.f32 1.0, %v7167
        %v7200 = vsub.f32 1.0, %v7168
        %v7201 = vsub.f32 1.0, %v7169
        %v7202 = vsub.f32 1.0, %v7170
        %v7203 = vsub.f32 1.0, %v7171
        %v7204 = vsub.f32 1.0, %v7172
        %vm7205 = vcmp.ge.f32.partialorder %v6117, 0.0
        %vm7206 = vcmp.ge.f32.partialorder %v6118, 0.0
        %vm7207 = vcmp.ge.f32.partialorder %v6119, 0.0
        %vm7208 = vcmp.ge.f32.partialorder %v6120, 0.0
        %vm7209 = vcmp.ge.f32.partialorder %v6121, 0.0
        %vm7210 = vcmp.ge.f32.partialorder %v6122, 0.0
        %vm7211 = vcmp.ge.f32.partialorder %v6123, 0.0
        %vm7212 = vcmp.ge.f32.partialorder %v6124, 0.0
        %vm7213 = vcmp.ge.f32.partialorder %v6125, 0.0
        %vm7214 = vcmp.ge.f32.partialorder %v6126, 0.0
        %vm7215 = vcmp.ge.f32.partialorder %v6127, 0.0
        %vm7216 = vcmp.ge.f32.partialorder %v6128, 0.0
        %vm7217 = vcmp.ge.f32.partialorder %v6129, 0.0
        %vm7218 = vcmp.ge.f32.partialorder %v6130, 0.0
        %vm7219 = vcmp.ge.f32.partialorder %v6131, 0.0
        %vm7220 = vcmp.ge.f32.partialorder %v6132, 0.0
        %vm7221 = vcmp.ge.f32.partialorder %v6133, 0.0
        %vm7222 = vcmp.ge.f32.partialorder %v6134, 0.0
        %vm7223 = vcmp.ge.f32.partialorder %v6135, 0.0
        %vm7224 = vcmp.ge.f32.partialorder %v6136, 0.0
        %vm7225 = vcmp.ge.f32.partialorder %v6137, 0.0
        %vm7226 = vcmp.ge.f32.partialorder %v6138, 0.0
        %vm7227 = vcmp.ge.f32.partialorder %v6139, 0.0
        %vm7228 = vcmp.ge.f32.partialorder %v6140, 0.0
        %vm7229 = vcmp.ge.f32.partialorder %v6141, 0.0
        %vm7230 = vcmp.ge.f32.partialorder %v6142, 0.0
        %vm7231 = vcmp.ge.f32.partialorder %v6143, 0.0
        %vm7232 = vcmp.ge.f32.partialorder %v6144, 0.0
        %vm7233 = vcmp.ge.f32.partialorder %v6145, 0.0
        %vm7234 = vcmp.ge.f32.partialorder %v6146, 0.0
        %vm7235 = vcmp.ge.f32.partialorder %v6147, 0.0
        %vm7236 = vcmp.ge.f32.partialorder %v6148, 0.0
        %v7237 = vsub.f32 0.0, %v7173
        %v7238 = vsub.f32 0.0, %v7174
        %v7239 = vsub.f32 0.0, %v7175
        %v7240 = vsub.f32 0.0, %v7176
        %v7241 = vsub.f32 0.0, %v7177
        %v7242 = vsub.f32 0.0, %v7178
        %v7243 = vsub.f32 0.0, %v7179
        %v7244 = vsub.f32 0.0, %v7180
        %v7245 = vsub.f32 0.0, %v7181
        %v7246 = vsub.f32 0.0, %v7182
        %v7247 = vsub.f32 0.0, %v7183
        %v7248 = vsub.f32 0.0, %v7184
        %v7249 = vsub.f32 0.0, %v7185
        %v7250 = vsub.f32 0.0, %v7186
        %v7251 = vsub.f32 0.0, %v7187
        %v7252 = vsub.f32 0.0, %v7188
        %v7253 = vsub.f32 0.0, %v7189
        %v7254 = vsub.f32 0.0, %v7190
        %v7255 = vsub.f32 0.0, %v7191
        %v7256 = vsub.f32 0.0, %v7192
        %v7257 = vsub.f32 0.0, %v7193
        %v7258 = vsub.f32 0.0, %v7194
        %v7259 = vsub.f32 0.0, %v7195
        %v7260 = vsub.f32 0.0, %v7196
        %v7261 = vsub.f32 0.0, %v7197
        %v7262 = vsub.f32 0.0, %v7198
        %v7263 = vsub.f32 0.0, %v7199
        %v7264 = vsub.f32 0.0, %v7200
        %v7265 = vsub.f32 0.0, %v7201
        %v7266 = vsub.f32 0.0, %v7202
        %v7267 = vsub.f32 0.0, %v7203
        %v7268 = vsub.f32 0.0, %v7204
        %v7269 = vsel %vm7205, %v7173, %v7237
        %v7270 = vsel %vm7206, %v7174, %v7238
        %v7271 = vsel %vm7207, %v7175, %v7239
        %v7272 = vsel %vm7208, %v7176, %v7240
        %v7273 = vsel %vm7209, %v7177, %v7241
        %v7274 = vsel %vm7210, %v7178, %v7242
        %v7275 = vsel %vm7211, %v7179, %v7243
        %v7276 = vsel %vm7212, %v7180, %v7244
        %v7277 = vsel %vm7213, %v7181, %v7245
        %v7278 = vsel %vm7214, %v7182, %v7246
        %v7279 = vsel %vm7215, %v7183, %v7247
        %v7280 = vsel %vm7216, %v7184, %v7248
        %v7281 = vsel %vm7217, %v7185, %v7249
        %v7282 = vsel %vm7218, %v7186, %v7250
        %v7283 = vsel %vm7219, %v7187, %v7251
        %v7284 = vsel %vm7220, %v7188, %v7252
        %v7285 = vsel %vm7221, %v7189, %v7253
        %v7286 = vsel %vm7222, %v7190, %v7254
        %v7287 = vsel %vm7223, %v7191, %v7255
        %v7288 = vsel %vm7224, %v7192, %v7256
        %v7289 = vsel %vm7225, %v7193, %v7257
        %v7290 = vsel %vm7226, %v7194, %v7258
        %v7291 = vsel %vm7227, %v7195, %v7259
        %v7292 = vsel %vm7228, %v7196, %v7260
        %v7293 = vsel %vm7229, %v7197, %v7261
        %v7294 = vsel %vm7230, %v7198, %v7262
        %v7295 = vsel %vm7231, %v7199, %v7263
        %v7296 = vsel %vm7232, %v7200, %v7264
        %v7297 = vsel %vm7233, %v7201, %v7265
        %v7298 = vsel %vm7234, %v7202, %v7266
        %v7299 = vsel %vm7235, %v7203, %v7267
        %v7300 = vsel %vm7236, %v7204, %v7268
        %v7301 = vadd.f32 %v7269, 1.0
        %v7302 = vadd.f32 %v7270, 1.0
        %v7303 = vadd.f32 %v7271, 1.0
        %v7304 = vadd.f32 %v7272, 1.0
        %v7305 = vadd.f32 %v7273, 1.0
        %v7306 = vadd.f32 %v7274, 1.0
        %v7307 = vadd.f32 %v7275, 1.0
        %v7308 = vadd.f32 %v7276, 1.0
        %v7309 = vadd.f32 %v7277, 1.0
        %v7310 = vadd.f32 %v7278, 1.0
        %v7311 = vadd.f32 %v7279, 1.0
        %v7312 = vadd.f32 %v7280, 1.0
        %v7313 = vadd.f32 %v7281, 1.0
        %v7314 = vadd.f32 %v7282, 1.0
        %v7315 = vadd.f32 %v7283, 1.0
        %v7316 = vadd.f32 %v7284, 1.0
        %v7317 = vadd.f32 %v7285, 1.0
        %v7318 = vadd.f32 %v7286, 1.0
        %v7319 = vadd.f32 %v7287, 1.0
        %v7320 = vadd.f32 %v7288, 1.0
        %v7321 = vadd.f32 %v7289, 1.0
        %v7322 = vadd.f32 %v7290, 1.0
        %v7323 = vadd.f32 %v7291, 1.0
        %v7324 = vadd.f32 %v7292, 1.0
        %v7325 = vadd.f32 %v7293, 1.0
        %v7326 = vadd.f32 %v7294, 1.0
        %v7327 = vadd.f32 %v7295, 1.0
        %v7328 = vadd.f32 %v7296, 1.0
        %v7329 = vadd.f32 %v7297, 1.0
        %v7330 = vadd.f32 %v7298, 1.0
        %v7331 = vadd.f32 %v7299, 1.0
        %v7332 = vadd.f32 %v7300, 1.0
        %v7333 = vmul.f32 %v6085, %v7301
        %v7334 = vmul.f32 %v6086, %v7302
        %v7335 = vmul.f32 %v6087, %v7303
        %v7336 = vmul.f32 %v6088, %v7304
        %v7337 = vmul.f32 %v6089, %v7305
        %v7338 = vmul.f32 %v6090, %v7306
        %v7339 = vmul.f32 %v6091, %v7307
        %v7340 = vmul.f32 %v6092, %v7308
        %v7341 = vmul.f32 %v6093, %v7309
        %v7342 = vmul.f32 %v6094, %v7310
        %v7343 = vmul.f32 %v6095, %v7311
        %v7344 = vmul.f32 %v6096, %v7312
        %v7345 = vmul.f32 %v6097, %v7313
        %v7346 = vmul.f32 %v6098, %v7314
        %v7347 = vmul.f32 %v6099, %v7315
        %v7348 = vmul.f32 %v6100, %v7316
        %v7349 = vmul.f32 %v6101, %v7317
        %v7350 = vmul.f32 %v6102, %v7318
        %v7351 = vmul.f32 %v6103, %v7319
        %v7352 = vmul.f32 %v6104, %v7320
        %v7353 = vmul.f32 %v6105, %v7321
        %v7354 = vmul.f32 %v6106, %v7322
        %v7355 = vmul.f32 %v6107, %v7323
        %v7356 = vmul.f32 %v6108, %v7324
        %v7357 = vmul.f32 %v6109, %v7325
        %v7358 = vmul.f32 %v6110, %v7326
        %v7359 = vmul.f32 %v6111, %v7327
        %v7360 = vmul.f32 %v6112, %v7328
        %v7361 = vmul.f32 %v6113, %v7329
        %v7362 = vmul.f32 %v6114, %v7330
        %v7363 = vmul.f32 %v6115, %v7331
        %v7364 = vmul.f32 %v6116, %v7332
        %v7365 = vpack.c.bf16 %v7335, %v7333
        %v7366 = vpack.c.bf16 %v7336, %v7334
        %v7367 = vpack.c.bf16 %v7339, %v7337
        %v7368 = vpack.c.bf16 %v7340, %v7338
        %v7369 = vpack.c.bf16 %v7343, %v7341
        %v7370 = vpack.c.bf16 %v7344, %v7342
        %v7371 = vpack.c.bf16 %v7347, %v7345
        %v7372 = vpack.c.bf16 %v7348, %v7346
        %v7373 = vpack.c.bf16 %v7351, %v7349
        %v7374 = vpack.c.bf16 %v7352, %v7350
        %v7375 = vpack.c.bf16 %v7355, %v7353
        %v7376 = vpack.c.bf16 %v7356, %v7354
        %v7377 = vpack.c.bf16 %v7359, %v7357
        %v7378 = vpack.c.bf16 %v7360, %v7358
        %v7379 = vpack.c.bf16 %v7363, %v7361
        %v7380 = vpack.c.bf16 %v7364, %v7362
        %v7381 = vld [vmem:[%s783] sm:$0xf]
        %v7382 = vld [vmem:[%s783 + $0x4] sm:$0xf]
        %v7383 = vld [vmem:[%s783 + $0x8] sm:$0xf]
        %v7384 = vld [vmem:[%s783 + $0xc] sm:$0xf]
        %v7385 = vld [vmem:[%s783 + $0x10] sm:$0xf]
        %v7386 = vld [vmem:[%s783 + $0x14] sm:$0xf]
        %v7387 = vld [vmem:[%s783 + $0x18] sm:$0xf]
        %v7388 = vld [vmem:[%s783 + $0x1c] sm:$0xf]
        %v7389 = vld [vmem:[%s783 + $0x20] sm:$0xf]
        %v7390 = vld [vmem:[%s783 + $0x24] sm:$0xf]
        %v7391 = vld [vmem:[%s783 + $0x28] sm:$0xf]
        %v7392 = vld [vmem:[%s783 + $0x2c] sm:$0xf]
        %v7393 = vld [vmem:[%s783 + $0x30] sm:$0xf]
        %v7394 = vld [vmem:[%s783 + $0x34] sm:$0xf]
        %v7395 = vld [vmem:[%s783 + $0x38] sm:$0xf]
        %v7396 = vld [vmem:[%s783 + $0x3c] sm:$0xf]
        %v7397 = vld [vmem:[%s783 + $0x40] sm:$0xf]
        %v7398 = vld [vmem:[%s783 + $0x44] sm:$0xf]
        %v7399 = vld [vmem:[%s783 + $0x48] sm:$0xf]
        %v7400 = vld [vmem:[%s783 + $0x4c] sm:$0xf]
        %v7401 = vld [vmem:[%s783 + $0x50] sm:$0xf]
        %v7402 = vld [vmem:[%s783 + $0x54] sm:$0xf]
        %v7403 = vld [vmem:[%s783 + $0x58] sm:$0xf]
        %v7404 = vld [vmem:[%s783 + $0x5c] sm:$0xf]
        %v7405 = vld [vmem:[%s783 + $0x60] sm:$0xf]
        %v7406 = vld [vmem:[%s783 + $0x64] sm:$0xf]
        %v7407 = vld [vmem:[%s783 + $0x68] sm:$0xf]
        %v7408 = vld [vmem:[%s783 + $0x6c] sm:$0xf]
        %v7409 = vld [vmem:[%s783 + $0x70] sm:$0xf]
        %v7410 = vld [vmem:[%s783 + $0x74] sm:$0xf]
        %v7411 = vld [vmem:[%s783 + $0x78] sm:$0xf]
        %v7412 = vld [vmem:[%s783 + $0x7c] sm:$0xf]
        %v7413 = vld [vmem:[%s894] sm:$0x1]
        %v7415 = vperm.slane %v7413, 0
        %v7449 = vunpack.c.l.b16 %v7381
        %v7450 = vunpack.c.l.b16 %v7382
        %v7451 = vunpack.c.l.b16 %v7383
        %v7452 = vunpack.c.l.b16 %v7384
        %v7453 = vunpack.c.l.b16 %v7385
        %v7454 = vunpack.c.l.b16 %v7386
        %v7455 = vunpack.c.l.b16 %v7387
        %v7456 = vunpack.c.l.b16 %v7388
        %v7457 = vunpack.c.l.b16 %v7389
        %v7458 = vunpack.c.l.b16 %v7390
        %v7459 = vunpack.c.l.b16 %v7391
        %v7460 = vunpack.c.l.b16 %v7392
        %v7461 = vunpack.c.l.b16 %v7393
        %v7462 = vunpack.c.l.b16 %v7394
        %v7463 = vunpack.c.l.b16 %v7395
        %v7464 = vunpack.c.l.b16 %v7396
        %v7465 = vunpack.c.l.b16 %v7397
        %v7466 = vunpack.c.l.b16 %v7398
        %v7467 = vunpack.c.l.b16 %v7399
        %v7468 = vunpack.c.l.b16 %v7400
        %v7469 = vunpack.c.l.b16 %v7401
        %v7470 = vunpack.c.l.b16 %v7402
        %v7471 = vunpack.c.l.b16 %v7403
        %v7472 = vunpack.c.l.b16 %v7404
        %v7473 = vunpack.c.l.b16 %v7405
        %v7474 = vunpack.c.l.b16 %v7406
        %v7475 = vunpack.c.l.b16 %v7407
        %v7476 = vunpack.c.l.b16 %v7408
        %v7477 = vunpack.c.l.b16 %v7409
        %v7478 = vunpack.c.l.b16 %v7410
        %v7479 = vunpack.c.l.b16 %v7411
        %v7480 = vunpack.c.l.b16 %v7412
        %v7481 = vpack.c.b16 %v7450, %v7449
        %v7482 = vpack.c.b16 %v7452, %v7451
        %v7483 = vpack.c.b16 %v7454, %v7453
        %v7484 = vpack.c.b16 %v7456, %v7455
        %v7485 = vpack.c.b16 %v7458, %v7457
        %v7486 = vpack.c.b16 %v7460, %v7459
        %v7487 = vpack.c.b16 %v7462, %v7461
        %v7488 = vpack.c.b16 %v7464, %v7463
        %v7489 = vpack.c.b16 %v7466, %v7465
        %v7490 = vpack.c.b16 %v7468, %v7467
        %v7491 = vpack.c.b16 %v7470, %v7469
        %v7492 = vpack.c.b16 %v7472, %v7471
        %v7493 = vpack.c.b16 %v7474, %v7473
        %v7494 = vpack.c.b16 %v7476, %v7475
        %v7495 = vpack.c.b16 %v7478, %v7477
        %v7496 = vpack.c.b16 %v7480, %v7479
        %7513 = vmatpush.bf16.msra.mxu0 %v7488
        %7514 = vmatpush.bf16.msra.mxu0 %v7487
        %7515 = vmatpush.bf16.msra.mxu0 %v7486
        %7516 = vmatpush.bf16.msra.mxu0 %v7485
        %7517 = vmatpush.bf16.msra.mxu0 %v7484
        %7518 = vmatpush.bf16.msra.mxu0 %v7483
        %7519 = vmatpush.bf16.msra.mxu0 %v7482
        %7520 = vmatpush.bf16.msra.mxu0 %v7481
        %7521 = vmatmul.bf16.gmra.mxu0 %v7365
        %v7522 = vpop.f32.mrf.mxu0
        %v7523 = vadd.f32 %v7415, %v7522
        %v7524 = vpop.f32.mrf.mxu0
        %v7525 = vadd.f32 %v7415, %v7524
        %7526 = vmatmul.bf16.gmra.mxu0 %v7367
        %v7527 = vpop.f32.mrf.mxu0
        %v7528 = vadd.f32 %v7415, %v7527
        %v7529 = vpop.f32.mrf.mxu0
        %v7530 = vadd.f32 %v7415, %v7529
        %7531 = vmatmul.bf16.gmra.mxu0 %v7369
        %v7532 = vpop.f32.mrf.mxu0
        %v7533 = vadd.f32 %v7415, %v7532
        %v7534 = vpop.f32.mrf.mxu0
        %v7535 = vadd.f32 %v7415, %v7534
        %7536 = vmatmul.bf16.gmra.mxu0 %v7371
        %v7537 = vpop.f32.mrf.mxu0
        %v7538 = vadd.f32 %v7415, %v7537
        %v7539 = vpop.f32.mrf.mxu0
        %v7540 = vadd.f32 %v7415, %v7539
        %7541 = vmatmul.bf16.gmra.mxu0 %v7373
        %v7542 = vpop.f32.mrf.mxu0
        %v7543 = vadd.f32 %v7415, %v7542
        %v7544 = vpop.f32.mrf.mxu0
        %v7545 = vadd.f32 %v7415, %v7544
        %7546 = vmatmul.bf16.gmra.mxu0 %v7375
        %v7547 = vpop.f32.mrf.mxu0
        %v7548 = vadd.f32 %v7415, %v7547
        %v7549 = vpop.f32.mrf.mxu0
        %v7550 = vadd.f32 %v7415, %v7549
        %7551 = vmatmul.bf16.gmra.mxu0 %v7377
        %v7552 = vpop.f32.mrf.mxu0
        %v7553 = vadd.f32 %v7415, %v7552
        %v7554 = vpop.f32.mrf.mxu0
        %v7555 = vadd.f32 %v7415, %v7554
        %7556 = vmatmul.bf16.gmra.mxu0 %v7379
        %v7557 = vpop.f32.mrf.mxu0
        %v7558 = vadd.f32 %v7415, %v7557
        %v7559 = vpop.f32.mrf.mxu0
        %v7560 = vadd.f32 %v7415, %v7559
        %7561 = vdwg.mxu0
        %7562 = vmatpush.bf16.msra.mxu0 %v7496
        %7563 = vmatpush.bf16.msra.mxu0 %v7495
        %7564 = vmatpush.bf16.msra.mxu0 %v7494
        %7565 = vmatpush.bf16.msra.mxu0 %v7493
        %7566 = vmatpush.bf16.msra.mxu0 %v7492
        %7567 = vmatpush.bf16.msra.mxu0 %v7491
        %7568 = vmatpush.bf16.msra.mxu0 %v7490
        %7569 = vmatpush.bf16.msra.mxu0 %v7489
        %7570 = vmatmul.bf16.gmra.mxu0 %v7366
        %v7571 = vpop.f32.mrf.mxu0
        %v7572 = vadd.f32 %v7523, %v7571
        %v7573 = vpop.f32.mrf.mxu0
        %v7574 = vadd.f32 %v7525, %v7573
        %7575 = vmatmul.bf16.gmra.mxu0 %v7368
        %v7576 = vpop.f32.mrf.mxu0
        %v7577 = vadd.f32 %v7528, %v7576
        %v7578 = vpop.f32.mrf.mxu0
        %v7579 = vadd.f32 %v7530, %v7578
        %7580 = vmatmul.bf16.gmra.mxu0 %v7370
        %v7581 = vpop.f32.mrf.mxu0
        %v7582 = vadd.f32 %v7533, %v7581
        %v7583 = vpop.f32.mrf.mxu0
        %v7584 = vadd.f32 %v7535, %v7583
        %7585 = vmatmul.bf16.gmra.mxu0 %v7372
        %v7586 = vpop.f32.mrf.mxu0
        %v7587 = vadd.f32 %v7538, %v7586
        %v7588 = vpop.f32.mrf.mxu0
        %v7589 = vadd.f32 %v7540, %v7588
        %7590 = vmatmul.bf16.gmra.mxu0 %v7374
        %v7591 = vpop.f32.mrf.mxu0
        %v7592 = vadd.f32 %v7543, %v7591
        %v7593 = vpop.f32.mrf.mxu0
        %v7594 = vadd.f32 %v7545, %v7593
        %7595 = vmatmul.bf16.gmra.mxu0 %v7376
        %v7596 = vpop.f32.mrf.mxu0
        %v7597 = vadd.f32 %v7548, %v7596
        %v7598 = vpop.f32.mrf.mxu0
        %v7599 = vadd.f32 %v7550, %v7598
        %7600 = vmatmul.bf16.gmra.mxu0 %v7378
        %v7601 = vpop.f32.mrf.mxu0
        %v7602 = vadd.f32 %v7553, %v7601
        %v7603 = vpop.f32.mrf.mxu0
        %v7604 = vadd.f32 %v7555, %v7603
        %7605 = vmatmul.bf16.gmra.mxu0 %v7380
        %v7606 = vpop.f32.mrf.mxu0
        %v7607 = vadd.f32 %v7558, %v7606
        %v7608 = vpop.f32.mrf.mxu0
        %v7609 = vadd.f32 %v7560, %v7608
        %7610 = vdwg.mxu0
        %v7611 = vadd.f32 %v7572, %v5501
        %v7612 = vadd.f32 %v7574, %v5502
        %v7613 = vadd.f32 %v7577, %v5503
        %v7614 = vadd.f32 %v7579, %v5504
        %v7615 = vadd.f32 %v7582, %v5505
        %v7616 = vadd.f32 %v7584, %v5506
        %v7617 = vadd.f32 %v7587, %v5507
        %v7618 = vadd.f32 %v7589, %v5508
        %v7619 = vadd.f32 %v7592, %v5509
        %v7620 = vadd.f32 %v7594, %v5510
        %v7621 = vadd.f32 %v7597, %v5511
        %v7622 = vadd.f32 %v7599, %v5512
        %v7623 = vadd.f32 %v7602, %v5513
        %v7624 = vadd.f32 %v7604, %v5514
        %v7625 = vadd.f32 %v7607, %v5515
        %v7626 = vadd.f32 %v7609, %v5516
        %7627 = vst [vmem:[#allocation2] sm:$0xff] %v7611
        %7628 = vst [vmem:[#allocation2 + $0x8] sm:$0xff] %v7612
        %7629 = vst [vmem:[#allocation2 + $0x10] sm:$0xff] %v7613
        %7630 = vst [vmem:[#allocation2 + $0x18] sm:$0xff] %v7614
        %7631 = vst [vmem:[#allocation2 + $0x20] sm:$0xff] %v7615
        %7632 = vst [vmem:[#allocation2 + $0x28] sm:$0xff] %v7616
        %7633 = vst [vmem:[#allocation2 + $0x30] sm:$0xff] %v7617
        %7634 = vst [vmem:[#allocation2 + $0x38] sm:$0xff] %v7618
        %7635 = vst [vmem:[#allocation2 + $0x40] sm:$0xff] %v7619
        %7636 = vst [vmem:[#allocation2 + $0x48] sm:$0xff] %v7620
        %7637 = vst [vmem:[#allocation2 + $0x50] sm:$0xff] %v7621
        %7638 = vst [vmem:[#allocation2 + $0x58] sm:$0xff] %v7622
        %7639 = vst [vmem:[#allocation2 + $0x60] sm:$0xff] %v7623
        %7640 = vst [vmem:[#allocation2 + $0x68] sm:$0xff] %v7624
        %7641 = vst [vmem:[#allocation2 + $0x70] sm:$0xff] %v7625
        %7642 = vst [vmem:[#allocation2 + $0x78] sm:$0xff] %v7626
        %7643 = vst [vmem:[%s877] sm:$0xff] %v7611
        %7644 = vst [vmem:[%s877 + $0x8] sm:$0xff] %v7612
        %7645 = vst [vmem:[%s877 + $0x10] sm:$0xff] %v7613
        %7646 = vst [vmem:[%s877 + $0x18] sm:$0xff] %v7614
        %7647 = vst [vmem:[%s877 + $0x20] sm:$0xff] %v7615
        %7648 = vst [vmem:[%s877 + $0x28] sm:$0xff] %v7616
        %7649 = vst [vmem:[%s877 + $0x30] sm:$0xff] %v7617
        %7650 = vst [vmem:[%s877 + $0x38] sm:$0xff] %v7618
        %7651 = vst [vmem:[%s877 + $0x40] sm:$0xff] %v7619
        %7652 = vst [vmem:[%s877 + $0x48] sm:$0xff] %v7620
        %7653 = vst [vmem:[%s877 + $0x50] sm:$0xff] %v7621
        %7654 = vst [vmem:[%s877 + $0x58] sm:$0xff] %v7622
        %7655 = vst [vmem:[%s877 + $0x60] sm:$0xff] %v7623
        %7656 = vst [vmem:[%s877 + $0x68] sm:$0xff] %v7624
        %7657 = vst [vmem:[%s877 + $0x70] sm:$0xff] %v7625
        %7658 = vst [vmem:[%s877 + $0x78] sm:$0xff] %v7626
        %s7659 = sand.u32 %s410, 1
        %s7660 = scalar_lea.sflag [#allocation5], %s7659
        %s7661 = sand.u32 %s410, 1
        %s7662 = smul.addr %s7661, 128
        %s7663 = scalar_lea.vmem [#allocation20], %s7662
        %s7664 = sand.u32 %s438, 1
        %s7665 = scalar_lea.sflag [#allocation22], %s7664
        %s7666 = sand.u32 %s438, 1
        %s7667 = smul.addr %s7666, 512
        %s7668 = scalar_lea.vmem [#allocation21], %s7667
        // Predicated region
        $region117: #{tpu_custom_call.1} parent=71 // pred_check
          %p7669 = pneg %p420
        $region118: #{tpu_custom_call.1} parent=71 // pred_check_branch
          %7671 = sbr.rel (%p7669) target = $region120
        $region119: #{tpu_custom_call.1} parent=71 // pred_region
          %7673 = vsyncadd %s7660, 0
          %s7674 = smul.addr %s54, 16
          %s7675 = smul.addr %s55, 32
          %s7676 = sadd.s32 %s7674, %s7675
          %s7677 = smul.addr %s7676, 8
          %s7678 = scalar_lea.hbm %s13, %s7677
          %s7679 = sshll.u32 %s7663, 4
          %s7680 = int_to_ptr.vmem [resolvable:$true] %s7679
          %s7681 = sshll.u32 %s7678, 4
          %s7682 = int_to_ptr.hbm [resolvable:$true] %s7681
          %7687 = dma.vmem_to_hbm [thread:$0]  %s7680, 2048, %s7682, %s7660, 128, 128, 8
        $region120: #{tpu_custom_call.1} parent=71 // pred_fallthru
          _
        // Predicated region
        $region121: #{tpu_custom_call.1} parent=71 // pred_check
          %p7688 = pneg %p448
        $region122: #{tpu_custom_call.1} parent=71 // pred_check_branch
          %7690 = sbr.rel (%p7688) target = $region124
        $region123: #{tpu_custom_call.1} parent=71 // pred_region
          %7692 = vsyncadd %s7665, 0
          %s7693 = smul.addr %s54, 64
          %s7694 = smul.addr %s55, 128
          %s7695 = sadd.s32 %s7693, %s7694
          %s7696 = smul.addr %s7695, 8
          %s7697 = scalar_lea.hbm %s14, %s7696
          %s7698 = sshll.u32 %s7668, 4
          %s7699 = int_to_ptr.vmem [resolvable:$true] %s7698
          %s7700 = sshll.u32 %s7697, 4
          %s7701 = int_to_ptr.hbm [resolvable:$true] %s7700
          %7706 = dma.vmem_to_hbm [thread:$0]  %s7699, 8192, %s7701, %s7665, 128, 128, 8
        $region124: #{tpu_custom_call.1} parent=71 // pred_fallthru
          _
      $region72: #{tpu_custom_call.1} parent=5 // pred_fallthru
        _
      %p7707 = scmp.le.s32.totalorder 2, %s45
      // Predicated region
      $region125: #{tpu_custom_call.1} parent=5 // pred_check
        %p7708 = pneg %p7707
      $region126: #{tpu_custom_call.1} parent=5 // pred_check_branch
        %7710 = sbr.rel (%p7708) target = $region128
      $region127: #{tpu_custom_call.1} parent=5 // pred_region
        %s7711 = ssub.s32 %s45, 2
        // Predicated region
        $region129: #{tpu_custom_call.1} parent=127 // pred_check
          %p7712 = pneg %p426
        $region130: #{tpu_custom_call.1} parent=127 // pred_check_branch
          %7714 = sbr.rel (%p7712) target = $region132
        $region131: #{tpu_custom_call.1} parent=127 // pred_region
          %s7715 = sand.u32 %s411, 1
          %s7716 = scalar_lea.sflag [#allocation5], %s7715
          %s7717 = sand.u32 %s411, 1
          %s7718 = smul.addr %s7717, 128
          %s7719 = scalar_lea.vmem [#allocation20], %s7718
          %7721 = dma.done %s7716, 2048
        $region132: #{tpu_custom_call.1} parent=127 // pred_fallthru
          _
        // Predicated region
        $region133: #{tpu_custom_call.1} parent=127 // pred_check
          %p7722 = pneg %p454
        $region134: #{tpu_custom_call.1} parent=127 // pred_check_branch
          %7724 = sbr.rel (%p7722) target = $region136
        $region135: #{tpu_custom_call.1} parent=127 // pred_region
          %s7725 = sand.u32 %s439, 1
          %s7726 = scalar_lea.sflag [#allocation22], %s7725
          %s7727 = sand.u32 %s439, 1
          %s7728 = smul.addr %s7727, 512
          %s7729 = scalar_lea.vmem [#allocation21], %s7728
          %7731 = dma.done %s7726, 8192
        $region136: #{tpu_custom_call.1} parent=127 // pred_fallthru
          _
      $region128: #{tpu_custom_call.1} parent=5 // pred_fallthru
        _
    $region6: #{tpu_custom_call.1} parent=1 // loop_footer
      %s49 = sadd.s32 1, %s45
    $region7: #{tpu_custom_call.1} parent=1 // loop_footer_branch
      %44 = sbr.rel target = $region3
    $region8: #{tpu_custom_call.1} parent=1 // loop_exit
      _
    %7732 = vsyncpa [#allocation4], 1
    %s7733 = scalar_lea.sflag [#allocation4], 1
    %7734 = vsyncpa %s7733, 1
    %7735 = vsyncpa [#allocation7], 1
    %s7736 = scalar_lea.sflag [#allocation7], 1
    %7737 = vsyncpa %s7736, 1
    %7738 = vsyncpa [#allocation10], 1
    %s7739 = scalar_lea.sflag [#allocation10], 1
    %7740 = vsyncpa %s7739, 1
    %7741 = vsyncpa [#allocation13], 1
    %s7742 = scalar_lea.sflag [#allocation13], 1
    %7743 = vsyncpa %s7742, 1
    %7744 = vsyncpa [#allocation16], 1
    %s7745 = scalar_lea.sflag [#allocation16], 1
    %7746 = vsyncpa %s7745, 1
    %7747 = vsyncpa [#allocation19], 1
    %s7748 = scalar_lea.sflag [#allocation19], 1
    %7749 = vsyncpa %s7748, 1
    %7750 = vsyncpa [#allocation5], 1
    %s7751 = scalar_lea.sflag [#allocation5], 1
    %7752 = vsyncpa %s7751, 1
    %7753 = vsyncpa [#allocation22], 1
    %s7754 = scalar_lea.sflag [#allocation22], 1
    %7755 = vsyncpa %s7754, 1

</llo_original>
